<compile_context>
chip_gen: v7x
topology: tpu7x:2x2x1
jax: 0.10.0
libtpu: 0.0.40
codegen_flags: <defaults>
</compile_context>

<pallas_src>
import functools

import jax
import jax.numpy as jnp
from jax.experimental import pallas as pl
from jax.experimental.pallas import tpu as pltpu


def _round_up(x, m):
    return ((x + m - 1) // m) * m


def _crnn_kernel(pix_ref, vec_ref, h_ref,
                 wc1_ref, bc1_ref, wc2_ref, bc2_ref,
                 wm_ref, bm_ref, wv_ref, wh_ref, bg_ref, wpix_ref,
                 w2_ref, b2_ref,
                 q_ref, hout_ref,
                 c1_ref, flat_ref,
                 *, S, S1, S2, NB, Co, H):
    f32 = jnp.float32
    M1 = S1 * S * NB          # conv1 rows, kept S-wide (cols >= S1 are garbage, never read)
    M2 = S2 * S * NB          # conv2 rows, kept S-wide

    # ---- conv1: 9 per-tap full-width matmuls, clean dot-accumulation chain --------
    acc1 = None
    for dy in range(3):
        for dx in range(3):
            t0 = (dy * S + dx) * NB
            d = jnp.dot(pix_ref[t0:t0 + M1, :], wc1_ref[dy, dx],
                        preferred_element_type=f32)
            acc1 = d if acc1 is None else acc1 + d
    c1_ref[0:M1, :] = jnp.maximum(acc1 + bc1_ref[...], 0.0)
    # Zero the 2*NB overshoot rows touched by the last conv2 taps (feed garbage rows only).
    c1_ref[M1:M1 + 2 * NB, :] = jnp.zeros((2 * NB, Co), f32)

    # ---- conv2: 9 per-tap full-width matmuls ---------------------------------------
    acc2 = None
    for dy in range(3):
        for dx in range(3):
            t0 = (dy * S + dx) * NB
            d = jnp.dot(c1_ref[t0:t0 + M2, :], wc2_ref[dy, dx],
                        preferred_element_type=f32)
            acc2 = d if acc2 is None else acc2 + d
    act2 = jnp.maximum(acc2 + bc2_ref[...], 0.0)

    # ---- flatten valid conv2 positions into (NB, S2*S2*Co), (h, w, c)-major columns -
    for p in range(S2):
        for q in range(S2):
            r0 = (p * S + q) * NB
            c0 = (p * S2 + q) * Co
            flat_ref[:, c0:c0 + Co] = act2[r0:r0 + NB, :]

    # ---- vec MLP + fused GRU gates (no concat; three accumulated matmuls) ----------
    v = jnp.maximum(jnp.dot(vec_ref[...], wm_ref[...], preferred_element_type=f32)
                    + bm_ref[...], 0.0)
    h = h_ref[...]
    g = (jnp.dot(flat_ref[...], wpix_ref[...], preferred_element_type=f32)
         + jnp.dot(v, wv_ref[...], preferred_element_type=f32)
         + jnp.dot(h, wh_ref[...], preferred_element_type=f32)
         + bg_ref[...])

    # gate columns: [r_fused | z_fused | n_input | n_hidden]  (PyTorch GRUCell order)
    r = jax.nn.sigmoid(g[:, 0:H])
    z = jax.nn.sigmoid(g[:, H:2 * H])
    n = jnp.tanh(g[:, 2 * H:3 * H] + r * g[:, 3 * H:4 * H])
    h_new = (1.0 - z) * n + z * h
    hout_ref[...] = h_new

    # ---- output head (lane-dense padded store) --------------------------------------
    q_ref[...] = jnp.dot(h_new, w2_ref[...], preferred_element_type=f32) + b2_ref[...]


def _const_spec(a):
    """Full-array block with a constant index_map (weight stays VMEM-resident)."""
    return pl.BlockSpec(a.shape, lambda b: (0,) * a.ndim)


def crnn_forward(inputs, hidden_state, params, cfg, nb_cap=128):
    """inputs: (batch, n_agent, pixid*fov*fov + lid); hidden_state: (..., H) -> (q, h)."""
    B, A, F = inputs.shape
    Nr = B * A
    S = cfg["fov"]; S1 = S - 2; S2 = S1 - 2
    Ci, Co = cfg["pixid"], cfg["pixod"]
    lid = cfg["lid"]
    H, nact = cfg["rnn_hidden_dim"], cfg["n_actions"]
    Lpad = params["wm"].shape[0]
    Apad = params["w2"].shape[1]
    KC = S2 * S2 * Co

    # batch block sizing: multiple of 8 sublanes, capped so one block + scratch fits
    # comfortably in v7x's 64 MiB VMEM (raise nb_cap on v5e/v6e if desired).
    NB = _round_up(min(nb_cap, _round_up(Nr, 8)), 8)
    Np = _round_up(Nr, NB)
    NBLK = Np // NB

    x = inputs.reshape(Nr, F).astype(jnp.float32)
    pix_feat = Ci * S * S
    pixel = x[:, :pix_feat].reshape(Nr, Ci, S, S)            # NCHW, as in the module
    vec = x[:, pix_feat:]

    # Host-side layout plumbing: NCHW -> (S, S, N, C) -> per-block (y, x, n)-major rows,
    # plus 2*NB zero rows per block so every per-tap slab slice is in bounds.
    pixel = jnp.transpose(pixel, (2, 3, 0, 1))
    pixel = jnp.pad(pixel, ((0, 0), (0, 0), (0, Np - Nr), (0, 0)))
    pixel = pixel.reshape(S * S, NBLK, NB, Ci).transpose(1, 0, 2, 3)
    pixel = pixel.reshape(NBLK, S * S * NB, Ci)
    pixel = jnp.pad(pixel, ((0, 0), (0, 2 * NB), (0, 0)))

    vec_p = jnp.pad(vec, ((0, Np - Nr), (0, Lpad - lid)))
    h_p = jnp.pad(hidden_state.reshape(-1, H).astype(jnp.float32), ((0, Np - Nr), (0, 0)))

    flops = 2 * Np * (9 * S1 * S * Ci * Co + 9 * S2 * S * Co * Co
                      + Lpad * Lpad + (Lpad + H + KC) * 4 * H + H * Apad)
    transcendentals = 3 * Np * H
    bytes_accessed = 4 * (int(pixel.size) + int(vec_p.size) + int(h_p.size)
                          + NBLK * sum(int(v.size) for v in params.values())
                          + Np * (Apad + H))

    kern = functools.partial(_crnn_kernel, S=S, S1=S1, S2=S2, NB=NB, Co=Co, H=H)

    in_specs = [
        pl.BlockSpec((None, (S * S + 2) * NB, Ci), lambda b: (b, 0, 0)),   # pixel block
        pl.BlockSpec((NB, Lpad), lambda b: (b, 0)),                        # vec block
        pl.BlockSpec((NB, H), lambda b: (b, 0)),                           # hidden block
        _const_spec(params["wc1"]), _const_spec(params["bc1"]),
        _const_spec(params["wc2"]), _const_spec(params["bc2"]),
        _const_spec(params["wm"]), _const_spec(params["bm"]),
        _const_spec(params["wv"]), _const_spec(params["wh"]),
        _const_spec(params["bg"]), _const_spec(params["wpix"]),
        _const_spec(params["w2"]), _const_spec(params["b2"]),
    ]
    out_specs = (pl.BlockSpec((NB, Apad), lambda b: (b, 0)),
                 pl.BlockSpec((NB, H), lambda b: (b, 0)))
    scratch_shapes = [pltpu.VMEM(((S1 * S + 2) * NB, Co), jnp.float32),    # conv1 slab
                      pltpu.VMEM((NB, KC), jnp.float32)]                   # conv2 flat

    q_pad, h_pad = pl.pallas_call(
        kern,
        grid=(NBLK,),
        out_shape=(jax.ShapeDtypeStruct((Np, Apad), jnp.float32),
                   jax.ShapeDtypeStruct((Np, H), jnp.float32)),
        in_specs=in_specs,
        out_specs=out_specs,
        scratch_shapes=scratch_shapes,
        compiler_params=pltpu.CompilerParams(
            dimension_semantics=("parallel",),
            vmem_limit_bytes=48 * 1024 * 1024),
        cost_estimate=pl.CostEstimate(flops=flops, transcendentals=transcendentals,
                                      bytes_accessed=bytes_accessed),
    )(pixel, vec_p, h_p,
      params["wc1"], params["bc1"], params["wc2"], params["bc2"],
      params["wm"], params["bm"], params["wv"], params["wh"], params["bg"],
      params["wpix"], params["w2"], params["b2"])

    q = q_pad[:Nr, :nact].reshape(B, A, nact)
    h = h_pad[:Nr, :]
    return q, h


# --------------------------- parameters (PyTorch layouts) ---------------------------

def init_torch_params(key, cfg):
    """Random weights in native PyTorch layouts (conv OIHW, Linear/GRUCell (out, in))."""
    S = cfg["fov"]; S2 = S - 4
    Ci, Co = cfg["pixid"], cfg["pixod"]
    lid, lod = cfg["lid"], cfg["lod"]
    H, nact = cfg["rnn_hidden_dim"], cfg["n_actions"]
    rnnout = S2 * S2 * Co
    sc = 0.1
    ks = jax.random.split(key, 12)
    nrm = jax.random.normal
    return {
        "conv1_w": sc * nrm(ks[0], (Co, Ci, 3, 3), jnp.float32),
        "conv1_b": sc * nrm(ks[1], (Co,), jnp.float32),
        "conv2_w": sc * nrm(ks[2], (Co, Co, 3, 3), jnp.float32),
        "conv2_b": sc * nrm(ks[3], (Co,), jnp.float32),
        "mlp1_w": sc * nrm(ks[4], (lod, lid), jnp.float32),
        "mlp1_b": sc * nrm(ks[5], (lod,), jnp.float32),
        "gru_w_ih": sc * nrm(ks[6], (3 * H, rnnout + lod), jnp.float32),
        "gru_w_hh": sc * nrm(ks[7], (3 * H, H), jnp.float32),
        "gru_b_ih": sc * nrm(ks[8], (3 * H,), jnp.float32),
        "gru_b_hh": sc * nrm(ks[9], (3 * H,), jnp.float32),
        "fc1_w": sc * nrm(ks[10], (nact, H), jnp.float32),
        "fc1_b": sc * nrm(ks[11], (nact,), jnp.float32),
    }


def pack_params(tp, cfg):
    """PyTorch layouts -> kernel layouts (HWIO convs, (in,out) linears, fused 4H gates)."""
    S = cfg["fov"]; S2 = S - 4
    Ci, Co = cfg["pixid"], cfg["pixod"]
    lid, lod = cfg["lid"], cfg["lod"]
    H, nact = cfg["rnn_hidden_dim"], cfg["n_actions"]
    rnnout = S2 * S2 * Co
    Lpad = _round_up(max(lid, lod), 128)
    Apad = _round_up(nact, 128)

    wc1 = jnp.transpose(tp["conv1_w"], (2, 3, 1, 0))           # OIHW -> HWIO
    wc2 = jnp.transpose(tp["conv2_w"], (2, 3, 1, 0))
    bc1 = tp["conv1_b"].reshape(1, Co)
    bc2 = tp["conv2_b"].reshape(1, Co)

    wm = jnp.zeros((Lpad, Lpad), jnp.float32).at[:lid, :lod].set(tp["mlp1_w"].T)
    bm = jnp.zeros((1, Lpad), jnp.float32).at[0, :lod].set(tp["mlp1_b"])

    w_ih = tp["gru_w_ih"].T                                    # (rnnout + lod, 3H), [r,z,n]
    w_hh = tp["gru_w_hh"].T                                    # (H, 3H)
    b_ih, b_hh = tp["gru_b_ih"], tp["gru_b_hh"]

    # PyTorch flattens the NCHW conv output (c, h, w)-major; the kernel's flat scratch is
    # (h, w, c)-major -> permute the pixel block of w_ih accordingly.
    wpix3 = w_ih[:rnnout].reshape(Co, S2, S2, 3 * H).transpose(1, 2, 0, 3)
    wpix3 = wpix3.reshape(rnnout, 3 * H)
    wpix = jnp.zeros((rnnout, 4 * H), jnp.float32).at[:, :3 * H].set(wpix3)

    # Packed gate columns = [r_fused | z_fused | n_input | n_hidden].
    wv = jnp.zeros((Lpad, 4 * H), jnp.float32).at[:lod, :3 * H].set(w_ih[rnnout:])
    wh = jnp.zeros((H, 4 * H), jnp.float32)
    wh = wh.at[:, :2 * H].set(w_hh[:, :2 * H]).at[:, 3 * H:].set(w_hh[:, 2 * H:])
    bg = jnp.zeros((1, 4 * H), jnp.float32)
    bg = bg.at[0, :2 * H].set(b_ih[:2 * H] + b_hh[:2 * H])
    bg = bg.at[0, 2 * H:3 * H].set(b_ih[2 * H:])
    bg = bg.at[0, 3 * H:].set(b_hh[2 * H:])

    w2 = jnp.zeros((H, Apad), jnp.float32).at[:, :nact].set(tp["fc1_w"].T)
    b2 = jnp.zeros((1, Apad), jnp.float32).at[0, :nact].set(tp["fc1_b"])

    return {"wc1": wc1, "bc1": bc1, "wc2": wc2, "bc2": bc2,
            "wm": wm, "bm": bm, "wv": wv, "wh": wh, "bg": bg, "wpix": wpix,
            "w2": w2, "b2": b2}


# ------------------------------ plain-JAX reference ----------------------------------

def crnn_forward_ref(inputs, hidden_state, tp, cfg):
    """PyTorch CRNN semantics computed from raw PyTorch-layout weights."""
    B, A, F = inputs.shape
    Nr = B * A
    S = cfg["fov"]; Ci = cfg["pixid"]
    H, nact = cfg["rnn_hidden_dim"], cfg["n_actions"]

    x = inputs.reshape(Nr, F)
    pix = x[:, :Ci * S * S].reshape(Nr, Ci, S, S)
    vec = x[:, Ci * S * S:]

    dn = ("NCHW", "OIHW", "NCHW")
    y = jax.nn.relu(jax.lax.conv_general_dilated(pix, tp["conv1_w"], (1, 1), "VALID",
                                                 dimension_numbers=dn)
                    + tp["conv1_b"][None, :, None, None])
    y = jax.nn.relu(jax.lax.conv_general_dilated(y, tp["conv2_w"], (1, 1), "VALID",
                                                 dimension_numbers=dn)
                    + tp["conv2_b"][None, :, None, None])
    pix_flat = y.reshape(Nr, -1)                          # (c, h, w)-major, like x.view(N,-1)

    v = jax.nn.relu(vec @ tp["mlp1_w"].T + tp["mlp1_b"])
    xcat = jnp.concatenate([pix_flat, v], axis=1)
    h = hidden_state.reshape(-1, H)

    gi = xcat @ tp["gru_w_ih"].T + tp["gru_b_ih"]
    gh = h @ tp["gru_w_hh"].T + tp["gru_b_hh"]
    r = jax.nn.sigmoid(gi[:, :H] + gh[:, :H])
    z = jax.nn.sigmoid(gi[:, H:2 * H] + gh[:, H:2 * H])
    n = jnp.tanh(gi[:, 2 * H:3 * H] + r * gh[:, 2 * H:3 * H])
    h_new = (1.0 - z) * n + z * h
    q = h_new @ tp["fc1_w"].T + tp["fc1_b"]
    return q.reshape(B, A, nact), h_new


if __name__ == "__main__":
    # fov=7 -> conv tower [3x3 s1, 3x3 s1]; obs feature = pixid*fov*fov + lid; last_action=False.
    cfg = dict(fov=7, pixid=3, pixod=32, lid=10, lod=10,
               rnn_hidden_dim=128, n_actions=32)
    batch, n_agent = 2, 3
    feat = cfg["pixid"] * cfg["fov"] ** 2 + cfg["lid"]          # 157

    key = jax.random.PRNGKey(0)
    k_in, k_h, k_p = jax.random.split(key, 3)
    inputs = jax.random.normal(k_in, (batch, n_agent, feat), jnp.float32)
    hidden_state = jax.random.normal(k_h, (batch, n_agent, cfg["rnn_hidden_dim"]),
                                     jnp.float32)
    torch_params = init_torch_params(k_p, cfg)
    params = pack_params(torch_params, cfg)

    q, h = crnn_forward(inputs, hidden_state, params, cfg)
    jax.block_until_ready((q, h))

    q_ref, h_ref = crnn_forward_ref(inputs, hidden_state, torch_params, cfg)
    assert q.shape == (batch, n_agent, cfg["n_actions"])
    assert h.shape == (batch * n_agent, cfg["rnn_hidden_dim"])
    assert jnp.allclose(q, q_ref, atol=1e-3, rtol=1e-3), "q mismatch vs reference"
    assert jnp.allclose(h, h_ref, atol=1e-3, rtol=1e-3), "h mismatch vs reference"

    print("KERNEL_OK")
</pallas_src>

<mosaic_0001>
module attributes {stable_mosaic.version = 11 : i64} {
  func.func @_crnn_kernel(%arg0: i32, %arg1: memref<1x408x3xf32, #tpu.memory_space<vmem>>, %arg2: memref<8x128xf32, #tpu.memory_space<vmem>>, %arg3: memref<8x128xf32, #tpu.memory_space<vmem>>, %arg4: memref<3x3x3x32xf32, #tpu.memory_space<vmem>>, %arg5: memref<1x32xf32, #tpu.memory_space<vmem>>, %arg6: memref<3x3x32x32xf32, #tpu.memory_space<vmem>>, %arg7: memref<1x32xf32, #tpu.memory_space<vmem>>, %arg8: memref<128x128xf32, #tpu.memory_space<vmem>>, %arg9: memref<1x128xf32, #tpu.memory_space<vmem>>, %arg10: memref<128x512xf32, #tpu.memory_space<vmem>>, %arg11: memref<128x512xf32, #tpu.memory_space<vmem>>, %arg12: memref<1x512xf32, #tpu.memory_space<vmem>>, %arg13: memref<288x512xf32, #tpu.memory_space<vmem>>, %arg14: memref<128x128xf32, #tpu.memory_space<vmem>>, %arg15: memref<1x128xf32, #tpu.memory_space<vmem>>, %arg16: memref<8x128xf32, #tpu.memory_space<vmem>>, %arg17: memref<8x128xf32, #tpu.memory_space<vmem>>, %arg18: memref<296x32xf32, #tpu.memory_space<vmem>>, %arg19: memref<8x288xf32, #tpu.memory_space<vmem>>) attributes {dimension_semantics = [#tpu.dimension_semantics<parallel>], iteration_bounds = array<i64: 1>, scalar_prefetch = 0 : i64, scratch_operands = 2 : i64, tpu.core_type = #tpu.core_type<tc>, window_params = [{transform_indices = @transform_0, window_bounds = array<i64: 1, 408, 3>}, {transform_indices = @transform_1, window_bounds = array<i64: 8, 128>}, {transform_indices = @transform_2, window_bounds = array<i64: 8, 128>}, {pipeline_mode = #tpu.pipeline_mode<synchronous>, transform_indices = @transform_3, window_bounds = array<i64: 3, 3, 3, 32>}, {pipeline_mode = #tpu.pipeline_mode<synchronous>, transform_indices = @transform_4, window_bounds = array<i64: 1, 32>}, {pipeline_mode = #tpu.pipeline_mode<synchronous>, transform_indices = @transform_5, window_bounds = array<i64: 3, 3, 32, 32>}, {pipeline_mode = #tpu.pipeline_mode<synchronous>, transform_indices = @transform_6, window_bounds = array<i64: 1, 32>}, {pipeline_mode = #tpu.pipeline_mode<synchronous>, transform_indices = @transform_7, window_bounds = array<i64: 128, 128>}, {pipeline_mode = #tpu.pipeline_mode<synchronous>, transform_indices = @transform_8, window_bounds = array<i64: 1, 128>}, {pipeline_mode = #tpu.pipeline_mode<synchronous>, transform_indices = @transform_9, window_bounds = array<i64: 128, 512>}, {pipeline_mode = #tpu.pipeline_mode<synchronous>, transform_indices = @transform_10, window_bounds = array<i64: 128, 512>}, {pipeline_mode = #tpu.pipeline_mode<synchronous>, transform_indices = @transform_11, window_bounds = array<i64: 1, 512>}, {pipeline_mode = #tpu.pipeline_mode<synchronous>, transform_indices = @transform_12, window_bounds = array<i64: 288, 512>}, {pipeline_mode = #tpu.pipeline_mode<synchronous>, transform_indices = @transform_13, window_bounds = array<i64: 128, 128>}, {pipeline_mode = #tpu.pipeline_mode<synchronous>, transform_indices = @transform_14, window_bounds = array<i64: 1, 128>}, {transform_indices = @transform_15, window_bounds = array<i64: 8, 128>}, {transform_indices = @transform_16, window_bounds = array<i64: 8, 128>}]} {
    %c0 = arith.constant 0 : index
    %c0_0 = arith.constant 0 : index
    %c0_1 = arith.constant 0 : index
    %0 = vector.load %arg1[%c0, %c0_0, %c0_1] : memref<1x408x3xf32, #tpu.memory_space<vmem>>, vector<1x280x3xf32>
    %1 = vector.shape_cast %0 : vector<1x280x3xf32> to vector<280x3xf32>
    %c0_2 = arith.constant 0 : index
    %c0_3 = arith.constant 0 : index
    %c0_4 = arith.constant 0 : index
    %c0_5 = arith.constant 0 : index
    %2 = vector.load %arg4[%c0_2, %c0_3, %c0_4, %c0_5] : memref<3x3x3x32xf32, #tpu.memory_space<vmem>>, vector<1x1x3x32xf32>
    %3 = vector.shape_cast %2 : vector<1x1x3x32xf32> to vector<3x32xf32>
    %cst = arith.constant dense<0.000000e+00> : vector<280x32xf32>
    %4 = tpu.matmul %1, %3, %cst {dimension_numbers = #tpu.dot_dimension_numbers<[1], [0], [0], [1], [0, 0, 1, 1], [], []>} : vector<280x3xf32>, vector<3x32xf32>, vector<280x32xf32> -> vector<280x32xf32>
    %c0_6 = arith.constant 0 : index
    %c8 = arith.constant 8 : index
    %c0_7 = arith.constant 0 : index
    %5 = vector.load %arg1[%c0_6, %c8, %c0_7] : memref<1x408x3xf32, #tpu.memory_space<vmem>>, vector<1x280x3xf32>
    %6 = vector.shape_cast %5 : vector<1x280x3xf32> to vector<280x3xf32>
    %c0_8 = arith.constant 0 : index
    %c1 = arith.constant 1 : index
    %c0_9 = arith.constant 0 : index
    %c0_10 = arith.constant 0 : index
    %7 = vector.load %arg4[%c0_8, %c1, %c0_9, %c0_10] : memref<3x3x3x32xf32, #tpu.memory_space<vmem>>, vector<1x1x3x32xf32>
    %8 = vector.shape_cast %7 : vector<1x1x3x32xf32> to vector<3x32xf32>
    %cst_11 = arith.constant dense<0.000000e+00> : vector<280x32xf32>
    %9 = tpu.matmul %6, %8, %cst_11 {dimension_numbers = #tpu.dot_dimension_numbers<[1], [0], [0], [1], [0, 0, 1, 1], [], []>} : vector<280x3xf32>, vector<3x32xf32>, vector<280x32xf32> -> vector<280x32xf32>
    %10 = arith.addf %4, %9 : vector<280x32xf32>
    %c0_12 = arith.constant 0 : index
    %c16 = arith.constant 16 : index
    %c0_13 = arith.constant 0 : index
    %11 = vector.load %arg1[%c0_12, %c16, %c0_13] : memref<1x408x3xf32, #tpu.memory_space<vmem>>, vector<1x280x3xf32>
    %12 = vector.shape_cast %11 : vector<1x280x3xf32> to vector<280x3xf32>
    %c0_14 = arith.constant 0 : index
    %c2 = arith.constant 2 : index
    %c0_15 = arith.constant 0 : index
    %c0_16 = arith.constant 0 : index
    %13 = vector.load %arg4[%c0_14, %c2, %c0_15, %c0_16] : memref<3x3x3x32xf32, #tpu.memory_space<vmem>>, vector<1x1x3x32xf32>
    %14 = vector.shape_cast %13 : vector<1x1x3x32xf32> to vector<3x32xf32>
    %cst_17 = arith.constant dense<0.000000e+00> : vector<280x32xf32>
    %15 = tpu.matmul %12, %14, %cst_17 {dimension_numbers = #tpu.dot_dimension_numbers<[1], [0], [0], [1], [0, 0, 1, 1], [], []>} : vector<280x3xf32>, vector<3x32xf32>, vector<280x32xf32> -> vector<280x32xf32>
    %16 = arith.addf %10, %15 : vector<280x32xf32>
    %c0_18 = arith.constant 0 : index
    %c56 = arith.constant 56 : index
    %c0_19 = arith.constant 0 : index
    %17 = vector.load %arg1[%c0_18, %c56, %c0_19] : memref<1x408x3xf32, #tpu.memory_space<vmem>>, vector<1x280x3xf32>
    %18 = vector.shape_cast %17 : vector<1x280x3xf32> to vector<280x3xf32>
    %c1_20 = arith.constant 1 : index
    %c0_21 = arith.constant 0 : index
    %c0_22 = arith.constant 0 : index
    %c0_23 = arith.constant 0 : index
    %19 = vector.load %arg4[%c1_20, %c0_21, %c0_22, %c0_23] : memref<3x3x3x32xf32, #tpu.memory_space<vmem>>, vector<1x1x3x32xf32>
    %20 = vector.shape_cast %19 : vector<1x1x3x32xf32> to vector<3x32xf32>
    %cst_24 = arith.constant dense<0.000000e+00> : vector<280x32xf32>
    %21 = tpu.matmul %18, %20, %cst_24 {dimension_numbers = #tpu.dot_dimension_numbers<[1], [0], [0], [1], [0, 0, 1, 1], [], []>} : vector<280x3xf32>, vector<3x32xf32>, vector<280x32xf32> -> vector<280x32xf32>
    %22 = arith.addf %16, %21 : vector<280x32xf32>
    %c0_25 = arith.constant 0 : index
    %c64 = arith.constant 64 : index
    %c0_26 = arith.constant 0 : index
    %23 = vector.load %arg1[%c0_25, %c64, %c0_26] : memref<1x408x3xf32, #tpu.memory_space<vmem>>, vector<1x280x3xf32>
    %24 = vector.shape_cast %23 : vector<1x280x3xf32> to vector<280x3xf32>
    %c1_27 = arith.constant 1 : index
    %c1_28 = arith.constant 1 : index
    %c0_29 = arith.constant 0 : index
    %c0_30 = arith.constant 0 : index
    %25 = vector.load %arg4[%c1_27, %c1_28, %c0_29, %c0_30] : memref<3x3x3x32xf32, #tpu.memory_space<vmem>>, vector<1x1x3x32xf32>
    %26 = vector.shape_cast %25 : vector<1x1x3x32xf32> to vector<3x32xf32>
    %cst_31 = arith.constant dense<0.000000e+00> : vector<280x32xf32>
    %27 = tpu.matmul %24, %26, %cst_31 {dimension_numbers = #tpu.dot_dimension_numbers<[1], [0], [0], [1], [0, 0, 1, 1], [], []>} : vector<280x3xf32>, vector<3x32xf32>, vector<280x32xf32> -> vector<280x32xf32>
    %28 = arith.addf %22, %27 : vector<280x32xf32>
    %c0_32 = arith.constant 0 : index
    %c72 = arith.constant 72 : index
    %c0_33 = arith.constant 0 : index
    %29 = vector.load %arg1[%c0_32, %c72, %c0_33] : memref<1x408x3xf32, #tpu.memory_space<vmem>>, vector<1x280x3xf32>
    %30 = vector.shape_cast %29 : vector<1x280x3xf32> to vector<280x3xf32>
    %c1_34 = arith.constant 1 : index
    %c2_35 = arith.constant 2 : index
    %c0_36 = arith.constant 0 : index
    %c0_37 = arith.constant 0 : index
    %31 = vector.load %arg4[%c1_34, %c2_35, %c0_36, %c0_37] : memref<3x3x3x32xf32, #tpu.memory_space<vmem>>, vector<1x1x3x32xf32>
    %32 = vector.shape_cast %31 : vector<1x1x3x32xf32> to vector<3x32xf32>
    %cst_38 = arith.constant dense<0.000000e+00> : vector<280x32xf32>
    %33 = tpu.matmul %30, %32, %cst_38 {dimension_numbers = #tpu.dot_dimension_numbers<[1], [0], [0], [1], [0, 0, 1, 1], [], []>} : vector<280x3xf32>, vector<3x32xf32>, vector<280x32xf32> -> vector<280x32xf32>
    %34 = arith.addf %28, %33 : vector<280x32xf32>
    %c0_39 = arith.constant 0 : index
    %c112 = arith.constant 112 : index
    %c0_40 = arith.constant 0 : index
    %35 = vector.load %arg1[%c0_39, %c112, %c0_40] : memref<1x408x3xf32, #tpu.memory_space<vmem>>, vector<1x280x3xf32>
    %36 = vector.shape_cast %35 : vector<1x280x3xf32> to vector<280x3xf32>
    %c2_41 = arith.constant 2 : index
    %c0_42 = arith.constant 0 : index
    %c0_43 = arith.constant 0 : index
    %c0_44 = arith.constant 0 : index
    %37 = vector.load %arg4[%c2_41, %c0_42, %c0_43, %c0_44] : memref<3x3x3x32xf32, #tpu.memory_space<vmem>>, vector<1x1x3x32xf32>
    %38 = vector.shape_cast %37 : vector<1x1x3x32xf32> to vector<3x32xf32>
    %cst_45 = arith.constant dense<0.000000e+00> : vector<280x32xf32>
    %39 = tpu.matmul %36, %38, %cst_45 {dimension_numbers = #tpu.dot_dimension_numbers<[1], [0], [0], [1], [0, 0, 1, 1], [], []>} : vector<280x3xf32>, vector<3x32xf32>, vector<280x32xf32> -> vector<280x32xf32>
    %40 = arith.addf %34, %39 : vector<280x32xf32>
    %c0_46 = arith.constant 0 : index
    %c120 = arith.constant 120 : index
    %c0_47 = arith.constant 0 : index
    %41 = vector.load %arg1[%c0_46, %c120, %c0_47] : memref<1x408x3xf32, #tpu.memory_space<vmem>>, vector<1x280x3xf32>
    %42 = vector.shape_cast %41 : vector<1x280x3xf32> to vector<280x3xf32>
    %c2_48 = arith.constant 2 : index
    %c1_49 = arith.constant 1 : index
    %c0_50 = arith.constant 0 : index
    %c0_51 = arith.constant 0 : index
    %43 = vector.load %arg4[%c2_48, %c1_49, %c0_50, %c0_51] : memref<3x3x3x32xf32, #tpu.memory_space<vmem>>, vector<1x1x3x32xf32>
    %44 = vector.shape_cast %43 : vector<1x1x3x32xf32> to vector<3x32xf32>
    %cst_52 = arith.constant dense<0.000000e+00> : vector<280x32xf32>
    %45 = tpu.matmul %42, %44, %cst_52 {dimension_numbers = #tpu.dot_dimension_numbers<[1], [0], [0], [1], [0, 0, 1, 1], [], []>} : vector<280x3xf32>, vector<3x32xf32>, vector<280x32xf32> -> vector<280x32xf32>
    %46 = arith.addf %40, %45 : vector<280x32xf32>
    %c0_53 = arith.constant 0 : index
    %c128 = arith.constant 128 : index
    %c0_54 = arith.constant 0 : index
    %47 = vector.load %arg1[%c0_53, %c128, %c0_54] : memref<1x408x3xf32, #tpu.memory_space<vmem>>, vector<1x280x3xf32>
    %48 = vector.shape_cast %47 : vector<1x280x3xf32> to vector<280x3xf32>
    %c2_55 = arith.constant 2 : index
    %c2_56 = arith.constant 2 : index
    %c0_57 = arith.constant 0 : index
    %c0_58 = arith.constant 0 : index
    %49 = vector.load %arg4[%c2_55, %c2_56, %c0_57, %c0_58] : memref<3x3x3x32xf32, #tpu.memory_space<vmem>>, vector<1x1x3x32xf32>
    %50 = vector.shape_cast %49 : vector<1x1x3x32xf32> to vector<3x32xf32>
    %cst_59 = arith.constant dense<0.000000e+00> : vector<280x32xf32>
    %51 = tpu.matmul %48, %50, %cst_59 {dimension_numbers = #tpu.dot_dimension_numbers<[1], [0], [0], [1], [0, 0, 1, 1], [], []>} : vector<280x3xf32>, vector<3x32xf32>, vector<280x32xf32> -> vector<280x32xf32>
    %52 = arith.addf %46, %51 : vector<280x32xf32>
    %c0_60 = arith.constant 0 : index
    %c0_61 = arith.constant 0 : index
    %53 = vector.load %arg5[%c0_60, %c0_61] : memref<1x32xf32, #tpu.memory_space<vmem>>, vector<1x32xf32>
    %54 = vector.broadcast %53 : vector<1x32xf32> to vector<280x32xf32>
    %55 = arith.addf %52, %54 : vector<280x32xf32>
    %cst_62 = arith.constant 0.000000e+00 : f32
    %56 = vector.broadcast %cst_62 : f32 to vector<280x32xf32>
    %57 = arith.maximumf %55, %56 : vector<280x32xf32>
    %c0_63 = arith.constant 0 : index
    %c0_64 = arith.constant 0 : index
    %58 = vector.load %arg18[%c0_63, %c0_64] : memref<296x32xf32, #tpu.memory_space<vmem>>, vector<280x32xf32>
    tpu.vector_store %arg18[%c0_63, %c0_64], %57 {strides = array<i32>} : memref<296x32xf32, #tpu.memory_space<vmem>>, vector<280x32xf32>,
    %cst_65 = arith.constant 0.000000e+00 : f32
    %59 = vector.broadcast %cst_65 : f32 to vector<16x32xf32>
    %c280 = arith.constant 280 : index
    %c0_66 = arith.constant 0 : index
    %60 = vector.load %arg18[%c280, %c0_66] : memref<296x32xf32, #tpu.memory_space<vmem>>, vector<16x32xf32>
    tpu.vector_store %arg18[%c280, %c0_66], %59 {strides = array<i32>} : memref<296x32xf32, #tpu.memory_space<vmem>>, vector<16x32xf32>,
    %c0_67 = arith.constant 0 : index
    %c0_68 = arith.constant 0 : index
    %61 = vector.load %arg18[%c0_67, %c0_68] : memref<296x32xf32, #tpu.memory_space<vmem>>, vector<168x32xf32>
    %c0_69 = arith.constant 0 : index
    %c0_70 = arith.constant 0 : index
    %c0_71 = arith.constant 0 : index
    %c0_72 = arith.constant 0 : index
    %62 = vector.load %arg6[%c0_69, %c0_70, %c0_71, %c0_72] : memref<3x3x32x32xf32, #tpu.memory_space<vmem>>, vector<1x1x32x32xf32>
    %63 = vector.shape_cast %62 : vector<1x1x32x32xf32> to vector<32x32xf32>
    %cst_73 = arith.constant dense<0.000000e+00> : vector<168x32xf32>
    %64 = tpu.matmul %61, %63, %cst_73 {dimension_numbers = #tpu.dot_dimension_numbers<[1], [0], [0], [1], [0, 0, 1, 1], [], []>} : vector<168x32xf32>, vector<32x32xf32>, vector<168x32xf32> -> vector<168x32xf32>
    %c8_74 = arith.constant 8 : index
    %c0_75 = arith.constant 0 : index
    %65 = vector.load %arg18[%c8_74, %c0_75] : memref<296x32xf32, #tpu.memory_space<vmem>>, vector<168x32xf32>
    %c0_76 = arith.constant 0 : index
    %c1_77 = arith.constant 1 : index
    %c0_78 = arith.constant 0 : index
    %c0_79 = arith.constant 0 : index
    %66 = vector.load %arg6[%c0_76, %c1_77, %c0_78, %c0_79] : memref<3x3x32x32xf32, #tpu.memory_space<vmem>>, vector<1x1x32x32xf32>
    %67 = vector.shape_cast %66 : vector<1x1x32x32xf32> to vector<32x32xf32>
    %cst_80 = arith.constant dense<0.000000e+00> : vector<168x32xf32>
    %68 = tpu.matmul %65, %67, %cst_80 {dimension_numbers = #tpu.dot_dimension_numbers<[1], [0], [0], [1], [0, 0, 1, 1], [], []>} : vector<168x32xf32>, vector<32x32xf32>, vector<168x32xf32> -> vector<168x32xf32>
    %69 = arith.addf %64, %68 : vector<168x32xf32>
    %c16_81 = arith.constant 16 : index
    %c0_82 = arith.constant 0 : index
    %70 = vector.load %arg18[%c16_81, %c0_82] : memref<296x32xf32, #tpu.memory_space<vmem>>, vector<168x32xf32>
    %c0_83 = arith.constant 0 : index
    %c2_84 = arith.constant 2 : index
    %c0_85 = arith.constant 0 : index
    %c0_86 = arith.constant 0 : index
    %71 = vector.load %arg6[%c0_83, %c2_84, %c0_85, %c0_86] : memref<3x3x32x32xf32, #tpu.memory_space<vmem>>, vector<1x1x32x32xf32>
    %72 = vector.shape_cast %71 : vector<1x1x32x32xf32> to vector<32x32xf32>
    %cst_87 = arith.constant dense<0.000000e+00> : vector<168x32xf32>
    %73 = tpu.matmul %70, %72, %cst_87 {dimension_numbers = #tpu.dot_dimension_numbers<[1], [0], [0], [1], [0, 0, 1, 1], [], []>} : vector<168x32xf32>, vector<32x32xf32>, vector<168x32xf32> -> vector<168x32xf32>
    %74 = arith.addf %69, %73 : vector<168x32xf32>
    %c56_88 = arith.constant 56 : index
    %c0_89 = arith.constant 0 : index
    %75 = vector.load %arg18[%c56_88, %c0_89] : memref<296x32xf32, #tpu.memory_space<vmem>>, vector<168x32xf32>
    %c1_90 = arith.constant 1 : index
    %c0_91 = arith.constant 0 : index
    %c0_92 = arith.constant 0 : index
    %c0_93 = arith.constant 0 : index
    %76 = vector.load %arg6[%c1_90, %c0_91, %c0_92, %c0_93] : memref<3x3x32x32xf32, #tpu.memory_space<vmem>>, vector<1x1x32x32xf32>
    %77 = vector.shape_cast %76 : vector<1x1x32x32xf32> to vector<32x32xf32>
    %cst_94 = arith.constant dense<0.000000e+00> : vector<168x32xf32>
    %78 = tpu.matmul %75, %77, %cst_94 {dimension_numbers = #tpu.dot_dimension_numbers<[1], [0], [0], [1], [0, 0, 1, 1], [], []>} : vector<168x32xf32>, vector<32x32xf32>, vector<168x32xf32> -> vector<168x32xf32>
    %79 = arith.addf %74, %78 : vector<168x32xf32>
    %c64_95 = arith.constant 64 : index
    %c0_96 = arith.constant 0 : index
    %80 = vector.load %arg18[%c64_95, %c0_96] : memref<296x32xf32, #tpu.memory_space<vmem>>, vector<168x32xf32>
    %c1_97 = arith.constant 1 : index
    %c1_98 = arith.constant 1 : index
    %c0_99 = arith.constant 0 : index
    %c0_100 = arith.constant 0 : index
    %81 = vector.load %arg6[%c1_97, %c1_98, %c0_99, %c0_100] : memref<3x3x32x32xf32, #tpu.memory_space<vmem>>, vector<1x1x32x32xf32>
    %82 = vector.shape_cast %81 : vector<1x1x32x32xf32> to vector<32x32xf32>
    %cst_101 = arith.constant dense<0.000000e+00> : vector<168x32xf32>
    %83 = tpu.matmul %80, %82, %cst_101 {dimension_numbers = #tpu.dot_dimension_numbers<[1], [0], [0], [1], [0, 0, 1, 1], [], []>} : vector<168x32xf32>, vector<32x32xf32>, vector<168x32xf32> -> vector<168x32xf32>
    %84 = arith.addf %79, %83 : vector<168x32xf32>
    %c72_102 = arith.constant 72 : index
    %c0_103 = arith.constant 0 : index
    %85 = vector.load %arg18[%c72_102, %c0_103] : memref<296x32xf32, #tpu.memory_space<vmem>>, vector<168x32xf32>
    %c1_104 = arith.constant 1 : index
    %c2_105 = arith.constant 2 : index
    %c0_106 = arith.constant 0 : index
    %c0_107 = arith.constant 0 : index
    %86 = vector.load %arg6[%c1_104, %c2_105, %c0_106, %c0_107] : memref<3x3x32x32xf32, #tpu.memory_space<vmem>>, vector<1x1x32x32xf32>
    %87 = vector.shape_cast %86 : vector<1x1x32x32xf32> to vector<32x32xf32>
    %cst_108 = arith.constant dense<0.000000e+00> : vector<168x32xf32>
    %88 = tpu.matmul %85, %87, %cst_108 {dimension_numbers = #tpu.dot_dimension_numbers<[1], [0], [0], [1], [0, 0, 1, 1], [], []>} : vector<168x32xf32>, vector<32x32xf32>, vector<168x32xf32> -> vector<168x32xf32>
    %89 = arith.addf %84, %88 : vector<168x32xf32>
    %c112_109 = arith.constant 112 : index
    %c0_110 = arith.constant 0 : index
    %90 = vector.load %arg18[%c112_109, %c0_110] : memref<296x32xf32, #tpu.memory_space<vmem>>, vector<168x32xf32>
    %c2_111 = arith.constant 2 : index
    %c0_112 = arith.constant 0 : index
    %c0_113 = arith.constant 0 : index
    %c0_114 = arith.constant 0 : index
    %91 = vector.load %arg6[%c2_111, %c0_112, %c0_113, %c0_114] : memref<3x3x32x32xf32, #tpu.memory_space<vmem>>, vector<1x1x32x32xf32>
    %92 = vector.shape_cast %91 : vector<1x1x32x32xf32> to vector<32x32xf32>
    %cst_115 = arith.constant dense<0.000000e+00> : vector<168x32xf32>
    %93 = tpu.matmul %90, %92, %cst_115 {dimension_numbers = #tpu.dot_dimension_numbers<[1], [0], [0], [1], [0, 0, 1, 1], [], []>} : vector<168x32xf32>, vector<32x32xf32>, vector<168x32xf32> -> vector<168x32xf32>
    %94 = arith.addf %89, %93 : vector<168x32xf32>
    %c120_116 = arith.constant 120 : index
    %c0_117 = arith.constant 0 : index
    %95 = vector.load %arg18[%c120_116, %c0_117] : memref<296x32xf32, #tpu.memory_space<vmem>>, vector<168x32xf32>
    %c2_118 = arith.constant 2 : index
    %c1_119 = arith.constant 1 : index
    %c0_120 = arith.constant 0 : index
    %c0_121 = arith.constant 0 : index
    %96 = vector.load %arg6[%c2_118, %c1_119, %c0_120, %c0_121] : memref<3x3x32x32xf32, #tpu.memory_space<vmem>>, vector<1x1x32x32xf32>
    %97 = vector.shape_cast %96 : vector<1x1x32x32xf32> to vector<32x32xf32>
    %cst_122 = arith.constant dense<0.000000e+00> : vector<168x32xf32>
    %98 = tpu.matmul %95, %97, %cst_122 {dimension_numbers = #tpu.dot_dimension_numbers<[1], [0], [0], [1], [0, 0, 1, 1], [], []>} : vector<168x32xf32>, vector<32x32xf32>, vector<168x32xf32> -> vector<168x32xf32>
    %99 = arith.addf %94, %98 : vector<168x32xf32>
    %c128_123 = arith.constant 128 : index
    %c0_124 = arith.constant 0 : index
    %100 = vector.load %arg18[%c128_123, %c0_124] : memref<296x32xf32, #tpu.memory_space<vmem>>, vector<168x32xf32>
    %c2_125 = arith.constant 2 : index
    %c2_126 = arith.constant 2 : index
    %c0_127 = arith.constant 0 : index
    %c0_128 = arith.constant 0 : index
    %101 = vector.load %arg6[%c2_125, %c2_126, %c0_127, %c0_128] : memref<3x3x32x32xf32, #tpu.memory_space<vmem>>, vector<1x1x32x32xf32>
    %102 = vector.shape_cast %101 : vector<1x1x32x32xf32> to vector<32x32xf32>
    %cst_129 = arith.constant dense<0.000000e+00> : vector<168x32xf32>
    %103 = tpu.matmul %100, %102, %cst_129 {dimension_numbers = #tpu.dot_dimension_numbers<[1], [0], [0], [1], [0, 0, 1, 1], [], []>} : vector<168x32xf32>, vector<32x32xf32>, vector<168x32xf32> -> vector<168x32xf32>
    %104 = arith.addf %99, %103 : vector<168x32xf32>
    %c0_130 = arith.constant 0 : index
    %c0_131 = arith.constant 0 : index
    %105 = vector.load %arg7[%c0_130, %c0_131] : memref<1x32xf32, #tpu.memory_space<vmem>>, vector<1x32xf32>
    %106 = vector.broadcast %105 : vector<1x32xf32> to vector<168x32xf32>
    %107 = arith.addf %104, %106 : vector<168x32xf32>
    %cst_132 = arith.constant 0.000000e+00 : f32
    %108 = vector.broadcast %cst_132 : f32 to vector<168x32xf32>
    %109 = arith.maximumf %107, %108 : vector<168x32xf32>
    %110 = vector.extract_strided_slice %109 {offsets = [0, 0], sizes = [8, 32], strides = [1, 1]} : vector<168x32xf32> to vector<8x32xf32>
    %c0_133 = arith.constant 0 : index
    %c0_134 = arith.constant 0 : index
    %111 = vector.load %arg19[%c0_133, %c0_134] : memref<8x288xf32, #tpu.memory_space<vmem>>, vector<8x32xf32>
    tpu.vector_store %arg19[%c0_133, %c0_134], %110 {strides = array<i32>} : memref<8x288xf32, #tpu.memory_space<vmem>>, vector<8x32xf32>,
    %112 = vector.extract_strided_slice %109 {offsets = [8, 0], sizes = [8, 32], strides = [1, 1]} : vector<168x32xf32> to vector<8x32xf32>
    %c0_135 = arith.constant 0 : index
    %c32 = arith.constant 32 : index
    %113 = vector.load %arg19[%c0_135, %c32] : memref<8x288xf32, #tpu.memory_space<vmem>>, vector<8x32xf32>
    tpu.vector_store %arg19[%c0_135, %c32], %112 {strides = array<i32>} : memref<8x288xf32, #tpu.memory_space<vmem>>, vector<8x32xf32>,
    %114 = vector.extract_strided_slice %109 {offsets = [16, 0], sizes = [8, 32], strides = [1, 1]} : vector<168x32xf32> to vector<8x32xf32>
    %c0_136 = arith.constant 0 : index
    %c64_137 = arith.constant 64 : index
    %115 = vector.load %arg19[%c0_136, %c64_137] : memref<8x288xf32, #tpu.memory_space<vmem>>, vector<8x32xf32>
    tpu.vector_store %arg19[%c0_136, %c64_137], %114 {strides = array<i32>} : memref<8x288xf32, #tpu.memory_space<vmem>>, vector<8x32xf32>,
    %116 = vector.extract_strided_slice %109 {offsets = [56, 0], sizes = [8, 32], strides = [1, 1]} : vector<168x32xf32> to vector<8x32xf32>
    %c0_138 = arith.constant 0 : index
    %c96 = arith.constant 96 : index
    %117 = vector.load %arg19[%c0_138, %c96] : memref<8x288xf32, #tpu.memory_space<vmem>>, vector<8x32xf32>
    tpu.vector_store %arg19[%c0_138, %c96], %116 {strides = array<i32>} : memref<8x288xf32, #tpu.memory_space<vmem>>, vector<8x32xf32>,
    %118 = vector.extract_strided_slice %109 {offsets = [64, 0], sizes = [8, 32], strides = [1, 1]} : vector<168x32xf32> to vector<8x32xf32>
    %c0_139 = arith.constant 0 : index
    %c128_140 = arith.constant 128 : index
    %119 = vector.load %arg19[%c0_139, %c128_140] : memref<8x288xf32, #tpu.memory_space<vmem>>, vector<8x32xf32>
    tpu.vector_store %arg19[%c0_139, %c128_140], %118 {strides = array<i32>} : memref<8x288xf32, #tpu.memory_space<vmem>>, vector<8x32xf32>,
    %120 = vector.extract_strided_slice %109 {offsets = [72, 0], sizes = [8, 32], strides = [1, 1]} : vector<168x32xf32> to vector<8x32xf32>
    %c0_141 = arith.constant 0 : index
    %c160 = arith.constant 160 : index
    %121 = vector.load %arg19[%c0_141, %c160] : memref<8x288xf32, #tpu.memory_space<vmem>>, vector<8x32xf32>
    tpu.vector_store %arg19[%c0_141, %c160], %120 {strides = array<i32>} : memref<8x288xf32, #tpu.memory_space<vmem>>, vector<8x32xf32>,
    %122 = vector.extract_strided_slice %109 {offsets = [112, 0], sizes = [8, 32], strides = [1, 1]} : vector<168x32xf32> to vector<8x32xf32>
    %c0_142 = arith.constant 0 : index
    %c192 = arith.constant 192 : index
    %123 = vector.load %arg19[%c0_142, %c192] : memref<8x288xf32, #tpu.memory_space<vmem>>, vector<8x32xf32>
    tpu.vector_store %arg19[%c0_142, %c192], %122 {strides = array<i32>} : memref<8x288xf32, #tpu.memory_space<vmem>>, vector<8x32xf32>,
    %124 = vector.extract_strided_slice %109 {offsets = [120, 0], sizes = [8, 32], strides = [1, 1]} : vector<168x32xf32> to vector<8x32xf32>
    %c0_143 = arith.constant 0 : index
    %c224 = arith.constant 224 : index
    %125 = vector.load %arg19[%c0_143, %c224] : memref<8x288xf32, #tpu.memory_space<vmem>>, vector<8x32xf32>
    tpu.vector_store %arg19[%c0_143, %c224], %124 {strides = array<i32>} : memref<8x288xf32, #tpu.memory_space<vmem>>, vector<8x32xf32>,
    %126 = vector.extract_strided_slice %109 {offsets = [128, 0], sizes = [8, 32], strides = [1, 1]} : vector<168x32xf32> to vector<8x32xf32>
    %c0_144 = arith.constant 0 : index
    %c256 = arith.constant 256 : index
    %127 = vector.load %arg19[%c0_144, %c256] : memref<8x288xf32, #tpu.memory_space<vmem>>, vector<8x32xf32>
    tpu.vector_store %arg19[%c0_144, %c256], %126 {strides = array<i32>} : memref<8x288xf32, #tpu.memory_space<vmem>>, vector<8x32xf32>,
    %c0_145 = arith.constant 0 : index
    %c0_146 = arith.constant 0 : index
    %128 = vector.load %arg2[%c0_145, %c0_146] : memref<8x128xf32, #tpu.memory_space<vmem>>, vector<8x128xf32>
    %c0_147 = arith.constant 0 : index
    %c0_148 = arith.constant 0 : index
    %129 = vector.load %arg8[%c0_147, %c0_148] : memref<128x128xf32, #tpu.memory_space<vmem>>, vector<128x128xf32>
    %cst_149 = arith.constant dense<0.000000e+00> : vector<8x128xf32>
    %130 = tpu.matmul %128, %129, %cst_149 {dimension_numbers = #tpu.dot_dimension_numbers<[1], [0], [0], [1], [0, 0, 1, 1], [], []>} : vector<8x128xf32>, vector<128x128xf32>, vector<8x128xf32> -> vector<8x128xf32>
    %c0_150 = arith.constant 0 : index
    %c0_151 = arith.constant 0 : index
    %131 = vector.load %arg9[%c0_150, %c0_151] : memref<1x128xf32, #tpu.memory_space<vmem>>, vector<1x128xf32>
    %132 = vector.broadcast %131 : vector<1x128xf32> to vector<8x128xf32>
    %133 = arith.addf %130, %132 : vector<8x128xf32>
    %cst_152 = arith.constant 0.000000e+00 : f32
    %134 = vector.broadcast %cst_152 : f32 to vector<8x128xf32>
    %135 = arith.maximumf %133, %134 : vector<8x128xf32>
    %c0_153 = arith.constant 0 : index
    %c0_154 = arith.constant 0 : index
    %136 = vector.load %arg3[%c0_153, %c0_154] : memref<8x128xf32, #tpu.memory_space<vmem>>, vector<8x128xf32>
    %c0_155 = arith.constant 0 : index
    %c0_156 = arith.constant 0 : index
    %137 = vector.load %arg19[%c0_155, %c0_156] : memref<8x288xf32, #tpu.memory_space<vmem>>, vector<8x288xf32>
    %c0_157 = arith.constant 0 : index
    %c0_158 = arith.constant 0 : index
    %138 = vector.load %arg13[%c0_157, %c0_158] : memref<288x512xf32, #tpu.memory_space<vmem>>, vector<288x512xf32>
    %cst_159 = arith.constant dense<0.000000e+00> : vector<8x512xf32>
    %139 = tpu.matmul %137, %138, %cst_159 {dimension_numbers = #tpu.dot_dimension_numbers<[1], [0], [0], [1], [0, 0, 1, 1], [], []>} : vector<8x288xf32>, vector<288x512xf32>, vector<8x512xf32> -> vector<8x512xf32>
    %c0_160 = arith.constant 0 : index
    %c0_161 = arith.constant 0 : index
    %140 = vector.load %arg10[%c0_160, %c0_161] : memref<128x512xf32, #tpu.memory_space<vmem>>, vector<128x512xf32>
    %cst_162 = arith.constant dense<0.000000e+00> : vector<8x512xf32>
    %141 = tpu.matmul %135, %140, %cst_162 {dimension_numbers = #tpu.dot_dimension_numbers<[1], [0], [0], [1], [0, 0, 1, 1], [], []>} : vector<8x128xf32>, vector<128x512xf32>, vector<8x512xf32> -> vector<8x512xf32>
    %142 = arith.addf %139, %141 : vector<8x512xf32>
    %c0_163 = arith.constant 0 : index
    %c0_164 = arith.constant 0 : index
    %143 = vector.load %arg11[%c0_163, %c0_164] : memref<128x512xf32, #tpu.memory_space<vmem>>, vector<128x512xf32>
    %cst_165 = arith.constant dense<0.000000e+00> : vector<8x512xf32>
    %144 = tpu.matmul %136, %143, %cst_165 {dimension_numbers = #tpu.dot_dimension_numbers<[1], [0], [0], [1], [0, 0, 1, 1], [], []>} : vector<8x128xf32>, vector<128x512xf32>, vector<8x512xf32> -> vector<8x512xf32>
    %145 = arith.addf %142, %144 : vector<8x512xf32>
    %c0_166 = arith.constant 0 : index
    %c0_167 = arith.constant 0 : index
    %146 = vector.load %arg12[%c0_166, %c0_167] : memref<1x512xf32, #tpu.memory_space<vmem>>, vector<1x512xf32>
    %147 = vector.broadcast %146 : vector<1x512xf32> to vector<8x512xf32>
    %148 = arith.addf %145, %147 : vector<8x512xf32>
    %149 = vector.extract_strided_slice %148 {offsets = [0, 0], sizes = [8, 128], strides = [1, 1]} : vector<8x512xf32> to vector<8x128xf32>
    %150 = arith.negf %149 : vector<8x128xf32>
    %151 = math.exp %150 : vector<8x128xf32>
    %cst_168 = arith.constant 1.000000e+00 : f32
    %152 = vector.broadcast %cst_168 : f32 to vector<8x128xf32>
    %153 = arith.addf %152, %151 : vector<8x128xf32>
    %154 = arith.divf %152, %153 : vector<8x128xf32>
    %155 = vector.extract_strided_slice %148 {offsets = [0, 128], sizes = [8, 128], strides = [1, 1]} : vector<8x512xf32> to vector<8x128xf32>
    %156 = arith.negf %155 : vector<8x128xf32>
    %157 = math.exp %156 : vector<8x128xf32>
    %cst_169 = arith.constant 1.000000e+00 : f32
    %158 = vector.broadcast %cst_169 : f32 to vector<8x128xf32>
    %159 = arith.addf %158, %157 : vector<8x128xf32>
    %160 = arith.divf %158, %159 : vector<8x128xf32>
    %161 = vector.extract_strided_slice %148 {offsets = [0, 256], sizes = [8, 128], strides = [1, 1]} : vector<8x512xf32> to vector<8x128xf32>
    %162 = vector.extract_strided_slice %148 {offsets = [0, 384], sizes = [8, 128], strides = [1, 1]} : vector<8x512xf32> to vector<8x128xf32>
    %163 = arith.mulf %154, %162 : vector<8x128xf32>
    %164 = arith.addf %161, %163 : vector<8x128xf32>
    %165 = math.tanh %164 : vector<8x128xf32>
    %cst_170 = arith.constant 1.000000e+00 : f32
    %166 = vector.broadcast %cst_170 : f32 to vector<8x128xf32>
    %167 = arith.subf %166, %160 : vector<8x128xf32>
    %168 = arith.mulf %167, %165 : vector<8x128xf32>
    %169 = arith.mulf %160, %136 : vector<8x128xf32>
    %170 = arith.addf %168, %169 : vector<8x128xf32>
    %c0_171 = arith.constant 0 : index
    %c0_172 = arith.constant 0 : index
    %171 = vector.load %arg17[%c0_171, %c0_172] : memref<8x128xf32, #tpu.memory_space<vmem>>, vector<8x128xf32>
    tpu.vector_store %arg17[%c0_171, %c0_172], %170 {strides = array<i32>} : memref<8x128xf32, #tpu.memory_space<vmem>>, vector<8x128xf32>,
    %c0_173 = arith.constant 0 : index
    %c0_174 = arith.constant 0 : index
    %172 = vector.load %arg14[%c0_173, %c0_174] : memref<128x128xf32, #tpu.memory_space<vmem>>, vector<128x128xf32>
    %cst_175 = arith.constant dense<0.000000e+00> : vector<8x128xf32>
    %173 = tpu.matmul %170, %172, %cst_175 {dimension_numbers = #tpu.dot_dimension_numbers<[1], [0], [0], [1], [0, 0, 1, 1], [], []>} : vector<8x128xf32>, vector<128x128xf32>, vector<8x128xf32> -> vector<8x128xf32>
    %c0_176 = arith.constant 0 : index
    %c0_177 = arith.constant 0 : index
    %174 = vector.load %arg15[%c0_176, %c0_177] : memref<1x128xf32, #tpu.memory_space<vmem>>, vector<1x128xf32>
    %175 = vector.broadcast %174 : vector<1x128xf32> to vector<8x128xf32>
    %176 = arith.addf %173, %175 : vector<8x128xf32>
    %c0_178 = arith.constant 0 : index
    %c0_179 = arith.constant 0 : index
    %177 = vector.load %arg16[%c0_178, %c0_179] : memref<8x128xf32, #tpu.memory_space<vmem>>, vector<8x128xf32>
    tpu.vector_store %arg16[%c0_178, %c0_179], %176 {strides = array<i32>} : memref<8x128xf32, #tpu.memory_space<vmem>>, vector<8x128xf32>,
    return
  }
  func.func @transform_0(%arg0: i32) -> (i32, i32, i32) {
    %c0_i32 = arith.constant 0 : i32
    %c0_i32_0 = arith.constant 0 : i32
    %c0_i32_1 = arith.constant 0 : i32
    return %arg0, %c0_i32, %c0_i32_0 : i32, i32, i32
  }
  func.func @transform_1(%arg0: i32) -> (i32, i32) {
    %c0_i32 = arith.constant 0 : i32
    %c0_i32_0 = arith.constant 0 : i32
    return %arg0, %c0_i32 : i32, i32
  }
  func.func @transform_2(%arg0: i32) -> (i32, i32) {
    %c0_i32 = arith.constant 0 : i32
    %c0_i32_0 = arith.constant 0 : i32
    return %arg0, %c0_i32 : i32, i32
  }
  func.func @transform_3(%arg0: i32) -> (i32, i32, i32, i32) {
    %c0_i32 = arith.constant 0 : i32
    %c0_i32_0 = arith.constant 0 : i32
    %c0_i32_1 = arith.constant 0 : i32
    %c0_i32_2 = arith.constant 0 : i32
    %c0_i32_3 = arith.constant 0 : i32
    return %c0_i32, %c0_i32_0, %c0_i32_1, %c0_i32_2 : i32, i32, i32, i32
  }
  func.func @transform_4(%arg0: i32) -> (i32, i32) {
    %c0_i32 = arith.constant 0 : i32
    %c0_i32_0 = arith.constant 0 : i32
    %c0_i32_1 = arith.constant 0 : i32
    return %c0_i32, %c0_i32_0 : i32, i32
  }
  func.func @transform_5(%arg0: i32) -> (i32, i32, i32, i32) {
    %c0_i32 = arith.constant 0 : i32
    %c0_i32_0 = arith.constant 0 : i32
    %c0_i32_1 = arith.constant 0 : i32
    %c0_i32_2 = arith.constant 0 : i32
    %c0_i32_3 = arith.constant 0 : i32
    return %c0_i32, %c0_i32_0, %c0_i32_1, %c0_i32_2 : i32, i32, i32, i32
  }
  func.func @transform_6(%arg0: i32) -> (i32, i32) {
    %c0_i32 = arith.constant 0 : i32
    %c0_i32_0 = arith.constant 0 : i32
    %c0_i32_1 = arith.constant 0 : i32
    return %c0_i32, %c0_i32_0 : i32, i32
  }
  func.func @transform_7(%arg0: i32) -> (i32, i32) {
    %c0_i32 = arith.constant 0 : i32
    %c0_i32_0 = arith.constant 0 : i32
    %c0_i32_1 = arith.constant 0 : i32
    return %c0_i32, %c0_i32_0 : i32, i32
  }
  func.func @transform_8(%arg0: i32) -> (i32, i32) {
    %c0_i32 = arith.constant 0 : i32
    %c0_i32_0 = arith.constant 0 : i32
    %c0_i32_1 = arith.constant 0 : i32
    return %c0_i32, %c0_i32_0 : i32, i32
  }
  func.func @transform_9(%arg0: i32) -> (i32, i32) {
    %c0_i32 = arith.constant 0 : i32
    %c0_i32_0 = arith.constant 0 : i32
    %c0_i32_1 = arith.constant 0 : i32
    return %c0_i32, %c0_i32_0 : i32, i32
  }
  func.func @transform_10(%arg0: i32) -> (i32, i32) {
    %c0_i32 = arith.constant 0 : i32
    %c0_i32_0 = arith.constant 0 : i32
    %c0_i32_1 = arith.constant 0 : i32
    return %c0_i32, %c0_i32_0 : i32, i32
  }
  func.func @transform_11(%arg0: i32) -> (i32, i32) {
    %c0_i32 = arith.constant 0 : i32
    %c0_i32_0 = arith.constant 0 : i32
    %c0_i32_1 = arith.constant 0 : i32
    return %c0_i32, %c0_i32_0 : i32, i32
  }
  func.func @transform_12(%arg0: i32) -> (i32, i32) {
    %c0_i32 = arith.constant 0 : i32
    %c0_i32_0 = arith.constant 0 : i32
    %c0_i32_1 = arith.constant 0 : i32
    return %c0_i32, %c0_i32_0 : i32, i32
  }
  func.func @transform_13(%arg0: i32) -> (i32, i32) {
    %c0_i32 = arith.constant 0 : i32
    %c0_i32_0 = arith.constant 0 : i32
    %c0_i32_1 = arith.constant 0 : i32
    return %c0_i32, %c0_i32_0 : i32, i32
  }
  func.func @transform_14(%arg0: i32) -> (i32, i32) {
    %c0_i32 = arith.constant 0 : i32
    %c0_i32_0 = arith.constant 0 : i32
    %c0_i32_1 = arith.constant 0 : i32
    return %c0_i32, %c0_i32_0 : i32, i32
  }
  func.func @transform_15(%arg0: i32) -> (i32, i32) {
    %c0_i32 = arith.constant 0 : i32
    %c0_i32_0 = arith.constant 0 : i32
    return %arg0, %c0_i32 : i32, i32
  }
  func.func @transform_16(%arg0: i32) -> (i32, i32) {
    %c0_i32 = arith.constant 0 : i32
    %c0_i32_0 = arith.constant 0 : i32
    return %arg0, %c0_i32 : i32, i32
  }
}

</mosaic_0001>

<llo_original>
// kernel: tpu_custom_call.1
$region0: #{tpu_custom_call.1}
  #allocation0 [shape = 'u32[]', space=smem, size = 0x4, offset = 0x4, fixed_abs, tag = 'smem constant byte address 0x4 - core index']
  #allocation1 [shape = 'u32[144,128]{1,0:T(1,128)}', space=vmem, size = 0x12000, scoped, tag = 'internal scratch']
  #allocation2 [shape = 'f32[296,32]{1,0:T(8,128)}', space=vmem, size = 0x25000, scoped, tag = 'scratch operand']
  #allocation3 [shape = 'f32[8,288]{1,0:T(8,128)}', space=vmem, size = 0x3000, scoped, tag = 'scratch operand']
  %s0 = inlined_call_operand.vmem [shape: f32[1,408,3], index: 0, kind: input, shape index: {}]
  %s1 = inlined_call_operand.vmem [shape: f32[8,128], index: 1, kind: input, shape index: {}]
  %s2 = inlined_call_operand.vmem [shape: f32[8,128], index: 2, kind: input, shape index: {}]
  %s3 = inlined_call_operand.hbm [shape: f32[3,3,3,32], index: 3, kind: input, shape index: {}]
  %s4 = inlined_call_operand.vmem [shape: f32[1,32], index: 4, kind: input, shape index: {}]
  %s5 = inlined_call_operand.vmem [shape: f32[3,3,32,32], index: 5, kind: input, shape index: {}]
  %s6 = inlined_call_operand.vmem [shape: f32[1,32], index: 6, kind: input, shape index: {}]
  %s7 = inlined_call_operand.vmem [shape: f32[128,128], index: 7, kind: input, shape index: {}]
  %s8 = inlined_call_operand.vmem [shape: f32[1,128], index: 8, kind: input, shape index: {}]
  %s9 = inlined_call_operand.hbm [shape: f32[128,512], index: 9, kind: input, shape index: {}]
  %s10 = inlined_call_operand.hbm [shape: f32[128,512], index: 10, kind: input, shape index: {}]
  %s11 = inlined_call_operand.vmem [shape: f32[1,512], index: 11, kind: input, shape index: {}]
  %s12 = inlined_call_operand.hbm [shape: f32[288,512], index: 12, kind: input, shape index: {}]
  %s13 = inlined_call_operand.hbm [shape: f32[128,128], index: 13, kind: input, shape index: {}]
  %s14 = inlined_call_operand.vmem [shape: f32[1,128], index: 14, kind: input, shape index: {}]
  %s15 = inlined_call_operand.hbm [shape: f32[8,128], index: 15, kind: output, shape index: {0}]
  %s16 = inlined_call_operand.hbm [shape: f32[8,128], index: 16, kind: output, shape index: {1}]
  %17 = xla_tuple %s15, %s16
  %s18 = sld [smem:[#allocation0]]
  $region98: #{tpu_custom_call.1} parent=0
    _
  %s20 = ssub.s32 1, %s18
  %s21 = scalar_select 0, %s20, %s18
  $region1: #{tpu_custom_call.1} parent=0
    #allocation4 [shape = 'u8[18432]{0}', space=vmem, size = 0x4800, scoped, tag = 'input window, operand 3, single buffered']
    #allocation5 [shape = 's32[1]{0}', space=sflag, size = 0x4, scoped, tag = 'scoped memory for tpu_custom_call.1']
    #allocation6 [shape = 's32[1]{0}', space=sflag, size = 0x4, scoped, tag = 'scoped memory for tpu_custom_call.1']
    #allocation7 [shape = 'u8[262144]{0}', space=vmem, size = 0x40000, scoped, tag = 'input window, operand 9, single buffered']
    #allocation8 [shape = 's32[1]{0}', space=sflag, size = 0x4, scoped, tag = 'scoped memory for tpu_custom_call.1']
    #allocation9 [shape = 'u8[262144]{0}', space=vmem, size = 0x40000, scoped, tag = 'input window, operand 10, single buffered']
    #allocation10 [shape = 'u8[589824]{0}', space=vmem, size = 0x90000, scoped, tag = 'input window, operand 12, single buffered']
    #allocation11 [shape = 's32[1]{0}', space=sflag, size = 0x4, scoped, tag = 'scoped memory for tpu_custom_call.1']
    #allocation12 [shape = 'u8[65536]{0}', space=vmem, size = 0x10000, scoped, tag = 'input window, operand 13, single buffered']
    #allocation13 [shape = 'u8[4096]{0}', space=vmem, size = 0x1000, scoped, tag = 'output window, operand 0, single buffered']
    #allocation14 [shape = 'u8[4096]{0}', space=vmem, size = 0x1000, scoped, tag = 'output window, operand 1, single buffered']
    #allocation15 [shape = 's32[1]{0}', space=sflag, size = 0x4, scoped, tag = 'scoped memory for tpu_custom_call.1']
    %22 = vsyncpa [#allocation5], 0
    %23 = vsyncpa [#allocation8], 0
    %24 = vsyncpa [#allocation11], 0
    %25 = vsyncpa [#allocation6], 0
    %26 = vsyncpa [#allocation15], 0
    // Predicated region
    $region2: #{tpu_custom_call.1} parent=1 // pred_check
      _
    $region3: #{tpu_custom_call.1} parent=1 // pred_check_branch
      %28 = sbr.rel (0) target = $region5
    $region4: #{tpu_custom_call.1} parent=1 // pred_region
      _
    $region5: #{tpu_custom_call.1} parent=1 // pred_fallthru
      _
    // Predicated region
    $region6: #{tpu_custom_call.1} parent=1 // pred_check
      _
    $region7: #{tpu_custom_call.1} parent=1 // pred_check_branch
      %30 = sbr.rel (0) target = $region9
    $region8: #{tpu_custom_call.1} parent=1 // pred_region
      _
    $region9: #{tpu_custom_call.1} parent=1 // pred_fallthru
      _
    // Predicated region
    $region10: #{tpu_custom_call.1} parent=1 // pred_check
      _
    $region11: #{tpu_custom_call.1} parent=1 // pred_check_branch
      %32 = sbr.rel (0) target = $region13
    $region12: #{tpu_custom_call.1} parent=1 // pred_region
      _
    $region13: #{tpu_custom_call.1} parent=1 // pred_fallthru
      _
    // Predicated region
    $region14: #{tpu_custom_call.1} parent=1 // pred_check
      _
    $region15: #{tpu_custom_call.1} parent=1 // pred_check_branch
      %34 = sbr.rel (0) target = $region17
    $region16: #{tpu_custom_call.1} parent=1 // pred_region
      %s36 = ssub.s32 576, 576
      %37 = vsyncadd [#allocation5], %s36
      %s38 = sshll.u32 [#allocation4], 4
      %s39 = int_to_ptr.vmem [resolvable:$true] %s38
      %44 = dma.hbm_to_vmem [thread:$0]  %s3, 576, %s39, [#allocation5], 64, 64, 4
    $region17: #{tpu_custom_call.1} parent=1 // pred_fallthru
      _
    // Predicated region
    $region18: #{tpu_custom_call.1} parent=1 // pred_check
      _
    $region19: #{tpu_custom_call.1} parent=1 // pred_check_branch
      %46 = sbr.rel (0) target = $region21
    $region20: #{tpu_custom_call.1} parent=1 // pred_region
      _
    $region21: #{tpu_custom_call.1} parent=1 // pred_fallthru
      _
    // Predicated region
    $region22: #{tpu_custom_call.1} parent=1 // pred_check
      _
    $region23: #{tpu_custom_call.1} parent=1 // pred_check_branch
      %48 = sbr.rel (0) target = $region25
    $region24: #{tpu_custom_call.1} parent=1 // pred_region
      _
    $region25: #{tpu_custom_call.1} parent=1 // pred_fallthru
      _
    // Predicated region
    $region26: #{tpu_custom_call.1} parent=1 // pred_check
      _
    $region27: #{tpu_custom_call.1} parent=1 // pred_check_branch
      %50 = sbr.rel (0) target = $region29
    $region28: #{tpu_custom_call.1} parent=1 // pred_region
      _
    $region29: #{tpu_custom_call.1} parent=1 // pred_fallthru
      _
    // Predicated region
    $region30: #{tpu_custom_call.1} parent=1 // pred_check
      _
    $region31: #{tpu_custom_call.1} parent=1 // pred_check_branch
      %52 = sbr.rel (0) target = $region33
    $region32: #{tpu_custom_call.1} parent=1 // pred_region
      _
    $region33: #{tpu_custom_call.1} parent=1 // pred_fallthru
      _
    // Predicated region
    $region34: #{tpu_custom_call.1} parent=1 // pred_check
      _
    $region35: #{tpu_custom_call.1} parent=1 // pred_check_branch
      %54 = sbr.rel (0) target = $region37
    $region36: #{tpu_custom_call.1} parent=1 // pred_region
      _
    $region37: #{tpu_custom_call.1} parent=1 // pred_fallthru
      _
    // Predicated region
    $region38: #{tpu_custom_call.1} parent=1 // pred_check
      _
    $region39: #{tpu_custom_call.1} parent=1 // pred_check_branch
      %56 = sbr.rel (0) target = $region41
    $region40: #{tpu_custom_call.1} parent=1 // pred_region
      %s58 = ssub.s32 8192, 8192
      %59 = vsyncadd [#allocation8], %s58
      %s60 = sshll.u32 [#allocation7], 4
      %s61 = int_to_ptr.vmem [resolvable:$true] %s60
      %66 = dma.hbm_to_vmem [thread:$0]  %s9, 8192, %s61, [#allocation8], 512, 512, 32
    $region41: #{tpu_custom_call.1} parent=1 // pred_fallthru
      _
    // Predicated region
    $region42: #{tpu_custom_call.1} parent=1 // pred_check
      _
    $region43: #{tpu_custom_call.1} parent=1 // pred_check_branch
      %68 = sbr.rel (0) target = $region45
    $region44: #{tpu_custom_call.1} parent=1 // pred_region
      %s70 = ssub.s32 8192, 8192
      %71 = vsyncadd [#allocation8], %s70
      %s72 = sshll.u32 [#allocation9], 4
      %s73 = int_to_ptr.vmem [resolvable:$true] %s72
      %78 = dma.hbm_to_vmem [thread:$0]  %s10, 8192, %s73, [#allocation8], 512, 512, 32
    $region45: #{tpu_custom_call.1} parent=1 // pred_fallthru
      _
    // Predicated region
    $region46: #{tpu_custom_call.1} parent=1 // pred_check
      _
    $region47: #{tpu_custom_call.1} parent=1 // pred_check_branch
      %80 = sbr.rel (0) target = $region49
    $region48: #{tpu_custom_call.1} parent=1 // pred_region
      _
    $region49: #{tpu_custom_call.1} parent=1 // pred_fallthru
      _
    // Predicated region
    $region50: #{tpu_custom_call.1} parent=1 // pred_check
      _
    $region51: #{tpu_custom_call.1} parent=1 // pred_check_branch
      %82 = sbr.rel (0) target = $region53
    $region52: #{tpu_custom_call.1} parent=1 // pred_region
      %s84 = ssub.s32 18432, 18432
      %85 = vsyncadd [#allocation11], %s84
      %s86 = sshll.u32 [#allocation10], 4
      %s87 = int_to_ptr.vmem [resolvable:$true] %s86
      %92 = dma.hbm_to_vmem [thread:$0]  %s12, 18432, %s87, [#allocation11], 512, 512, 32
    $region53: #{tpu_custom_call.1} parent=1 // pred_fallthru
      _
    // Predicated region
    $region54: #{tpu_custom_call.1} parent=1 // pred_check
      _
    $region55: #{tpu_custom_call.1} parent=1 // pred_check_branch
      %94 = sbr.rel (0) target = $region57
    $region56: #{tpu_custom_call.1} parent=1 // pred_region
      %s96 = ssub.s32 2048, 2048
      %97 = vsyncadd [#allocation11], %s96
      %s98 = sshll.u32 [#allocation12], 4
      %s99 = int_to_ptr.vmem [resolvable:$true] %s98
      %104 = dma.hbm_to_vmem [thread:$0]  %s13, 2048, %s99, [#allocation11], 128, 128, 8
    $region57: #{tpu_custom_call.1} parent=1 // pred_fallthru
      _
    // Predicated region
    $region58: #{tpu_custom_call.1} parent=1 // pred_check
      _
    $region59: #{tpu_custom_call.1} parent=1 // pred_check_branch
      %106 = sbr.rel (0) target = $region61
    $region60: #{tpu_custom_call.1} parent=1 // pred_region
      _
    $region61: #{tpu_custom_call.1} parent=1 // pred_fallthru
      _
    // Predicated region
    $region62: #{tpu_custom_call.1} parent=1 // pred_check
      _
    $region63: #{tpu_custom_call.1} parent=1 // pred_check_branch
      %108 = sbr.rel (0) target = $region65
    $region64: #{tpu_custom_call.1} parent=1 // pred_region
      %109 = dma.done [#allocation5], 576
    $region65: #{tpu_custom_call.1} parent=1 // pred_fallthru
      _
    // Predicated region
    $region66: #{tpu_custom_call.1} parent=1 // pred_check
      _
    $region67: #{tpu_custom_call.1} parent=1 // pred_check_branch
      %111 = sbr.rel (0) target = $region69
    $region68: #{tpu_custom_call.1} parent=1 // pred_region
      %112 = dma.done [#allocation8], 8192
    $region69: #{tpu_custom_call.1} parent=1 // pred_fallthru
      _
    // Predicated region
    $region70: #{tpu_custom_call.1} parent=1 // pred_check
      _
    $region71: #{tpu_custom_call.1} parent=1 // pred_check_branch
      %114 = sbr.rel (0) target = $region73
    $region72: #{tpu_custom_call.1} parent=1 // pred_region
      %115 = dma.done [#allocation8], 8192
    $region73: #{tpu_custom_call.1} parent=1 // pred_fallthru
      _
    // Predicated region
    $region74: #{tpu_custom_call.1} parent=1 // pred_check
      _
    $region75: #{tpu_custom_call.1} parent=1 // pred_check_branch
      %117 = sbr.rel (0) target = $region77
    $region76: #{tpu_custom_call.1} parent=1 // pred_region
      %118 = dma.done [#allocation11], 18432
    $region77: #{tpu_custom_call.1} parent=1 // pred_fallthru
      _
    // Predicated region
    $region78: #{tpu_custom_call.1} parent=1 // pred_check
      _
    $region79: #{tpu_custom_call.1} parent=1 // pred_check_branch
      %120 = sbr.rel (0) target = $region81
    $region80: #{tpu_custom_call.1} parent=1 // pred_region
      %121 = dma.done [#allocation11], 2048
    $region81: #{tpu_custom_call.1} parent=1 // pred_fallthru
      _
    %v122 = vld [vmem:[%s0] sm:$0xff]
    %v123 = vld [vmem:[%s0 + $0x8] sm:$0xff]
    %v124 = vld [vmem:[%s0 + $0x10] sm:$0xff]
    %v125 = vld [vmem:[%s0 + $0x18] sm:$0xff]
    %v126 = vld [vmem:[%s0 + $0x20] sm:$0xff]
    %v127 = vld [vmem:[%s0 + $0x28] sm:$0xff]
    %v128 = vld [vmem:[%s0 + $0x30] sm:$0xff]
    %v129 = vld [vmem:[%s0 + $0x38] sm:$0xff]
    %v130 = vld [vmem:[%s0 + $0x40] sm:$0xff]
    %v131 = vld [vmem:[%s0 + $0x48] sm:$0xff]
    %v132 = vld [vmem:[%s0 + $0x50] sm:$0xff]
    %v133 = vld [vmem:[%s0 + $0x58] sm:$0xff]
    %v134 = vld [vmem:[%s0 + $0x60] sm:$0xff]
    %v135 = vld [vmem:[%s0 + $0x68] sm:$0xff]
    %v136 = vld [vmem:[%s0 + $0x70] sm:$0xff]
    %v137 = vld [vmem:[%s0 + $0x78] sm:$0xff]
    %v138 = vld [vmem:[%s0 + $0x80] sm:$0xff]
    %v139 = vld [vmem:[%s0 + $0x88] sm:$0xff]
    %v140 = vld [vmem:[%s0 + $0x90] sm:$0xff]
    %v141 = vld [vmem:[%s0 + $0x98] sm:$0xff]
    %v142 = vld [vmem:[%s0 + $0xa0] sm:$0xff]
    %v143 = vld [vmem:[%s0 + $0xa8] sm:$0xff]
    %v144 = vld [vmem:[%s0 + $0xb0] sm:$0xff]
    %v145 = vld [vmem:[%s0 + $0xb8] sm:$0xff]
    %v146 = vld [vmem:[%s0 + $0xc0] sm:$0xff]
    %v147 = vld [vmem:[%s0 + $0xc8] sm:$0xff]
    %v148 = vld [vmem:[%s0 + $0xd0] sm:$0xff]
    %v149 = vld [vmem:[%s0 + $0xd8] sm:$0xff]
    %v150 = vld [vmem:[%s0 + $0xe0] sm:$0xff]
    %v151 = vld [vmem:[%s0 + $0xe8] sm:$0xff]
    %v152 = vld [vmem:[%s0 + $0xf0] sm:$0xff]
    %v153 = vld [vmem:[%s0 + $0xf8] sm:$0xff]
    %v154 = vld [vmem:[%s0 + $0x100] sm:$0xff]
    %v155 = vld [vmem:[%s0 + $0x108] sm:$0xff]
    %v156 = vld [vmem:[%s0 + $0x110] sm:$0xff]
    %v157 = vld [vmem:[#allocation4] sm:$0x7]
    %v158 = vld [vmem:[%s0 + $0x118] sm:$0xff]
    %s159 = scalar_lea.vmem [#allocation4], 4
    %v160 = vld [vmem:[%s159] sm:$0x7]
    %vm161 = vcmask 23552
    %v163 = vsel %vm161, %v123, 0
    %v166 = vsel %vm161, %v124, 0
    %v169 = vsel %vm161, %v125, 0
    %v172 = vsel %vm161, %v126, 0
    %v175 = vsel %vm161, %v127, 0
    %v178 = vsel %vm161, %v128, 0
    %v181 = vsel %vm161, %v129, 0
    %v184 = vsel %vm161, %v130, 0
    %v187 = vsel %vm161, %v131, 0
    %v190 = vsel %vm161, %v132, 0
    %v193 = vsel %vm161, %v133, 0
    %v196 = vsel %vm161, %v134, 0
    %v199 = vsel %vm161, %v135, 0
    %v202 = vsel %vm161, %v136, 0
    %v205 = vsel %vm161, %v137, 0
    %v208 = vsel %vm161, %v138, 0
    %v211 = vsel %vm161, %v139, 0
    %v214 = vsel %vm161, %v140, 0
    %v217 = vsel %vm161, %v141, 0
    %v220 = vsel %vm161, %v142, 0
    %v223 = vsel %vm161, %v143, 0
    %v226 = vsel %vm161, %v144, 0
    %v229 = vsel %vm161, %v145, 0
    %v232 = vsel %vm161, %v146, 0
    %v235 = vsel %vm161, %v147, 0
    %v238 = vsel %vm161, %v148, 0
    %v241 = vsel %vm161, %v149, 0
    %v244 = vsel %vm161, %v150, 0
    %v247 = vsel %vm161, %v151, 0
    %v250 = vsel %vm161, %v152, 0
    %v253 = vsel %vm161, %v153, 0
    %v256 = vsel %vm161, %v154, 0
    %v259 = vsel %vm161, %v155, 0
    %v262 = vsel %vm161, %v156, 0
    %v265 = vsel %vm161, %v158, 0
    %vm267 = vcmask 1042432
    %v269 = vsel %vm267, %v160, 0
    %271 = vmatprep.subr.mxu0 0.0
    %272 = vmatpush1.msra.mxu0 %v269
    %273 = vmatprep.subr.mxu0 0.0
    %274 = vmatpush1.msra.mxu0 0.0
    %275 = vmatprep.subr.mxu0 0.0
    %276 = vmatpush1.msra.mxu0 0.0
    %277 = vmatprep.subr.mxu0 0.0
    %278 = vmatpush1.msra.mxu0 0.0
    %279 = vmatprep.subr.mxu0 0.0
    %280 = vmatpush1.msra.mxu0 0.0
    %281 = vmatprep.subr.mxu0 0.0
    %282 = vmatpush1.msra.mxu0 0.0
    %283 = vmatprep.subr.mxu0 0.0
    %284 = vmatpush1.msra.mxu0 0.0
    %285 = vmatprep.subr.mxu0 0.0
    %286 = vmatpush1.msra.mxu0 0.0
    %287 = vmatprep.subr.mxu0 0.0
    %288 = vmatpush1.msra.mxu0 0.0
    %289 = vmatprep.subr.mxu0 0.0
    %290 = vmatpush1.msra.mxu0 0.0
    %291 = vmatprep.subr.mxu0 0.0
    %292 = vmatpush1.msra.mxu0 0.0
    %293 = vmatprep.subr.mxu0 0.0
    %294 = vmatpush1.msra.mxu0 0.0
    %295 = vmatprep.subr.mxu0 0.0
    %296 = vmatpush1.msra.mxu0 0.0
    %297 = vmatprep.subr.mxu0 0.0
    %298 = vmatpush1.msra.mxu0 0.0
    %299 = vmatprep.subr.mxu0 0.0
    %300 = vmatpush1.msra.mxu0 0.0
    %301 = vmatprep.subr.mxu0 0.0
    %302 = vmatpush1.msra.mxu0 0.0
    %303 = vmatprep.subr.mxu0 0.0
    %304 = vmatpush1.msra.mxu0 0.0
    %305 = vmatprep.subr.mxu0 0.0
    %306 = vmatpush1.msra.mxu0 0.0
    %307 = vmatprep.subr.mxu0 0.0
    %308 = vmatpush1.msra.mxu0 0.0
    %309 = vmatprep.subr.mxu0 0.0
    %310 = vmatpush1.msra.mxu0 0.0
    %311 = vmatprep.subr.mxu0 0.0
    %312 = vmatpush1.msra.mxu0 0.0
    %313 = vmatprep.subr.mxu0 0.0
    %314 = vmatpush1.msra.mxu0 0.0
    %315 = vmatprep.subr.mxu0 0.0
    %316 = vmatpush1.msra.mxu0 0.0
    %317 = vmatprep.subr.mxu0 0.0
    %318 = vmatpush1.msra.mxu0 0.0
    %319 = vmatprep.subr.mxu0 0.0
    %320 = vmatpush1.msra.mxu0 0.0
    %321 = vmatprep.subr.mxu0 0.0
    %322 = vmatpush1.msra.mxu0 0.0
    %323 = vmatprep.subr.mxu0 0.0
    %324 = vmatpush1.msra.mxu0 0.0
    %325 = vmatprep.subr.mxu0 0.0
    %326 = vmatpush1.msra.mxu0 0.0
    %327 = vmatprep.subr.mxu0 0.0
    %328 = vmatpush1.msra.mxu0 0.0
    %329 = vmatprep.subr.mxu0 0.0
    %330 = vmatpush1.msra.mxu0 0.0
    %331 = vmatprep.subr.mxu0 0.0
    %332 = vmatpush1.msra.mxu0 0.0
    %333 = vmatprep.subr.mxu0 0.0
    %334 = vmatpush1.msra.mxu0 0.0
    %335 = vmatprep.mubr.f32.mxu0 0.0
    %336 = vmatmul.mubr.f32.gmra.mrb[0].mxu0 %v163
    %v337 = vpop.f32.mrb[0].mxu0
    %v338 = vadd.f32 0.0, %v337
    %v339 = vpop.f32.mrb[0].mxu0
    %340 = vmatprep.mubr.f32.mxu0 0.0
    %341 = vmatmul.mubr.f32.gmra.mrb[0].mxu0 %v166
    %v342 = vpop.f32.mrb[0].mxu0
    %v343 = vadd.f32 0.0, %v342
    %v344 = vpop.f32.mrb[0].mxu0
    %345 = vmatprep.mubr.f32.mxu0 0.0
    %346 = vmatmul.mubr.f32.gmra.mrb[0].mxu0 %v169
    %v347 = vpop.f32.mrb[0].mxu0
    %v348 = vadd.f32 0.0, %v347
    %v349 = vpop.f32.mrb[0].mxu0
    %350 = vmatprep.mubr.f32.mxu0 0.0
    %351 = vmatmul.mubr.f32.gmra.mrb[0].mxu0 %v172
    %v352 = vpop.f32.mrb[0].mxu0
    %v353 = vadd.f32 0.0, %v352
    %v354 = vpop.f32.mrb[0].mxu0
    %355 = vmatprep.mubr.f32.mxu0 0.0
    %356 = vmatmul.mubr.f32.gmra.mrb[0].mxu0 %v175
    %v357 = vpop.f32.mrb[0].mxu0
    %v358 = vadd.f32 0.0, %v357
    %v359 = vpop.f32.mrb[0].mxu0
    %360 = vmatprep.mubr.f32.mxu0 0.0
    %361 = vmatmul.mubr.f32.gmra.mrb[0].mxu0 %v178
    %v362 = vpop.f32.mrb[0].mxu0
    %v363 = vadd.f32 0.0, %v362
    %v364 = vpop.f32.mrb[0].mxu0
    %365 = vmatprep.mubr.f32.mxu0 0.0
    %366 = vmatmul.mubr.f32.gmra.mrb[0].mxu0 %v181
    %v367 = vpop.f32.mrb[0].mxu0
    %v368 = vadd.f32 0.0, %v367
    %v369 = vpop.f32.mrb[0].mxu0
    %370 = vmatprep.mubr.f32.mxu0 0.0
    %371 = vmatmul.mubr.f32.gmra.mrb[0].mxu0 %v184
    %v372 = vpop.f32.mrb[0].mxu0
    %v373 = vadd.f32 0.0, %v372
    %v374 = vpop.f32.mrb[0].mxu0
    %375 = vmatprep.mubr.f32.mxu0 0.0
    %376 = vmatmul.mubr.f32.gmra.mrb[0].mxu0 %v187
    %v377 = vpop.f32.mrb[0].mxu0
    %v378 = vadd.f32 0.0, %v377
    %v379 = vpop.f32.mrb[0].mxu0
    %380 = vmatprep.mubr.f32.mxu0 0.0
    %381 = vmatmul.mubr.f32.gmra.mrb[0].mxu0 %v190
    %v382 = vpop.f32.mrb[0].mxu0
    %v383 = vadd.f32 0.0, %v382
    %v384 = vpop.f32.mrb[0].mxu0
    %385 = vmatprep.mubr.f32.mxu0 0.0
    %386 = vmatmul.mubr.f32.gmra.mrb[0].mxu0 %v193
    %v387 = vpop.f32.mrb[0].mxu0
    %v388 = vadd.f32 0.0, %v387
    %v389 = vpop.f32.mrb[0].mxu0
    %390 = vmatprep.mubr.f32.mxu0 0.0
    %391 = vmatmul.mubr.f32.gmra.mrb[0].mxu0 %v196
    %v392 = vpop.f32.mrb[0].mxu0
    %v393 = vadd.f32 0.0, %v392
    %v394 = vpop.f32.mrb[0].mxu0
    %395 = vmatprep.mubr.f32.mxu0 0.0
    %396 = vmatmul.mubr.f32.gmra.mrb[0].mxu0 %v199
    %v397 = vpop.f32.mrb[0].mxu0
    %v398 = vadd.f32 0.0, %v397
    %v399 = vpop.f32.mrb[0].mxu0
    %400 = vmatprep.mubr.f32.mxu0 0.0
    %401 = vmatmul.mubr.f32.gmra.mrb[0].mxu0 %v202
    %v402 = vpop.f32.mrb[0].mxu0
    %v403 = vadd.f32 0.0, %v402
    %v404 = vpop.f32.mrb[0].mxu0
    %405 = vmatprep.mubr.f32.mxu0 0.0
    %406 = vmatmul.mubr.f32.gmra.mrb[0].mxu0 %v205
    %v407 = vpop.f32.mrb[0].mxu0
    %v408 = vadd.f32 0.0, %v407
    %v409 = vpop.f32.mrb[0].mxu0
    %410 = vmatprep.mubr.f32.mxu0 0.0
    %411 = vmatmul.mubr.f32.gmra.mrb[0].mxu0 %v208
    %v412 = vpop.f32.mrb[0].mxu0
    %v413 = vadd.f32 0.0, %v412
    %v414 = vpop.f32.mrb[0].mxu0
    %415 = vmatprep.mubr.f32.mxu0 0.0
    %416 = vmatmul.mubr.f32.gmra.mrb[0].mxu0 %v211
    %v417 = vpop.f32.mrb[0].mxu0
    %v418 = vadd.f32 0.0, %v417
    %v419 = vpop.f32.mrb[0].mxu0
    %420 = vmatprep.mubr.f32.mxu0 0.0
    %421 = vmatmul.mubr.f32.gmra.mrb[0].mxu0 %v214
    %v422 = vpop.f32.mrb[0].mxu0
    %v423 = vadd.f32 0.0, %v422
    %v424 = vpop.f32.mrb[0].mxu0
    %425 = vmatprep.mubr.f32.mxu0 0.0
    %426 = vmatmul.mubr.f32.gmra.mrb[0].mxu0 %v217
    %v427 = vpop.f32.mrb[0].mxu0
    %v428 = vadd.f32 0.0, %v427
    %v429 = vpop.f32.mrb[0].mxu0
    %430 = vmatprep.mubr.f32.mxu0 0.0
    %431 = vmatmul.mubr.f32.gmra.mrb[0].mxu0 %v220
    %v432 = vpop.f32.mrb[0].mxu0
    %v433 = vadd.f32 0.0, %v432
    %v434 = vpop.f32.mrb[0].mxu0
    %435 = vmatprep.mubr.f32.mxu0 0.0
    %436 = vmatmul.mubr.f32.gmra.mrb[0].mxu0 %v223
    %v437 = vpop.f32.mrb[0].mxu0
    %v438 = vadd.f32 0.0, %v437
    %v439 = vpop.f32.mrb[0].mxu0
    %440 = vmatprep.mubr.f32.mxu0 0.0
    %441 = vmatmul.mubr.f32.gmra.mrb[0].mxu0 %v226
    %v442 = vpop.f32.mrb[0].mxu0
    %v443 = vadd.f32 0.0, %v442
    %v444 = vpop.f32.mrb[0].mxu0
    %445 = vmatprep.mubr.f32.mxu0 0.0
    %446 = vmatmul.mubr.f32.gmra.mrb[0].mxu0 %v229
    %v447 = vpop.f32.mrb[0].mxu0
    %v448 = vadd.f32 0.0, %v447
    %v449 = vpop.f32.mrb[0].mxu0
    %450 = vmatprep.mubr.f32.mxu0 0.0
    %451 = vmatmul.mubr.f32.gmra.mrb[0].mxu0 %v232
    %v452 = vpop.f32.mrb[0].mxu0
    %v453 = vadd.f32 0.0, %v452
    %v454 = vpop.f32.mrb[0].mxu0
    %455 = vmatprep.mubr.f32.mxu0 0.0
    %456 = vmatmul.mubr.f32.gmra.mrb[0].mxu0 %v235
    %v457 = vpop.f32.mrb[0].mxu0
    %v458 = vadd.f32 0.0, %v457
    %v459 = vpop.f32.mrb[0].mxu0
    %460 = vmatprep.mubr.f32.mxu0 0.0
    %461 = vmatmul.mubr.f32.gmra.mrb[0].mxu0 %v238
    %v462 = vpop.f32.mrb[0].mxu0
    %v463 = vadd.f32 0.0, %v462
    %v464 = vpop.f32.mrb[0].mxu0
    %465 = vmatprep.mubr.f32.mxu0 0.0
    %466 = vmatmul.mubr.f32.gmra.mrb[0].mxu0 %v241
    %v467 = vpop.f32.mrb[0].mxu0
    %v468 = vadd.f32 0.0, %v467
    %v469 = vpop.f32.mrb[0].mxu0
    %470 = vmatprep.mubr.f32.mxu0 0.0
    %471 = vmatmul.mubr.f32.gmra.mrb[0].mxu0 %v244
    %v472 = vpop.f32.mrb[0].mxu0
    %v473 = vadd.f32 0.0, %v472
    %v474 = vpop.f32.mrb[0].mxu0
    %475 = vmatprep.mubr.f32.mxu0 0.0
    %476 = vmatmul.mubr.f32.gmra.mrb[0].mxu0 %v247
    %v477 = vpop.f32.mrb[0].mxu0
    %v478 = vadd.f32 0.0, %v477
    %v479 = vpop.f32.mrb[0].mxu0
    %480 = vmatprep.mubr.f32.mxu0 0.0
    %481 = vmatmul.mubr.f32.gmra.mrb[0].mxu0 %v250
    %v482 = vpop.f32.mrb[0].mxu0
    %v483 = vadd.f32 0.0, %v482
    %v484 = vpop.f32.mrb[0].mxu0
    %485 = vmatprep.mubr.f32.mxu0 0.0
    %486 = vmatmul.mubr.f32.gmra.mrb[0].mxu0 %v253
    %v487 = vpop.f32.mrb[0].mxu0
    %v488 = vadd.f32 0.0, %v487
    %v489 = vpop.f32.mrb[0].mxu0
    %490 = vmatprep.mubr.f32.mxu0 0.0
    %491 = vmatmul.mubr.f32.gmra.mrb[0].mxu0 %v256
    %v492 = vpop.f32.mrb[0].mxu0
    %v493 = vadd.f32 0.0, %v492
    %v494 = vpop.f32.mrb[0].mxu0
    %495 = vmatprep.mubr.f32.mxu0 0.0
    %496 = vmatmul.mubr.f32.gmra.mrb[0].mxu0 %v259
    %v497 = vpop.f32.mrb[0].mxu0
    %v498 = vadd.f32 0.0, %v497
    %v499 = vpop.f32.mrb[0].mxu0
    %500 = vmatprep.mubr.f32.mxu0 0.0
    %501 = vmatmul.mubr.f32.gmra.mrb[0].mxu0 %v262
    %v502 = vpop.f32.mrb[0].mxu0
    %v503 = vadd.f32 0.0, %v502
    %v504 = vpop.f32.mrb[0].mxu0
    %505 = vmatprep.mubr.f32.mxu0 0.0
    %506 = vmatmul.mubr.f32.gmra.mrb[0].mxu0 %v265
    %v507 = vpop.f32.mrb[0].mxu0
    %v508 = vadd.f32 0.0, %v507
    %v509 = vpop.f32.mrb[0].mxu0
    %510 = vdwg.mxu0
    %v512 = vsel %vm161, %v122, 0
    %v515 = vsel %vm267, %v157, 0
    %517 = vmatprep.subr.mxu0 0.0
    %518 = vmatpush1.msra.mxu0 %v515
    %519 = vmatprep.subr.mxu0 0.0
    %520 = vmatpush1.msra.mxu0 0.0
    %521 = vmatprep.subr.mxu0 0.0
    %522 = vmatpush1.msra.mxu0 0.0
    %523 = vmatprep.subr.mxu0 0.0
    %524 = vmatpush1.msra.mxu0 0.0
    %525 = vmatprep.subr.mxu0 0.0
    %526 = vmatpush1.msra.mxu0 0.0
    %527 = vmatprep.subr.mxu0 0.0
    %528 = vmatpush1.msra.mxu0 0.0
    %529 = vmatprep.subr.mxu0 0.0
    %530 = vmatpush1.msra.mxu0 0.0
    %531 = vmatprep.subr.mxu0 0.0
    %532 = vmatpush1.msra.mxu0 0.0
    %533 = vmatprep.subr.mxu0 0.0
    %534 = vmatpush1.msra.mxu0 0.0
    %535 = vmatprep.subr.mxu0 0.0
    %536 = vmatpush1.msra.mxu0 0.0
    %537 = vmatprep.subr.mxu0 0.0
    %538 = vmatpush1.msra.mxu0 0.0
    %539 = vmatprep.subr.mxu0 0.0
    %540 = vmatpush1.msra.mxu0 0.0
    %541 = vmatprep.subr.mxu0 0.0
    %542 = vmatpush1.msra.mxu0 0.0
    %543 = vmatprep.subr.mxu0 0.0
    %544 = vmatpush1.msra.mxu0 0.0
    %545 = vmatprep.subr.mxu0 0.0
    %546 = vmatpush1.msra.mxu0 0.0
    %547 = vmatprep.subr.mxu0 0.0
    %548 = vmatpush1.msra.mxu0 0.0
    %549 = vmatprep.subr.mxu0 0.0
    %550 = vmatpush1.msra.mxu0 0.0
    %551 = vmatprep.subr.mxu0 0.0
    %552 = vmatpush1.msra.mxu0 0.0
    %553 = vmatprep.subr.mxu0 0.0
    %554 = vmatpush1.msra.mxu0 0.0
    %555 = vmatprep.subr.mxu0 0.0
    %556 = vmatpush1.msra.mxu0 0.0
    %557 = vmatprep.subr.mxu0 0.0
    %558 = vmatpush1.msra.mxu0 0.0
    %559 = vmatprep.subr.mxu0 0.0
    %560 = vmatpush1.msra.mxu0 0.0
    %561 = vmatprep.subr.mxu0 0.0
    %562 = vmatpush1.msra.mxu0 0.0
    %563 = vmatprep.subr.mxu0 0.0
    %564 = vmatpush1.msra.mxu0 0.0
    %565 = vmatprep.subr.mxu0 0.0
    %566 = vmatpush1.msra.mxu0 0.0
    %567 = vmatprep.subr.mxu0 0.0
    %568 = vmatpush1.msra.mxu0 0.0
    %569 = vmatprep.subr.mxu0 0.0
    %570 = vmatpush1.msra.mxu0 0.0
    %571 = vmatprep.subr.mxu0 0.0
    %572 = vmatpush1.msra.mxu0 0.0
    %573 = vmatprep.subr.mxu0 0.0
    %574 = vmatpush1.msra.mxu0 0.0
    %575 = vmatprep.subr.mxu0 0.0
    %576 = vmatpush1.msra.mxu0 0.0
    %577 = vmatprep.subr.mxu0 0.0
    %578 = vmatpush1.msra.mxu0 0.0
    %579 = vmatprep.subr.mxu0 0.0
    %580 = vmatpush1.msra.mxu0 0.0
    %581 = vmatprep.mubr.f32.mxu0 0.0
    %582 = vmatmul.mubr.f32.gmra.mrb[0].mxu0 %v512
    %v583 = vpop.f32.mrb[0].mxu0
    %v584 = vadd.f32 %v338, %v583
    %v585 = vpop.f32.mrb[0].mxu0
    %586 = vmatprep.mubr.f32.mxu0 0.0
    %587 = vmatmul.mubr.f32.gmra.mrb[0].mxu0 %v163
    %v588 = vpop.f32.mrb[0].mxu0
    %v589 = vadd.f32 %v343, %v588
    %v590 = vpop.f32.mrb[0].mxu0
    %591 = vmatprep.mubr.f32.mxu0 0.0
    %592 = vmatmul.mubr.f32.gmra.mrb[0].mxu0 %v166
    %v593 = vpop.f32.mrb[0].mxu0
    %v594 = vadd.f32 %v348, %v593
    %v595 = vpop.f32.mrb[0].mxu0
    %596 = vmatprep.mubr.f32.mxu0 0.0
    %597 = vmatmul.mubr.f32.gmra.mrb[0].mxu0 %v169
    %v598 = vpop.f32.mrb[0].mxu0
    %v599 = vadd.f32 %v353, %v598
    %v600 = vpop.f32.mrb[0].mxu0
    %601 = vmatprep.mubr.f32.mxu0 0.0
    %602 = vmatmul.mubr.f32.gmra.mrb[0].mxu0 %v172
    %v603 = vpop.f32.mrb[0].mxu0
    %v604 = vadd.f32 %v358, %v603
    %v605 = vpop.f32.mrb[0].mxu0
    %606 = vmatprep.mubr.f32.mxu0 0.0
    %607 = vmatmul.mubr.f32.gmra.mrb[0].mxu0 %v175
    %v608 = vpop.f32.mrb[0].mxu0
    %v609 = vadd.f32 %v363, %v608
    %v610 = vpop.f32.mrb[0].mxu0
    %611 = vmatprep.mubr.f32.mxu0 0.0
    %612 = vmatmul.mubr.f32.gmra.mrb[0].mxu0 %v178
    %v613 = vpop.f32.mrb[0].mxu0
    %v614 = vadd.f32 %v368, %v613
    %v615 = vpop.f32.mrb[0].mxu0
    %616 = vmatprep.mubr.f32.mxu0 0.0
    %617 = vmatmul.mubr.f32.gmra.mrb[0].mxu0 %v181
    %v618 = vpop.f32.mrb[0].mxu0
    %v619 = vadd.f32 %v373, %v618
    %v620 = vpop.f32.mrb[0].mxu0
    %621 = vmatprep.mubr.f32.mxu0 0.0
    %622 = vmatmul.mubr.f32.gmra.mrb[0].mxu0 %v184
    %v623 = vpop.f32.mrb[0].mxu0
    %v624 = vadd.f32 %v378, %v623
    %v625 = vpop.f32.mrb[0].mxu0
    %626 = vmatprep.mubr.f32.mxu0 0.0
    %627 = vmatmul.mubr.f32.gmra.mrb[0].mxu0 %v187
    %v628 = vpop.f32.mrb[0].mxu0
    %v629 = vadd.f32 %v383, %v628
    %v630 = vpop.f32.mrb[0].mxu0
    %631 = vmatprep.mubr.f32.mxu0 0.0
    %632 = vmatmul.mubr.f32.gmra.mrb[0].mxu0 %v190
    %v633 = vpop.f32.mrb[0].mxu0
    %v634 = vadd.f32 %v388, %v633
    %v635 = vpop.f32.mrb[0].mxu0
    %636 = vmatprep.mubr.f32.mxu0 0.0
    %637 = vmatmul.mubr.f32.gmra.mrb[0].mxu0 %v193
    %v638 = vpop.f32.mrb[0].mxu0
    %v639 = vadd.f32 %v393, %v638
    %v640 = vpop.f32.mrb[0].mxu0
    %641 = vmatprep.mubr.f32.mxu0 0.0
    %642 = vmatmul.mubr.f32.gmra.mrb[0].mxu0 %v196
    %v643 = vpop.f32.mrb[0].mxu0
    %v644 = vadd.f32 %v398, %v643
    %v645 = vpop.f32.mrb[0].mxu0
    %646 = vmatprep.mubr.f32.mxu0 0.0
    %647 = vmatmul.mubr.f32.gmra.mrb[0].mxu0 %v199
    %v648 = vpop.f32.mrb[0].mxu0
    %v649 = vadd.f32 %v403, %v648
    %v650 = vpop.f32.mrb[0].mxu0
    %651 = vmatprep.mubr.f32.mxu0 0.0
    %652 = vmatmul.mubr.f32.gmra.mrb[0].mxu0 %v202
    %v653 = vpop.f32.mrb[0].mxu0
    %v654 = vadd.f32 %v408, %v653
    %v655 = vpop.f32.mrb[0].mxu0
    %656 = vmatprep.mubr.f32.mxu0 0.0
    %657 = vmatmul.mubr.f32.gmra.mrb[0].mxu0 %v205
    %v658 = vpop.f32.mrb[0].mxu0
    %v659 = vadd.f32 %v413, %v658
    %v660 = vpop.f32.mrb[0].mxu0
    %661 = vmatprep.mubr.f32.mxu0 0.0
    %662 = vmatmul.mubr.f32.gmra.mrb[0].mxu0 %v208
    %v663 = vpop.f32.mrb[0].mxu0
    %v664 = vadd.f32 %v418, %v663
    %v665 = vpop.f32.mrb[0].mxu0
    %666 = vmatprep.mubr.f32.mxu0 0.0
    %667 = vmatmul.mubr.f32.gmra.mrb[0].mxu0 %v211
    %v668 = vpop.f32.mrb[0].mxu0
    %v669 = vadd.f32 %v423, %v668
    %v670 = vpop.f32.mrb[0].mxu0
    %671 = vmatprep.mubr.f32.mxu0 0.0
    %672 = vmatmul.mubr.f32.gmra.mrb[0].mxu0 %v214
    %v673 = vpop.f32.mrb[0].mxu0
    %v674 = vadd.f32 %v428, %v673
    %v675 = vpop.f32.mrb[0].mxu0
    %676 = vmatprep.mubr.f32.mxu0 0.0
    %677 = vmatmul.mubr.f32.gmra.mrb[0].mxu0 %v217
    %v678 = vpop.f32.mrb[0].mxu0
    %v679 = vadd.f32 %v433, %v678
    %v680 = vpop.f32.mrb[0].mxu0
    %681 = vmatprep.mubr.f32.mxu0 0.0
    %682 = vmatmul.mubr.f32.gmra.mrb[0].mxu0 %v220
    %v683 = vpop.f32.mrb[0].mxu0
    %v684 = vadd.f32 %v438, %v683
    %v685 = vpop.f32.mrb[0].mxu0
    %686 = vmatprep.mubr.f32.mxu0 0.0
    %687 = vmatmul.mubr.f32.gmra.mrb[0].mxu0 %v223
    %v688 = vpop.f32.mrb[0].mxu0
    %v689 = vadd.f32 %v443, %v688
    %v690 = vpop.f32.mrb[0].mxu0
    %691 = vmatprep.mubr.f32.mxu0 0.0
    %692 = vmatmul.mubr.f32.gmra.mrb[0].mxu0 %v226
    %v693 = vpop.f32.mrb[0].mxu0
    %v694 = vadd.f32 %v448, %v693
    %v695 = vpop.f32.mrb[0].mxu0
    %696 = vmatprep.mubr.f32.mxu0 0.0
    %697 = vmatmul.mubr.f32.gmra.mrb[0].mxu0 %v229
    %v698 = vpop.f32.mrb[0].mxu0
    %v699 = vadd.f32 %v453, %v698
    %v700 = vpop.f32.mrb[0].mxu0
    %701 = vmatprep.mubr.f32.mxu0 0.0
    %702 = vmatmul.mubr.f32.gmra.mrb[0].mxu0 %v232
    %v703 = vpop.f32.mrb[0].mxu0
    %v704 = vadd.f32 %v458, %v703
    %v705 = vpop.f32.mrb[0].mxu0
    %706 = vmatprep.mubr.f32.mxu0 0.0
    %707 = vmatmul.mubr.f32.gmra.mrb[0].mxu0 %v235
    %v708 = vpop.f32.mrb[0].mxu0
    %v709 = vadd.f32 %v463, %v708
    %v710 = vpop.f32.mrb[0].mxu0
    %711 = vmatprep.mubr.f32.mxu0 0.0
    %712 = vmatmul.mubr.f32.gmra.mrb[0].mxu0 %v238
    %v713 = vpop.f32.mrb[0].mxu0
    %v714 = vadd.f32 %v468, %v713
    %v715 = vpop.f32.mrb[0].mxu0
    %716 = vmatprep.mubr.f32.mxu0 0.0
    %717 = vmatmul.mubr.f32.gmra.mrb[0].mxu0 %v241
    %v718 = vpop.f32.mrb[0].mxu0
    %v719 = vadd.f32 %v473, %v718
    %v720 = vpop.f32.mrb[0].mxu0
    %721 = vmatprep.mubr.f32.mxu0 0.0
    %722 = vmatmul.mubr.f32.gmra.mrb[0].mxu0 %v244
    %v723 = vpop.f32.mrb[0].mxu0
    %v724 = vadd.f32 %v478, %v723
    %v725 = vpop.f32.mrb[0].mxu0
    %726 = vmatprep.mubr.f32.mxu0 0.0
    %727 = vmatmul.mubr.f32.gmra.mrb[0].mxu0 %v247
    %v728 = vpop.f32.mrb[0].mxu0
    %v729 = vadd.f32 %v483, %v728
    %v730 = vpop.f32.mrb[0].mxu0
    %731 = vmatprep.mubr.f32.mxu0 0.0
    %732 = vmatmul.mubr.f32.gmra.mrb[0].mxu0 %v250
    %v733 = vpop.f32.mrb[0].mxu0
    %v734 = vadd.f32 %v488, %v733
    %v735 = vpop.f32.mrb[0].mxu0
    %736 = vmatprep.mubr.f32.mxu0 0.0
    %737 = vmatmul.mubr.f32.gmra.mrb[0].mxu0 %v253
    %v738 = vpop.f32.mrb[0].mxu0
    %v739 = vadd.f32 %v493, %v738
    %v740 = vpop.f32.mrb[0].mxu0
    %741 = vmatprep.mubr.f32.mxu0 0.0
    %742 = vmatmul.mubr.f32.gmra.mrb[0].mxu0 %v256
    %v743 = vpop.f32.mrb[0].mxu0
    %v744 = vadd.f32 %v498, %v743
    %v745 = vpop.f32.mrb[0].mxu0
    %746 = vmatprep.mubr.f32.mxu0 0.0
    %747 = vmatmul.mubr.f32.gmra.mrb[0].mxu0 %v259
    %v748 = vpop.f32.mrb[0].mxu0
    %v749 = vadd.f32 %v503, %v748
    %v750 = vpop.f32.mrb[0].mxu0
    %751 = vmatprep.mubr.f32.mxu0 0.0
    %752 = vmatmul.mubr.f32.gmra.mrb[0].mxu0 %v262
    %v753 = vpop.f32.mrb[0].mxu0
    %v754 = vadd.f32 %v508, %v753
    %v755 = vpop.f32.mrb[0].mxu0
    %756 = vdwg.mxu0
    %v757 = vld [vmem:[%s0 + $0x10] sm:$0xff]
    %v758 = vld [vmem:[%s0 + $0x18] sm:$0xff]
    %v759 = vld [vmem:[%s0 + $0x20] sm:$0xff]
    %v760 = vld [vmem:[%s0 + $0x28] sm:$0xff]
    %v761 = vld [vmem:[%s0 + $0x30] sm:$0xff]
    %v762 = vld [vmem:[%s0 + $0x38] sm:$0xff]
    %v763 = vld [vmem:[%s0 + $0x40] sm:$0xff]
    %v764 = vld [vmem:[%s0 + $0x48] sm:$0xff]
    %v765 = vld [vmem:[%s0 + $0x50] sm:$0xff]
    %v766 = vld [vmem:[%s0 + $0x58] sm:$0xff]
    %v767 = vld [vmem:[%s0 + $0x60] sm:$0xff]
    %v768 = vld [vmem:[%s0 + $0x68] sm:$0xff]
    %v769 = vld [vmem:[%s0 + $0x70] sm:$0xff]
    %v770 = vld [vmem:[%s0 + $0x78] sm:$0xff]
    %v771 = vld [vmem:[%s0 + $0x80] sm:$0xff]
    %v772 = vld [vmem:[%s0 + $0x88] sm:$0xff]
    %v773 = vld [vmem:[%s0 + $0x90] sm:$0xff]
    %v774 = vld [vmem:[%s0 + $0x98] sm:$0xff]
    %v775 = vld [vmem:[%s0 + $0xa0] sm:$0xff]
    %v776 = vld [vmem:[%s0 + $0xa8] sm:$0xff]
    %v777 = vld [vmem:[%s0 + $0xb0] sm:$0xff]
    %v778 = vld [vmem:[%s0 + $0xb8] sm:$0xff]
    %v779 = vld [vmem:[%s0 + $0xc0] sm:$0xff]
    %v780 = vld [vmem:[%s0 + $0xc8] sm:$0xff]
    %v781 = vld [vmem:[%s0 + $0xd0] sm:$0xff]
    %v782 = vld [vmem:[%s0 + $0xd8] sm:$0xff]
    %v783 = vld [vmem:[%s0 + $0xe0] sm:$0xff]
    %v784 = vld [vmem:[%s0 + $0xe8] sm:$0xff]
    %v785 = vld [vmem:[%s0 + $0xf0] sm:$0xff]
    %v786 = vld [vmem:[%s0 + $0xf8] sm:$0xff]
    %v787 = vld [vmem:[%s0 + $0x100] sm:$0xff]
    %v788 = vld [vmem:[%s0 + $0x108] sm:$0xff]
    %v789 = vld [vmem:[%s0 + $0x110] sm:$0xff]
    %v790 = vld [vmem:[%s0 + $0x118] sm:$0xff]
    %v791 = vld [vmem:[%s0 + $0x120] sm:$0xff]
    %s792 = scalar_lea.vmem [#allocation4], 8
    %v793 = vld [vmem:[%s792] sm:$0x7]
    %v795 = vsel %vm161, %v757, 0
    %v798 = vsel %vm161, %v758, 0
    %v801 = vsel %vm161, %v759, 0
    %v804 = vsel %vm161, %v760, 0
    %v807 = vsel %vm161, %v761, 0
    %v810 = vsel %vm161, %v762, 0
    %v813 = vsel %vm161, %v763, 0
    %v816 = vsel %vm161, %v764, 0
    %v819 = vsel %vm161, %v765, 0
    %v822 = vsel %vm161, %v766, 0
    %v825 = vsel %vm161, %v767, 0
    %v828 = vsel %vm161, %v768, 0
    %v831 = vsel %vm161, %v769, 0
    %v834 = vsel %vm161, %v770, 0
    %v837 = vsel %vm161, %v771, 0
    %v840 = vsel %vm161, %v772, 0
    %v843 = vsel %vm161, %v773, 0
    %v846 = vsel %vm161, %v774, 0
    %v849 = vsel %vm161, %v775, 0
    %v852 = vsel %vm161, %v776, 0
    %v855 = vsel %vm161, %v777, 0
    %v858 = vsel %vm161, %v778, 0
    %v861 = vsel %vm161, %v779, 0
    %v864 = vsel %vm161, %v780, 0
    %v867 = vsel %vm161, %v781, 0
    %v870 = vsel %vm161, %v782, 0
    %v873 = vsel %vm161, %v783, 0
    %v876 = vsel %vm161, %v784, 0
    %v879 = vsel %vm161, %v785, 0
    %v882 = vsel %vm161, %v786, 0
    %v885 = vsel %vm161, %v787, 0
    %v888 = vsel %vm161, %v788, 0
    %v891 = vsel %vm161, %v789, 0
    %v894 = vsel %vm161, %v790, 0
    %v897 = vsel %vm161, %v791, 0
    %v900 = vsel %vm267, %v793, 0
    %902 = vmatprep.subr.mxu0 0.0
    %903 = vmatpush1.msra.mxu0 %v900
    %904 = vmatprep.subr.mxu0 0.0
    %905 = vmatpush1.msra.mxu0 0.0
    %906 = vmatprep.subr.mxu0 0.0
    %907 = vmatpush1.msra.mxu0 0.0
    %908 = vmatprep.subr.mxu0 0.0
    %909 = vmatpush1.msra.mxu0 0.0
    %910 = vmatprep.subr.mxu0 0.0
    %911 = vmatpush1.msra.mxu0 0.0
    %912 = vmatprep.subr.mxu0 0.0
    %913 = vmatpush1.msra.mxu0 0.0
    %914 = vmatprep.subr.mxu0 0.0
    %915 = vmatpush1.msra.mxu0 0.0
    %916 = vmatprep.subr.mxu0 0.0
    %917 = vmatpush1.msra.mxu0 0.0
    %918 = vmatprep.subr.mxu0 0.0
    %919 = vmatpush1.msra.mxu0 0.0
    %920 = vmatprep.subr.mxu0 0.0
    %921 = vmatpush1.msra.mxu0 0.0
    %922 = vmatprep.subr.mxu0 0.0
    %923 = vmatpush1.msra.mxu0 0.0
    %924 = vmatprep.subr.mxu0 0.0
    %925 = vmatpush1.msra.mxu0 0.0
    %926 = vmatprep.subr.mxu0 0.0
    %927 = vmatpush1.msra.mxu0 0.0
    %928 = vmatprep.subr.mxu0 0.0
    %929 = vmatpush1.msra.mxu0 0.0
    %930 = vmatprep.subr.mxu0 0.0
    %931 = vmatpush1.msra.mxu0 0.0
    %932 = vmatprep.subr.mxu0 0.0
    %933 = vmatpush1.msra.mxu0 0.0
    %934 = vmatprep.subr.mxu0 0.0
    %935 = vmatpush1.msra.mxu0 0.0
    %936 = vmatprep.subr.mxu0 0.0
    %937 = vmatpush1.msra.mxu0 0.0
    %938 = vmatprep.subr.mxu0 0.0
    %939 = vmatpush1.msra.mxu0 0.0
    %940 = vmatprep.subr.mxu0 0.0
    %941 = vmatpush1.msra.mxu0 0.0
    %942 = vmatprep.subr.mxu0 0.0
    %943 = vmatpush1.msra.mxu0 0.0
    %944 = vmatprep.subr.mxu0 0.0
    %945 = vmatpush1.msra.mxu0 0.0
    %946 = vmatprep.subr.mxu0 0.0
    %947 = vmatpush1.msra.mxu0 0.0
    %948 = vmatprep.subr.mxu0 0.0
    %949 = vmatpush1.msra.mxu0 0.0
    %950 = vmatprep.subr.mxu0 0.0
    %951 = vmatpush1.msra.mxu0 0.0
    %952 = vmatprep.subr.mxu0 0.0
    %953 = vmatpush1.msra.mxu0 0.0
    %954 = vmatprep.subr.mxu0 0.0
    %955 = vmatpush1.msra.mxu0 0.0
    %956 = vmatprep.subr.mxu0 0.0
    %957 = vmatpush1.msra.mxu0 0.0
    %958 = vmatprep.subr.mxu0 0.0
    %959 = vmatpush1.msra.mxu0 0.0
    %960 = vmatprep.subr.mxu0 0.0
    %961 = vmatpush1.msra.mxu0 0.0
    %962 = vmatprep.subr.mxu0 0.0
    %963 = vmatpush1.msra.mxu0 0.0
    %964 = vmatprep.subr.mxu0 0.0
    %965 = vmatpush1.msra.mxu0 0.0
    %966 = vmatprep.mubr.f32.mxu0 0.0
    %967 = vmatmul.mubr.f32.gmra.mrb[0].mxu0 %v795
    %v968 = vpop.f32.mrb[0].mxu0
    %v969 = vadd.f32 0.0, %v968
    %v970 = vpop.f32.mrb[0].mxu0
    %971 = vmatprep.mubr.f32.mxu0 0.0
    %972 = vmatmul.mubr.f32.gmra.mrb[0].mxu0 %v798
    %v973 = vpop.f32.mrb[0].mxu0
    %v974 = vadd.f32 0.0, %v973
    %v975 = vpop.f32.mrb[0].mxu0
    %976 = vmatprep.mubr.f32.mxu0 0.0
    %977 = vmatmul.mubr.f32.gmra.mrb[0].mxu0 %v801
    %v978 = vpop.f32.mrb[0].mxu0
    %v979 = vadd.f32 0.0, %v978
    %v980 = vpop.f32.mrb[0].mxu0
    %981 = vmatprep.mubr.f32.mxu0 0.0
    %982 = vmatmul.mubr.f32.gmra.mrb[0].mxu0 %v804
    %v983 = vpop.f32.mrb[0].mxu0
    %v984 = vadd.f32 0.0, %v983
    %v985 = vpop.f32.mrb[0].mxu0
    %986 = vmatprep.mubr.f32.mxu0 0.0
    %987 = vmatmul.mubr.f32.gmra.mrb[0].mxu0 %v807
    %v988 = vpop.f32.mrb[0].mxu0
    %v989 = vadd.f32 0.0, %v988
    %v990 = vpop.f32.mrb[0].mxu0
    %991 = vmatprep.mubr.f32.mxu0 0.0
    %992 = vmatmul.mubr.f32.gmra.mrb[0].mxu0 %v810
    %v993 = vpop.f32.mrb[0].mxu0
    %v994 = vadd.f32 0.0, %v993
    %v995 = vpop.f32.mrb[0].mxu0
    %996 = vmatprep.mubr.f32.mxu0 0.0
    %997 = vmatmul.mubr.f32.gmra.mrb[0].mxu0 %v813
    %v998 = vpop.f32.mrb[0].mxu0
    %v999 = vadd.f32 0.0, %v998
    %v1000 = vpop.f32.mrb[0].mxu0
    %1001 = vmatprep.mubr.f32.mxu0 0.0
    %1002 = vmatmul.mubr.f32.gmra.mrb[0].mxu0 %v816
    %v1003 = vpop.f32.mrb[0].mxu0
    %v1004 = vadd.f32 0.0, %v1003
    %v1005 = vpop.f32.mrb[0].mxu0
    %1006 = vmatprep.mubr.f32.mxu0 0.0
    %1007 = vmatmul.mubr.f32.gmra.mrb[0].mxu0 %v819
    %v1008 = vpop.f32.mrb[0].mxu0
    %v1009 = vadd.f32 0.0, %v1008
    %v1010 = vpop.f32.mrb[0].mxu0
    %1011 = vmatprep.mubr.f32.mxu0 0.0
    %1012 = vmatmul.mubr.f32.gmra.mrb[0].mxu0 %v822
    %v1013 = vpop.f32.mrb[0].mxu0
    %v1014 = vadd.f32 0.0, %v1013
    %v1015 = vpop.f32.mrb[0].mxu0
    %1016 = vmatprep.mubr.f32.mxu0 0.0
    %1017 = vmatmul.mubr.f32.gmra.mrb[0].mxu0 %v825
    %v1018 = vpop.f32.mrb[0].mxu0
    %v1019 = vadd.f32 0.0, %v1018
    %v1020 = vpop.f32.mrb[0].mxu0
    %1021 = vmatprep.mubr.f32.mxu0 0.0
    %1022 = vmatmul.mubr.f32.gmra.mrb[0].mxu0 %v828
    %v1023 = vpop.f32.mrb[0].mxu0
    %v1024 = vadd.f32 0.0, %v1023
    %v1025 = vpop.f32.mrb[0].mxu0
    %1026 = vmatprep.mubr.f32.mxu0 0.0
    %1027 = vmatmul.mubr.f32.gmra.mrb[0].mxu0 %v831
    %v1028 = vpop.f32.mrb[0].mxu0
    %v1029 = vadd.f32 0.0, %v1028
    %v1030 = vpop.f32.mrb[0].mxu0
    %1031 = vmatprep.mubr.f32.mxu0 0.0
    %1032 = vmatmul.mubr.f32.gmra.mrb[0].mxu0 %v834
    %v1033 = vpop.f32.mrb[0].mxu0
    %v1034 = vadd.f32 0.0, %v1033
    %v1035 = vpop.f32.mrb[0].mxu0
    %1036 = vmatprep.mubr.f32.mxu0 0.0
    %1037 = vmatmul.mubr.f32.gmra.mrb[0].mxu0 %v837
    %v1038 = vpop.f32.mrb[0].mxu0
    %v1039 = vadd.f32 0.0, %v1038
    %v1040 = vpop.f32.mrb[0].mxu0
    %1041 = vmatprep.mubr.f32.mxu0 0.0
    %1042 = vmatmul.mubr.f32.gmra.mrb[0].mxu0 %v840
    %v1043 = vpop.f32.mrb[0].mxu0
    %v1044 = vadd.f32 0.0, %v1043
    %v1045 = vpop.f32.mrb[0].mxu0
    %1046 = vmatprep.mubr.f32.mxu0 0.0
    %1047 = vmatmul.mubr.f32.gmra.mrb[0].mxu0 %v843
    %v1048 = vpop.f32.mrb[0].mxu0
    %v1049 = vadd.f32 0.0, %v1048
    %v1050 = vpop.f32.mrb[0].mxu0
    %1051 = vmatprep.mubr.f32.mxu0 0.0
    %1052 = vmatmul.mubr.f32.gmra.mrb[0].mxu0 %v846
    %v1053 = vpop.f32.mrb[0].mxu0
    %v1054 = vadd.f32 0.0, %v1053
    %v1055 = vpop.f32.mrb[0].mxu0
    %1056 = vmatprep.mubr.f32.mxu0 0.0
    %1057 = vmatmul.mubr.f32.gmra.mrb[0].mxu0 %v849
    %v1058 = vpop.f32.mrb[0].mxu0
    %v1059 = vadd.f32 0.0, %v1058
    %v1060 = vpop.f32.mrb[0].mxu0
    %1061 = vmatprep.mubr.f32.mxu0 0.0
    %1062 = vmatmul.mubr.f32.gmra.mrb[0].mxu0 %v852
    %v1063 = vpop.f32.mrb[0].mxu0
    %v1064 = vadd.f32 0.0, %v1063
    %v1065 = vpop.f32.mrb[0].mxu0
    %1066 = vmatprep.mubr.f32.mxu0 0.0
    %1067 = vmatmul.mubr.f32.gmra.mrb[0].mxu0 %v855
    %v1068 = vpop.f32.mrb[0].mxu0
    %v1069 = vadd.f32 0.0, %v1068
    %v1070 = vpop.f32.mrb[0].mxu0
    %1071 = vmatprep.mubr.f32.mxu0 0.0
    %1072 = vmatmul.mubr.f32.gmra.mrb[0].mxu0 %v858
    %v1073 = vpop.f32.mrb[0].mxu0
    %v1074 = vadd.f32 0.0, %v1073
    %v1075 = vpop.f32.mrb[0].mxu0
    %1076 = vmatprep.mubr.f32.mxu0 0.0
    %1077 = vmatmul.mubr.f32.gmra.mrb[0].mxu0 %v861
    %v1078 = vpop.f32.mrb[0].mxu0
    %v1079 = vadd.f32 0.0, %v1078
    %v1080 = vpop.f32.mrb[0].mxu0
    %1081 = vmatprep.mubr.f32.mxu0 0.0
    %1082 = vmatmul.mubr.f32.gmra.mrb[0].mxu0 %v864
    %v1083 = vpop.f32.mrb[0].mxu0
    %v1084 = vadd.f32 0.0, %v1083
    %v1085 = vpop.f32.mrb[0].mxu0
    %1086 = vmatprep.mubr.f32.mxu0 0.0
    %1087 = vmatmul.mubr.f32.gmra.mrb[0].mxu0 %v867
    %v1088 = vpop.f32.mrb[0].mxu0
    %v1089 = vadd.f32 0.0, %v1088
    %v1090 = vpop.f32.mrb[0].mxu0
    %1091 = vmatprep.mubr.f32.mxu0 0.0
    %1092 = vmatmul.mubr.f32.gmra.mrb[0].mxu0 %v870
    %v1093 = vpop.f32.mrb[0].mxu0
    %v1094 = vadd.f32 0.0, %v1093
    %v1095 = vpop.f32.mrb[0].mxu0
    %1096 = vmatprep.mubr.f32.mxu0 0.0
    %1097 = vmatmul.mubr.f32.gmra.mrb[0].mxu0 %v873
    %v1098 = vpop.f32.mrb[0].mxu0
    %v1099 = vadd.f32 0.0, %v1098
    %v1100 = vpop.f32.mrb[0].mxu0
    %1101 = vmatprep.mubr.f32.mxu0 0.0
    %1102 = vmatmul.mubr.f32.gmra.mrb[0].mxu0 %v876
    %v1103 = vpop.f32.mrb[0].mxu0
    %v1104 = vadd.f32 0.0, %v1103
    %v1105 = vpop.f32.mrb[0].mxu0
    %1106 = vmatprep.mubr.f32.mxu0 0.0
    %1107 = vmatmul.mubr.f32.gmra.mrb[0].mxu0 %v879
    %v1108 = vpop.f32.mrb[0].mxu0
    %v1109 = vadd.f32 0.0, %v1108
    %v1110 = vpop.f32.mrb[0].mxu0
    %1111 = vmatprep.mubr.f32.mxu0 0.0
    %1112 = vmatmul.mubr.f32.gmra.mrb[0].mxu0 %v882
    %v1113 = vpop.f32.mrb[0].mxu0
    %v1114 = vadd.f32 0.0, %v1113
    %v1115 = vpop.f32.mrb[0].mxu0
    %1116 = vmatprep.mubr.f32.mxu0 0.0
    %1117 = vmatmul.mubr.f32.gmra.mrb[0].mxu0 %v885
    %v1118 = vpop.f32.mrb[0].mxu0
    %v1119 = vadd.f32 0.0, %v1118
    %v1120 = vpop.f32.mrb[0].mxu0
    %1121 = vmatprep.mubr.f32.mxu0 0.0
    %1122 = vmatmul.mubr.f32.gmra.mrb[0].mxu0 %v888
    %v1123 = vpop.f32.mrb[0].mxu0
    %v1124 = vadd.f32 0.0, %v1123
    %v1125 = vpop.f32.mrb[0].mxu0
    %1126 = vmatprep.mubr.f32.mxu0 0.0
    %1127 = vmatmul.mubr.f32.gmra.mrb[0].mxu0 %v891
    %v1128 = vpop.f32.mrb[0].mxu0
    %v1129 = vadd.f32 0.0, %v1128
    %v1130 = vpop.f32.mrb[0].mxu0
    %1131 = vmatprep.mubr.f32.mxu0 0.0
    %1132 = vmatmul.mubr.f32.gmra.mrb[0].mxu0 %v894
    %v1133 = vpop.f32.mrb[0].mxu0
    %v1134 = vadd.f32 0.0, %v1133
    %v1135 = vpop.f32.mrb[0].mxu0
    %1136 = vmatprep.mubr.f32.mxu0 0.0
    %1137 = vmatmul.mubr.f32.gmra.mrb[0].mxu0 %v897
    %v1138 = vpop.f32.mrb[0].mxu0
    %v1139 = vadd.f32 0.0, %v1138
    %v1140 = vpop.f32.mrb[0].mxu0
    %1141 = vdwg.mxu0
    %v1142 = vadd.f32 %v584, %v969
    %v1143 = vadd.f32 %v589, %v974
    %v1144 = vadd.f32 %v594, %v979
    %v1145 = vadd.f32 %v599, %v984
    %v1146 = vadd.f32 %v604, %v989
    %v1147 = vadd.f32 %v609, %v994
    %v1148 = vadd.f32 %v614, %v999
    %v1149 = vadd.f32 %v619, %v1004
    %v1150 = vadd.f32 %v624, %v1009
    %v1151 = vadd.f32 %v629, %v1014
    %v1152 = vadd.f32 %v634, %v1019
    %v1153 = vadd.f32 %v639, %v1024
    %v1154 = vadd.f32 %v644, %v1029
    %v1155 = vadd.f32 %v649, %v1034
    %v1156 = vadd.f32 %v654, %v1039
    %v1157 = vadd.f32 %v659, %v1044
    %v1158 = vadd.f32 %v664, %v1049
    %v1159 = vadd.f32 %v669, %v1054
    %v1160 = vadd.f32 %v674, %v1059
    %v1161 = vadd.f32 %v679, %v1064
    %v1162 = vadd.f32 %v684, %v1069
    %v1163 = vadd.f32 %v689, %v1074
    %v1164 = vadd.f32 %v694, %v1079
    %v1165 = vadd.f32 %v699, %v1084
    %v1166 = vadd.f32 %v704, %v1089
    %v1167 = vadd.f32 %v709, %v1094
    %v1168 = vadd.f32 %v714, %v1099
    %v1169 = vadd.f32 %v719, %v1104
    %v1170 = vadd.f32 %v724, %v1109
    %v1171 = vadd.f32 %v729, %v1114
    %v1172 = vadd.f32 %v734, %v1119
    %v1173 = vadd.f32 %v739, %v1124
    %v1174 = vadd.f32 %v744, %v1129
    %v1175 = vadd.f32 %v749, %v1134
    %v1176 = vadd.f32 %v754, %v1139
    %v1177 = vld [vmem:[%s0 + $0x38] sm:$0xff]
    %v1178 = vld [vmem:[%s0 + $0x40] sm:$0xff]
    %v1179 = vld [vmem:[%s0 + $0x48] sm:$0xff]
    %v1180 = vld [vmem:[%s0 + $0x50] sm:$0xff]
    %v1181 = vld [vmem:[%s0 + $0x58] sm:$0xff]
    %v1182 = vld [vmem:[%s0 + $0x60] sm:$0xff]
    %v1183 = vld [vmem:[%s0 + $0x68] sm:$0xff]
    %v1184 = vld [vmem:[%s0 + $0x70] sm:$0xff]
    %v1185 = vld [vmem:[%s0 + $0x78] sm:$0xff]
    %v1186 = vld [vmem:[%s0 + $0x80] sm:$0xff]
    %v1187 = vld [vmem:[%s0 + $0x88] sm:$0xff]
    %v1188 = vld [vmem:[%s0 + $0x90] sm:$0xff]
    %v1189 = vld [vmem:[%s0 + $0x98] sm:$0xff]
    %v1190 = vld [vmem:[%s0 + $0xa0] sm:$0xff]
    %v1191 = vld [vmem:[%s0 + $0xa8] sm:$0xff]
    %v1192 = vld [vmem:[%s0 + $0xb0] sm:$0xff]
    %v1193 = vld [vmem:[%s0 + $0xb8] sm:$0xff]
    %v1194 = vld [vmem:[%s0 + $0xc0] sm:$0xff]
    %v1195 = vld [vmem:[%s0 + $0xc8] sm:$0xff]
    %v1196 = vld [vmem:[%s0 + $0xd0] sm:$0xff]
    %v1197 = vld [vmem:[%s0 + $0xd8] sm:$0xff]
    %v1198 = vld [vmem:[%s0 + $0xe0] sm:$0xff]
    %v1199 = vld [vmem:[%s0 + $0xe8] sm:$0xff]
    %v1200 = vld [vmem:[%s0 + $0xf0] sm:$0xff]
    %v1201 = vld [vmem:[%s0 + $0xf8] sm:$0xff]
    %v1202 = vld [vmem:[%s0 + $0x100] sm:$0xff]
    %v1203 = vld [vmem:[%s0 + $0x108] sm:$0xff]
    %v1204 = vld [vmem:[%s0 + $0x110] sm:$0xff]
    %v1205 = vld [vmem:[%s0 + $0x118] sm:$0xff]
    %v1206 = vld [vmem:[%s0 + $0x120] sm:$0xff]
    %v1207 = vld [vmem:[%s0 + $0x128] sm:$0xff]
    %v1208 = vld [vmem:[%s0 + $0x130] sm:$0xff]
    %v1209 = vld [vmem:[%s0 + $0x138] sm:$0xff]
    %v1210 = vld [vmem:[%s0 + $0x140] sm:$0xff]
    %v1211 = vld [vmem:[%s0 + $0x148] sm:$0xff]
    %s1212 = scalar_lea.vmem [#allocation4], 12
    %v1213 = vld [vmem:[%s1212] sm:$0x7]
    %v1215 = vsel %vm161, %v1177, 0
    %v1218 = vsel %vm161, %v1178, 0
    %v1221 = vsel %vm161, %v1179, 0
    %v1224 = vsel %vm161, %v1180, 0
    %v1227 = vsel %vm161, %v1181, 0
    %v1230 = vsel %vm161, %v1182, 0
    %v1233 = vsel %vm161, %v1183, 0
    %v1236 = vsel %vm161, %v1184, 0
    %v1239 = vsel %vm161, %v1185, 0
    %v1242 = vsel %vm161, %v1186, 0
    %v1245 = vsel %vm161, %v1187, 0
    %v1248 = vsel %vm161, %v1188, 0
    %v1251 = vsel %vm161, %v1189, 0
    %v1254 = vsel %vm161, %v1190, 0
    %v1257 = vsel %vm161, %v1191, 0
    %v1260 = vsel %vm161, %v1192, 0
    %v1263 = vsel %vm161, %v1193, 0
    %v1266 = vsel %vm161, %v1194, 0
    %v1269 = vsel %vm161, %v1195, 0
    %v1272 = vsel %vm161, %v1196, 0
    %v1275 = vsel %vm161, %v1197, 0
    %v1278 = vsel %vm161, %v1198, 0
    %v1281 = vsel %vm161, %v1199, 0
    %v1284 = vsel %vm161, %v1200, 0
    %v1287 = vsel %vm161, %v1201, 0
    %v1290 = vsel %vm161, %v1202, 0
    %v1293 = vsel %vm161, %v1203, 0
    %v1296 = vsel %vm161, %v1204, 0
    %v1299 = vsel %vm161, %v1205, 0
    %v1302 = vsel %vm161, %v1206, 0
    %v1305 = vsel %vm161, %v1207, 0
    %v1308 = vsel %vm161, %v1208, 0
    %v1311 = vsel %vm161, %v1209, 0
    %v1314 = vsel %vm161, %v1210, 0
    %v1317 = vsel %vm161, %v1211, 0
    %v1320 = vsel %vm267, %v1213, 0
    %1322 = vmatprep.subr.mxu0 0.0
    %1323 = vmatpush1.msra.mxu0 %v1320
    %1324 = vmatprep.subr.mxu0 0.0
    %1325 = vmatpush1.msra.mxu0 0.0
    %1326 = vmatprep.subr.mxu0 0.0
    %1327 = vmatpush1.msra.mxu0 0.0
    %1328 = vmatprep.subr.mxu0 0.0
    %1329 = vmatpush1.msra.mxu0 0.0
    %1330 = vmatprep.subr.mxu0 0.0
    %1331 = vmatpush1.msra.mxu0 0.0
    %1332 = vmatprep.subr.mxu0 0.0
    %1333 = vmatpush1.msra.mxu0 0.0
    %1334 = vmatprep.subr.mxu0 0.0
    %1335 = vmatpush1.msra.mxu0 0.0
    %1336 = vmatprep.subr.mxu0 0.0
    %1337 = vmatpush1.msra.mxu0 0.0
    %1338 = vmatprep.subr.mxu0 0.0
    %1339 = vmatpush1.msra.mxu0 0.0
    %1340 = vmatprep.subr.mxu0 0.0
    %1341 = vmatpush1.msra.mxu0 0.0
    %1342 = vmatprep.subr.mxu0 0.0
    %1343 = vmatpush1.msra.mxu0 0.0
    %1344 = vmatprep.subr.mxu0 0.0
    %1345 = vmatpush1.msra.mxu0 0.0
    %1346 = vmatprep.subr.mxu0 0.0
    %1347 = vmatpush1.msra.mxu0 0.0
    %1348 = vmatprep.subr.mxu0 0.0
    %1349 = vmatpush1.msra.mxu0 0.0
    %1350 = vmatprep.subr.mxu0 0.0
    %1351 = vmatpush1.msra.mxu0 0.0
    %1352 = vmatprep.subr.mxu0 0.0
    %1353 = vmatpush1.msra.mxu0 0.0
    %1354 = vmatprep.subr.mxu0 0.0
    %1355 = vmatpush1.msra.mxu0 0.0
    %1356 = vmatprep.subr.mxu0 0.0
    %1357 = vmatpush1.msra.mxu0 0.0
    %1358 = vmatprep.subr.mxu0 0.0
    %1359 = vmatpush1.msra.mxu0 0.0
    %1360 = vmatprep.subr.mxu0 0.0
    %1361 = vmatpush1.msra.mxu0 0.0
    %1362 = vmatprep.subr.mxu0 0.0
    %1363 = vmatpush1.msra.mxu0 0.0
    %1364 = vmatprep.subr.mxu0 0.0
    %1365 = vmatpush1.msra.mxu0 0.0
    %1366 = vmatprep.subr.mxu0 0.0
    %1367 = vmatpush1.msra.mxu0 0.0
    %1368 = vmatprep.subr.mxu0 0.0
    %1369 = vmatpush1.msra.mxu0 0.0
    %1370 = vmatprep.subr.mxu0 0.0
    %1371 = vmatpush1.msra.mxu0 0.0
    %1372 = vmatprep.subr.mxu0 0.0
    %1373 = vmatpush1.msra.mxu0 0.0
    %1374 = vmatprep.subr.mxu0 0.0
    %1375 = vmatpush1.msra.mxu0 0.0
    %1376 = vmatprep.subr.mxu0 0.0
    %1377 = vmatpush1.msra.mxu0 0.0
    %1378 = vmatprep.subr.mxu0 0.0
    %1379 = vmatpush1.msra.mxu0 0.0
    %1380 = vmatprep.subr.mxu0 0.0
    %1381 = vmatpush1.msra.mxu0 0.0
    %1382 = vmatprep.subr.mxu0 0.0
    %1383 = vmatpush1.msra.mxu0 0.0
    %1384 = vmatprep.subr.mxu0 0.0
    %1385 = vmatpush1.msra.mxu0 0.0
    %1386 = vmatprep.mubr.f32.mxu0 0.0
    %1387 = vmatmul.mubr.f32.gmra.mrb[0].mxu0 %v1215
    %v1388 = vpop.f32.mrb[0].mxu0
    %v1389 = vadd.f32 0.0, %v1388
    %v1390 = vpop.f32.mrb[0].mxu0
    %1391 = vmatprep.mubr.f32.mxu0 0.0
    %1392 = vmatmul.mubr.f32.gmra.mrb[0].mxu0 %v1218
    %v1393 = vpop.f32.mrb[0].mxu0
    %v1394 = vadd.f32 0.0, %v1393
    %v1395 = vpop.f32.mrb[0].mxu0
    %1396 = vmatprep.mubr.f32.mxu0 0.0
    %1397 = vmatmul.mubr.f32.gmra.mrb[0].mxu0 %v1221
    %v1398 = vpop.f32.mrb[0].mxu0
    %v1399 = vadd.f32 0.0, %v1398
    %v1400 = vpop.f32.mrb[0].mxu0
    %1401 = vmatprep.mubr.f32.mxu0 0.0
    %1402 = vmatmul.mubr.f32.gmra.mrb[0].mxu0 %v1224
    %v1403 = vpop.f32.mrb[0].mxu0
    %v1404 = vadd.f32 0.0, %v1403
    %v1405 = vpop.f32.mrb[0].mxu0
    %1406 = vmatprep.mubr.f32.mxu0 0.0
    %1407 = vmatmul.mubr.f32.gmra.mrb[0].mxu0 %v1227
    %v1408 = vpop.f32.mrb[0].mxu0
    %v1409 = vadd.f32 0.0, %v1408
    %v1410 = vpop.f32.mrb[0].mxu0
    %1411 = vmatprep.mubr.f32.mxu0 0.0
    %1412 = vmatmul.mubr.f32.gmra.mrb[0].mxu0 %v1230
    %v1413 = vpop.f32.mrb[0].mxu0
    %v1414 = vadd.f32 0.0, %v1413
    %v1415 = vpop.f32.mrb[0].mxu0
    %1416 = vmatprep.mubr.f32.mxu0 0.0
    %1417 = vmatmul.mubr.f32.gmra.mrb[0].mxu0 %v1233
    %v1418 = vpop.f32.mrb[0].mxu0
    %v1419 = vadd.f32 0.0, %v1418
    %v1420 = vpop.f32.mrb[0].mxu0
    %1421 = vmatprep.mubr.f32.mxu0 0.0
    %1422 = vmatmul.mubr.f32.gmra.mrb[0].mxu0 %v1236
    %v1423 = vpop.f32.mrb[0].mxu0
    %v1424 = vadd.f32 0.0, %v1423
    %v1425 = vpop.f32.mrb[0].mxu0
    %1426 = vmatprep.mubr.f32.mxu0 0.0
    %1427 = vmatmul.mubr.f32.gmra.mrb[0].mxu0 %v1239
    %v1428 = vpop.f32.mrb[0].mxu0
    %v1429 = vadd.f32 0.0, %v1428
    %v1430 = vpop.f32.mrb[0].mxu0
    %1431 = vmatprep.mubr.f32.mxu0 0.0
    %1432 = vmatmul.mubr.f32.gmra.mrb[0].mxu0 %v1242
    %v1433 = vpop.f32.mrb[0].mxu0
    %v1434 = vadd.f32 0.0, %v1433
    %v1435 = vpop.f32.mrb[0].mxu0
    %1436 = vmatprep.mubr.f32.mxu0 0.0
    %1437 = vmatmul.mubr.f32.gmra.mrb[0].mxu0 %v1245
    %v1438 = vpop.f32.mrb[0].mxu0
    %v1439 = vadd.f32 0.0, %v1438
    %v1440 = vpop.f32.mrb[0].mxu0
    %1441 = vmatprep.mubr.f32.mxu0 0.0
    %1442 = vmatmul.mubr.f32.gmra.mrb[0].mxu0 %v1248
    %v1443 = vpop.f32.mrb[0].mxu0
    %v1444 = vadd.f32 0.0, %v1443
    %v1445 = vpop.f32.mrb[0].mxu0
    %1446 = vmatprep.mubr.f32.mxu0 0.0
    %1447 = vmatmul.mubr.f32.gmra.mrb[0].mxu0 %v1251
    %v1448 = vpop.f32.mrb[0].mxu0
    %v1449 = vadd.f32 0.0, %v1448
    %v1450 = vpop.f32.mrb[0].mxu0
    %1451 = vmatprep.mubr.f32.mxu0 0.0
    %1452 = vmatmul.mubr.f32.gmra.mrb[0].mxu0 %v1254
    %v1453 = vpop.f32.mrb[0].mxu0
    %v1454 = vadd.f32 0.0, %v1453
    %v1455 = vpop.f32.mrb[0].mxu0
    %1456 = vmatprep.mubr.f32.mxu0 0.0
    %1457 = vmatmul.mubr.f32.gmra.mrb[0].mxu0 %v1257
    %v1458 = vpop.f32.mrb[0].mxu0
    %v1459 = vadd.f32 0.0, %v1458
    %v1460 = vpop.f32.mrb[0].mxu0
    %1461 = vmatprep.mubr.f32.mxu0 0.0
    %1462 = vmatmul.mubr.f32.gmra.mrb[0].mxu0 %v1260
    %v1463 = vpop.f32.mrb[0].mxu0
    %v1464 = vadd.f32 0.0, %v1463
    %v1465 = vpop.f32.mrb[0].mxu0
    %1466 = vmatprep.mubr.f32.mxu0 0.0
    %1467 = vmatmul.mubr.f32.gmra.mrb[0].mxu0 %v1263
    %v1468 = vpop.f32.mrb[0].mxu0
    %v1469 = vadd.f32 0.0, %v1468
    %v1470 = vpop.f32.mrb[0].mxu0
    %1471 = vmatprep.mubr.f32.mxu0 0.0
    %1472 = vmatmul.mubr.f32.gmra.mrb[0].mxu0 %v1266
    %v1473 = vpop.f32.mrb[0].mxu0
    %v1474 = vadd.f32 0.0, %v1473
    %v1475 = vpop.f32.mrb[0].mxu0
    %1476 = vmatprep.mubr.f32.mxu0 0.0
    %1477 = vmatmul.mubr.f32.gmra.mrb[0].mxu0 %v1269
    %v1478 = vpop.f32.mrb[0].mxu0
    %v1479 = vadd.f32 0.0, %v1478
    %v1480 = vpop.f32.mrb[0].mxu0
    %1481 = vmatprep.mubr.f32.mxu0 0.0
    %1482 = vmatmul.mubr.f32.gmra.mrb[0].mxu0 %v1272
    %v1483 = vpop.f32.mrb[0].mxu0
    %v1484 = vadd.f32 0.0, %v1483
    %v1485 = vpop.f32.mrb[0].mxu0
    %1486 = vmatprep.mubr.f32.mxu0 0.0
    %1487 = vmatmul.mubr.f32.gmra.mrb[0].mxu0 %v1275
    %v1488 = vpop.f32.mrb[0].mxu0
    %v1489 = vadd.f32 0.0, %v1488
    %v1490 = vpop.f32.mrb[0].mxu0
    %1491 = vmatprep.mubr.f32.mxu0 0.0
    %1492 = vmatmul.mubr.f32.gmra.mrb[0].mxu0 %v1278
    %v1493 = vpop.f32.mrb[0].mxu0
    %v1494 = vadd.f32 0.0, %v1493
    %v1495 = vpop.f32.mrb[0].mxu0
    %1496 = vmatprep.mubr.f32.mxu0 0.0
    %1497 = vmatmul.mubr.f32.gmra.mrb[0].mxu0 %v1281
    %v1498 = vpop.f32.mrb[0].mxu0
    %v1499 = vadd.f32 0.0, %v1498
    %v1500 = vpop.f32.mrb[0].mxu0
    %1501 = vmatprep.mubr.f32.mxu0 0.0
    %1502 = vmatmul.mubr.f32.gmra.mrb[0].mxu0 %v1284
    %v1503 = vpop.f32.mrb[0].mxu0
    %v1504 = vadd.f32 0.0, %v1503
    %v1505 = vpop.f32.mrb[0].mxu0
    %1506 = vmatprep.mubr.f32.mxu0 0.0
    %1507 = vmatmul.mubr.f32.gmra.mrb[0].mxu0 %v1287
    %v1508 = vpop.f32.mrb[0].mxu0
    %v1509 = vadd.f32 0.0, %v1508
    %v1510 = vpop.f32.mrb[0].mxu0
    %1511 = vmatprep.mubr.f32.mxu0 0.0
    %1512 = vmatmul.mubr.f32.gmra.mrb[0].mxu0 %v1290
    %v1513 = vpop.f32.mrb[0].mxu0
    %v1514 = vadd.f32 0.0, %v1513
    %v1515 = vpop.f32.mrb[0].mxu0
    %1516 = vmatprep.mubr.f32.mxu0 0.0
    %1517 = vmatmul.mubr.f32.gmra.mrb[0].mxu0 %v1293
    %v1518 = vpop.f32.mrb[0].mxu0
    %v1519 = vadd.f32 0.0, %v1518
    %v1520 = vpop.f32.mrb[0].mxu0
    %1521 = vmatprep.mubr.f32.mxu0 0.0
    %1522 = vmatmul.mubr.f32.gmra.mrb[0].mxu0 %v1296
    %v1523 = vpop.f32.mrb[0].mxu0
    %v1524 = vadd.f32 0.0, %v1523
    %v1525 = vpop.f32.mrb[0].mxu0
    %1526 = vmatprep.mubr.f32.mxu0 0.0
    %1527 = vmatmul.mubr.f32.gmra.mrb[0].mxu0 %v1299
    %v1528 = vpop.f32.mrb[0].mxu0
    %v1529 = vadd.f32 0.0, %v1528
    %v1530 = vpop.f32.mrb[0].mxu0
    %1531 = vmatprep.mubr.f32.mxu0 0.0
    %1532 = vmatmul.mubr.f32.gmra.mrb[0].mxu0 %v1302
    %v1533 = vpop.f32.mrb[0].mxu0
    %v1534 = vadd.f32 0.0, %v1533
    %v1535 = vpop.f32.mrb[0].mxu0
    %1536 = vmatprep.mubr.f32.mxu0 0.0
    %1537 = vmatmul.mubr.f32.gmra.mrb[0].mxu0 %v1305
    %v1538 = vpop.f32.mrb[0].mxu0
    %v1539 = vadd.f32 0.0, %v1538
    %v1540 = vpop.f32.mrb[0].mxu0
    %1541 = vmatprep.mubr.f32.mxu0 0.0
    %1542 = vmatmul.mubr.f32.gmra.mrb[0].mxu0 %v1308
    %v1543 = vpop.f32.mrb[0].mxu0
    %v1544 = vadd.f32 0.0, %v1543
    %v1545 = vpop.f32.mrb[0].mxu0
    %1546 = vmatprep.mubr.f32.mxu0 0.0
    %1547 = vmatmul.mubr.f32.gmra.mrb[0].mxu0 %v1311
    %v1548 = vpop.f32.mrb[0].mxu0
    %v1549 = vadd.f32 0.0, %v1548
    %v1550 = vpop.f32.mrb[0].mxu0
    %1551 = vmatprep.mubr.f32.mxu0 0.0
    %1552 = vmatmul.mubr.f32.gmra.mrb[0].mxu0 %v1314
    %v1553 = vpop.f32.mrb[0].mxu0
    %v1554 = vadd.f32 0.0, %v1553
    %v1555 = vpop.f32.mrb[0].mxu0
    %1556 = vmatprep.mubr.f32.mxu0 0.0
    %1557 = vmatmul.mubr.f32.gmra.mrb[0].mxu0 %v1317
    %v1558 = vpop.f32.mrb[0].mxu0
    %v1559 = vadd.f32 0.0, %v1558
    %v1560 = vpop.f32.mrb[0].mxu0
    %1561 = vdwg.mxu0
    %v1562 = vadd.f32 %v1142, %v1389
    %v1563 = vadd.f32 %v1143, %v1394
    %v1564 = vadd.f32 %v1144, %v1399
    %v1565 = vadd.f32 %v1145, %v1404
    %v1566 = vadd.f32 %v1146, %v1409
    %v1567 = vadd.f32 %v1147, %v1414
    %v1568 = vadd.f32 %v1148, %v1419
    %v1569 = vadd.f32 %v1149, %v1424
    %v1570 = vadd.f32 %v1150, %v1429
    %v1571 = vadd.f32 %v1151, %v1434
    %v1572 = vadd.f32 %v1152, %v1439
    %v1573 = vadd.f32 %v1153, %v1444
    %v1574 = vadd.f32 %v1154, %v1449
    %v1575 = vadd.f32 %v1155, %v1454
    %v1576 = vadd.f32 %v1156, %v1459
    %v1577 = vadd.f32 %v1157, %v1464
    %v1578 = vadd.f32 %v1158, %v1469
    %v1579 = vadd.f32 %v1159, %v1474
    %v1580 = vadd.f32 %v1160, %v1479
    %v1581 = vadd.f32 %v1161, %v1484
    %v1582 = vadd.f32 %v1162, %v1489
    %v1583 = vadd.f32 %v1163, %v1494
    %v1584 = vadd.f32 %v1164, %v1499
    %v1585 = vadd.f32 %v1165, %v1504
    %v1586 = vadd.f32 %v1166, %v1509
    %v1587 = vadd.f32 %v1167, %v1514
    %v1588 = vadd.f32 %v1168, %v1519
    %v1589 = vadd.f32 %v1169, %v1524
    %v1590 = vadd.f32 %v1170, %v1529
    %v1591 = vadd.f32 %v1171, %v1534
    %v1592 = vadd.f32 %v1172, %v1539
    %v1593 = vadd.f32 %v1173, %v1544
    %v1594 = vadd.f32 %v1174, %v1549
    %v1595 = vadd.f32 %v1175, %v1554
    %v1596 = vadd.f32 %v1176, %v1559
    %v1597 = vld [vmem:[%s0 + $0x40] sm:$0xff]
    %v1598 = vld [vmem:[%s0 + $0x48] sm:$0xff]
    %v1599 = vld [vmem:[%s0 + $0x50] sm:$0xff]
    %v1600 = vld [vmem:[%s0 + $0x58] sm:$0xff]
    %v1601 = vld [vmem:[%s0 + $0x60] sm:$0xff]
    %v1602 = vld [vmem:[%s0 + $0x68] sm:$0xff]
    %v1603 = vld [vmem:[%s0 + $0x70] sm:$0xff]
    %v1604 = vld [vmem:[%s0 + $0x78] sm:$0xff]
    %v1605 = vld [vmem:[%s0 + $0x80] sm:$0xff]
    %v1606 = vld [vmem:[%s0 + $0x88] sm:$0xff]
    %v1607 = vld [vmem:[%s0 + $0x90] sm:$0xff]
    %v1608 = vld [vmem:[%s0 + $0x98] sm:$0xff]
    %v1609 = vld [vmem:[%s0 + $0xa0] sm:$0xff]
    %v1610 = vld [vmem:[%s0 + $0xa8] sm:$0xff]
    %v1611 = vld [vmem:[%s0 + $0xb0] sm:$0xff]
    %v1612 = vld [vmem:[%s0 + $0xb8] sm:$0xff]
    %v1613 = vld [vmem:[%s0 + $0xc0] sm:$0xff]
    %v1614 = vld [vmem:[%s0 + $0xc8] sm:$0xff]
    %v1615 = vld [vmem:[%s0 + $0xd0] sm:$0xff]
    %v1616 = vld [vmem:[%s0 + $0xd8] sm:$0xff]
    %v1617 = vld [vmem:[%s0 + $0xe0] sm:$0xff]
    %v1618 = vld [vmem:[%s0 + $0xe8] sm:$0xff]
    %v1619 = vld [vmem:[%s0 + $0xf0] sm:$0xff]
    %v1620 = vld [vmem:[%s0 + $0xf8] sm:$0xff]
    %v1621 = vld [vmem:[%s0 + $0x100] sm:$0xff]
    %v1622 = vld [vmem:[%s0 + $0x108] sm:$0xff]
    %v1623 = vld [vmem:[%s0 + $0x110] sm:$0xff]
    %v1624 = vld [vmem:[%s0 + $0x118] sm:$0xff]
    %v1625 = vld [vmem:[%s0 + $0x120] sm:$0xff]
    %v1626 = vld [vmem:[%s0 + $0x128] sm:$0xff]
    %v1627 = vld [vmem:[%s0 + $0x130] sm:$0xff]
    %v1628 = vld [vmem:[%s0 + $0x138] sm:$0xff]
    %v1629 = vld [vmem:[%s0 + $0x140] sm:$0xff]
    %v1630 = vld [vmem:[%s0 + $0x148] sm:$0xff]
    %v1631 = vld [vmem:[%s0 + $0x150] sm:$0xff]
    %s1632 = scalar_lea.vmem [#allocation4], 16
    %v1633 = vld [vmem:[%s1632] sm:$0x7]
    %v1635 = vsel %vm161, %v1597, 0
    %v1638 = vsel %vm161, %v1598, 0
    %v1641 = vsel %vm161, %v1599, 0
    %v1644 = vsel %vm161, %v1600, 0
    %v1647 = vsel %vm161, %v1601, 0
    %v1650 = vsel %vm161, %v1602, 0
    %v1653 = vsel %vm161, %v1603, 0
    %v1656 = vsel %vm161, %v1604, 0
    %v1659 = vsel %vm161, %v1605, 0
    %v1662 = vsel %vm161, %v1606, 0
    %v1665 = vsel %vm161, %v1607, 0
    %v1668 = vsel %vm161, %v1608, 0
    %v1671 = vsel %vm161, %v1609, 0
    %v1674 = vsel %vm161, %v1610, 0
    %v1677 = vsel %vm161, %v1611, 0
    %v1680 = vsel %vm161, %v1612, 0
    %v1683 = vsel %vm161, %v1613, 0
    %v1686 = vsel %vm161, %v1614, 0
    %v1689 = vsel %vm161, %v1615, 0
    %v1692 = vsel %vm161, %v1616, 0
    %v1695 = vsel %vm161, %v1617, 0
    %v1698 = vsel %vm161, %v1618, 0
    %v1701 = vsel %vm161, %v1619, 0
    %v1704 = vsel %vm161, %v1620, 0
    %v1707 = vsel %vm161, %v1621, 0
    %v1710 = vsel %vm161, %v1622, 0
    %v1713 = vsel %vm161, %v1623, 0
    %v1716 = vsel %vm161, %v1624, 0
    %v1719 = vsel %vm161, %v1625, 0
    %v1722 = vsel %vm161, %v1626, 0
    %v1725 = vsel %vm161, %v1627, 0
    %v1728 = vsel %vm161, %v1628, 0
    %v1731 = vsel %vm161, %v1629, 0
    %v1734 = vsel %vm161, %v1630, 0
    %v1737 = vsel %vm161, %v1631, 0
    %v1740 = vsel %vm267, %v1633, 0
    %1742 = vmatprep.subr.mxu0 0.0
    %1743 = vmatpush1.msra.mxu0 %v1740
    %1744 = vmatprep.subr.mxu0 0.0
    %1745 = vmatpush1.msra.mxu0 0.0
    %1746 = vmatprep.subr.mxu0 0.0
    %1747 = vmatpush1.msra.mxu0 0.0
    %1748 = vmatprep.subr.mxu0 0.0
    %1749 = vmatpush1.msra.mxu0 0.0
    %1750 = vmatprep.subr.mxu0 0.0
    %1751 = vmatpush1.msra.mxu0 0.0
    %1752 = vmatprep.subr.mxu0 0.0
    %1753 = vmatpush1.msra.mxu0 0.0
    %1754 = vmatprep.subr.mxu0 0.0
    %1755 = vmatpush1.msra.mxu0 0.0
    %1756 = vmatprep.subr.mxu0 0.0
    %1757 = vmatpush1.msra.mxu0 0.0
    %1758 = vmatprep.subr.mxu0 0.0
    %1759 = vmatpush1.msra.mxu0 0.0
    %1760 = vmatprep.subr.mxu0 0.0
    %1761 = vmatpush1.msra.mxu0 0.0
    %1762 = vmatprep.subr.mxu0 0.0
    %1763 = vmatpush1.msra.mxu0 0.0
    %1764 = vmatprep.subr.mxu0 0.0
    %1765 = vmatpush1.msra.mxu0 0.0
    %1766 = vmatprep.subr.mxu0 0.0
    %1767 = vmatpush1.msra.mxu0 0.0
    %1768 = vmatprep.subr.mxu0 0.0
    %1769 = vmatpush1.msra.mxu0 0.0
    %1770 = vmatprep.subr.mxu0 0.0
    %1771 = vmatpush1.msra.mxu0 0.0
    %1772 = vmatprep.subr.mxu0 0.0
    %1773 = vmatpush1.msra.mxu0 0.0
    %1774 = vmatprep.subr.mxu0 0.0
    %1775 = vmatpush1.msra.mxu0 0.0
    %1776 = vmatprep.subr.mxu0 0.0
    %1777 = vmatpush1.msra.mxu0 0.0
    %1778 = vmatprep.subr.mxu0 0.0
    %1779 = vmatpush1.msra.mxu0 0.0
    %1780 = vmatprep.subr.mxu0 0.0
    %1781 = vmatpush1.msra.mxu0 0.0
    %1782 = vmatprep.subr.mxu0 0.0
    %1783 = vmatpush1.msra.mxu0 0.0
    %1784 = vmatprep.subr.mxu0 0.0
    %1785 = vmatpush1.msra.mxu0 0.0
    %1786 = vmatprep.subr.mxu0 0.0
    %1787 = vmatpush1.msra.mxu0 0.0
    %1788 = vmatprep.subr.mxu0 0.0
    %1789 = vmatpush1.msra.mxu0 0.0
    %1790 = vmatprep.subr.mxu0 0.0
    %1791 = vmatpush1.msra.mxu0 0.0
    %1792 = vmatprep.subr.mxu0 0.0
    %1793 = vmatpush1.msra.mxu0 0.0
    %1794 = vmatprep.subr.mxu0 0.0
    %1795 = vmatpush1.msra.mxu0 0.0
    %1796 = vmatprep.subr.mxu0 0.0
    %1797 = vmatpush1.msra.mxu0 0.0
    %1798 = vmatprep.subr.mxu0 0.0
    %1799 = vmatpush1.msra.mxu0 0.0
    %1800 = vmatprep.subr.mxu0 0.0
    %1801 = vmatpush1.msra.mxu0 0.0
    %1802 = vmatprep.subr.mxu0 0.0
    %1803 = vmatpush1.msra.mxu0 0.0
    %1804 = vmatprep.subr.mxu0 0.0
    %1805 = vmatpush1.msra.mxu0 0.0
    %1806 = vmatprep.mubr.f32.mxu0 0.0
    %1807 = vmatmul.mubr.f32.gmra.mrb[0].mxu0 %v1635
    %v1808 = vpop.f32.mrb[0].mxu0
    %v1809 = vadd.f32 0.0, %v1808
    %v1810 = vpop.f32.mrb[0].mxu0
    %1811 = vmatprep.mubr.f32.mxu0 0.0
    %1812 = vmatmul.mubr.f32.gmra.mrb[0].mxu0 %v1638
    %v1813 = vpop.f32.mrb[0].mxu0
    %v1814 = vadd.f32 0.0, %v1813
    %v1815 = vpop.f32.mrb[0].mxu0
    %1816 = vmatprep.mubr.f32.mxu0 0.0
    %1817 = vmatmul.mubr.f32.gmra.mrb[0].mxu0 %v1641
    %v1818 = vpop.f32.mrb[0].mxu0
    %v1819 = vadd.f32 0.0, %v1818
    %v1820 = vpop.f32.mrb[0].mxu0
    %1821 = vmatprep.mubr.f32.mxu0 0.0
    %1822 = vmatmul.mubr.f32.gmra.mrb[0].mxu0 %v1644
    %v1823 = vpop.f32.mrb[0].mxu0
    %v1824 = vadd.f32 0.0, %v1823
    %v1825 = vpop.f32.mrb[0].mxu0
    %1826 = vmatprep.mubr.f32.mxu0 0.0
    %1827 = vmatmul.mubr.f32.gmra.mrb[0].mxu0 %v1647
    %v1828 = vpop.f32.mrb[0].mxu0
    %v1829 = vadd.f32 0.0, %v1828
    %v1830 = vpop.f32.mrb[0].mxu0
    %1831 = vmatprep.mubr.f32.mxu0 0.0
    %1832 = vmatmul.mubr.f32.gmra.mrb[0].mxu0 %v1650
    %v1833 = vpop.f32.mrb[0].mxu0
    %v1834 = vadd.f32 0.0, %v1833
    %v1835 = vpop.f32.mrb[0].mxu0
    %1836 = vmatprep.mubr.f32.mxu0 0.0
    %1837 = vmatmul.mubr.f32.gmra.mrb[0].mxu0 %v1653
    %v1838 = vpop.f32.mrb[0].mxu0
    %v1839 = vadd.f32 0.0, %v1838
    %v1840 = vpop.f32.mrb[0].mxu0
    %1841 = vmatprep.mubr.f32.mxu0 0.0
    %1842 = vmatmul.mubr.f32.gmra.mrb[0].mxu0 %v1656
    %v1843 = vpop.f32.mrb[0].mxu0
    %v1844 = vadd.f32 0.0, %v1843
    %v1845 = vpop.f32.mrb[0].mxu0
    %1846 = vmatprep.mubr.f32.mxu0 0.0
    %1847 = vmatmul.mubr.f32.gmra.mrb[0].mxu0 %v1659
    %v1848 = vpop.f32.mrb[0].mxu0
    %v1849 = vadd.f32 0.0, %v1848
    %v1850 = vpop.f32.mrb[0].mxu0
    %1851 = vmatprep.mubr.f32.mxu0 0.0
    %1852 = vmatmul.mubr.f32.gmra.mrb[0].mxu0 %v1662
    %v1853 = vpop.f32.mrb[0].mxu0
    %v1854 = vadd.f32 0.0, %v1853
    %v1855 = vpop.f32.mrb[0].mxu0
    %1856 = vmatprep.mubr.f32.mxu0 0.0
    %1857 = vmatmul.mubr.f32.gmra.mrb[0].mxu0 %v1665
    %v1858 = vpop.f32.mrb[0].mxu0
    %v1859 = vadd.f32 0.0, %v1858
    %v1860 = vpop.f32.mrb[0].mxu0
    %1861 = vmatprep.mubr.f32.mxu0 0.0
    %1862 = vmatmul.mubr.f32.gmra.mrb[0].mxu0 %v1668
    %v1863 = vpop.f32.mrb[0].mxu0
    %v1864 = vadd.f32 0.0, %v1863
    %v1865 = vpop.f32.mrb[0].mxu0
    %1866 = vmatprep.mubr.f32.mxu0 0.0
    %1867 = vmatmul.mubr.f32.gmra.mrb[0].mxu0 %v1671
    %v1868 = vpop.f32.mrb[0].mxu0
    %v1869 = vadd.f32 0.0, %v1868
    %v1870 = vpop.f32.mrb[0].mxu0
    %1871 = vmatprep.mubr.f32.mxu0 0.0
    %1872 = vmatmul.mubr.f32.gmra.mrb[0].mxu0 %v1674
    %v1873 = vpop.f32.mrb[0].mxu0
    %v1874 = vadd.f32 0.0, %v1873
    %v1875 = vpop.f32.mrb[0].mxu0
    %1876 = vmatprep.mubr.f32.mxu0 0.0
    %1877 = vmatmul.mubr.f32.gmra.mrb[0].mxu0 %v1677
    %v1878 = vpop.f32.mrb[0].mxu0
    %v1879 = vadd.f32 0.0, %v1878
    %v1880 = vpop.f32.mrb[0].mxu0
    %1881 = vmatprep.mubr.f32.mxu0 0.0
    %1882 = vmatmul.mubr.f32.gmra.mrb[0].mxu0 %v1680
    %v1883 = vpop.f32.mrb[0].mxu0
    %v1884 = vadd.f32 0.0, %v1883
    %v1885 = vpop.f32.mrb[0].mxu0
    %1886 = vmatprep.mubr.f32.mxu0 0.0
    %1887 = vmatmul.mubr.f32.gmra.mrb[0].mxu0 %v1683
    %v1888 = vpop.f32.mrb[0].mxu0
    %v1889 = vadd.f32 0.0, %v1888
    %v1890 = vpop.f32.mrb[0].mxu0
    %1891 = vmatprep.mubr.f32.mxu0 0.0
    %1892 = vmatmul.mubr.f32.gmra.mrb[0].mxu0 %v1686
    %v1893 = vpop.f32.mrb[0].mxu0
    %v1894 = vadd.f32 0.0, %v1893
    %v1895 = vpop.f32.mrb[0].mxu0
    %1896 = vmatprep.mubr.f32.mxu0 0.0
    %1897 = vmatmul.mubr.f32.gmra.mrb[0].mxu0 %v1689
    %v1898 = vpop.f32.mrb[0].mxu0
    %v1899 = vadd.f32 0.0, %v1898
    %v1900 = vpop.f32.mrb[0].mxu0
    %1901 = vmatprep.mubr.f32.mxu0 0.0
    %1902 = vmatmul.mubr.f32.gmra.mrb[0].mxu0 %v1692
    %v1903 = vpop.f32.mrb[0].mxu0
    %v1904 = vadd.f32 0.0, %v1903
    %v1905 = vpop.f32.mrb[0].mxu0
    %1906 = vmatprep.mubr.f32.mxu0 0.0
    %1907 = vmatmul.mubr.f32.gmra.mrb[0].mxu0 %v1695
    %v1908 = vpop.f32.mrb[0].mxu0
    %v1909 = vadd.f32 0.0, %v1908
    %v1910 = vpop.f32.mrb[0].mxu0
    %1911 = vmatprep.mubr.f32.mxu0 0.0
    %1912 = vmatmul.mubr.f32.gmra.mrb[0].mxu0 %v1698
    %v1913 = vpop.f32.mrb[0].mxu0
    %v1914 = vadd.f32 0.0, %v1913
    %v1915 = vpop.f32.mrb[0].mxu0
    %1916 = vmatprep.mubr.f32.mxu0 0.0
    %1917 = vmatmul.mubr.f32.gmra.mrb[0].mxu0 %v1701
    %v1918 = vpop.f32.mrb[0].mxu0
    %v1919 = vadd.f32 0.0, %v1918
    %v1920 = vpop.f32.mrb[0].mxu0
    %1921 = vmatprep.mubr.f32.mxu0 0.0
    %1922 = vmatmul.mubr.f32.gmra.mrb[0].mxu0 %v1704
    %v1923 = vpop.f32.mrb[0].mxu0
    %v1924 = vadd.f32 0.0, %v1923
    %v1925 = vpop.f32.mrb[0].mxu0
    %1926 = vmatprep.mubr.f32.mxu0 0.0
    %1927 = vmatmul.mubr.f32.gmra.mrb[0].mxu0 %v1707
    %v1928 = vpop.f32.mrb[0].mxu0
    %v1929 = vadd.f32 0.0, %v1928
    %v1930 = vpop.f32.mrb[0].mxu0
    %1931 = vmatprep.mubr.f32.mxu0 0.0
    %1932 = vmatmul.mubr.f32.gmra.mrb[0].mxu0 %v1710
    %v1933 = vpop.f32.mrb[0].mxu0
    %v1934 = vadd.f32 0.0, %v1933
    %v1935 = vpop.f32.mrb[0].mxu0
    %1936 = vmatprep.mubr.f32.mxu0 0.0
    %1937 = vmatmul.mubr.f32.gmra.mrb[0].mxu0 %v1713
    %v1938 = vpop.f32.mrb[0].mxu0
    %v1939 = vadd.f32 0.0, %v1938
    %v1940 = vpop.f32.mrb[0].mxu0
    %1941 = vmatprep.mubr.f32.mxu0 0.0
    %1942 = vmatmul.mubr.f32.gmra.mrb[0].mxu0 %v1716
    %v1943 = vpop.f32.mrb[0].mxu0
    %v1944 = vadd.f32 0.0, %v1943
    %v1945 = vpop.f32.mrb[0].mxu0
    %1946 = vmatprep.mubr.f32.mxu0 0.0
    %1947 = vmatmul.mubr.f32.gmra.mrb[0].mxu0 %v1719
    %v1948 = vpop.f32.mrb[0].mxu0
    %v1949 = vadd.f32 0.0, %v1948
    %v1950 = vpop.f32.mrb[0].mxu0
    %1951 = vmatprep.mubr.f32.mxu0 0.0
    %1952 = vmatmul.mubr.f32.gmra.mrb[0].mxu0 %v1722
    %v1953 = vpop.f32.mrb[0].mxu0
    %v1954 = vadd.f32 0.0, %v1953
    %v1955 = vpop.f32.mrb[0].mxu0
    %1956 = vmatprep.mubr.f32.mxu0 0.0
    %1957 = vmatmul.mubr.f32.gmra.mrb[0].mxu0 %v1725
    %v1958 = vpop.f32.mrb[0].mxu0
    %v1959 = vadd.f32 0.0, %v1958
    %v1960 = vpop.f32.mrb[0].mxu0
    %1961 = vmatprep.mubr.f32.mxu0 0.0
    %1962 = vmatmul.mubr.f32.gmra.mrb[0].mxu0 %v1728
    %v1963 = vpop.f32.mrb[0].mxu0
    %v1964 = vadd.f32 0.0, %v1963
    %v1965 = vpop.f32.mrb[0].mxu0
    %1966 = vmatprep.mubr.f32.mxu0 0.0
    %1967 = vmatmul.mubr.f32.gmra.mrb[0].mxu0 %v1731
    %v1968 = vpop.f32.mrb[0].mxu0
    %v1969 = vadd.f32 0.0, %v1968
    %v1970 = vpop.f32.mrb[0].mxu0
    %1971 = vmatprep.mubr.f32.mxu0 0.0
    %1972 = vmatmul.mubr.f32.gmra.mrb[0].mxu0 %v1734
    %v1973 = vpop.f32.mrb[0].mxu0
    %v1974 = vadd.f32 0.0, %v1973
    %v1975 = vpop.f32.mrb[0].mxu0
    %1976 = vmatprep.mubr.f32.mxu0 0.0
    %1977 = vmatmul.mubr.f32.gmra.mrb[0].mxu0 %v1737
    %v1978 = vpop.f32.mrb[0].mxu0
    %v1979 = vadd.f32 0.0, %v1978
    %v1980 = vpop.f32.mrb[0].mxu0
    %1981 = vdwg.mxu0
    %v1982 = vadd.f32 %v1562, %v1809
    %v1983 = vadd.f32 %v1563, %v1814
    %v1984 = vadd.f32 %v1564, %v1819
    %v1985 = vadd.f32 %v1565, %v1824
    %v1986 = vadd.f32 %v1566, %v1829
    %v1987 = vadd.f32 %v1567, %v1834
    %v1988 = vadd.f32 %v1568, %v1839
    %v1989 = vadd.f32 %v1569, %v1844
    %v1990 = vadd.f32 %v1570, %v1849
    %v1991 = vadd.f32 %v1571, %v1854
    %v1992 = vadd.f32 %v1572, %v1859
    %v1993 = vadd.f32 %v1573, %v1864
    %v1994 = vadd.f32 %v1574, %v1869
    %v1995 = vadd.f32 %v1575, %v1874
    %v1996 = vadd.f32 %v1576, %v1879
    %v1997 = vadd.f32 %v1577, %v1884
    %v1998 = vadd.f32 %v1578, %v1889
    %v1999 = vadd.f32 %v1579, %v1894
    %v2000 = vadd.f32 %v1580, %v1899
    %v2001 = vadd.f32 %v1581, %v1904
    %v2002 = vadd.f32 %v1582, %v1909
    %v2003 = vadd.f32 %v1583, %v1914
    %v2004 = vadd.f32 %v1584, %v1919
    %v2005 = vadd.f32 %v1585, %v1924
    %v2006 = vadd.f32 %v1586, %v1929
    %v2007 = vadd.f32 %v1587, %v1934
    %v2008 = vadd.f32 %v1588, %v1939
    %v2009 = vadd.f32 %v1589, %v1944
    %v2010 = vadd.f32 %v1590, %v1949
    %v2011 = vadd.f32 %v1591, %v1954
    %v2012 = vadd.f32 %v1592, %v1959
    %v2013 = vadd.f32 %v1593, %v1964
    %v2014 = vadd.f32 %v1594, %v1969
    %v2015 = vadd.f32 %v1595, %v1974
    %v2016 = vadd.f32 %v1596, %v1979
    %v2017 = vld [vmem:[%s0 + $0x48] sm:$0xff]
    %v2018 = vld [vmem:[%s0 + $0x50] sm:$0xff]
    %v2019 = vld [vmem:[%s0 + $0x58] sm:$0xff]
    %v2020 = vld [vmem:[%s0 + $0x60] sm:$0xff]
    %v2021 = vld [vmem:[%s0 + $0x68] sm:$0xff]
    %v2022 = vld [vmem:[%s0 + $0x70] sm:$0xff]
    %v2023 = vld [vmem:[%s0 + $0x78] sm:$0xff]
    %v2024 = vld [vmem:[%s0 + $0x80] sm:$0xff]
    %v2025 = vld [vmem:[%s0 + $0x88] sm:$0xff]
    %v2026 = vld [vmem:[%s0 + $0x90] sm:$0xff]
    %v2027 = vld [vmem:[%s0 + $0x98] sm:$0xff]
    %v2028 = vld [vmem:[%s0 + $0xa0] sm:$0xff]
    %v2029 = vld [vmem:[%s0 + $0xa8] sm:$0xff]
    %v2030 = vld [vmem:[%s0 + $0xb0] sm:$0xff]
    %v2031 = vld [vmem:[%s0 + $0xb8] sm:$0xff]
    %v2032 = vld [vmem:[%s0 + $0xc0] sm:$0xff]
    %v2033 = vld [vmem:[%s0 + $0xc8] sm:$0xff]
    %v2034 = vld [vmem:[%s0 + $0xd0] sm:$0xff]
    %v2035 = vld [vmem:[%s0 + $0xd8] sm:$0xff]
    %v2036 = vld [vmem:[%s0 + $0xe0] sm:$0xff]
    %v2037 = vld [vmem:[%s0 + $0xe8] sm:$0xff]
    %v2038 = vld [vmem:[%s0 + $0xf0] sm:$0xff]
    %v2039 = vld [vmem:[%s0 + $0xf8] sm:$0xff]
    %v2040 = vld [vmem:[%s0 + $0x100] sm:$0xff]
    %v2041 = vld [vmem:[%s0 + $0x108] sm:$0xff]
    %v2042 = vld [vmem:[%s0 + $0x110] sm:$0xff]
    %v2043 = vld [vmem:[%s0 + $0x118] sm:$0xff]
    %v2044 = vld [vmem:[%s0 + $0x120] sm:$0xff]
    %v2045 = vld [vmem:[%s0 + $0x128] sm:$0xff]
    %v2046 = vld [vmem:[%s0 + $0x130] sm:$0xff]
    %v2047 = vld [vmem:[%s0 + $0x138] sm:$0xff]
    %v2048 = vld [vmem:[%s0 + $0x140] sm:$0xff]
    %v2049 = vld [vmem:[%s0 + $0x148] sm:$0xff]
    %v2050 = vld [vmem:[%s0 + $0x150] sm:$0xff]
    %v2051 = vld [vmem:[%s0 + $0x158] sm:$0xff]
    %s2052 = scalar_lea.vmem [#allocation4], 20
    %v2053 = vld [vmem:[%s2052] sm:$0x7]
    %v2055 = vsel %vm161, %v2017, 0
    %v2058 = vsel %vm161, %v2018, 0
    %v2061 = vsel %vm161, %v2019, 0
    %v2064 = vsel %vm161, %v2020, 0
    %v2067 = vsel %vm161, %v2021, 0
    %v2070 = vsel %vm161, %v2022, 0
    %v2073 = vsel %vm161, %v2023, 0
    %v2076 = vsel %vm161, %v2024, 0
    %v2079 = vsel %vm161, %v2025, 0
    %v2082 = vsel %vm161, %v2026, 0
    %v2085 = vsel %vm161, %v2027, 0
    %v2088 = vsel %vm161, %v2028, 0
    %v2091 = vsel %vm161, %v2029, 0
    %v2094 = vsel %vm161, %v2030, 0
    %v2097 = vsel %vm161, %v2031, 0
    %v2100 = vsel %vm161, %v2032, 0
    %v2103 = vsel %vm161, %v2033, 0
    %v2106 = vsel %vm161, %v2034, 0
    %v2109 = vsel %vm161, %v2035, 0
    %v2112 = vsel %vm161, %v2036, 0
    %v2115 = vsel %vm161, %v2037, 0
    %v2118 = vsel %vm161, %v2038, 0
    %v2121 = vsel %vm161, %v2039, 0
    %v2124 = vsel %vm161, %v2040, 0
    %v2127 = vsel %vm161, %v2041, 0
    %v2130 = vsel %vm161, %v2042, 0
    %v2133 = vsel %vm161, %v2043, 0
    %v2136 = vsel %vm161, %v2044, 0
    %v2139 = vsel %vm161, %v2045, 0
    %v2142 = vsel %vm161, %v2046, 0
    %v2145 = vsel %vm161, %v2047, 0
    %v2148 = vsel %vm161, %v2048, 0
    %v2151 = vsel %vm161, %v2049, 0
    %v2154 = vsel %vm161, %v2050, 0
    %v2157 = vsel %vm161, %v2051, 0
    %v2160 = vsel %vm267, %v2053, 0
    %2162 = vmatprep.subr.mxu0 0.0
    %2163 = vmatpush1.msra.mxu0 %v2160
    %2164 = vmatprep.subr.mxu0 0.0
    %2165 = vmatpush1.msra.mxu0 0.0
    %2166 = vmatprep.subr.mxu0 0.0
    %2167 = vmatpush1.msra.mxu0 0.0
    %2168 = vmatprep.subr.mxu0 0.0
    %2169 = vmatpush1.msra.mxu0 0.0
    %2170 = vmatprep.subr.mxu0 0.0
    %2171 = vmatpush1.msra.mxu0 0.0
    %2172 = vmatprep.subr.mxu0 0.0
    %2173 = vmatpush1.msra.mxu0 0.0
    %2174 = vmatprep.subr.mxu0 0.0
    %2175 = vmatpush1.msra.mxu0 0.0
    %2176 = vmatprep.subr.mxu0 0.0
    %2177 = vmatpush1.msra.mxu0 0.0
    %2178 = vmatprep.subr.mxu0 0.0
    %2179 = vmatpush1.msra.mxu0 0.0
    %2180 = vmatprep.subr.mxu0 0.0
    %2181 = vmatpush1.msra.mxu0 0.0
    %2182 = vmatprep.subr.mxu0 0.0
    %2183 = vmatpush1.msra.mxu0 0.0
    %2184 = vmatprep.subr.mxu0 0.0
    %2185 = vmatpush1.msra.mxu0 0.0
    %2186 = vmatprep.subr.mxu0 0.0
    %2187 = vmatpush1.msra.mxu0 0.0
    %2188 = vmatprep.subr.mxu0 0.0
    %2189 = vmatpush1.msra.mxu0 0.0
    %2190 = vmatprep.subr.mxu0 0.0
    %2191 = vmatpush1.msra.mxu0 0.0
    %2192 = vmatprep.subr.mxu0 0.0
    %2193 = vmatpush1.msra.mxu0 0.0
    %2194 = vmatprep.subr.mxu0 0.0
    %2195 = vmatpush1.msra.mxu0 0.0
    %2196 = vmatprep.subr.mxu0 0.0
    %2197 = vmatpush1.msra.mxu0 0.0
    %2198 = vmatprep.subr.mxu0 0.0
    %2199 = vmatpush1.msra.mxu0 0.0
    %2200 = vmatprep.subr.mxu0 0.0
    %2201 = vmatpush1.msra.mxu0 0.0
    %2202 = vmatprep.subr.mxu0 0.0
    %2203 = vmatpush1.msra.mxu0 0.0
    %2204 = vmatprep.subr.mxu0 0.0
    %2205 = vmatpush1.msra.mxu0 0.0
    %2206 = vmatprep.subr.mxu0 0.0
    %2207 = vmatpush1.msra.mxu0 0.0
    %2208 = vmatprep.subr.mxu0 0.0
    %2209 = vmatpush1.msra.mxu0 0.0
    %2210 = vmatprep.subr.mxu0 0.0
    %2211 = vmatpush1.msra.mxu0 0.0
    %2212 = vmatprep.subr.mxu0 0.0
    %2213 = vmatpush1.msra.mxu0 0.0
    %2214 = vmatprep.subr.mxu0 0.0
    %2215 = vmatpush1.msra.mxu0 0.0
    %2216 = vmatprep.subr.mxu0 0.0
    %2217 = vmatpush1.msra.mxu0 0.0
    %2218 = vmatprep.subr.mxu0 0.0
    %2219 = vmatpush1.msra.mxu0 0.0
    %2220 = vmatprep.subr.mxu0 0.0
    %2221 = vmatpush1.msra.mxu0 0.0
    %2222 = vmatprep.subr.mxu0 0.0
    %2223 = vmatpush1.msra.mxu0 0.0
    %2224 = vmatprep.subr.mxu0 0.0
    %2225 = vmatpush1.msra.mxu0 0.0
    %2226 = vmatprep.mubr.f32.mxu0 0.0
    %2227 = vmatmul.mubr.f32.gmra.mrb[0].mxu0 %v2055
    %v2228 = vpop.f32.mrb[0].mxu0
    %v2229 = vadd.f32 0.0, %v2228
    %v2230 = vpop.f32.mrb[0].mxu0
    %2231 = vmatprep.mubr.f32.mxu0 0.0
    %2232 = vmatmul.mubr.f32.gmra.mrb[0].mxu0 %v2058
    %v2233 = vpop.f32.mrb[0].mxu0
    %v2234 = vadd.f32 0.0, %v2233
    %v2235 = vpop.f32.mrb[0].mxu0
    %2236 = vmatprep.mubr.f32.mxu0 0.0
    %2237 = vmatmul.mubr.f32.gmra.mrb[0].mxu0 %v2061
    %v2238 = vpop.f32.mrb[0].mxu0
    %v2239 = vadd.f32 0.0, %v2238
    %v2240 = vpop.f32.mrb[0].mxu0
    %2241 = vmatprep.mubr.f32.mxu0 0.0
    %2242 = vmatmul.mubr.f32.gmra.mrb[0].mxu0 %v2064
    %v2243 = vpop.f32.mrb[0].mxu0
    %v2244 = vadd.f32 0.0, %v2243
    %v2245 = vpop.f32.mrb[0].mxu0
    %2246 = vmatprep.mubr.f32.mxu0 0.0
    %2247 = vmatmul.mubr.f32.gmra.mrb[0].mxu0 %v2067
    %v2248 = vpop.f32.mrb[0].mxu0
    %v2249 = vadd.f32 0.0, %v2248
    %v2250 = vpop.f32.mrb[0].mxu0
    %2251 = vmatprep.mubr.f32.mxu0 0.0
    %2252 = vmatmul.mubr.f32.gmra.mrb[0].mxu0 %v2070
    %v2253 = vpop.f32.mrb[0].mxu0
    %v2254 = vadd.f32 0.0, %v2253
    %v2255 = vpop.f32.mrb[0].mxu0
    %2256 = vmatprep.mubr.f32.mxu0 0.0
    %2257 = vmatmul.mubr.f32.gmra.mrb[0].mxu0 %v2073
    %v2258 = vpop.f32.mrb[0].mxu0
    %v2259 = vadd.f32 0.0, %v2258
    %v2260 = vpop.f32.mrb[0].mxu0
    %2261 = vmatprep.mubr.f32.mxu0 0.0
    %2262 = vmatmul.mubr.f32.gmra.mrb[0].mxu0 %v2076
    %v2263 = vpop.f32.mrb[0].mxu0
    %v2264 = vadd.f32 0.0, %v2263
    %v2265 = vpop.f32.mrb[0].mxu0
    %2266 = vmatprep.mubr.f32.mxu0 0.0
    %2267 = vmatmul.mubr.f32.gmra.mrb[0].mxu0 %v2079
    %v2268 = vpop.f32.mrb[0].mxu0
    %v2269 = vadd.f32 0.0, %v2268
    %v2270 = vpop.f32.mrb[0].mxu0
    %2271 = vmatprep.mubr.f32.mxu0 0.0
    %2272 = vmatmul.mubr.f32.gmra.mrb[0].mxu0 %v2082
    %v2273 = vpop.f32.mrb[0].mxu0
    %v2274 = vadd.f32 0.0, %v2273
    %v2275 = vpop.f32.mrb[0].mxu0
    %2276 = vmatprep.mubr.f32.mxu0 0.0
    %2277 = vmatmul.mubr.f32.gmra.mrb[0].mxu0 %v2085
    %v2278 = vpop.f32.mrb[0].mxu0
    %v2279 = vadd.f32 0.0, %v2278
    %v2280 = vpop.f32.mrb[0].mxu0
    %2281 = vmatprep.mubr.f32.mxu0 0.0
    %2282 = vmatmul.mubr.f32.gmra.mrb[0].mxu0 %v2088
    %v2283 = vpop.f32.mrb[0].mxu0
    %v2284 = vadd.f32 0.0, %v2283
    %v2285 = vpop.f32.mrb[0].mxu0
    %2286 = vmatprep.mubr.f32.mxu0 0.0
    %2287 = vmatmul.mubr.f32.gmra.mrb[0].mxu0 %v2091
    %v2288 = vpop.f32.mrb[0].mxu0
    %v2289 = vadd.f32 0.0, %v2288
    %v2290 = vpop.f32.mrb[0].mxu0
    %2291 = vmatprep.mubr.f32.mxu0 0.0
    %2292 = vmatmul.mubr.f32.gmra.mrb[0].mxu0 %v2094
    %v2293 = vpop.f32.mrb[0].mxu0
    %v2294 = vadd.f32 0.0, %v2293
    %v2295 = vpop.f32.mrb[0].mxu0
    %2296 = vmatprep.mubr.f32.mxu0 0.0
    %2297 = vmatmul.mubr.f32.gmra.mrb[0].mxu0 %v2097
    %v2298 = vpop.f32.mrb[0].mxu0
    %v2299 = vadd.f32 0.0, %v2298
    %v2300 = vpop.f32.mrb[0].mxu0
    %2301 = vmatprep.mubr.f32.mxu0 0.0
    %2302 = vmatmul.mubr.f32.gmra.mrb[0].mxu0 %v2100
    %v2303 = vpop.f32.mrb[0].mxu0
    %v2304 = vadd.f32 0.0, %v2303
    %v2305 = vpop.f32.mrb[0].mxu0
    %2306 = vmatprep.mubr.f32.mxu0 0.0
    %2307 = vmatmul.mubr.f32.gmra.mrb[0].mxu0 %v2103
    %v2308 = vpop.f32.mrb[0].mxu0
    %v2309 = vadd.f32 0.0, %v2308
    %v2310 = vpop.f32.mrb[0].mxu0
    %2311 = vmatprep.mubr.f32.mxu0 0.0
    %2312 = vmatmul.mubr.f32.gmra.mrb[0].mxu0 %v2106
    %v2313 = vpop.f32.mrb[0].mxu0
    %v2314 = vadd.f32 0.0, %v2313
    %v2315 = vpop.f32.mrb[0].mxu0
    %2316 = vmatprep.mubr.f32.mxu0 0.0
    %2317 = vmatmul.mubr.f32.gmra.mrb[0].mxu0 %v2109
    %v2318 = vpop.f32.mrb[0].mxu0
    %v2319 = vadd.f32 0.0, %v2318
    %v2320 = vpop.f32.mrb[0].mxu0
    %2321 = vmatprep.mubr.f32.mxu0 0.0
    %2322 = vmatmul.mubr.f32.gmra.mrb[0].mxu0 %v2112
    %v2323 = vpop.f32.mrb[0].mxu0
    %v2324 = vadd.f32 0.0, %v2323
    %v2325 = vpop.f32.mrb[0].mxu0
    %2326 = vmatprep.mubr.f32.mxu0 0.0
    %2327 = vmatmul.mubr.f32.gmra.mrb[0].mxu0 %v2115
    %v2328 = vpop.f32.mrb[0].mxu0
    %v2329 = vadd.f32 0.0, %v2328
    %v2330 = vpop.f32.mrb[0].mxu0
    %2331 = vmatprep.mubr.f32.mxu0 0.0
    %2332 = vmatmul.mubr.f32.gmra.mrb[0].mxu0 %v2118
    %v2333 = vpop.f32.mrb[0].mxu0
    %v2334 = vadd.f32 0.0, %v2333
    %v2335 = vpop.f32.mrb[0].mxu0
    %2336 = vmatprep.mubr.f32.mxu0 0.0
    %2337 = vmatmul.mubr.f32.gmra.mrb[0].mxu0 %v2121
    %v2338 = vpop.f32.mrb[0].mxu0
    %v2339 = vadd.f32 0.0, %v2338
    %v2340 = vpop.f32.mrb[0].mxu0
    %2341 = vmatprep.mubr.f32.mxu0 0.0
    %2342 = vmatmul.mubr.f32.gmra.mrb[0].mxu0 %v2124
    %v2343 = vpop.f32.mrb[0].mxu0
    %v2344 = vadd.f32 0.0, %v2343
    %v2345 = vpop.f32.mrb[0].mxu0
    %2346 = vmatprep.mubr.f32.mxu0 0.0
    %2347 = vmatmul.mubr.f32.gmra.mrb[0].mxu0 %v2127
    %v2348 = vpop.f32.mrb[0].mxu0
    %v2349 = vadd.f32 0.0, %v2348
    %v2350 = vpop.f32.mrb[0].mxu0
    %2351 = vmatprep.mubr.f32.mxu0 0.0
    %2352 = vmatmul.mubr.f32.gmra.mrb[0].mxu0 %v2130
    %v2353 = vpop.f32.mrb[0].mxu0
    %v2354 = vadd.f32 0.0, %v2353
    %v2355 = vpop.f32.mrb[0].mxu0
    %2356 = vmatprep.mubr.f32.mxu0 0.0
    %2357 = vmatmul.mubr.f32.gmra.mrb[0].mxu0 %v2133
    %v2358 = vpop.f32.mrb[0].mxu0
    %v2359 = vadd.f32 0.0, %v2358
    %v2360 = vpop.f32.mrb[0].mxu0
    %2361 = vmatprep.mubr.f32.mxu0 0.0
    %2362 = vmatmul.mubr.f32.gmra.mrb[0].mxu0 %v2136
    %v2363 = vpop.f32.mrb[0].mxu0
    %v2364 = vadd.f32 0.0, %v2363
    %v2365 = vpop.f32.mrb[0].mxu0
    %2366 = vmatprep.mubr.f32.mxu0 0.0
    %2367 = vmatmul.mubr.f32.gmra.mrb[0].mxu0 %v2139
    %v2368 = vpop.f32.mrb[0].mxu0
    %v2369 = vadd.f32 0.0, %v2368
    %v2370 = vpop.f32.mrb[0].mxu0
    %2371 = vmatprep.mubr.f32.mxu0 0.0
    %2372 = vmatmul.mubr.f32.gmra.mrb[0].mxu0 %v2142
    %v2373 = vpop.f32.mrb[0].mxu0
    %v2374 = vadd.f32 0.0, %v2373
    %v2375 = vpop.f32.mrb[0].mxu0
    %2376 = vmatprep.mubr.f32.mxu0 0.0
    %2377 = vmatmul.mubr.f32.gmra.mrb[0].mxu0 %v2145
    %v2378 = vpop.f32.mrb[0].mxu0
    %v2379 = vadd.f32 0.0, %v2378
    %v2380 = vpop.f32.mrb[0].mxu0
    %2381 = vmatprep.mubr.f32.mxu0 0.0
    %2382 = vmatmul.mubr.f32.gmra.mrb[0].mxu0 %v2148
    %v2383 = vpop.f32.mrb[0].mxu0
    %v2384 = vadd.f32 0.0, %v2383
    %v2385 = vpop.f32.mrb[0].mxu0
    %2386 = vmatprep.mubr.f32.mxu0 0.0
    %2387 = vmatmul.mubr.f32.gmra.mrb[0].mxu0 %v2151
    %v2388 = vpop.f32.mrb[0].mxu0
    %v2389 = vadd.f32 0.0, %v2388
    %v2390 = vpop.f32.mrb[0].mxu0
    %2391 = vmatprep.mubr.f32.mxu0 0.0
    %2392 = vmatmul.mubr.f32.gmra.mrb[0].mxu0 %v2154
    %v2393 = vpop.f32.mrb[0].mxu0
    %v2394 = vadd.f32 0.0, %v2393
    %v2395 = vpop.f32.mrb[0].mxu0
    %2396 = vmatprep.mubr.f32.mxu0 0.0
    %2397 = vmatmul.mubr.f32.gmra.mrb[0].mxu0 %v2157
    %v2398 = vpop.f32.mrb[0].mxu0
    %v2399 = vadd.f32 0.0, %v2398
    %v2400 = vpop.f32.mrb[0].mxu0
    %2401 = vdwg.mxu0
    %v2402 = vadd.f32 %v1982, %v2229
    %v2403 = vadd.f32 %v1983, %v2234
    %v2404 = vadd.f32 %v1984, %v2239
    %v2405 = vadd.f32 %v1985, %v2244
    %v2406 = vadd.f32 %v1986, %v2249
    %v2407 = vadd.f32 %v1987, %v2254
    %v2408 = vadd.f32 %v1988, %v2259
    %v2409 = vadd.f32 %v1989, %v2264
    %v2410 = vadd.f32 %v1990, %v2269
    %v2411 = vadd.f32 %v1991, %v2274
    %v2412 = vadd.f32 %v1992, %v2279
    %v2413 = vadd.f32 %v1993, %v2284
    %v2414 = vadd.f32 %v1994, %v2289
    %v2415 = vadd.f32 %v1995, %v2294
    %v2416 = vadd.f32 %v1996, %v2299
    %v2417 = vadd.f32 %v1997, %v2304
    %v2418 = vadd.f32 %v1998, %v2309
    %v2419 = vadd.f32 %v1999, %v2314
    %v2420 = vadd.f32 %v2000, %v2319
    %v2421 = vadd.f32 %v2001, %v2324
    %v2422 = vadd.f32 %v2002, %v2329
    %v2423 = vadd.f32 %v2003, %v2334
    %v2424 = vadd.f32 %v2004, %v2339
    %v2425 = vadd.f32 %v2005, %v2344
    %v2426 = vadd.f32 %v2006, %v2349
    %v2427 = vadd.f32 %v2007, %v2354
    %v2428 = vadd.f32 %v2008, %v2359
    %v2429 = vadd.f32 %v2009, %v2364
    %v2430 = vadd.f32 %v2010, %v2369
    %v2431 = vadd.f32 %v2011, %v2374
    %v2432 = vadd.f32 %v2012, %v2379
    %v2433 = vadd.f32 %v2013, %v2384
    %v2434 = vadd.f32 %v2014, %v2389
    %v2435 = vadd.f32 %v2015, %v2394
    %v2436 = vadd.f32 %v2016, %v2399
    %v2437 = vld [vmem:[%s0 + $0x70] sm:$0xff]
    %v2438 = vld [vmem:[%s0 + $0x78] sm:$0xff]
    %v2439 = vld [vmem:[%s0 + $0x80] sm:$0xff]
    %v2440 = vld [vmem:[%s0 + $0x88] sm:$0xff]
    %v2441 = vld [vmem:[%s0 + $0x90] sm:$0xff]
    %v2442 = vld [vmem:[%s0 + $0x98] sm:$0xff]
    %v2443 = vld [vmem:[%s0 + $0xa0] sm:$0xff]
    %v2444 = vld [vmem:[%s0 + $0xa8] sm:$0xff]
    %v2445 = vld [vmem:[%s0 + $0xb0] sm:$0xff]
    %v2446 = vld [vmem:[%s0 + $0xb8] sm:$0xff]
    %v2447 = vld [vmem:[%s0 + $0xc0] sm:$0xff]
    %v2448 = vld [vmem:[%s0 + $0xc8] sm:$0xff]
    %v2449 = vld [vmem:[%s0 + $0xd0] sm:$0xff]
    %v2450 = vld [vmem:[%s0 + $0xd8] sm:$0xff]
    %v2451 = vld [vmem:[%s0 + $0xe0] sm:$0xff]
    %v2452 = vld [vmem:[%s0 + $0xe8] sm:$0xff]
    %v2453 = vld [vmem:[%s0 + $0xf0] sm:$0xff]
    %v2454 = vld [vmem:[%s0 + $0xf8] sm:$0xff]
    %v2455 = vld [vmem:[%s0 + $0x100] sm:$0xff]
    %v2456 = vld [vmem:[%s0 + $0x108] sm:$0xff]
    %v2457 = vld [vmem:[%s0 + $0x110] sm:$0xff]
    %v2458 = vld [vmem:[%s0 + $0x118] sm:$0xff]
    %v2459 = vld [vmem:[%s0 + $0x120] sm:$0xff]
    %v2460 = vld [vmem:[%s0 + $0x128] sm:$0xff]
    %v2461 = vld [vmem:[%s0 + $0x130] sm:$0xff]
    %v2462 = vld [vmem:[%s0 + $0x138] sm:$0xff]
    %v2463 = vld [vmem:[%s0 + $0x140] sm:$0xff]
    %v2464 = vld [vmem:[%s0 + $0x148] sm:$0xff]
    %v2465 = vld [vmem:[%s0 + $0x150] sm:$0xff]
    %v2466 = vld [vmem:[%s0 + $0x158] sm:$0xff]
    %v2467 = vld [vmem:[%s0 + $0x160] sm:$0xff]
    %v2468 = vld [vmem:[%s0 + $0x168] sm:$0xff]
    %v2469 = vld [vmem:[%s0 + $0x170] sm:$0xff]
    %v2470 = vld [vmem:[%s0 + $0x178] sm:$0xff]
    %v2471 = vld [vmem:[%s0 + $0x180] sm:$0xff]
    %s2472 = scalar_lea.vmem [#allocation4], 24
    %v2473 = vld [vmem:[%s2472] sm:$0x7]
    %v2475 = vsel %vm161, %v2437, 0
    %v2478 = vsel %vm161, %v2438, 0
    %v2481 = vsel %vm161, %v2439, 0
    %v2484 = vsel %vm161, %v2440, 0
    %v2487 = vsel %vm161, %v2441, 0
    %v2490 = vsel %vm161, %v2442, 0
    %v2493 = vsel %vm161, %v2443, 0
    %v2496 = vsel %vm161, %v2444, 0
    %v2499 = vsel %vm161, %v2445, 0
    %v2502 = vsel %vm161, %v2446, 0
    %v2505 = vsel %vm161, %v2447, 0
    %v2508 = vsel %vm161, %v2448, 0
    %v2511 = vsel %vm161, %v2449, 0
    %v2514 = vsel %vm161, %v2450, 0
    %v2517 = vsel %vm161, %v2451, 0
    %v2520 = vsel %vm161, %v2452, 0
    %v2523 = vsel %vm161, %v2453, 0
    %v2526 = vsel %vm161, %v2454, 0
    %v2529 = vsel %vm161, %v2455, 0
    %v2532 = vsel %vm161, %v2456, 0
    %v2535 = vsel %vm161, %v2457, 0
    %v2538 = vsel %vm161, %v2458, 0
    %v2541 = vsel %vm161, %v2459, 0
    %v2544 = vsel %vm161, %v2460, 0
    %v2547 = vsel %vm161, %v2461, 0
    %v2550 = vsel %vm161, %v2462, 0
    %v2553 = vsel %vm161, %v2463, 0
    %v2556 = vsel %vm161, %v2464, 0
    %v2559 = vsel %vm161, %v2465, 0
    %v2562 = vsel %vm161, %v2466, 0
    %v2565 = vsel %vm161, %v2467, 0
    %v2568 = vsel %vm161, %v2468, 0
    %v2571 = vsel %vm161, %v2469, 0
    %v2574 = vsel %vm161, %v2470, 0
    %v2577 = vsel %vm161, %v2471, 0
    %v2580 = vsel %vm267, %v2473, 0
    %2582 = vmatprep.subr.mxu0 0.0
    %2583 = vmatpush1.msra.mxu0 %v2580
    %2584 = vmatprep.subr.mxu0 0.0
    %2585 = vmatpush1.msra.mxu0 0.0
    %2586 = vmatprep.subr.mxu0 0.0
    %2587 = vmatpush1.msra.mxu0 0.0
    %2588 = vmatprep.subr.mxu0 0.0
    %2589 = vmatpush1.msra.mxu0 0.0
    %2590 = vmatprep.subr.mxu0 0.0
    %2591 = vmatpush1.msra.mxu0 0.0
    %2592 = vmatprep.subr.mxu0 0.0
    %2593 = vmatpush1.msra.mxu0 0.0
    %2594 = vmatprep.subr.mxu0 0.0
    %2595 = vmatpush1.msra.mxu0 0.0
    %2596 = vmatprep.subr.mxu0 0.0
    %2597 = vmatpush1.msra.mxu0 0.0
    %2598 = vmatprep.subr.mxu0 0.0
    %2599 = vmatpush1.msra.mxu0 0.0
    %2600 = vmatprep.subr.mxu0 0.0
    %2601 = vmatpush1.msra.mxu0 0.0
    %2602 = vmatprep.subr.mxu0 0.0
    %2603 = vmatpush1.msra.mxu0 0.0
    %2604 = vmatprep.subr.mxu0 0.0
    %2605 = vmatpush1.msra.mxu0 0.0
    %2606 = vmatprep.subr.mxu0 0.0
    %2607 = vmatpush1.msra.mxu0 0.0
    %2608 = vmatprep.subr.mxu0 0.0
    %2609 = vmatpush1.msra.mxu0 0.0
    %2610 = vmatprep.subr.mxu0 0.0
    %2611 = vmatpush1.msra.mxu0 0.0
    %2612 = vmatprep.subr.mxu0 0.0
    %2613 = vmatpush1.msra.mxu0 0.0
    %2614 = vmatprep.subr.mxu0 0.0
    %2615 = vmatpush1.msra.mxu0 0.0
    %2616 = vmatprep.subr.mxu0 0.0
    %2617 = vmatpush1.msra.mxu0 0.0
    %2618 = vmatprep.subr.mxu0 0.0
    %2619 = vmatpush1.msra.mxu0 0.0
    %2620 = vmatprep.subr.mxu0 0.0
    %2621 = vmatpush1.msra.mxu0 0.0
    %2622 = vmatprep.subr.mxu0 0.0
    %2623 = vmatpush1.msra.mxu0 0.0
    %2624 = vmatprep.subr.mxu0 0.0
    %2625 = vmatpush1.msra.mxu0 0.0
    %2626 = vmatprep.subr.mxu0 0.0
    %2627 = vmatpush1.msra.mxu0 0.0
    %2628 = vmatprep.subr.mxu0 0.0
    %2629 = vmatpush1.msra.mxu0 0.0
    %2630 = vmatprep.subr.mxu0 0.0
    %2631 = vmatpush1.msra.mxu0 0.0
    %2632 = vmatprep.subr.mxu0 0.0
    %2633 = vmatpush1.msra.mxu0 0.0
    %2634 = vmatprep.subr.mxu0 0.0
    %2635 = vmatpush1.msra.mxu0 0.0
    %2636 = vmatprep.subr.mxu0 0.0
    %2637 = vmatpush1.msra.mxu0 0.0
    %2638 = vmatprep.subr.mxu0 0.0
    %2639 = vmatpush1.msra.mxu0 0.0
    %2640 = vmatprep.subr.mxu0 0.0
    %2641 = vmatpush1.msra.mxu0 0.0
    %2642 = vmatprep.subr.mxu0 0.0
    %2643 = vmatpush1.msra.mxu0 0.0
    %2644 = vmatprep.subr.mxu0 0.0
    %2645 = vmatpush1.msra.mxu0 0.0
    %2646 = vmatprep.mubr.f32.mxu0 0.0
    %2647 = vmatmul.mubr.f32.gmra.mrb[0].mxu0 %v2475
    %v2648 = vpop.f32.mrb[0].mxu0
    %v2649 = vadd.f32 0.0, %v2648
    %v2650 = vpop.f32.mrb[0].mxu0
    %2651 = vmatprep.mubr.f32.mxu0 0.0
    %2652 = vmatmul.mubr.f32.gmra.mrb[0].mxu0 %v2478
    %v2653 = vpop.f32.mrb[0].mxu0
    %v2654 = vadd.f32 0.0, %v2653
    %v2655 = vpop.f32.mrb[0].mxu0
    %2656 = vmatprep.mubr.f32.mxu0 0.0
    %2657 = vmatmul.mubr.f32.gmra.mrb[0].mxu0 %v2481
    %v2658 = vpop.f32.mrb[0].mxu0
    %v2659 = vadd.f32 0.0, %v2658
    %v2660 = vpop.f32.mrb[0].mxu0
    %2661 = vmatprep.mubr.f32.mxu0 0.0
    %2662 = vmatmul.mubr.f32.gmra.mrb[0].mxu0 %v2484
    %v2663 = vpop.f32.mrb[0].mxu0
    %v2664 = vadd.f32 0.0, %v2663
    %v2665 = vpop.f32.mrb[0].mxu0
    %2666 = vmatprep.mubr.f32.mxu0 0.0
    %2667 = vmatmul.mubr.f32.gmra.mrb[0].mxu0 %v2487
    %v2668 = vpop.f32.mrb[0].mxu0
    %v2669 = vadd.f32 0.0, %v2668
    %v2670 = vpop.f32.mrb[0].mxu0
    %2671 = vmatprep.mubr.f32.mxu0 0.0
    %2672 = vmatmul.mubr.f32.gmra.mrb[0].mxu0 %v2490
    %v2673 = vpop.f32.mrb[0].mxu0
    %v2674 = vadd.f32 0.0, %v2673
    %v2675 = vpop.f32.mrb[0].mxu0
    %2676 = vmatprep.mubr.f32.mxu0 0.0
    %2677 = vmatmul.mubr.f32.gmra.mrb[0].mxu0 %v2493
    %v2678 = vpop.f32.mrb[0].mxu0
    %v2679 = vadd.f32 0.0, %v2678
    %v2680 = vpop.f32.mrb[0].mxu0
    %2681 = vmatprep.mubr.f32.mxu0 0.0
    %2682 = vmatmul.mubr.f32.gmra.mrb[0].mxu0 %v2496
    %v2683 = vpop.f32.mrb[0].mxu0
    %v2684 = vadd.f32 0.0, %v2683
    %v2685 = vpop.f32.mrb[0].mxu0
    %2686 = vmatprep.mubr.f32.mxu0 0.0
    %2687 = vmatmul.mubr.f32.gmra.mrb[0].mxu0 %v2499
    %v2688 = vpop.f32.mrb[0].mxu0
    %v2689 = vadd.f32 0.0, %v2688
    %v2690 = vpop.f32.mrb[0].mxu0
    %2691 = vmatprep.mubr.f32.mxu0 0.0
    %2692 = vmatmul.mubr.f32.gmra.mrb[0].mxu0 %v2502
    %v2693 = vpop.f32.mrb[0].mxu0
    %v2694 = vadd.f32 0.0, %v2693
    %v2695 = vpop.f32.mrb[0].mxu0
    %2696 = vmatprep.mubr.f32.mxu0 0.0
    %2697 = vmatmul.mubr.f32.gmra.mrb[0].mxu0 %v2505
    %v2698 = vpop.f32.mrb[0].mxu0
    %v2699 = vadd.f32 0.0, %v2698
    %v2700 = vpop.f32.mrb[0].mxu0
    %2701 = vmatprep.mubr.f32.mxu0 0.0
    %2702 = vmatmul.mubr.f32.gmra.mrb[0].mxu0 %v2508
    %v2703 = vpop.f32.mrb[0].mxu0
    %v2704 = vadd.f32 0.0, %v2703
    %v2705 = vpop.f32.mrb[0].mxu0
    %2706 = vmatprep.mubr.f32.mxu0 0.0
    %2707 = vmatmul.mubr.f32.gmra.mrb[0].mxu0 %v2511
    %v2708 = vpop.f32.mrb[0].mxu0
    %v2709 = vadd.f32 0.0, %v2708
    %v2710 = vpop.f32.mrb[0].mxu0
    %2711 = vmatprep.mubr.f32.mxu0 0.0
    %2712 = vmatmul.mubr.f32.gmra.mrb[0].mxu0 %v2514
    %v2713 = vpop.f32.mrb[0].mxu0
    %v2714 = vadd.f32 0.0, %v2713
    %v2715 = vpop.f32.mrb[0].mxu0
    %2716 = vmatprep.mubr.f32.mxu0 0.0
    %2717 = vmatmul.mubr.f32.gmra.mrb[0].mxu0 %v2517
    %v2718 = vpop.f32.mrb[0].mxu0
    %v2719 = vadd.f32 0.0, %v2718
    %v2720 = vpop.f32.mrb[0].mxu0
    %2721 = vmatprep.mubr.f32.mxu0 0.0
    %2722 = vmatmul.mubr.f32.gmra.mrb[0].mxu0 %v2520
    %v2723 = vpop.f32.mrb[0].mxu0
    %v2724 = vadd.f32 0.0, %v2723
    %v2725 = vpop.f32.mrb[0].mxu0
    %2726 = vmatprep.mubr.f32.mxu0 0.0
    %2727 = vmatmul.mubr.f32.gmra.mrb[0].mxu0 %v2523
    %v2728 = vpop.f32.mrb[0].mxu0
    %v2729 = vadd.f32 0.0, %v2728
    %v2730 = vpop.f32.mrb[0].mxu0
    %2731 = vmatprep.mubr.f32.mxu0 0.0
    %2732 = vmatmul.mubr.f32.gmra.mrb[0].mxu0 %v2526
    %v2733 = vpop.f32.mrb[0].mxu0
    %v2734 = vadd.f32 0.0, %v2733
    %v2735 = vpop.f32.mrb[0].mxu0
    %2736 = vmatprep.mubr.f32.mxu0 0.0
    %2737 = vmatmul.mubr.f32.gmra.mrb[0].mxu0 %v2529
    %v2738 = vpop.f32.mrb[0].mxu0
    %v2739 = vadd.f32 0.0, %v2738
    %v2740 = vpop.f32.mrb[0].mxu0
    %2741 = vmatprep.mubr.f32.mxu0 0.0
    %2742 = vmatmul.mubr.f32.gmra.mrb[0].mxu0 %v2532
    %v2743 = vpop.f32.mrb[0].mxu0
    %v2744 = vadd.f32 0.0, %v2743
    %v2745 = vpop.f32.mrb[0].mxu0
    %2746 = vmatprep.mubr.f32.mxu0 0.0
    %2747 = vmatmul.mubr.f32.gmra.mrb[0].mxu0 %v2535
    %v2748 = vpop.f32.mrb[0].mxu0
    %v2749 = vadd.f32 0.0, %v2748
    %v2750 = vpop.f32.mrb[0].mxu0
    %2751 = vmatprep.mubr.f32.mxu0 0.0
    %2752 = vmatmul.mubr.f32.gmra.mrb[0].mxu0 %v2538
    %v2753 = vpop.f32.mrb[0].mxu0
    %v2754 = vadd.f32 0.0, %v2753
    %v2755 = vpop.f32.mrb[0].mxu0
    %2756 = vmatprep.mubr.f32.mxu0 0.0
    %2757 = vmatmul.mubr.f32.gmra.mrb[0].mxu0 %v2541
    %v2758 = vpop.f32.mrb[0].mxu0
    %v2759 = vadd.f32 0.0, %v2758
    %v2760 = vpop.f32.mrb[0].mxu0
    %2761 = vmatprep.mubr.f32.mxu0 0.0
    %2762 = vmatmul.mubr.f32.gmra.mrb[0].mxu0 %v2544
    %v2763 = vpop.f32.mrb[0].mxu0
    %v2764 = vadd.f32 0.0, %v2763
    %v2765 = vpop.f32.mrb[0].mxu0
    %2766 = vmatprep.mubr.f32.mxu0 0.0
    %2767 = vmatmul.mubr.f32.gmra.mrb[0].mxu0 %v2547
    %v2768 = vpop.f32.mrb[0].mxu0
    %v2769 = vadd.f32 0.0, %v2768
    %v2770 = vpop.f32.mrb[0].mxu0
    %2771 = vmatprep.mubr.f32.mxu0 0.0
    %2772 = vmatmul.mubr.f32.gmra.mrb[0].mxu0 %v2550
    %v2773 = vpop.f32.mrb[0].mxu0
    %v2774 = vadd.f32 0.0, %v2773
    %v2775 = vpop.f32.mrb[0].mxu0
    %2776 = vmatprep.mubr.f32.mxu0 0.0
    %2777 = vmatmul.mubr.f32.gmra.mrb[0].mxu0 %v2553
    %v2778 = vpop.f32.mrb[0].mxu0
    %v2779 = vadd.f32 0.0, %v2778
    %v2780 = vpop.f32.mrb[0].mxu0
    %2781 = vmatprep.mubr.f32.mxu0 0.0
    %2782 = vmatmul.mubr.f32.gmra.mrb[0].mxu0 %v2556
    %v2783 = vpop.f32.mrb[0].mxu0
    %v2784 = vadd.f32 0.0, %v2783
    %v2785 = vpop.f32.mrb[0].mxu0
    %2786 = vmatprep.mubr.f32.mxu0 0.0
    %2787 = vmatmul.mubr.f32.gmra.mrb[0].mxu0 %v2559
    %v2788 = vpop.f32.mrb[0].mxu0
    %v2789 = vadd.f32 0.0, %v2788
    %v2790 = vpop.f32.mrb[0].mxu0
    %2791 = vmatprep.mubr.f32.mxu0 0.0
    %2792 = vmatmul.mubr.f32.gmra.mrb[0].mxu0 %v2562
    %v2793 = vpop.f32.mrb[0].mxu0
    %v2794 = vadd.f32 0.0, %v2793
    %v2795 = vpop.f32.mrb[0].mxu0
    %2796 = vmatprep.mubr.f32.mxu0 0.0
    %2797 = vmatmul.mubr.f32.gmra.mrb[0].mxu0 %v2565
    %v2798 = vpop.f32.mrb[0].mxu0
    %v2799 = vadd.f32 0.0, %v2798
    %v2800 = vpop.f32.mrb[0].mxu0
    %2801 = vmatprep.mubr.f32.mxu0 0.0
    %2802 = vmatmul.mubr.f32.gmra.mrb[0].mxu0 %v2568
    %v2803 = vpop.f32.mrb[0].mxu0
    %v2804 = vadd.f32 0.0, %v2803
    %v2805 = vpop.f32.mrb[0].mxu0
    %2806 = vmatprep.mubr.f32.mxu0 0.0
    %2807 = vmatmul.mubr.f32.gmra.mrb[0].mxu0 %v2571
    %v2808 = vpop.f32.mrb[0].mxu0
    %v2809 = vadd.f32 0.0, %v2808
    %v2810 = vpop.f32.mrb[0].mxu0
    %2811 = vmatprep.mubr.f32.mxu0 0.0
    %2812 = vmatmul.mubr.f32.gmra.mrb[0].mxu0 %v2574
    %v2813 = vpop.f32.mrb[0].mxu0
    %v2814 = vadd.f32 0.0, %v2813
    %v2815 = vpop.f32.mrb[0].mxu0
    %2816 = vmatprep.mubr.f32.mxu0 0.0
    %2817 = vmatmul.mubr.f32.gmra.mrb[0].mxu0 %v2577
    %v2818 = vpop.f32.mrb[0].mxu0
    %v2819 = vadd.f32 0.0, %v2818
    %v2820 = vpop.f32.mrb[0].mxu0
    %2821 = vdwg.mxu0
    %v2822 = vadd.f32 %v2402, %v2649
    %v2823 = vadd.f32 %v2403, %v2654
    %v2824 = vadd.f32 %v2404, %v2659
    %v2825 = vadd.f32 %v2405, %v2664
    %v2826 = vadd.f32 %v2406, %v2669
    %v2827 = vadd.f32 %v2407, %v2674
    %v2828 = vadd.f32 %v2408, %v2679
    %v2829 = vadd.f32 %v2409, %v2684
    %v2830 = vadd.f32 %v2410, %v2689
    %v2831 = vadd.f32 %v2411, %v2694
    %v2832 = vadd.f32 %v2412, %v2699
    %v2833 = vadd.f32 %v2413, %v2704
    %v2834 = vadd.f32 %v2414, %v2709
    %v2835 = vadd.f32 %v2415, %v2714
    %v2836 = vadd.f32 %v2416, %v2719
    %v2837 = vadd.f32 %v2417, %v2724
    %v2838 = vadd.f32 %v2418, %v2729
    %v2839 = vadd.f32 %v2419, %v2734
    %v2840 = vadd.f32 %v2420, %v2739
    %v2841 = vadd.f32 %v2421, %v2744
    %v2842 = vadd.f32 %v2422, %v2749
    %v2843 = vadd.f32 %v2423, %v2754
    %v2844 = vadd.f32 %v2424, %v2759
    %v2845 = vadd.f32 %v2425, %v2764
    %v2846 = vadd.f32 %v2426, %v2769
    %v2847 = vadd.f32 %v2427, %v2774
    %v2848 = vadd.f32 %v2428, %v2779
    %v2849 = vadd.f32 %v2429, %v2784
    %v2850 = vadd.f32 %v2430, %v2789
    %v2851 = vadd.f32 %v2431, %v2794
    %v2852 = vadd.f32 %v2432, %v2799
    %v2853 = vadd.f32 %v2433, %v2804
    %v2854 = vadd.f32 %v2434, %v2809
    %v2855 = vadd.f32 %v2435, %v2814
    %v2856 = vadd.f32 %v2436, %v2819
    %v2857 = vld [vmem:[%s0 + $0x78] sm:$0xff]
    %v2858 = vld [vmem:[%s0 + $0x80] sm:$0xff]
    %v2859 = vld [vmem:[%s0 + $0x88] sm:$0xff]
    %v2860 = vld [vmem:[%s0 + $0x90] sm:$0xff]
    %v2861 = vld [vmem:[%s0 + $0x98] sm:$0xff]
    %v2862 = vld [vmem:[%s0 + $0xa0] sm:$0xff]
    %v2863 = vld [vmem:[%s0 + $0xa8] sm:$0xff]
    %v2864 = vld [vmem:[%s0 + $0xb0] sm:$0xff]
    %v2865 = vld [vmem:[%s0 + $0xb8] sm:$0xff]
    %v2866 = vld [vmem:[%s0 + $0xc0] sm:$0xff]
    %v2867 = vld [vmem:[%s0 + $0xc8] sm:$0xff]
    %v2868 = vld [vmem:[%s0 + $0xd0] sm:$0xff]
    %v2869 = vld [vmem:[%s0 + $0xd8] sm:$0xff]
    %v2870 = vld [vmem:[%s0 + $0xe0] sm:$0xff]
    %v2871 = vld [vmem:[%s0 + $0xe8] sm:$0xff]
    %v2872 = vld [vmem:[%s0 + $0xf0] sm:$0xff]
    %v2873 = vld [vmem:[%s0 + $0xf8] sm:$0xff]
    %v2874 = vld [vmem:[%s0 + $0x100] sm:$0xff]
    %v2875 = vld [vmem:[%s0 + $0x108] sm:$0xff]
    %v2876 = vld [vmem:[%s0 + $0x110] sm:$0xff]
    %v2877 = vld [vmem:[%s0 + $0x118] sm:$0xff]
    %v2878 = vld [vmem:[%s0 + $0x120] sm:$0xff]
    %v2879 = vld [vmem:[%s0 + $0x128] sm:$0xff]
    %v2880 = vld [vmem:[%s0 + $0x130] sm:$0xff]
    %v2881 = vld [vmem:[%s0 + $0x138] sm:$0xff]
    %v2882 = vld [vmem:[%s0 + $0x140] sm:$0xff]
    %v2883 = vld [vmem:[%s0 + $0x148] sm:$0xff]
    %v2884 = vld [vmem:[%s0 + $0x150] sm:$0xff]
    %v2885 = vld [vmem:[%s0 + $0x158] sm:$0xff]
    %v2886 = vld [vmem:[%s0 + $0x160] sm:$0xff]
    %v2887 = vld [vmem:[%s0 + $0x168] sm:$0xff]
    %v2888 = vld [vmem:[%s0 + $0x170] sm:$0xff]
    %v2889 = vld [vmem:[%s0 + $0x178] sm:$0xff]
    %v2890 = vld [vmem:[%s0 + $0x180] sm:$0xff]
    %v2891 = vld [vmem:[%s0 + $0x188] sm:$0xff]
    %s2892 = scalar_lea.vmem [#allocation4], 28
    %v2893 = vld [vmem:[%s2892] sm:$0x7]
    %v2895 = vsel %vm161, %v2857, 0
    %v2898 = vsel %vm161, %v2858, 0
    %v2901 = vsel %vm161, %v2859, 0
    %v2904 = vsel %vm161, %v2860, 0
    %v2907 = vsel %vm161, %v2861, 0
    %v2910 = vsel %vm161, %v2862, 0
    %v2913 = vsel %vm161, %v2863, 0
    %v2916 = vsel %vm161, %v2864, 0
    %v2919 = vsel %vm161, %v2865, 0
    %v2922 = vsel %vm161, %v2866, 0
    %v2925 = vsel %vm161, %v2867, 0
    %v2928 = vsel %vm161, %v2868, 0
    %v2931 = vsel %vm161, %v2869, 0
    %v2934 = vsel %vm161, %v2870, 0
    %v2937 = vsel %vm161, %v2871, 0
    %v2940 = vsel %vm161, %v2872, 0
    %v2943 = vsel %vm161, %v2873, 0
    %v2946 = vsel %vm161, %v2874, 0
    %v2949 = vsel %vm161, %v2875, 0
    %v2952 = vsel %vm161, %v2876, 0
    %v2955 = vsel %vm161, %v2877, 0
    %v2958 = vsel %vm161, %v2878, 0
    %v2961 = vsel %vm161, %v2879, 0
    %v2964 = vsel %vm161, %v2880, 0
    %v2967 = vsel %vm161, %v2881, 0
    %v2970 = vsel %vm161, %v2882, 0
    %v2973 = vsel %vm161, %v2883, 0
    %v2976 = vsel %vm161, %v2884, 0
    %v2979 = vsel %vm161, %v2885, 0
    %v2982 = vsel %vm161, %v2886, 0
    %v2985 = vsel %vm161, %v2887, 0
    %v2988 = vsel %vm161, %v2888, 0
    %v2991 = vsel %vm161, %v2889, 0
    %v2994 = vsel %vm161, %v2890, 0
    %v2997 = vsel %vm161, %v2891, 0
    %v3000 = vsel %vm267, %v2893, 0
    %3002 = vmatprep.subr.mxu0 0.0
    %3003 = vmatpush1.msra.mxu0 %v3000
    %3004 = vmatprep.subr.mxu0 0.0
    %3005 = vmatpush1.msra.mxu0 0.0
    %3006 = vmatprep.subr.mxu0 0.0
    %3007 = vmatpush1.msra.mxu0 0.0
    %3008 = vmatprep.subr.mxu0 0.0
    %3009 = vmatpush1.msra.mxu0 0.0
    %3010 = vmatprep.subr.mxu0 0.0
    %3011 = vmatpush1.msra.mxu0 0.0
    %3012 = vmatprep.subr.mxu0 0.0
    %3013 = vmatpush1.msra.mxu0 0.0
    %3014 = vmatprep.subr.mxu0 0.0
    %3015 = vmatpush1.msra.mxu0 0.0
    %3016 = vmatprep.subr.mxu0 0.0
    %3017 = vmatpush1.msra.mxu0 0.0
    %3018 = vmatprep.subr.mxu0 0.0
    %3019 = vmatpush1.msra.mxu0 0.0
    %3020 = vmatprep.subr.mxu0 0.0
    %3021 = vmatpush1.msra.mxu0 0.0
    %3022 = vmatprep.subr.mxu0 0.0
    %3023 = vmatpush1.msra.mxu0 0.0
    %3024 = vmatprep.subr.mxu0 0.0
    %3025 = vmatpush1.msra.mxu0 0.0
    %3026 = vmatprep.subr.mxu0 0.0
    %3027 = vmatpush1.msra.mxu0 0.0
    %3028 = vmatprep.subr.mxu0 0.0
    %3029 = vmatpush1.msra.mxu0 0.0
    %3030 = vmatprep.subr.mxu0 0.0
    %3031 = vmatpush1.msra.mxu0 0.0
    %3032 = vmatprep.subr.mxu0 0.0
    %3033 = vmatpush1.msra.mxu0 0.0
    %3034 = vmatprep.subr.mxu0 0.0
    %3035 = vmatpush1.msra.mxu0 0.0
    %3036 = vmatprep.subr.mxu0 0.0
    %3037 = vmatpush1.msra.mxu0 0.0
    %3038 = vmatprep.subr.mxu0 0.0
    %3039 = vmatpush1.msra.mxu0 0.0
    %3040 = vmatprep.subr.mxu0 0.0
    %3041 = vmatpush1.msra.mxu0 0.0
    %3042 = vmatprep.subr.mxu0 0.0
    %3043 = vmatpush1.msra.mxu0 0.0
    %3044 = vmatprep.subr.mxu0 0.0
    %3045 = vmatpush1.msra.mxu0 0.0
    %3046 = vmatprep.subr.mxu0 0.0
    %3047 = vmatpush1.msra.mxu0 0.0
    %3048 = vmatprep.subr.mxu0 0.0
    %3049 = vmatpush1.msra.mxu0 0.0
    %3050 = vmatprep.subr.mxu0 0.0
    %3051 = vmatpush1.msra.mxu0 0.0
    %3052 = vmatprep.subr.mxu0 0.0
    %3053 = vmatpush1.msra.mxu0 0.0
    %3054 = vmatprep.subr.mxu0 0.0
    %3055 = vmatpush1.msra.mxu0 0.0
    %3056 = vmatprep.subr.mxu0 0.0
    %3057 = vmatpush1.msra.mxu0 0.0
    %3058 = vmatprep.subr.mxu0 0.0
    %3059 = vmatpush1.msra.mxu0 0.0
    %3060 = vmatprep.subr.mxu0 0.0
    %3061 = vmatpush1.msra.mxu0 0.0
    %3062 = vmatprep.subr.mxu0 0.0
    %3063 = vmatpush1.msra.mxu0 0.0
    %3064 = vmatprep.subr.mxu0 0.0
    %3065 = vmatpush1.msra.mxu0 0.0
    %3066 = vmatprep.mubr.f32.mxu0 0.0
    %3067 = vmatmul.mubr.f32.gmra.mrb[0].mxu0 %v2895
    %v3068 = vpop.f32.mrb[0].mxu0
    %v3069 = vadd.f32 0.0, %v3068
    %v3070 = vpop.f32.mrb[0].mxu0
    %3071 = vmatprep.mubr.f32.mxu0 0.0
    %3072 = vmatmul.mubr.f32.gmra.mrb[0].mxu0 %v2898
    %v3073 = vpop.f32.mrb[0].mxu0
    %v3074 = vadd.f32 0.0, %v3073
    %v3075 = vpop.f32.mrb[0].mxu0
    %3076 = vmatprep.mubr.f32.mxu0 0.0
    %3077 = vmatmul.mubr.f32.gmra.mrb[0].mxu0 %v2901
    %v3078 = vpop.f32.mrb[0].mxu0
    %v3079 = vadd.f32 0.0, %v3078
    %v3080 = vpop.f32.mrb[0].mxu0
    %3081 = vmatprep.mubr.f32.mxu0 0.0
    %3082 = vmatmul.mubr.f32.gmra.mrb[0].mxu0 %v2904
    %v3083 = vpop.f32.mrb[0].mxu0
    %v3084 = vadd.f32 0.0, %v3083
    %v3085 = vpop.f32.mrb[0].mxu0
    %3086 = vmatprep.mubr.f32.mxu0 0.0
    %3087 = vmatmul.mubr.f32.gmra.mrb[0].mxu0 %v2907
    %v3088 = vpop.f32.mrb[0].mxu0
    %v3089 = vadd.f32 0.0, %v3088
    %v3090 = vpop.f32.mrb[0].mxu0
    %3091 = vmatprep.mubr.f32.mxu0 0.0
    %3092 = vmatmul.mubr.f32.gmra.mrb[0].mxu0 %v2910
    %v3093 = vpop.f32.mrb[0].mxu0
    %v3094 = vadd.f32 0.0, %v3093
    %v3095 = vpop.f32.mrb[0].mxu0
    %3096 = vmatprep.mubr.f32.mxu0 0.0
    %3097 = vmatmul.mubr.f32.gmra.mrb[0].mxu0 %v2913
    %v3098 = vpop.f32.mrb[0].mxu0
    %v3099 = vadd.f32 0.0, %v3098
    %v3100 = vpop.f32.mrb[0].mxu0
    %3101 = vmatprep.mubr.f32.mxu0 0.0
    %3102 = vmatmul.mubr.f32.gmra.mrb[0].mxu0 %v2916
    %v3103 = vpop.f32.mrb[0].mxu0
    %v3104 = vadd.f32 0.0, %v3103
    %v3105 = vpop.f32.mrb[0].mxu0
    %3106 = vmatprep.mubr.f32.mxu0 0.0
    %3107 = vmatmul.mubr.f32.gmra.mrb[0].mxu0 %v2919
    %v3108 = vpop.f32.mrb[0].mxu0
    %v3109 = vadd.f32 0.0, %v3108
    %v3110 = vpop.f32.mrb[0].mxu0
    %3111 = vmatprep.mubr.f32.mxu0 0.0
    %3112 = vmatmul.mubr.f32.gmra.mrb[0].mxu0 %v2922
    %v3113 = vpop.f32.mrb[0].mxu0
    %v3114 = vadd.f32 0.0, %v3113
    %v3115 = vpop.f32.mrb[0].mxu0
    %3116 = vmatprep.mubr.f32.mxu0 0.0
    %3117 = vmatmul.mubr.f32.gmra.mrb[0].mxu0 %v2925
    %v3118 = vpop.f32.mrb[0].mxu0
    %v3119 = vadd.f32 0.0, %v3118
    %v3120 = vpop.f32.mrb[0].mxu0
    %3121 = vmatprep.mubr.f32.mxu0 0.0
    %3122 = vmatmul.mubr.f32.gmra.mrb[0].mxu0 %v2928
    %v3123 = vpop.f32.mrb[0].mxu0
    %v3124 = vadd.f32 0.0, %v3123
    %v3125 = vpop.f32.mrb[0].mxu0
    %3126 = vmatprep.mubr.f32.mxu0 0.0
    %3127 = vmatmul.mubr.f32.gmra.mrb[0].mxu0 %v2931
    %v3128 = vpop.f32.mrb[0].mxu0
    %v3129 = vadd.f32 0.0, %v3128
    %v3130 = vpop.f32.mrb[0].mxu0
    %3131 = vmatprep.mubr.f32.mxu0 0.0
    %3132 = vmatmul.mubr.f32.gmra.mrb[0].mxu0 %v2934
    %v3133 = vpop.f32.mrb[0].mxu0
    %v3134 = vadd.f32 0.0, %v3133
    %v3135 = vpop.f32.mrb[0].mxu0
    %3136 = vmatprep.mubr.f32.mxu0 0.0
    %3137 = vmatmul.mubr.f32.gmra.mrb[0].mxu0 %v2937
    %v3138 = vpop.f32.mrb[0].mxu0
    %v3139 = vadd.f32 0.0, %v3138
    %v3140 = vpop.f32.mrb[0].mxu0
    %3141 = vmatprep.mubr.f32.mxu0 0.0
    %3142 = vmatmul.mubr.f32.gmra.mrb[0].mxu0 %v2940
    %v3143 = vpop.f32.mrb[0].mxu0
    %v3144 = vadd.f32 0.0, %v3143
    %v3145 = vpop.f32.mrb[0].mxu0
    %3146 = vmatprep.mubr.f32.mxu0 0.0
    %3147 = vmatmul.mubr.f32.gmra.mrb[0].mxu0 %v2943
    %v3148 = vpop.f32.mrb[0].mxu0
    %v3149 = vadd.f32 0.0, %v3148
    %v3150 = vpop.f32.mrb[0].mxu0
    %3151 = vmatprep.mubr.f32.mxu0 0.0
    %3152 = vmatmul.mubr.f32.gmra.mrb[0].mxu0 %v2946
    %v3153 = vpop.f32.mrb[0].mxu0
    %v3154 = vadd.f32 0.0, %v3153
    %v3155 = vpop.f32.mrb[0].mxu0
    %3156 = vmatprep.mubr.f32.mxu0 0.0
    %3157 = vmatmul.mubr.f32.gmra.mrb[0].mxu0 %v2949
    %v3158 = vpop.f32.mrb[0].mxu0
    %v3159 = vadd.f32 0.0, %v3158
    %v3160 = vpop.f32.mrb[0].mxu0
    %3161 = vmatprep.mubr.f32.mxu0 0.0
    %3162 = vmatmul.mubr.f32.gmra.mrb[0].mxu0 %v2952
    %v3163 = vpop.f32.mrb[0].mxu0
    %v3164 = vadd.f32 0.0, %v3163
    %v3165 = vpop.f32.mrb[0].mxu0
    %3166 = vmatprep.mubr.f32.mxu0 0.0
    %3167 = vmatmul.mubr.f32.gmra.mrb[0].mxu0 %v2955
    %v3168 = vpop.f32.mrb[0].mxu0
    %v3169 = vadd.f32 0.0, %v3168
    %v3170 = vpop.f32.mrb[0].mxu0
    %3171 = vmatprep.mubr.f32.mxu0 0.0
    %3172 = vmatmul.mubr.f32.gmra.mrb[0].mxu0 %v2958
    %v3173 = vpop.f32.mrb[0].mxu0
    %v3174 = vadd.f32 0.0, %v3173
    %v3175 = vpop.f32.mrb[0].mxu0
    %3176 = vmatprep.mubr.f32.mxu0 0.0
    %3177 = vmatmul.mubr.f32.gmra.mrb[0].mxu0 %v2961
    %v3178 = vpop.f32.mrb[0].mxu0
    %v3179 = vadd.f32 0.0, %v3178
    %v3180 = vpop.f32.mrb[0].mxu0
    %3181 = vmatprep.mubr.f32.mxu0 0.0
    %3182 = vmatmul.mubr.f32.gmra.mrb[0].mxu0 %v2964
    %v3183 = vpop.f32.mrb[0].mxu0
    %v3184 = vadd.f32 0.0, %v3183
    %v3185 = vpop.f32.mrb[0].mxu0
    %3186 = vmatprep.mubr.f32.mxu0 0.0
    %3187 = vmatmul.mubr.f32.gmra.mrb[0].mxu0 %v2967
    %v3188 = vpop.f32.mrb[0].mxu0
    %v3189 = vadd.f32 0.0, %v3188
    %v3190 = vpop.f32.mrb[0].mxu0
    %3191 = vmatprep.mubr.f32.mxu0 0.0
    %3192 = vmatmul.mubr.f32.gmra.mrb[0].mxu0 %v2970
    %v3193 = vpop.f32.mrb[0].mxu0
    %v3194 = vadd.f32 0.0, %v3193
    %v3195 = vpop.f32.mrb[0].mxu0
    %3196 = vmatprep.mubr.f32.mxu0 0.0
    %3197 = vmatmul.mubr.f32.gmra.mrb[0].mxu0 %v2973
    %v3198 = vpop.f32.mrb[0].mxu0
    %v3199 = vadd.f32 0.0, %v3198
    %v3200 = vpop.f32.mrb[0].mxu0
    %3201 = vmatprep.mubr.f32.mxu0 0.0
    %3202 = vmatmul.mubr.f32.gmra.mrb[0].mxu0 %v2976
    %v3203 = vpop.f32.mrb[0].mxu0
    %v3204 = vadd.f32 0.0, %v3203
    %v3205 = vpop.f32.mrb[0].mxu0
    %3206 = vmatprep.mubr.f32.mxu0 0.0
    %3207 = vmatmul.mubr.f32.gmra.mrb[0].mxu0 %v2979
    %v3208 = vpop.f32.mrb[0].mxu0
    %v3209 = vadd.f32 0.0, %v3208
    %v3210 = vpop.f32.mrb[0].mxu0
    %3211 = vmatprep.mubr.f32.mxu0 0.0
    %3212 = vmatmul.mubr.f32.gmra.mrb[0].mxu0 %v2982
    %v3213 = vpop.f32.mrb[0].mxu0
    %v3214 = vadd.f32 0.0, %v3213
    %v3215 = vpop.f32.mrb[0].mxu0
    %3216 = vmatprep.mubr.f32.mxu0 0.0
    %3217 = vmatmul.mubr.f32.gmra.mrb[0].mxu0 %v2985
    %v3218 = vpop.f32.mrb[0].mxu0
    %v3219 = vadd.f32 0.0, %v3218
    %v3220 = vpop.f32.mrb[0].mxu0
    %3221 = vmatprep.mubr.f32.mxu0 0.0
    %3222 = vmatmul.mubr.f32.gmra.mrb[0].mxu0 %v2988
    %v3223 = vpop.f32.mrb[0].mxu0
    %v3224 = vadd.f32 0.0, %v3223
    %v3225 = vpop.f32.mrb[0].mxu0
    %3226 = vmatprep.mubr.f32.mxu0 0.0
    %3227 = vmatmul.mubr.f32.gmra.mrb[0].mxu0 %v2991
    %v3228 = vpop.f32.mrb[0].mxu0
    %v3229 = vadd.f32 0.0, %v3228
    %v3230 = vpop.f32.mrb[0].mxu0
    %3231 = vmatprep.mubr.f32.mxu0 0.0
    %3232 = vmatmul.mubr.f32.gmra.mrb[0].mxu0 %v2994
    %v3233 = vpop.f32.mrb[0].mxu0
    %v3234 = vadd.f32 0.0, %v3233
    %v3235 = vpop.f32.mrb[0].mxu0
    %3236 = vmatprep.mubr.f32.mxu0 0.0
    %3237 = vmatmul.mubr.f32.gmra.mrb[0].mxu0 %v2997
    %v3238 = vpop.f32.mrb[0].mxu0
    %v3239 = vadd.f32 0.0, %v3238
    %v3240 = vpop.f32.mrb[0].mxu0
    %3241 = vdwg.mxu0
    %v3242 = vadd.f32 %v2822, %v3069
    %v3243 = vadd.f32 %v2823, %v3074
    %v3244 = vadd.f32 %v2824, %v3079
    %v3245 = vadd.f32 %v2825, %v3084
    %v3246 = vadd.f32 %v2826, %v3089
    %v3247 = vadd.f32 %v2827, %v3094
    %v3248 = vadd.f32 %v2828, %v3099
    %v3249 = vadd.f32 %v2829, %v3104
    %v3250 = vadd.f32 %v2830, %v3109
    %v3251 = vadd.f32 %v2831, %v3114
    %v3252 = vadd.f32 %v2832, %v3119
    %v3253 = vadd.f32 %v2833, %v3124
    %v3254 = vadd.f32 %v2834, %v3129
    %v3255 = vadd.f32 %v2835, %v3134
    %v3256 = vadd.f32 %v2836, %v3139
    %v3257 = vadd.f32 %v2837, %v3144
    %v3258 = vadd.f32 %v2838, %v3149
    %v3259 = vadd.f32 %v2839, %v3154
    %v3260 = vadd.f32 %v2840, %v3159
    %v3261 = vadd.f32 %v2841, %v3164
    %v3262 = vadd.f32 %v2842, %v3169
    %v3263 = vadd.f32 %v2843, %v3174
    %v3264 = vadd.f32 %v2844, %v3179
    %v3265 = vadd.f32 %v2845, %v3184
    %v3266 = vadd.f32 %v2846, %v3189
    %v3267 = vadd.f32 %v2847, %v3194
    %v3268 = vadd.f32 %v2848, %v3199
    %v3269 = vadd.f32 %v2849, %v3204
    %v3270 = vadd.f32 %v2850, %v3209
    %v3271 = vadd.f32 %v2851, %v3214
    %v3272 = vadd.f32 %v2852, %v3219
    %v3273 = vadd.f32 %v2853, %v3224
    %v3274 = vadd.f32 %v2854, %v3229
    %v3275 = vadd.f32 %v2855, %v3234
    %v3276 = vadd.f32 %v2856, %v3239
    %v3277 = vld [vmem:[%s0 + $0x80] sm:$0xff]
    %v3278 = vld [vmem:[%s0 + $0x88] sm:$0xff]
    %v3279 = vld [vmem:[%s0 + $0x90] sm:$0xff]
    %v3280 = vld [vmem:[%s0 + $0x98] sm:$0xff]
    %v3281 = vld [vmem:[%s0 + $0xa0] sm:$0xff]
    %v3282 = vld [vmem:[%s0 + $0xa8] sm:$0xff]
    %v3283 = vld [vmem:[%s0 + $0xb0] sm:$0xff]
    %v3284 = vld [vmem:[%s0 + $0xb8] sm:$0xff]
    %v3285 = vld [vmem:[%s0 + $0xc0] sm:$0xff]
    %v3286 = vld [vmem:[%s0 + $0xc8] sm:$0xff]
    %v3287 = vld [vmem:[%s0 + $0xd0] sm:$0xff]
    %v3288 = vld [vmem:[%s0 + $0xd8] sm:$0xff]
    %v3289 = vld [vmem:[%s0 + $0xe0] sm:$0xff]
    %v3290 = vld [vmem:[%s0 + $0xe8] sm:$0xff]
    %v3291 = vld [vmem:[%s0 + $0xf0] sm:$0xff]
    %v3292 = vld [vmem:[%s0 + $0xf8] sm:$0xff]
    %v3293 = vld [vmem:[%s0 + $0x100] sm:$0xff]
    %v3294 = vld [vmem:[%s0 + $0x108] sm:$0xff]
    %v3295 = vld [vmem:[%s0 + $0x110] sm:$0xff]
    %v3296 = vld [vmem:[%s0 + $0x118] sm:$0xff]
    %v3297 = vld [vmem:[%s0 + $0x120] sm:$0xff]
    %v3298 = vld [vmem:[%s0 + $0x128] sm:$0xff]
    %v3299 = vld [vmem:[%s0 + $0x130] sm:$0xff]
    %v3300 = vld [vmem:[%s0 + $0x138] sm:$0xff]
    %v3301 = vld [vmem:[%s0 + $0x140] sm:$0xff]
    %v3302 = vld [vmem:[%s0 + $0x148] sm:$0xff]
    %v3303 = vld [vmem:[%s0 + $0x150] sm:$0xff]
    %v3304 = vld [vmem:[%s0 + $0x158] sm:$0xff]
    %v3305 = vld [vmem:[%s0 + $0x160] sm:$0xff]
    %v3306 = vld [vmem:[%s0 + $0x168] sm:$0xff]
    %v3307 = vld [vmem:[%s0 + $0x170] sm:$0xff]
    %v3308 = vld [vmem:[%s0 + $0x178] sm:$0xff]
    %v3309 = vld [vmem:[%s0 + $0x180] sm:$0xff]
    %v3310 = vld [vmem:[%s0 + $0x188] sm:$0xff]
    %v3311 = vld [vmem:[%s0 + $0x190] sm:$0xff]
    %s3312 = scalar_lea.vmem [#allocation4], 32
    %v3313 = vld [vmem:[%s3312] sm:$0x7]
    %v3315 = vsel %vm161, %v3277, 0
    %v3318 = vsel %vm161, %v3278, 0
    %v3321 = vsel %vm161, %v3279, 0
    %v3324 = vsel %vm161, %v3280, 0
    %v3327 = vsel %vm161, %v3281, 0
    %v3330 = vsel %vm161, %v3282, 0
    %v3333 = vsel %vm161, %v3283, 0
    %v3336 = vsel %vm161, %v3284, 0
    %v3339 = vsel %vm161, %v3285, 0
    %v3342 = vsel %vm161, %v3286, 0
    %v3345 = vsel %vm161, %v3287, 0
    %v3348 = vsel %vm161, %v3288, 0
    %v3351 = vsel %vm161, %v3289, 0
    %v3354 = vsel %vm161, %v3290, 0
    %v3357 = vsel %vm161, %v3291, 0
    %v3360 = vsel %vm161, %v3292, 0
    %v3363 = vsel %vm161, %v3293, 0
    %v3366 = vsel %vm161, %v3294, 0
    %v3369 = vsel %vm161, %v3295, 0
    %v3372 = vsel %vm161, %v3296, 0
    %v3375 = vsel %vm161, %v3297, 0
    %v3378 = vsel %vm161, %v3298, 0
    %v3381 = vsel %vm161, %v3299, 0
    %v3384 = vsel %vm161, %v3300, 0
    %v3387 = vsel %vm161, %v3301, 0
    %v3390 = vsel %vm161, %v3302, 0
    %v3393 = vsel %vm161, %v3303, 0
    %v3396 = vsel %vm161, %v3304, 0
    %v3399 = vsel %vm161, %v3305, 0
    %v3402 = vsel %vm161, %v3306, 0
    %v3405 = vsel %vm161, %v3307, 0
    %v3408 = vsel %vm161, %v3308, 0
    %v3411 = vsel %vm161, %v3309, 0
    %v3414 = vsel %vm161, %v3310, 0
    %v3417 = vsel %vm161, %v3311, 0
    %v3420 = vsel %vm267, %v3313, 0
    %3422 = vmatprep.subr.mxu0 0.0
    %3423 = vmatpush1.msra.mxu0 %v3420
    %3424 = vmatprep.subr.mxu0 0.0
    %3425 = vmatpush1.msra.mxu0 0.0
    %3426 = vmatprep.subr.mxu0 0.0
    %3427 = vmatpush1.msra.mxu0 0.0
    %3428 = vmatprep.subr.mxu0 0.0
    %3429 = vmatpush1.msra.mxu0 0.0
    %3430 = vmatprep.subr.mxu0 0.0
    %3431 = vmatpush1.msra.mxu0 0.0
    %3432 = vmatprep.subr.mxu0 0.0
    %3433 = vmatpush1.msra.mxu0 0.0
    %3434 = vmatprep.subr.mxu0 0.0
    %3435 = vmatpush1.msra.mxu0 0.0
    %3436 = vmatprep.subr.mxu0 0.0
    %3437 = vmatpush1.msra.mxu0 0.0
    %3438 = vmatprep.subr.mxu0 0.0
    %3439 = vmatpush1.msra.mxu0 0.0
    %3440 = vmatprep.subr.mxu0 0.0
    %3441 = vmatpush1.msra.mxu0 0.0
    %3442 = vmatprep.subr.mxu0 0.0
    %3443 = vmatpush1.msra.mxu0 0.0
    %3444 = vmatprep.subr.mxu0 0.0
    %3445 = vmatpush1.msra.mxu0 0.0
    %3446 = vmatprep.subr.mxu0 0.0
    %3447 = vmatpush1.msra.mxu0 0.0
    %3448 = vmatprep.subr.mxu0 0.0
    %3449 = vmatpush1.msra.mxu0 0.0
    %3450 = vmatprep.subr.mxu0 0.0
    %3451 = vmatpush1.msra.mxu0 0.0
    %3452 = vmatprep.subr.mxu0 0.0
    %3453 = vmatpush1.msra.mxu0 0.0
    %3454 = vmatprep.subr.mxu0 0.0
    %3455 = vmatpush1.msra.mxu0 0.0
    %3456 = vmatprep.subr.mxu0 0.0
    %3457 = vmatpush1.msra.mxu0 0.0
    %3458 = vmatprep.subr.mxu0 0.0
    %3459 = vmatpush1.msra.mxu0 0.0
    %3460 = vmatprep.subr.mxu0 0.0
    %3461 = vmatpush1.msra.mxu0 0.0
    %3462 = vmatprep.subr.mxu0 0.0
    %3463 = vmatpush1.msra.mxu0 0.0
    %3464 = vmatprep.subr.mxu0 0.0
    %3465 = vmatpush1.msra.mxu0 0.0
    %3466 = vmatprep.subr.mxu0 0.0
    %3467 = vmatpush1.msra.mxu0 0.0
    %3468 = vmatprep.subr.mxu0 0.0
    %3469 = vmatpush1.msra.mxu0 0.0
    %3470 = vmatprep.subr.mxu0 0.0
    %3471 = vmatpush1.msra.mxu0 0.0
    %3472 = vmatprep.subr.mxu0 0.0
    %3473 = vmatpush1.msra.mxu0 0.0
    %3474 = vmatprep.subr.mxu0 0.0
    %3475 = vmatpush1.msra.mxu0 0.0
    %3476 = vmatprep.subr.mxu0 0.0
    %3477 = vmatpush1.msra.mxu0 0.0
    %3478 = vmatprep.subr.mxu0 0.0
    %3479 = vmatpush1.msra.mxu0 0.0
    %3480 = vmatprep.subr.mxu0 0.0
    %3481 = vmatpush1.msra.mxu0 0.0
    %3482 = vmatprep.subr.mxu0 0.0
    %3483 = vmatpush1.msra.mxu0 0.0
    %3484 = vmatprep.subr.mxu0 0.0
    %3485 = vmatpush1.msra.mxu0 0.0
    %3486 = vmatprep.mubr.f32.mxu0 0.0
    %3487 = vmatmul.mubr.f32.gmra.mrb[0].mxu0 %v3315
    %v3488 = vpop.f32.mrb[0].mxu0
    %v3489 = vadd.f32 0.0, %v3488
    %v3490 = vpop.f32.mrb[0].mxu0
    %3491 = vmatprep.mubr.f32.mxu0 0.0
    %3492 = vmatmul.mubr.f32.gmra.mrb[0].mxu0 %v3318
    %v3493 = vpop.f32.mrb[0].mxu0
    %v3494 = vadd.f32 0.0, %v3493
    %v3495 = vpop.f32.mrb[0].mxu0
    %3496 = vmatprep.mubr.f32.mxu0 0.0
    %3497 = vmatmul.mubr.f32.gmra.mrb[0].mxu0 %v3321
    %v3498 = vpop.f32.mrb[0].mxu0
    %v3499 = vadd.f32 0.0, %v3498
    %v3500 = vpop.f32.mrb[0].mxu0
    %3501 = vmatprep.mubr.f32.mxu0 0.0
    %3502 = vmatmul.mubr.f32.gmra.mrb[0].mxu0 %v3324
    %v3503 = vpop.f32.mrb[0].mxu0
    %v3504 = vadd.f32 0.0, %v3503
    %v3505 = vpop.f32.mrb[0].mxu0
    %3506 = vmatprep.mubr.f32.mxu0 0.0
    %3507 = vmatmul.mubr.f32.gmra.mrb[0].mxu0 %v3327
    %v3508 = vpop.f32.mrb[0].mxu0
    %v3509 = vadd.f32 0.0, %v3508
    %v3510 = vpop.f32.mrb[0].mxu0
    %3511 = vmatprep.mubr.f32.mxu0 0.0
    %3512 = vmatmul.mubr.f32.gmra.mrb[0].mxu0 %v3330
    %v3513 = vpop.f32.mrb[0].mxu0
    %v3514 = vadd.f32 0.0, %v3513
    %v3515 = vpop.f32.mrb[0].mxu0
    %3516 = vmatprep.mubr.f32.mxu0 0.0
    %3517 = vmatmul.mubr.f32.gmra.mrb[0].mxu0 %v3333
    %v3518 = vpop.f32.mrb[0].mxu0
    %v3519 = vadd.f32 0.0, %v3518
    %v3520 = vpop.f32.mrb[0].mxu0
    %3521 = vmatprep.mubr.f32.mxu0 0.0
    %3522 = vmatmul.mubr.f32.gmra.mrb[0].mxu0 %v3336
    %v3523 = vpop.f32.mrb[0].mxu0
    %v3524 = vadd.f32 0.0, %v3523
    %v3525 = vpop.f32.mrb[0].mxu0
    %3526 = vmatprep.mubr.f32.mxu0 0.0
    %3527 = vmatmul.mubr.f32.gmra.mrb[0].mxu0 %v3339
    %v3528 = vpop.f32.mrb[0].mxu0
    %v3529 = vadd.f32 0.0, %v3528
    %v3530 = vpop.f32.mrb[0].mxu0
    %3531 = vmatprep.mubr.f32.mxu0 0.0
    %3532 = vmatmul.mubr.f32.gmra.mrb[0].mxu0 %v3342
    %v3533 = vpop.f32.mrb[0].mxu0
    %v3534 = vadd.f32 0.0, %v3533
    %v3535 = vpop.f32.mrb[0].mxu0
    %3536 = vmatprep.mubr.f32.mxu0 0.0
    %3537 = vmatmul.mubr.f32.gmra.mrb[0].mxu0 %v3345
    %v3538 = vpop.f32.mrb[0].mxu0
    %v3539 = vadd.f32 0.0, %v3538
    %v3540 = vpop.f32.mrb[0].mxu0
    %3541 = vmatprep.mubr.f32.mxu0 0.0
    %3542 = vmatmul.mubr.f32.gmra.mrb[0].mxu0 %v3348
    %v3543 = vpop.f32.mrb[0].mxu0
    %v3544 = vadd.f32 0.0, %v3543
    %v3545 = vpop.f32.mrb[0].mxu0
    %3546 = vmatprep.mubr.f32.mxu0 0.0
    %3547 = vmatmul.mubr.f32.gmra.mrb[0].mxu0 %v3351
    %v3548 = vpop.f32.mrb[0].mxu0
    %v3549 = vadd.f32 0.0, %v3548
    %v3550 = vpop.f32.mrb[0].mxu0
    %3551 = vmatprep.mubr.f32.mxu0 0.0
    %3552 = vmatmul.mubr.f32.gmra.mrb[0].mxu0 %v3354
    %v3553 = vpop.f32.mrb[0].mxu0
    %v3554 = vadd.f32 0.0, %v3553
    %v3555 = vpop.f32.mrb[0].mxu0
    %3556 = vmatprep.mubr.f32.mxu0 0.0
    %3557 = vmatmul.mubr.f32.gmra.mrb[0].mxu0 %v3357
    %v3558 = vpop.f32.mrb[0].mxu0
    %v3559 = vadd.f32 0.0, %v3558
    %v3560 = vpop.f32.mrb[0].mxu0
    %3561 = vmatprep.mubr.f32.mxu0 0.0
    %3562 = vmatmul.mubr.f32.gmra.mrb[0].mxu0 %v3360
    %v3563 = vpop.f32.mrb[0].mxu0
    %v3564 = vadd.f32 0.0, %v3563
    %v3565 = vpop.f32.mrb[0].mxu0
    %3566 = vmatprep.mubr.f32.mxu0 0.0
    %3567 = vmatmul.mubr.f32.gmra.mrb[0].mxu0 %v3363
    %v3568 = vpop.f32.mrb[0].mxu0
    %v3569 = vadd.f32 0.0, %v3568
    %v3570 = vpop.f32.mrb[0].mxu0
    %3571 = vmatprep.mubr.f32.mxu0 0.0
    %3572 = vmatmul.mubr.f32.gmra.mrb[0].mxu0 %v3366
    %v3573 = vpop.f32.mrb[0].mxu0
    %v3574 = vadd.f32 0.0, %v3573
    %v3575 = vpop.f32.mrb[0].mxu0
    %3576 = vmatprep.mubr.f32.mxu0 0.0
    %3577 = vmatmul.mubr.f32.gmra.mrb[0].mxu0 %v3369
    %v3578 = vpop.f32.mrb[0].mxu0
    %v3579 = vadd.f32 0.0, %v3578
    %v3580 = vpop.f32.mrb[0].mxu0
    %3581 = vmatprep.mubr.f32.mxu0 0.0
    %3582 = vmatmul.mubr.f32.gmra.mrb[0].mxu0 %v3372
    %v3583 = vpop.f32.mrb[0].mxu0
    %v3584 = vadd.f32 0.0, %v3583
    %v3585 = vpop.f32.mrb[0].mxu0
    %3586 = vmatprep.mubr.f32.mxu0 0.0
    %3587 = vmatmul.mubr.f32.gmra.mrb[0].mxu0 %v3375
    %v3588 = vpop.f32.mrb[0].mxu0
    %v3589 = vadd.f32 0.0, %v3588
    %v3590 = vpop.f32.mrb[0].mxu0
    %3591 = vmatprep.mubr.f32.mxu0 0.0
    %3592 = vmatmul.mubr.f32.gmra.mrb[0].mxu0 %v3378
    %v3593 = vpop.f32.mrb[0].mxu0
    %v3594 = vadd.f32 0.0, %v3593
    %v3595 = vpop.f32.mrb[0].mxu0
    %3596 = vmatprep.mubr.f32.mxu0 0.0
    %3597 = vmatmul.mubr.f32.gmra.mrb[0].mxu0 %v3381
    %v3598 = vpop.f32.mrb[0].mxu0
    %v3599 = vadd.f32 0.0, %v3598
    %v3600 = vpop.f32.mrb[0].mxu0
    %3601 = vmatprep.mubr.f32.mxu0 0.0
    %3602 = vmatmul.mubr.f32.gmra.mrb[0].mxu0 %v3384
    %v3603 = vpop.f32.mrb[0].mxu0
    %v3604 = vadd.f32 0.0, %v3603
    %v3605 = vpop.f32.mrb[0].mxu0
    %3606 = vmatprep.mubr.f32.mxu0 0.0
    %3607 = vmatmul.mubr.f32.gmra.mrb[0].mxu0 %v3387
    %v3608 = vpop.f32.mrb[0].mxu0
    %v3609 = vadd.f32 0.0, %v3608
    %v3610 = vpop.f32.mrb[0].mxu0
    %3611 = vmatprep.mubr.f32.mxu0 0.0
    %3612 = vmatmul.mubr.f32.gmra.mrb[0].mxu0 %v3390
    %v3613 = vpop.f32.mrb[0].mxu0
    %v3614 = vadd.f32 0.0, %v3613
    %v3615 = vpop.f32.mrb[0].mxu0
    %3616 = vmatprep.mubr.f32.mxu0 0.0
    %3617 = vmatmul.mubr.f32.gmra.mrb[0].mxu0 %v3393
    %v3618 = vpop.f32.mrb[0].mxu0
    %v3619 = vadd.f32 0.0, %v3618
    %v3620 = vpop.f32.mrb[0].mxu0
    %3621 = vmatprep.mubr.f32.mxu0 0.0
    %3622 = vmatmul.mubr.f32.gmra.mrb[0].mxu0 %v3396
    %v3623 = vpop.f32.mrb[0].mxu0
    %v3624 = vadd.f32 0.0, %v3623
    %v3625 = vpop.f32.mrb[0].mxu0
    %3626 = vmatprep.mubr.f32.mxu0 0.0
    %3627 = vmatmul.mubr.f32.gmra.mrb[0].mxu0 %v3399
    %v3628 = vpop.f32.mrb[0].mxu0
    %v3629 = vadd.f32 0.0, %v3628
    %v3630 = vpop.f32.mrb[0].mxu0
    %3631 = vmatprep.mubr.f32.mxu0 0.0
    %3632 = vmatmul.mubr.f32.gmra.mrb[0].mxu0 %v3402
    %v3633 = vpop.f32.mrb[0].mxu0
    %v3634 = vadd.f32 0.0, %v3633
    %v3635 = vpop.f32.mrb[0].mxu0
    %3636 = vmatprep.mubr.f32.mxu0 0.0
    %3637 = vmatmul.mubr.f32.gmra.mrb[0].mxu0 %v3405
    %v3638 = vpop.f32.mrb[0].mxu0
    %v3639 = vadd.f32 0.0, %v3638
    %v3640 = vpop.f32.mrb[0].mxu0
    %3641 = vmatprep.mubr.f32.mxu0 0.0
    %3642 = vmatmul.mubr.f32.gmra.mrb[0].mxu0 %v3408
    %v3643 = vpop.f32.mrb[0].mxu0
    %v3644 = vadd.f32 0.0, %v3643
    %v3645 = vpop.f32.mrb[0].mxu0
    %3646 = vmatprep.mubr.f32.mxu0 0.0
    %3647 = vmatmul.mubr.f32.gmra.mrb[0].mxu0 %v3411
    %v3648 = vpop.f32.mrb[0].mxu0
    %v3649 = vadd.f32 0.0, %v3648
    %v3650 = vpop.f32.mrb[0].mxu0
    %3651 = vmatprep.mubr.f32.mxu0 0.0
    %3652 = vmatmul.mubr.f32.gmra.mrb[0].mxu0 %v3414
    %v3653 = vpop.f32.mrb[0].mxu0
    %v3654 = vadd.f32 0.0, %v3653
    %v3655 = vpop.f32.mrb[0].mxu0
    %3656 = vmatprep.mubr.f32.mxu0 0.0
    %3657 = vmatmul.mubr.f32.gmra.mrb[0].mxu0 %v3417
    %v3658 = vpop.f32.mrb[0].mxu0
    %v3659 = vadd.f32 0.0, %v3658
    %v3660 = vpop.f32.mrb[0].mxu0
    %3661 = vdwg.mxu0
    %v3662 = vadd.f32 %v3242, %v3489
    %v3663 = vadd.f32 %v3243, %v3494
    %v3664 = vadd.f32 %v3244, %v3499
    %v3665 = vadd.f32 %v3245, %v3504
    %v3666 = vadd.f32 %v3246, %v3509
    %v3667 = vadd.f32 %v3247, %v3514
    %v3668 = vadd.f32 %v3248, %v3519
    %v3669 = vadd.f32 %v3249, %v3524
    %v3670 = vadd.f32 %v3250, %v3529
    %v3671 = vadd.f32 %v3251, %v3534
    %v3672 = vadd.f32 %v3252, %v3539
    %v3673 = vadd.f32 %v3253, %v3544
    %v3674 = vadd.f32 %v3254, %v3549
    %v3675 = vadd.f32 %v3255, %v3554
    %v3676 = vadd.f32 %v3256, %v3559
    %v3677 = vadd.f32 %v3257, %v3564
    %v3678 = vadd.f32 %v3258, %v3569
    %v3679 = vadd.f32 %v3259, %v3574
    %v3680 = vadd.f32 %v3260, %v3579
    %v3681 = vadd.f32 %v3261, %v3584
    %v3682 = vadd.f32 %v3262, %v3589
    %v3683 = vadd.f32 %v3263, %v3594
    %v3684 = vadd.f32 %v3264, %v3599
    %v3685 = vadd.f32 %v3265, %v3604
    %v3686 = vadd.f32 %v3266, %v3609
    %v3687 = vadd.f32 %v3267, %v3614
    %v3688 = vadd.f32 %v3268, %v3619
    %v3689 = vadd.f32 %v3269, %v3624
    %v3690 = vadd.f32 %v3270, %v3629
    %v3691 = vadd.f32 %v3271, %v3634
    %v3692 = vadd.f32 %v3272, %v3639
    %v3693 = vadd.f32 %v3273, %v3644
    %v3694 = vadd.f32 %v3274, %v3649
    %v3695 = vadd.f32 %v3275, %v3654
    %v3696 = vadd.f32 %v3276, %v3659
    %v3697 = vld [vmem:[%s4] sm:$0x1]
    %v3699 = vlaneseq
    %v3700 = vshrl.u32 %v3699, 7
    %v3701 = vsub.s32 0, %v3700
    %v3702 = vrot.slane %v3697, %v3701
    %v3704 = vadd.f32 %v3662, %v3702
    %v3705 = vadd.f32 %v3663, %v3702
    %v3706 = vadd.f32 %v3664, %v3702
    %v3707 = vadd.f32 %v3665, %v3702
    %v3708 = vadd.f32 %v3666, %v3702
    %v3709 = vadd.f32 %v3667, %v3702
    %v3710 = vadd.f32 %v3668, %v3702
    %v3711 = vadd.f32 %v3669, %v3702
    %v3712 = vadd.f32 %v3670, %v3702
    %v3713 = vadd.f32 %v3671, %v3702
    %v3714 = vadd.f32 %v3672, %v3702
    %v3715 = vadd.f32 %v3673, %v3702
    %v3716 = vadd.f32 %v3674, %v3702
    %v3717 = vadd.f32 %v3675, %v3702
    %v3718 = vadd.f32 %v3676, %v3702
    %v3719 = vadd.f32 %v3677, %v3702
    %v3720 = vadd.f32 %v3678, %v3702
    %v3721 = vadd.f32 %v3679, %v3702
    %v3722 = vadd.f32 %v3680, %v3702
    %v3723 = vadd.f32 %v3681, %v3702
    %v3724 = vadd.f32 %v3682, %v3702
    %v3725 = vadd.f32 %v3683, %v3702
    %v3726 = vadd.f32 %v3684, %v3702
    %v3727 = vadd.f32 %v3685, %v3702
    %v3728 = vadd.f32 %v3686, %v3702
    %v3729 = vadd.f32 %v3687, %v3702
    %v3730 = vadd.f32 %v3688, %v3702
    %v3731 = vadd.f32 %v3689, %v3702
    %v3732 = vadd.f32 %v3690, %v3702
    %v3733 = vadd.f32 %v3691, %v3702
    %v3734 = vadd.f32 %v3692, %v3702
    %v3735 = vadd.f32 %v3693, %v3702
    %v3736 = vadd.f32 %v3694, %v3702
    %v3737 = vadd.f32 %v3695, %v3702
    %v3738 = vadd.f32 %v3696, %v3702
    %v3739 = vmax.f32 %v3704, 0.0
    %v3740 = vmax.f32 %v3705, 0.0
    %v3741 = vmax.f32 %v3706, 0.0
    %v3742 = vmax.f32 %v3707, 0.0
    %v3743 = vmax.f32 %v3708, 0.0
    %v3744 = vmax.f32 %v3709, 0.0
    %v3745 = vmax.f32 %v3710, 0.0
    %v3746 = vmax.f32 %v3711, 0.0
    %v3747 = vmax.f32 %v3712, 0.0
    %v3748 = vmax.f32 %v3713, 0.0
    %v3749 = vmax.f32 %v3714, 0.0
    %v3750 = vmax.f32 %v3715, 0.0
    %v3751 = vmax.f32 %v3716, 0.0
    %v3752 = vmax.f32 %v3717, 0.0
    %v3753 = vmax.f32 %v3718, 0.0
    %v3754 = vmax.f32 %v3719, 0.0
    %v3755 = vmax.f32 %v3720, 0.0
    %v3756 = vmax.f32 %v3721, 0.0
    %v3757 = vmax.f32 %v3722, 0.0
    %v3758 = vmax.f32 %v3723, 0.0
    %v3759 = vmax.f32 %v3724, 0.0
    %v3760 = vmax.f32 %v3725, 0.0
    %v3761 = vmax.f32 %v3726, 0.0
    %v3762 = vmax.f32 %v3727, 0.0
    %v3763 = vmax.f32 %v3728, 0.0
    %v3764 = vmax.f32 %v3729, 0.0
    %v3765 = vmax.f32 %v3730, 0.0
    %v3766 = vmax.f32 %v3731, 0.0
    %v3767 = vmax.f32 %v3732, 0.0
    %v3768 = vmax.f32 %v3733, 0.0
    %v3769 = vmax.f32 %v3734, 0.0
    %v3770 = vmax.f32 %v3735, 0.0
    %v3771 = vmax.f32 %v3736, 0.0
    %v3772 = vmax.f32 %v3737, 0.0
    %v3773 = vmax.f32 %v3738, 0.0
    %vm3774 = vcmask 261120
    %3775 = vst.msk [vmem:[#allocation2] sm:$0xff] %vm3774, %v3739
    %3776 = vst.msk [vmem:[#allocation2 + $0x8] sm:$0xff] %vm3774, %v3740
    %3777 = vst.msk [vmem:[#allocation2 + $0x10] sm:$0xff] %vm3774, %v3741
    %3778 = vst.msk [vmem:[#allocation2 + $0x18] sm:$0xff] %vm3774, %v3742
    %3779 = vst.msk [vmem:[#allocation2 + $0x20] sm:$0xff] %vm3774, %v3743
    %3780 = vst.msk [vmem:[#allocation2 + $0x28] sm:$0xff] %vm3774, %v3744
    %3781 = vst.msk [vmem:[#allocation2 + $0x30] sm:$0xff] %vm3774, %v3745
    %3782 = vst.msk [vmem:[#allocation2 + $0x38] sm:$0xff] %vm3774, %v3746
    %3783 = vst.msk [vmem:[#allocation2 + $0x40] sm:$0xff] %vm3774, %v3747
    %3784 = vst.msk [vmem:[#allocation2 + $0x48] sm:$0xff] %vm3774, %v3748
    %3785 = vst.msk [vmem:[#allocation2 + $0x50] sm:$0xff] %vm3774, %v3749
    %3786 = vst.msk [vmem:[#allocation2 + $0x58] sm:$0xff] %vm3774, %v3750
    %3787 = vst.msk [vmem:[#allocation2 + $0x60] sm:$0xff] %vm3774, %v3751
    %3788 = vst.msk [vmem:[#allocation2 + $0x68] sm:$0xff] %vm3774, %v3752
    %3789 = vst.msk [vmem:[#allocation2 + $0x70] sm:$0xff] %vm3774, %v3753
    %3790 = vst.msk [vmem:[#allocation2 + $0x78] sm:$0xff] %vm3774, %v3754
    %3791 = vst.msk [vmem:[#allocation2 + $0x80] sm:$0xff] %vm3774, %v3755
    %3792 = vst.msk [vmem:[#allocation2 + $0x88] sm:$0xff] %vm3774, %v3756
    %3793 = vst.msk [vmem:[#allocation2 + $0x90] sm:$0xff] %vm3774, %v3757
    %3794 = vst.msk [vmem:[#allocation2 + $0x98] sm:$0xff] %vm3774, %v3758
    %3795 = vst.msk [vmem:[#allocation2 + $0xa0] sm:$0xff] %vm3774, %v3759
    %3796 = vst.msk [vmem:[#allocation2 + $0xa8] sm:$0xff] %vm3774, %v3760
    %3797 = vst.msk [vmem:[#allocation2 + $0xb0] sm:$0xff] %vm3774, %v3761
    %3798 = vst.msk [vmem:[#allocation2 + $0xb8] sm:$0xff] %vm3774, %v3762
    %3799 = vst.msk [vmem:[#allocation2 + $0xc0] sm:$0xff] %vm3774, %v3763
    %3800 = vst.msk [vmem:[#allocation2 + $0xc8] sm:$0xff] %vm3774, %v3764
    %3801 = vst.msk [vmem:[#allocation2 + $0xd0] sm:$0xff] %vm3774, %v3765
    %3802 = vst.msk [vmem:[#allocation2 + $0xd8] sm:$0xff] %vm3774, %v3766
    %3803 = vst.msk [vmem:[#allocation2 + $0xe0] sm:$0xff] %vm3774, %v3767
    %3804 = vst.msk [vmem:[#allocation2 + $0xe8] sm:$0xff] %vm3774, %v3768
    %3805 = vst.msk [vmem:[#allocation2 + $0xf0] sm:$0xff] %vm3774, %v3769
    %3806 = vst.msk [vmem:[#allocation2 + $0xf8] sm:$0xff] %vm3774, %v3770
    %3807 = vst.msk [vmem:[#allocation2 + $0x100] sm:$0xff] %vm3774, %v3771
    %3808 = vst.msk [vmem:[#allocation2 + $0x108] sm:$0xff] %vm3774, %v3772
    %3809 = vst.msk [vmem:[#allocation2 + $0x110] sm:$0xff] %vm3774, %v3773
    %3810 = vst.msk [vmem:[#allocation2 + $0x118] sm:$0xff] %vm3774, 0.0
    %3811 = vst.msk [vmem:[#allocation2 + $0x120] sm:$0xff] %vm3774, 0.0
    %v3812 = vld [vmem:[#allocation2] sm:$0xff]
    %v3813 = vld [vmem:[#allocation2 + $0x8] sm:$0xff]
    %v3814 = vld [vmem:[#allocation2 + $0x10] sm:$0xff]
    %v3815 = vld [vmem:[#allocation2 + $0x18] sm:$0xff]
    %v3816 = vld [vmem:[#allocation2 + $0x20] sm:$0xff]
    %v3817 = vld [vmem:[#allocation2 + $0x28] sm:$0xff]
    %v3818 = vld [vmem:[#allocation2 + $0x30] sm:$0xff]
    %v3819 = vld [vmem:[#allocation2 + $0x38] sm:$0xff]
    %v3820 = vld [vmem:[#allocation2 + $0x40] sm:$0xff]
    %v3821 = vld [vmem:[#allocation2 + $0x48] sm:$0xff]
    %v3822 = vld [vmem:[#allocation2 + $0x50] sm:$0xff]
    %v3823 = vld [vmem:[#allocation2 + $0x58] sm:$0xff]
    %v3824 = vld [vmem:[#allocation2 + $0x60] sm:$0xff]
    %v3825 = vld [vmem:[#allocation2 + $0x68] sm:$0xff]
    %v3826 = vld [vmem:[#allocation2 + $0x70] sm:$0xff]
    %v3827 = vld [vmem:[#allocation2 + $0x78] sm:$0xff]
    %v3828 = vld [vmem:[#allocation2 + $0x80] sm:$0xff]
    %v3829 = vld [vmem:[#allocation2 + $0x88] sm:$0xff]
    %v3830 = vld [vmem:[#allocation2 + $0x90] sm:$0xff]
    %v3831 = vld [vmem:[#allocation2 + $0x98] sm:$0xff]
    %v3832 = vld [vmem:[#allocation2 + $0xa0] sm:$0xff]
    %v3833 = vld [vmem:[%s5] sm:$0xff]
    %v3834 = vld [vmem:[%s5 + $0x8] sm:$0xff]
    %v3835 = vld [vmem:[%s5 + $0x10] sm:$0xff]
    %v3836 = vld [vmem:[%s5 + $0x18] sm:$0xff]
    %v3837 = vld [vmem:[#allocation2 + $0xa8] sm:$0xff]
    %s3838 = scalar_lea.vmem %s5, 32
    %v3839 = vld [vmem:[%s3838] sm:$0xff]
    %v3840 = vld [vmem:[%s3838 + $0x8] sm:$0xff]
    %v3841 = vld [vmem:[%s3838 + $0x10] sm:$0xff]
    %v3842 = vld [vmem:[%s3838 + $0x18] sm:$0xff]
    %v3844 = vsel %vm3774, %v3813, 0
    %v3847 = vsel %vm3774, %v3814, 0
    %v3850 = vsel %vm3774, %v3815, 0
    %v3853 = vsel %vm3774, %v3816, 0
    %v3856 = vsel %vm3774, %v3817, 0
    %v3859 = vsel %vm3774, %v3818, 0
    %v3862 = vsel %vm3774, %v3819, 0
    %v3865 = vsel %vm3774, %v3820, 0
    %v3868 = vsel %vm3774, %v3821, 0
    %v3871 = vsel %vm3774, %v3822, 0
    %v3874 = vsel %vm3774, %v3823, 0
    %v3877 = vsel %vm3774, %v3824, 0
    %v3880 = vsel %vm3774, %v3825, 0
    %v3883 = vsel %vm3774, %v3826, 0
    %v3886 = vsel %vm3774, %v3827, 0
    %v3889 = vsel %vm3774, %v3828, 0
    %v3892 = vsel %vm3774, %v3829, 0
    %v3895 = vsel %vm3774, %v3830, 0
    %v3898 = vsel %vm3774, %v3831, 0
    %v3901 = vsel %vm3774, %v3832, 0
    %v3904 = vsel %vm3774, %v3837, 0
    %3906 = vmatprep.subr.mxu0 0.0
    %3907 = vmatpush1.msra.mxu0 %v3839
    %3908 = vmatprep.subr.mxu0 0.0
    %3909 = vmatpush1.msra.mxu0 %v3840
    %3910 = vmatprep.subr.mxu0 0.0
    %3911 = vmatpush1.msra.mxu0 %v3841
    %3912 = vmatprep.subr.mxu0 0.0
    %3913 = vmatpush1.msra.mxu0 %v3842
    %3914 = vmatprep.subr.mxu0 0.0
    %3915 = vmatpush1.msra.mxu0 0.0
    %3916 = vmatprep.subr.mxu0 0.0
    %3917 = vmatpush1.msra.mxu0 0.0
    %3918 = vmatprep.subr.mxu0 0.0
    %3919 = vmatpush1.msra.mxu0 0.0
    %3920 = vmatprep.subr.mxu0 0.0
    %3921 = vmatpush1.msra.mxu0 0.0
    %3922 = vmatprep.subr.mxu0 0.0
    %3923 = vmatpush1.msra.mxu0 0.0
    %3924 = vmatprep.subr.mxu0 0.0
    %3925 = vmatpush1.msra.mxu0 0.0
    %3926 = vmatprep.subr.mxu0 0.0
    %3927 = vmatpush1.msra.mxu0 0.0
    %3928 = vmatprep.subr.mxu0 0.0
    %3929 = vmatpush1.msra.mxu0 0.0
    %3930 = vmatprep.subr.mxu0 0.0
    %3931 = vmatpush1.msra.mxu0 0.0
    %3932 = vmatprep.subr.mxu0 0.0
    %3933 = vmatpush1.msra.mxu0 0.0
    %3934 = vmatprep.subr.mxu0 0.0
    %3935 = vmatpush1.msra.mxu0 0.0
    %3936 = vmatprep.subr.mxu0 0.0
    %3937 = vmatpush1.msra.mxu0 0.0
    %3938 = vmatprep.subr.mxu0 0.0
    %3939 = vmatpush1.msra.mxu0 0.0
    %3940 = vmatprep.subr.mxu0 0.0
    %3941 = vmatpush1.msra.mxu0 0.0
    %3942 = vmatprep.subr.mxu0 0.0
    %3943 = vmatpush1.msra.mxu0 0.0
    %3944 = vmatprep.subr.mxu0 0.0
    %3945 = vmatpush1.msra.mxu0 0.0
    %3946 = vmatprep.subr.mxu0 0.0
    %3947 = vmatpush1.msra.mxu0 0.0
    %3948 = vmatprep.subr.mxu0 0.0
    %3949 = vmatpush1.msra.mxu0 0.0
    %3950 = vmatprep.subr.mxu0 0.0
    %3951 = vmatpush1.msra.mxu0 0.0
    %3952 = vmatprep.subr.mxu0 0.0
    %3953 = vmatpush1.msra.mxu0 0.0
    %3954 = vmatprep.subr.mxu0 0.0
    %3955 = vmatpush1.msra.mxu0 0.0
    %3956 = vmatprep.subr.mxu0 0.0
    %3957 = vmatpush1.msra.mxu0 0.0
    %3958 = vmatprep.subr.mxu0 0.0
    %3959 = vmatpush1.msra.mxu0 0.0
    %3960 = vmatprep.subr.mxu0 0.0
    %3961 = vmatpush1.msra.mxu0 0.0
    %3962 = vmatprep.subr.mxu0 0.0
    %3963 = vmatpush1.msra.mxu0 0.0
    %3964 = vmatprep.subr.mxu0 0.0
    %3965 = vmatpush1.msra.mxu0 0.0
    %3966 = vmatprep.subr.mxu0 0.0
    %3967 = vmatpush1.msra.mxu0 0.0
    %3968 = vmatprep.subr.mxu0 0.0
    %3969 = vmatpush1.msra.mxu0 0.0
    %3970 = vmatprep.mubr.f32.mxu0 0.0
    %3971 = vmatmul.mubr.f32.gmra.mrb[0].mxu0 %v3844
    %v3972 = vpop.f32.mrb[0].mxu0
    %v3973 = vadd.f32 0.0, %v3972
    %v3974 = vpop.f32.mrb[0].mxu0
    %3975 = vmatprep.mubr.f32.mxu0 0.0
    %3976 = vmatmul.mubr.f32.gmra.mrb[0].mxu0 %v3847
    %v3977 = vpop.f32.mrb[0].mxu0
    %v3978 = vadd.f32 0.0, %v3977
    %v3979 = vpop.f32.mrb[0].mxu0
    %3980 = vmatprep.mubr.f32.mxu0 0.0
    %3981 = vmatmul.mubr.f32.gmra.mrb[0].mxu0 %v3850
    %v3982 = vpop.f32.mrb[0].mxu0
    %v3983 = vadd.f32 0.0, %v3982
    %v3984 = vpop.f32.mrb[0].mxu0
    %3985 = vmatprep.mubr.f32.mxu0 0.0
    %3986 = vmatmul.mubr.f32.gmra.mrb[0].mxu0 %v3853
    %v3987 = vpop.f32.mrb[0].mxu0
    %v3988 = vpop.f32.mrb[0].mxu0
    %3989 = vmatprep.mubr.f32.mxu0 0.0
    %3990 = vmatmul.mubr.f32.gmra.mrb[0].mxu0 %v3856
    %v3991 = vpop.f32.mrb[0].mxu0
    %v3992 = vpop.f32.mrb[0].mxu0
    %3993 = vmatprep.mubr.f32.mxu0 0.0
    %3994 = vmatmul.mubr.f32.gmra.mrb[0].mxu0 %v3859
    %v3995 = vpop.f32.mrb[0].mxu0
    %v3996 = vpop.f32.mrb[0].mxu0
    %3997 = vmatprep.mubr.f32.mxu0 0.0
    %3998 = vmatmul.mubr.f32.gmra.mrb[0].mxu0 %v3862
    %v3999 = vpop.f32.mrb[0].mxu0
    %v4000 = vpop.f32.mrb[0].mxu0
    %4001 = vmatprep.mubr.f32.mxu0 0.0
    %4002 = vmatmul.mubr.f32.gmra.mrb[0].mxu0 %v3865
    %v4003 = vpop.f32.mrb[0].mxu0
    %v4004 = vadd.f32 0.0, %v4003
    %v4005 = vpop.f32.mrb[0].mxu0
    %4006 = vmatprep.mubr.f32.mxu0 0.0
    %4007 = vmatmul.mubr.f32.gmra.mrb[0].mxu0 %v3868
    %v4008 = vpop.f32.mrb[0].mxu0
    %v4009 = vadd.f32 0.0, %v4008
    %v4010 = vpop.f32.mrb[0].mxu0
    %4011 = vmatprep.mubr.f32.mxu0 0.0
    %4012 = vmatmul.mubr.f32.gmra.mrb[0].mxu0 %v3871
    %v4013 = vpop.f32.mrb[0].mxu0
    %v4014 = vadd.f32 0.0, %v4013
    %v4015 = vpop.f32.mrb[0].mxu0
    %4016 = vmatprep.mubr.f32.mxu0 0.0
    %4017 = vmatmul.mubr.f32.gmra.mrb[0].mxu0 %v3874
    %v4018 = vpop.f32.mrb[0].mxu0
    %v4019 = vpop.f32.mrb[0].mxu0
    %4020 = vmatprep.mubr.f32.mxu0 0.0
    %4021 = vmatmul.mubr.f32.gmra.mrb[0].mxu0 %v3877
    %v4022 = vpop.f32.mrb[0].mxu0
    %v4023 = vpop.f32.mrb[0].mxu0
    %4024 = vmatprep.mubr.f32.mxu0 0.0
    %4025 = vmatmul.mubr.f32.gmra.mrb[0].mxu0 %v3880
    %v4026 = vpop.f32.mrb[0].mxu0
    %v4027 = vpop.f32.mrb[0].mxu0
    %4028 = vmatprep.mubr.f32.mxu0 0.0
    %4029 = vmatmul.mubr.f32.gmra.mrb[0].mxu0 %v3883
    %v4030 = vpop.f32.mrb[0].mxu0
    %v4031 = vpop.f32.mrb[0].mxu0
    %4032 = vmatprep.mubr.f32.mxu0 0.0
    %4033 = vmatmul.mubr.f32.gmra.mrb[0].mxu0 %v3886
    %v4034 = vpop.f32.mrb[0].mxu0
    %v4035 = vadd.f32 0.0, %v4034
    %v4036 = vpop.f32.mrb[0].mxu0
    %4037 = vmatprep.mubr.f32.mxu0 0.0
    %4038 = vmatmul.mubr.f32.gmra.mrb[0].mxu0 %v3889
    %v4039 = vpop.f32.mrb[0].mxu0
    %v4040 = vadd.f32 0.0, %v4039
    %v4041 = vpop.f32.mrb[0].mxu0
    %4042 = vmatprep.mubr.f32.mxu0 0.0
    %4043 = vmatmul.mubr.f32.gmra.mrb[0].mxu0 %v3892
    %v4044 = vpop.f32.mrb[0].mxu0
    %v4045 = vadd.f32 0.0, %v4044
    %v4046 = vpop.f32.mrb[0].mxu0
    %4047 = vmatprep.mubr.f32.mxu0 0.0
    %4048 = vmatmul.mubr.f32.gmra.mrb[0].mxu0 %v3895
    %v4049 = vpop.f32.mrb[0].mxu0
    %v4050 = vpop.f32.mrb[0].mxu0
    %4051 = vmatprep.mubr.f32.mxu0 0.0
    %4052 = vmatmul.mubr.f32.gmra.mrb[0].mxu0 %v3898
    %v4053 = vpop.f32.mrb[0].mxu0
    %v4054 = vpop.f32.mrb[0].mxu0
    %4055 = vmatprep.mubr.f32.mxu0 0.0
    %4056 = vmatmul.mubr.f32.gmra.mrb[0].mxu0 %v3901
    %v4057 = vpop.f32.mrb[0].mxu0
    %v4058 = vpop.f32.mrb[0].mxu0
    %4059 = vmatprep.mubr.f32.mxu0 0.0
    %4060 = vmatmul.mubr.f32.gmra.mrb[0].mxu0 %v3904
    %v4061 = vpop.f32.mrb[0].mxu0
    %v4062 = vpop.f32.mrb[0].mxu0
    %4063 = vdwg.mxu0
    %v4065 = vsel %vm3774, %v3812, 0
    %4067 = vmatprep.subr.mxu0 0.0
    %4068 = vmatpush1.msra.mxu0 %v3833
    %4069 = vmatprep.subr.mxu0 0.0
    %4070 = vmatpush1.msra.mxu0 %v3834
    %4071 = vmatprep.subr.mxu0 0.0
    %4072 = vmatpush1.msra.mxu0 %v3835
    %4073 = vmatprep.subr.mxu0 0.0
    %4074 = vmatpush1.msra.mxu0 %v3836
    %4075 = vmatprep.subr.mxu0 0.0
    %4076 = vmatpush1.msra.mxu0 0.0
    %4077 = vmatprep.subr.mxu0 0.0
    %4078 = vmatpush1.msra.mxu0 0.0
    %4079 = vmatprep.subr.mxu0 0.0
    %4080 = vmatpush1.msra.mxu0 0.0
    %4081 = vmatprep.subr.mxu0 0.0
    %4082 = vmatpush1.msra.mxu0 0.0
    %4083 = vmatprep.subr.mxu0 0.0
    %4084 = vmatpush1.msra.mxu0 0.0
    %4085 = vmatprep.subr.mxu0 0.0
    %4086 = vmatpush1.msra.mxu0 0.0
    %4087 = vmatprep.subr.mxu0 0.0
    %4088 = vmatpush1.msra.mxu0 0.0
    %4089 = vmatprep.subr.mxu0 0.0
    %4090 = vmatpush1.msra.mxu0 0.0
    %4091 = vmatprep.subr.mxu0 0.0
    %4092 = vmatpush1.msra.mxu0 0.0
    %4093 = vmatprep.subr.mxu0 0.0
    %4094 = vmatpush1.msra.mxu0 0.0
    %4095 = vmatprep.subr.mxu0 0.0
    %4096 = vmatpush1.msra.mxu0 0.0
    %4097 = vmatprep.subr.mxu0 0.0
    %4098 = vmatpush1.msra.mxu0 0.0
    %4099 = vmatprep.subr.mxu0 0.0
    %4100 = vmatpush1.msra.mxu0 0.0
    %4101 = vmatprep.subr.mxu0 0.0
    %4102 = vmatpush1.msra.mxu0 0.0
    %4103 = vmatprep.subr.mxu0 0.0
    %4104 = vmatpush1.msra.mxu0 0.0
    %4105 = vmatprep.subr.mxu0 0.0
    %4106 = vmatpush1.msra.mxu0 0.0
    %4107 = vmatprep.subr.mxu0 0.0
    %4108 = vmatpush1.msra.mxu0 0.0
    %4109 = vmatprep.subr.mxu0 0.0
    %4110 = vmatpush1.msra.mxu0 0.0
    %4111 = vmatprep.subr.mxu0 0.0
    %4112 = vmatpush1.msra.mxu0 0.0
    %4113 = vmatprep.subr.mxu0 0.0
    %4114 = vmatpush1.msra.mxu0 0.0
    %4115 = vmatprep.subr.mxu0 0.0
    %4116 = vmatpush1.msra.mxu0 0.0
    %4117 = vmatprep.subr.mxu0 0.0
    %4118 = vmatpush1.msra.mxu0 0.0
    %4119 = vmatprep.subr.mxu0 0.0
    %4120 = vmatpush1.msra.mxu0 0.0
    %4121 = vmatprep.subr.mxu0 0.0
    %4122 = vmatpush1.msra.mxu0 0.0
    %4123 = vmatprep.subr.mxu0 0.0
    %4124 = vmatpush1.msra.mxu0 0.0
    %4125 = vmatprep.subr.mxu0 0.0
    %4126 = vmatpush1.msra.mxu0 0.0
    %4127 = vmatprep.subr.mxu0 0.0
    %4128 = vmatpush1.msra.mxu0 0.0
    %4129 = vmatprep.subr.mxu0 0.0
    %4130 = vmatpush1.msra.mxu0 0.0
    %4131 = vmatprep.mubr.f32.mxu0 0.0
    %4132 = vmatmul.mubr.f32.gmra.mrb[0].mxu0 %v4065
    %v4133 = vpop.f32.mrb[0].mxu0
    %v4134 = vadd.f32 %v3973, %v4133
    %v4135 = vpop.f32.mrb[0].mxu0
    %4136 = vmatprep.mubr.f32.mxu0 0.0
    %4137 = vmatmul.mubr.f32.gmra.mrb[0].mxu0 %v3844
    %v4138 = vpop.f32.mrb[0].mxu0
    %v4139 = vadd.f32 %v3978, %v4138
    %v4140 = vpop.f32.mrb[0].mxu0
    %4141 = vmatprep.mubr.f32.mxu0 0.0
    %4142 = vmatmul.mubr.f32.gmra.mrb[0].mxu0 %v3847
    %v4143 = vpop.f32.mrb[0].mxu0
    %v4144 = vadd.f32 %v3983, %v4143
    %v4145 = vpop.f32.mrb[0].mxu0
    %4146 = vmatprep.mubr.f32.mxu0 0.0
    %4147 = vmatmul.mubr.f32.gmra.mrb[0].mxu0 %v3850
    %v4148 = vpop.f32.mrb[0].mxu0
    %v4149 = vpop.f32.mrb[0].mxu0
    %4150 = vmatprep.mubr.f32.mxu0 0.0
    %4151 = vmatmul.mubr.f32.gmra.mrb[0].mxu0 %v3853
    %v4152 = vpop.f32.mrb[0].mxu0
    %v4153 = vpop.f32.mrb[0].mxu0
    %4154 = vmatprep.mubr.f32.mxu0 0.0
    %4155 = vmatmul.mubr.f32.gmra.mrb[0].mxu0 %v3856
    %v4156 = vpop.f32.mrb[0].mxu0
    %v4157 = vpop.f32.mrb[0].mxu0
    %4158 = vmatprep.mubr.f32.mxu0 0.0
    %4159 = vmatmul.mubr.f32.gmra.mrb[0].mxu0 %v3859
    %v4160 = vpop.f32.mrb[0].mxu0
    %v4161 = vpop.f32.mrb[0].mxu0
    %4162 = vmatprep.mubr.f32.mxu0 0.0
    %4163 = vmatmul.mubr.f32.gmra.mrb[0].mxu0 %v3862
    %v4164 = vpop.f32.mrb[0].mxu0
    %v4165 = vadd.f32 %v4004, %v4164
    %v4166 = vpop.f32.mrb[0].mxu0
    %4167 = vmatprep.mubr.f32.mxu0 0.0
    %4168 = vmatmul.mubr.f32.gmra.mrb[0].mxu0 %v3865
    %v4169 = vpop.f32.mrb[0].mxu0
    %v4170 = vadd.f32 %v4009, %v4169
    %v4171 = vpop.f32.mrb[0].mxu0
    %4172 = vmatprep.mubr.f32.mxu0 0.0
    %4173 = vmatmul.mubr.f32.gmra.mrb[0].mxu0 %v3868
    %v4174 = vpop.f32.mrb[0].mxu0
    %v4175 = vadd.f32 %v4014, %v4174
    %v4176 = vpop.f32.mrb[0].mxu0
    %4177 = vmatprep.mubr.f32.mxu0 0.0
    %4178 = vmatmul.mubr.f32.gmra.mrb[0].mxu0 %v3871
    %v4179 = vpop.f32.mrb[0].mxu0
    %v4180 = vpop.f32.mrb[0].mxu0
    %4181 = vmatprep.mubr.f32.mxu0 0.0
    %4182 = vmatmul.mubr.f32.gmra.mrb[0].mxu0 %v3874
    %v4183 = vpop.f32.mrb[0].mxu0
    %v4184 = vpop.f32.mrb[0].mxu0
    %4185 = vmatprep.mubr.f32.mxu0 0.0
    %4186 = vmatmul.mubr.f32.gmra.mrb[0].mxu0 %v3877
    %v4187 = vpop.f32.mrb[0].mxu0
    %v4188 = vpop.f32.mrb[0].mxu0
    %4189 = vmatprep.mubr.f32.mxu0 0.0
    %4190 = vmatmul.mubr.f32.gmra.mrb[0].mxu0 %v3880
    %v4191 = vpop.f32.mrb[0].mxu0
    %v4192 = vpop.f32.mrb[0].mxu0
    %4193 = vmatprep.mubr.f32.mxu0 0.0
    %4194 = vmatmul.mubr.f32.gmra.mrb[0].mxu0 %v3883
    %v4195 = vpop.f32.mrb[0].mxu0
    %v4196 = vadd.f32 %v4035, %v4195
    %v4197 = vpop.f32.mrb[0].mxu0
    %4198 = vmatprep.mubr.f32.mxu0 0.0
    %4199 = vmatmul.mubr.f32.gmra.mrb[0].mxu0 %v3886
    %v4200 = vpop.f32.mrb[0].mxu0
    %v4201 = vadd.f32 %v4040, %v4200
    %v4202 = vpop.f32.mrb[0].mxu0
    %4203 = vmatprep.mubr.f32.mxu0 0.0
    %4204 = vmatmul.mubr.f32.gmra.mrb[0].mxu0 %v3889
    %v4205 = vpop.f32.mrb[0].mxu0
    %v4206 = vadd.f32 %v4045, %v4205
    %v4207 = vpop.f32.mrb[0].mxu0
    %4208 = vmatprep.mubr.f32.mxu0 0.0
    %4209 = vmatmul.mubr.f32.gmra.mrb[0].mxu0 %v3892
    %v4210 = vpop.f32.mrb[0].mxu0
    %v4211 = vpop.f32.mrb[0].mxu0
    %4212 = vmatprep.mubr.f32.mxu0 0.0
    %4213 = vmatmul.mubr.f32.gmra.mrb[0].mxu0 %v3895
    %v4214 = vpop.f32.mrb[0].mxu0
    %v4215 = vpop.f32.mrb[0].mxu0
    %4216 = vmatprep.mubr.f32.mxu0 0.0
    %4217 = vmatmul.mubr.f32.gmra.mrb[0].mxu0 %v3898
    %v4218 = vpop.f32.mrb[0].mxu0
    %v4219 = vpop.f32.mrb[0].mxu0
    %4220 = vmatprep.mubr.f32.mxu0 0.0
    %4221 = vmatmul.mubr.f32.gmra.mrb[0].mxu0 %v3901
    %v4222 = vpop.f32.mrb[0].mxu0
    %v4223 = vpop.f32.mrb[0].mxu0
    %4224 = vdwg.mxu0
    %v4225 = vld [vmem:[#allocation2 + $0x10] sm:$0xff]
    %v4226 = vld [vmem:[#allocation2 + $0x18] sm:$0xff]
    %v4227 = vld [vmem:[#allocation2 + $0x20] sm:$0xff]
    %v4228 = vld [vmem:[#allocation2 + $0x28] sm:$0xff]
    %v4229 = vld [vmem:[#allocation2 + $0x30] sm:$0xff]
    %v4230 = vld [vmem:[#allocation2 + $0x38] sm:$0xff]
    %v4231 = vld [vmem:[#allocation2 + $0x40] sm:$0xff]
    %v4232 = vld [vmem:[#allocation2 + $0x48] sm:$0xff]
    %v4233 = vld [vmem:[#allocation2 + $0x50] sm:$0xff]
    %v4234 = vld [vmem:[#allocation2 + $0x58] sm:$0xff]
    %v4235 = vld [vmem:[#allocation2 + $0x60] sm:$0xff]
    %v4236 = vld [vmem:[#allocation2 + $0x68] sm:$0xff]
    %v4237 = vld [vmem:[#allocation2 + $0x70] sm:$0xff]
    %v4238 = vld [vmem:[#allocation2 + $0x78] sm:$0xff]
    %v4239 = vld [vmem:[#allocation2 + $0x80] sm:$0xff]
    %v4240 = vld [vmem:[#allocation2 + $0x88] sm:$0xff]
    %v4241 = vld [vmem:[#allocation2 + $0x90] sm:$0xff]
    %v4242 = vld [vmem:[#allocation2 + $0x98] sm:$0xff]
    %v4243 = vld [vmem:[#allocation2 + $0xa0] sm:$0xff]
    %v4244 = vld [vmem:[#allocation2 + $0xa8] sm:$0xff]
    %v4245 = vld [vmem:[#allocation2 + $0xb0] sm:$0xff]
    %s4246 = scalar_lea.vmem %s5, 64
    %v4247 = vld [vmem:[%s4246] sm:$0xff]
    %v4248 = vld [vmem:[%s4246 + $0x8] sm:$0xff]
    %v4249 = vld [vmem:[%s4246 + $0x10] sm:$0xff]
    %v4250 = vld [vmem:[%s4246 + $0x18] sm:$0xff]
    %v4252 = vsel %vm3774, %v4225, 0
    %v4255 = vsel %vm3774, %v4226, 0
    %v4258 = vsel %vm3774, %v4227, 0
    %v4261 = vsel %vm3774, %v4228, 0
    %v4264 = vsel %vm3774, %v4229, 0
    %v4267 = vsel %vm3774, %v4230, 0
    %v4270 = vsel %vm3774, %v4231, 0
    %v4273 = vsel %vm3774, %v4232, 0
    %v4276 = vsel %vm3774, %v4233, 0
    %v4279 = vsel %vm3774, %v4234, 0
    %v4282 = vsel %vm3774, %v4235, 0
    %v4285 = vsel %vm3774, %v4236, 0
    %v4288 = vsel %vm3774, %v4237, 0
    %v4291 = vsel %vm3774, %v4238, 0
    %v4294 = vsel %vm3774, %v4239, 0
    %v4297 = vsel %vm3774, %v4240, 0
    %v4300 = vsel %vm3774, %v4241, 0
    %v4303 = vsel %vm3774, %v4242, 0
    %v4306 = vsel %vm3774, %v4243, 0
    %v4309 = vsel %vm3774, %v4244, 0
    %v4312 = vsel %vm3774, %v4245, 0
    %4314 = vmatprep.subr.mxu0 0.0
    %4315 = vmatpush1.msra.mxu0 %v4247
    %4316 = vmatprep.subr.mxu0 0.0
    %4317 = vmatpush1.msra.mxu0 %v4248
    %4318 = vmatprep.subr.mxu0 0.0
    %4319 = vmatpush1.msra.mxu0 %v4249
    %4320 = vmatprep.subr.mxu0 0.0
    %4321 = vmatpush1.msra.mxu0 %v4250
    %4322 = vmatprep.subr.mxu0 0.0
    %4323 = vmatpush1.msra.mxu0 0.0
    %4324 = vmatprep.subr.mxu0 0.0
    %4325 = vmatpush1.msra.mxu0 0.0
    %4326 = vmatprep.subr.mxu0 0.0
    %4327 = vmatpush1.msra.mxu0 0.0
    %4328 = vmatprep.subr.mxu0 0.0
    %4329 = vmatpush1.msra.mxu0 0.0
    %4330 = vmatprep.subr.mxu0 0.0
    %4331 = vmatpush1.msra.mxu0 0.0
    %4332 = vmatprep.subr.mxu0 0.0
    %4333 = vmatpush1.msra.mxu0 0.0
    %4334 = vmatprep.subr.mxu0 0.0
    %4335 = vmatpush1.msra.mxu0 0.0
    %4336 = vmatprep.subr.mxu0 0.0
    %4337 = vmatpush1.msra.mxu0 0.0
    %4338 = vmatprep.subr.mxu0 0.0
    %4339 = vmatpush1.msra.mxu0 0.0
    %4340 = vmatprep.subr.mxu0 0.0
    %4341 = vmatpush1.msra.mxu0 0.0
    %4342 = vmatprep.subr.mxu0 0.0
    %4343 = vmatpush1.msra.mxu0 0.0
    %4344 = vmatprep.subr.mxu0 0.0
    %4345 = vmatpush1.msra.mxu0 0.0
    %4346 = vmatprep.subr.mxu0 0.0
    %4347 = vmatpush1.msra.mxu0 0.0
    %4348 = vmatprep.subr.mxu0 0.0
    %4349 = vmatpush1.msra.mxu0 0.0
    %4350 = vmatprep.subr.mxu0 0.0
    %4351 = vmatpush1.msra.mxu0 0.0
    %4352 = vmatprep.subr.mxu0 0.0
    %4353 = vmatpush1.msra.mxu0 0.0
    %4354 = vmatprep.subr.mxu0 0.0
    %4355 = vmatpush1.msra.mxu0 0.0
    %4356 = vmatprep.subr.mxu0 0.0
    %4357 = vmatpush1.msra.mxu0 0.0
    %4358 = vmatprep.subr.mxu0 0.0
    %4359 = vmatpush1.msra.mxu0 0.0
    %4360 = vmatprep.subr.mxu0 0.0
    %4361 = vmatpush1.msra.mxu0 0.0
    %4362 = vmatprep.subr.mxu0 0.0
    %4363 = vmatpush1.msra.mxu0 0.0
    %4364 = vmatprep.subr.mxu0 0.0
    %4365 = vmatpush1.msra.mxu0 0.0
    %4366 = vmatprep.subr.mxu0 0.0
    %4367 = vmatpush1.msra.mxu0 0.0
    %4368 = vmatprep.subr.mxu0 0.0
    %4369 = vmatpush1.msra.mxu0 0.0
    %4370 = vmatprep.subr.mxu0 0.0
    %4371 = vmatpush1.msra.mxu0 0.0
    %4372 = vmatprep.subr.mxu0 0.0
    %4373 = vmatpush1.msra.mxu0 0.0
    %4374 = vmatprep.subr.mxu0 0.0
    %4375 = vmatpush1.msra.mxu0 0.0
    %4376 = vmatprep.subr.mxu0 0.0
    %4377 = vmatpush1.msra.mxu0 0.0
    %4378 = vmatprep.mubr.f32.mxu0 0.0
    %4379 = vmatmul.mubr.f32.gmra.mrb[0].mxu0 %v4252
    %v4380 = vpop.f32.mrb[0].mxu0
    %v4381 = vadd.f32 0.0, %v4380
    %v4382 = vpop.f32.mrb[0].mxu0
    %4383 = vmatprep.mubr.f32.mxu0 0.0
    %4384 = vmatmul.mubr.f32.gmra.mrb[0].mxu0 %v4255
    %v4385 = vpop.f32.mrb[0].mxu0
    %v4386 = vadd.f32 0.0, %v4385
    %v4387 = vpop.f32.mrb[0].mxu0
    %4388 = vmatprep.mubr.f32.mxu0 0.0
    %4389 = vmatmul.mubr.f32.gmra.mrb[0].mxu0 %v4258
    %v4390 = vpop.f32.mrb[0].mxu0
    %v4391 = vadd.f32 0.0, %v4390
    %v4392 = vpop.f32.mrb[0].mxu0
    %4393 = vmatprep.mubr.f32.mxu0 0.0
    %4394 = vmatmul.mubr.f32.gmra.mrb[0].mxu0 %v4261
    %v4395 = vpop.f32.mrb[0].mxu0
    %v4396 = vpop.f32.mrb[0].mxu0
    %4397 = vmatprep.mubr.f32.mxu0 0.0
    %4398 = vmatmul.mubr.f32.gmra.mrb[0].mxu0 %v4264
    %v4399 = vpop.f32.mrb[0].mxu0
    %v4400 = vpop.f32.mrb[0].mxu0
    %4401 = vmatprep.mubr.f32.mxu0 0.0
    %4402 = vmatmul.mubr.f32.gmra.mrb[0].mxu0 %v4267
    %v4403 = vpop.f32.mrb[0].mxu0
    %v4404 = vpop.f32.mrb[0].mxu0
    %4405 = vmatprep.mubr.f32.mxu0 0.0
    %4406 = vmatmul.mubr.f32.gmra.mrb[0].mxu0 %v4270
    %v4407 = vpop.f32.mrb[0].mxu0
    %v4408 = vpop.f32.mrb[0].mxu0
    %4409 = vmatprep.mubr.f32.mxu0 0.0
    %4410 = vmatmul.mubr.f32.gmra.mrb[0].mxu0 %v4273
    %v4411 = vpop.f32.mrb[0].mxu0
    %v4412 = vadd.f32 0.0, %v4411
    %v4413 = vpop.f32.mrb[0].mxu0
    %4414 = vmatprep.mubr.f32.mxu0 0.0
    %4415 = vmatmul.mubr.f32.gmra.mrb[0].mxu0 %v4276
    %v4416 = vpop.f32.mrb[0].mxu0
    %v4417 = vadd.f32 0.0, %v4416
    %v4418 = vpop.f32.mrb[0].mxu0
    %4419 = vmatprep.mubr.f32.mxu0 0.0
    %4420 = vmatmul.mubr.f32.gmra.mrb[0].mxu0 %v4279
    %v4421 = vpop.f32.mrb[0].mxu0
    %v4422 = vadd.f32 0.0, %v4421
    %v4423 = vpop.f32.mrb[0].mxu0
    %4424 = vmatprep.mubr.f32.mxu0 0.0
    %4425 = vmatmul.mubr.f32.gmra.mrb[0].mxu0 %v4282
    %v4426 = vpop.f32.mrb[0].mxu0
    %v4427 = vpop.f32.mrb[0].mxu0
    %4428 = vmatprep.mubr.f32.mxu0 0.0
    %4429 = vmatmul.mubr.f32.gmra.mrb[0].mxu0 %v4285
    %v4430 = vpop.f32.mrb[0].mxu0
    %v4431 = vpop.f32.mrb[0].mxu0
    %4432 = vmatprep.mubr.f32.mxu0 0.0
    %4433 = vmatmul.mubr.f32.gmra.mrb[0].mxu0 %v4288
    %v4434 = vpop.f32.mrb[0].mxu0
    %v4435 = vpop.f32.mrb[0].mxu0
    %4436 = vmatprep.mubr.f32.mxu0 0.0
    %4437 = vmatmul.mubr.f32.gmra.mrb[0].mxu0 %v4291
    %v4438 = vpop.f32.mrb[0].mxu0
    %v4439 = vpop.f32.mrb[0].mxu0
    %4440 = vmatprep.mubr.f32.mxu0 0.0
    %4441 = vmatmul.mubr.f32.gmra.mrb[0].mxu0 %v4294
    %v4442 = vpop.f32.mrb[0].mxu0
    %v4443 = vadd.f32 0.0, %v4442
    %v4444 = vpop.f32.mrb[0].mxu0
    %4445 = vmatprep.mubr.f32.mxu0 0.0
    %4446 = vmatmul.mubr.f32.gmra.mrb[0].mxu0 %v4297
    %v4447 = vpop.f32.mrb[0].mxu0
    %v4448 = vadd.f32 0.0, %v4447
    %v4449 = vpop.f32.mrb[0].mxu0
    %4450 = vmatprep.mubr.f32.mxu0 0.0
    %4451 = vmatmul.mubr.f32.gmra.mrb[0].mxu0 %v4300
    %v4452 = vpop.f32.mrb[0].mxu0
    %v4453 = vadd.f32 0.0, %v4452
    %v4454 = vpop.f32.mrb[0].mxu0
    %4455 = vmatprep.mubr.f32.mxu0 0.0
    %4456 = vmatmul.mubr.f32.gmra.mrb[0].mxu0 %v4303
    %v4457 = vpop.f32.mrb[0].mxu0
    %v4458 = vpop.f32.mrb[0].mxu0
    %4459 = vmatprep.mubr.f32.mxu0 0.0
    %4460 = vmatmul.mubr.f32.gmra.mrb[0].mxu0 %v4306
    %v4461 = vpop.f32.mrb[0].mxu0
    %v4462 = vpop.f32.mrb[0].mxu0
    %4463 = vmatprep.mubr.f32.mxu0 0.0
    %4464 = vmatmul.mubr.f32.gmra.mrb[0].mxu0 %v4309
    %v4465 = vpop.f32.mrb[0].mxu0
    %v4466 = vpop.f32.mrb[0].mxu0
    %4467 = vmatprep.mubr.f32.mxu0 0.0
    %4468 = vmatmul.mubr.f32.gmra.mrb[0].mxu0 %v4312
    %v4469 = vpop.f32.mrb[0].mxu0
    %v4470 = vpop.f32.mrb[0].mxu0
    %4471 = vdwg.mxu0
    %v4472 = vadd.f32 %v4134, %v4381
    %v4473 = vadd.f32 %v4139, %v4386
    %v4474 = vadd.f32 %v4144, %v4391
    %v4475 = vadd.f32 %v4165, %v4412
    %v4476 = vadd.f32 %v4170, %v4417
    %v4477 = vadd.f32 %v4175, %v4422
    %v4478 = vadd.f32 %v4196, %v4443
    %v4479 = vadd.f32 %v4201, %v4448
    %v4480 = vadd.f32 %v4206, %v4453
    %v4481 = vld [vmem:[#allocation2 + $0x38] sm:$0xff]
    %v4482 = vld [vmem:[#allocation2 + $0x40] sm:$0xff]
    %v4483 = vld [vmem:[#allocation2 + $0x48] sm:$0xff]
    %v4484 = vld [vmem:[#allocation2 + $0x50] sm:$0xff]
    %v4485 = vld [vmem:[#allocation2 + $0x58] sm:$0xff]
    %v4486 = vld [vmem:[#allocation2 + $0x60] sm:$0xff]
    %v4487 = vld [vmem:[#allocation2 + $0x68] sm:$0xff]
    %v4488 = vld [vmem:[#allocation2 + $0x70] sm:$0xff]
    %v4489 = vld [vmem:[#allocation2 + $0x78] sm:$0xff]
    %v4490 = vld [vmem:[#allocation2 + $0x80] sm:$0xff]
    %v4491 = vld [vmem:[#allocation2 + $0x88] sm:$0xff]
    %v4492 = vld [vmem:[#allocation2 + $0x90] sm:$0xff]
    %v4493 = vld [vmem:[#allocation2 + $0x98] sm:$0xff]
    %v4494 = vld [vmem:[#allocation2 + $0xa0] sm:$0xff]
    %v4495 = vld [vmem:[#allocation2 + $0xa8] sm:$0xff]
    %v4496 = vld [vmem:[#allocation2 + $0xb0] sm:$0xff]
    %v4497 = vld [vmem:[#allocation2 + $0xb8] sm:$0xff]
    %v4498 = vld [vmem:[#allocation2 + $0xc0] sm:$0xff]
    %v4499 = vld [vmem:[#allocation2 + $0xc8] sm:$0xff]
    %v4500 = vld [vmem:[#allocation2 + $0xd0] sm:$0xff]
    %v4501 = vld [vmem:[#allocation2 + $0xd8] sm:$0xff]
    %s4502 = scalar_lea.vmem %s5, 96
    %v4503 = vld [vmem:[%s4502] sm:$0xff]
    %v4504 = vld [vmem:[%s4502 + $0x8] sm:$0xff]
    %v4505 = vld [vmem:[%s4502 + $0x10] sm:$0xff]
    %v4506 = vld [vmem:[%s4502 + $0x18] sm:$0xff]
    %v4508 = vsel %vm3774, %v4481, 0
    %v4511 = vsel %vm3774, %v4482, 0
    %v4514 = vsel %vm3774, %v4483, 0
    %v4517 = vsel %vm3774, %v4484, 0
    %v4520 = vsel %vm3774, %v4485, 0
    %v4523 = vsel %vm3774, %v4486, 0
    %v4526 = vsel %vm3774, %v4487, 0
    %v4529 = vsel %vm3774, %v4488, 0
    %v4532 = vsel %vm3774, %v4489, 0
    %v4535 = vsel %vm3774, %v4490, 0
    %v4538 = vsel %vm3774, %v4491, 0
    %v4541 = vsel %vm3774, %v4492, 0
    %v4544 = vsel %vm3774, %v4493, 0
    %v4547 = vsel %vm3774, %v4494, 0
    %v4550 = vsel %vm3774, %v4495, 0
    %v4553 = vsel %vm3774, %v4496, 0
    %v4556 = vsel %vm3774, %v4497, 0
    %v4559 = vsel %vm3774, %v4498, 0
    %v4562 = vsel %vm3774, %v4499, 0
    %v4565 = vsel %vm3774, %v4500, 0
    %v4568 = vsel %vm3774, %v4501, 0
    %4570 = vmatprep.subr.mxu0 0.0
    %4571 = vmatpush1.msra.mxu0 %v4503
    %4572 = vmatprep.subr.mxu0 0.0
    %4573 = vmatpush1.msra.mxu0 %v4504
    %4574 = vmatprep.subr.mxu0 0.0
    %4575 = vmatpush1.msra.mxu0 %v4505
    %4576 = vmatprep.subr.mxu0 0.0
    %4577 = vmatpush1.msra.mxu0 %v4506
    %4578 = vmatprep.subr.mxu0 0.0
    %4579 = vmatpush1.msra.mxu0 0.0
    %4580 = vmatprep.subr.mxu0 0.0
    %4581 = vmatpush1.msra.mxu0 0.0
    %4582 = vmatprep.subr.mxu0 0.0
    %4583 = vmatpush1.msra.mxu0 0.0
    %4584 = vmatprep.subr.mxu0 0.0
    %4585 = vmatpush1.msra.mxu0 0.0
    %4586 = vmatprep.subr.mxu0 0.0
    %4587 = vmatpush1.msra.mxu0 0.0
    %4588 = vmatprep.subr.mxu0 0.0
    %4589 = vmatpush1.msra.mxu0 0.0
    %4590 = vmatprep.subr.mxu0 0.0
    %4591 = vmatpush1.msra.mxu0 0.0
    %4592 = vmatprep.subr.mxu0 0.0
    %4593 = vmatpush1.msra.mxu0 0.0
    %4594 = vmatprep.subr.mxu0 0.0
    %4595 = vmatpush1.msra.mxu0 0.0
    %4596 = vmatprep.subr.mxu0 0.0
    %4597 = vmatpush1.msra.mxu0 0.0
    %4598 = vmatprep.subr.mxu0 0.0
    %4599 = vmatpush1.msra.mxu0 0.0
    %4600 = vmatprep.subr.mxu0 0.0
    %4601 = vmatpush1.msra.mxu0 0.0
    %4602 = vmatprep.subr.mxu0 0.0
    %4603 = vmatpush1.msra.mxu0 0.0
    %4604 = vmatprep.subr.mxu0 0.0
    %4605 = vmatpush1.msra.mxu0 0.0
    %4606 = vmatprep.subr.mxu0 0.0
    %4607 = vmatpush1.msra.mxu0 0.0
    %4608 = vmatprep.subr.mxu0 0.0
    %4609 = vmatpush1.msra.mxu0 0.0
    %4610 = vmatprep.subr.mxu0 0.0
    %4611 = vmatpush1.msra.mxu0 0.0
    %4612 = vmatprep.subr.mxu0 0.0
    %4613 = vmatpush1.msra.mxu0 0.0
    %4614 = vmatprep.subr.mxu0 0.0
    %4615 = vmatpush1.msra.mxu0 0.0
    %4616 = vmatprep.subr.mxu0 0.0
    %4617 = vmatpush1.msra.mxu0 0.0
    %4618 = vmatprep.subr.mxu0 0.0
    %4619 = vmatpush1.msra.mxu0 0.0
    %4620 = vmatprep.subr.mxu0 0.0
    %4621 = vmatpush1.msra.mxu0 0.0
    %4622 = vmatprep.subr.mxu0 0.0
    %4623 = vmatpush1.msra.mxu0 0.0
    %4624 = vmatprep.subr.mxu0 0.0
    %4625 = vmatpush1.msra.mxu0 0.0
    %4626 = vmatprep.subr.mxu0 0.0
    %4627 = vmatpush1.msra.mxu0 0.0
    %4628 = vmatprep.subr.mxu0 0.0
    %4629 = vmatpush1.msra.mxu0 0.0
    %4630 = vmatprep.subr.mxu0 0.0
    %4631 = vmatpush1.msra.mxu0 0.0
    %4632 = vmatprep.subr.mxu0 0.0
    %4633 = vmatpush1.msra.mxu0 0.0
    %4634 = vmatprep.mubr.f32.mxu0 0.0
    %4635 = vmatmul.mubr.f32.gmra.mrb[0].mxu0 %v4508
    %v4636 = vpop.f32.mrb[0].mxu0
    %v4637 = vadd.f32 0.0, %v4636
    %v4638 = vpop.f32.mrb[0].mxu0
    %4639 = vmatprep.mubr.f32.mxu0 0.0
    %4640 = vmatmul.mubr.f32.gmra.mrb[0].mxu0 %v4511
    %v4641 = vpop.f32.mrb[0].mxu0
    %v4642 = vadd.f32 0.0, %v4641
    %v4643 = vpop.f32.mrb[0].mxu0
    %4644 = vmatprep.mubr.f32.mxu0 0.0
    %4645 = vmatmul.mubr.f32.gmra.mrb[0].mxu0 %v4514
    %v4646 = vpop.f32.mrb[0].mxu0
    %v4647 = vadd.f32 0.0, %v4646
    %v4648 = vpop.f32.mrb[0].mxu0
    %4649 = vmatprep.mubr.f32.mxu0 0.0
    %4650 = vmatmul.mubr.f32.gmra.mrb[0].mxu0 %v4517
    %v4651 = vpop.f32.mrb[0].mxu0
    %v4652 = vpop.f32.mrb[0].mxu0
    %4653 = vmatprep.mubr.f32.mxu0 0.0
    %4654 = vmatmul.mubr.f32.gmra.mrb[0].mxu0 %v4520
    %v4655 = vpop.f32.mrb[0].mxu0
    %v4656 = vpop.f32.mrb[0].mxu0
    %4657 = vmatprep.mubr.f32.mxu0 0.0
    %4658 = vmatmul.mubr.f32.gmra.mrb[0].mxu0 %v4523
    %v4659 = vpop.f32.mrb[0].mxu0
    %v4660 = vpop.f32.mrb[0].mxu0
    %4661 = vmatprep.mubr.f32.mxu0 0.0
    %4662 = vmatmul.mubr.f32.gmra.mrb[0].mxu0 %v4526
    %v4663 = vpop.f32.mrb[0].mxu0
    %v4664 = vpop.f32.mrb[0].mxu0
    %4665 = vmatprep.mubr.f32.mxu0 0.0
    %4666 = vmatmul.mubr.f32.gmra.mrb[0].mxu0 %v4529
    %v4667 = vpop.f32.mrb[0].mxu0
    %v4668 = vadd.f32 0.0, %v4667
    %v4669 = vpop.f32.mrb[0].mxu0
    %4670 = vmatprep.mubr.f32.mxu0 0.0
    %4671 = vmatmul.mubr.f32.gmra.mrb[0].mxu0 %v4532
    %v4672 = vpop.f32.mrb[0].mxu0
    %v4673 = vadd.f32 0.0, %v4672
    %v4674 = vpop.f32.mrb[0].mxu0
    %4675 = vmatprep.mubr.f32.mxu0 0.0
    %4676 = vmatmul.mubr.f32.gmra.mrb[0].mxu0 %v4535
    %v4677 = vpop.f32.mrb[0].mxu0
    %v4678 = vadd.f32 0.0, %v4677
    %v4679 = vpop.f32.mrb[0].mxu0
    %4680 = vmatprep.mubr.f32.mxu0 0.0
    %4681 = vmatmul.mubr.f32.gmra.mrb[0].mxu0 %v4538
    %v4682 = vpop.f32.mrb[0].mxu0
    %v4683 = vpop.f32.mrb[0].mxu0
    %4684 = vmatprep.mubr.f32.mxu0 0.0
    %4685 = vmatmul.mubr.f32.gmra.mrb[0].mxu0 %v4541
    %v4686 = vpop.f32.mrb[0].mxu0
    %v4687 = vpop.f32.mrb[0].mxu0
    %4688 = vmatprep.mubr.f32.mxu0 0.0
    %4689 = vmatmul.mubr.f32.gmra.mrb[0].mxu0 %v4544
    %v4690 = vpop.f32.mrb[0].mxu0
    %v4691 = vpop.f32.mrb[0].mxu0
    %4692 = vmatprep.mubr.f32.mxu0 0.0
    %4693 = vmatmul.mubr.f32.gmra.mrb[0].mxu0 %v4547
    %v4694 = vpop.f32.mrb[0].mxu0
    %v4695 = vpop.f32.mrb[0].mxu0
    %4696 = vmatprep.mubr.f32.mxu0 0.0
    %4697 = vmatmul.mubr.f32.gmra.mrb[0].mxu0 %v4550
    %v4698 = vpop.f32.mrb[0].mxu0
    %v4699 = vadd.f32 0.0, %v4698
    %v4700 = vpop.f32.mrb[0].mxu0
    %4701 = vmatprep.mubr.f32.mxu0 0.0
    %4702 = vmatmul.mubr.f32.gmra.mrb[0].mxu0 %v4553
    %v4703 = vpop.f32.mrb[0].mxu0
    %v4704 = vadd.f32 0.0, %v4703
    %v4705 = vpop.f32.mrb[0].mxu0
    %4706 = vmatprep.mubr.f32.mxu0 0.0
    %4707 = vmatmul.mubr.f32.gmra.mrb[0].mxu0 %v4556
    %v4708 = vpop.f32.mrb[0].mxu0
    %v4709 = vadd.f32 0.0, %v4708
    %v4710 = vpop.f32.mrb[0].mxu0
    %4711 = vmatprep.mubr.f32.mxu0 0.0
    %4712 = vmatmul.mubr.f32.gmra.mrb[0].mxu0 %v4559
    %v4713 = vpop.f32.mrb[0].mxu0
    %v4714 = vpop.f32.mrb[0].mxu0
    %4715 = vmatprep.mubr.f32.mxu0 0.0
    %4716 = vmatmul.mubr.f32.gmra.mrb[0].mxu0 %v4562
    %v4717 = vpop.f32.mrb[0].mxu0
    %v4718 = vpop.f32.mrb[0].mxu0
    %4719 = vmatprep.mubr.f32.mxu0 0.0
    %4720 = vmatmul.mubr.f32.gmra.mrb[0].mxu0 %v4565
    %v4721 = vpop.f32.mrb[0].mxu0
    %v4722 = vpop.f32.mrb[0].mxu0
    %4723 = vmatprep.mubr.f32.mxu0 0.0
    %4724 = vmatmul.mubr.f32.gmra.mrb[0].mxu0 %v4568
    %v4725 = vpop.f32.mrb[0].mxu0
    %v4726 = vpop.f32.mrb[0].mxu0
    %4727 = vdwg.mxu0
    %v4728 = vadd.f32 %v4472, %v4637
    %v4729 = vadd.f32 %v4473, %v4642
    %v4730 = vadd.f32 %v4474, %v4647
    %v4731 = vadd.f32 %v4475, %v4668
    %v4732 = vadd.f32 %v4476, %v4673
    %v4733 = vadd.f32 %v4477, %v4678
    %v4734 = vadd.f32 %v4478, %v4699
    %v4735 = vadd.f32 %v4479, %v4704
    %v4736 = vadd.f32 %v4480, %v4709
    %v4737 = vld [vmem:[#allocation2 + $0x40] sm:$0xff]
    %v4738 = vld [vmem:[#allocation2 + $0x48] sm:$0xff]
    %v4739 = vld [vmem:[#allocation2 + $0x50] sm:$0xff]
    %v4740 = vld [vmem:[#allocation2 + $0x58] sm:$0xff]
    %v4741 = vld [vmem:[#allocation2 + $0x60] sm:$0xff]
    %v4742 = vld [vmem:[#allocation2 + $0x68] sm:$0xff]
    %v4743 = vld [vmem:[#allocation2 + $0x70] sm:$0xff]
    %v4744 = vld [vmem:[#allocation2 + $0x78] sm:$0xff]
    %v4745 = vld [vmem:[#allocation2 + $0x80] sm:$0xff]
    %v4746 = vld [vmem:[#allocation2 + $0x88] sm:$0xff]
    %v4747 = vld [vmem:[#allocation2 + $0x90] sm:$0xff]
    %v4748 = vld [vmem:[#allocation2 + $0x98] sm:$0xff]
    %v4749 = vld [vmem:[#allocation2 + $0xa0] sm:$0xff]
    %v4750 = vld [vmem:[#allocation2 + $0xa8] sm:$0xff]
    %v4751 = vld [vmem:[#allocation2 + $0xb0] sm:$0xff]
    %v4752 = vld [vmem:[#allocation2 + $0xb8] sm:$0xff]
    %v4753 = vld [vmem:[#allocation2 + $0xc0] sm:$0xff]
    %v4754 = vld [vmem:[#allocation2 + $0xc8] sm:$0xff]
    %v4755 = vld [vmem:[#allocation2 + $0xd0] sm:$0xff]
    %v4756 = vld [vmem:[#allocation2 + $0xd8] sm:$0xff]
    %v4757 = vld [vmem:[#allocation2 + $0xe0] sm:$0xff]
    %s4758 = scalar_lea.vmem %s5, 128
    %v4759 = vld [vmem:[%s4758] sm:$0xff]
    %v4760 = vld [vmem:[%s4758 + $0x8] sm:$0xff]
    %v4761 = vld [vmem:[%s4758 + $0x10] sm:$0xff]
    %v4762 = vld [vmem:[%s4758 + $0x18] sm:$0xff]
    %v4764 = vsel %vm3774, %v4737, 0
    %v4767 = vsel %vm3774, %v4738, 0
    %v4770 = vsel %vm3774, %v4739, 0
    %v4773 = vsel %vm3774, %v4740, 0
    %v4776 = vsel %vm3774, %v4741, 0
    %v4779 = vsel %vm3774, %v4742, 0
    %v4782 = vsel %vm3774, %v4743, 0
    %v4785 = vsel %vm3774, %v4744, 0
    %v4788 = vsel %vm3774, %v4745, 0
    %v4791 = vsel %vm3774, %v4746, 0
    %v4794 = vsel %vm3774, %v4747, 0
    %v4797 = vsel %vm3774, %v4748, 0
    %v4800 = vsel %vm3774, %v4749, 0
    %v4803 = vsel %vm3774, %v4750, 0
    %v4806 = vsel %vm3774, %v4751, 0
    %v4809 = vsel %vm3774, %v4752, 0
    %v4812 = vsel %vm3774, %v4753, 0
    %v4815 = vsel %vm3774, %v4754, 0
    %v4818 = vsel %vm3774, %v4755, 0
    %v4821 = vsel %vm3774, %v4756, 0
    %v4824 = vsel %vm3774, %v4757, 0
    %4826 = vmatprep.subr.mxu0 0.0
    %4827 = vmatpush1.msra.mxu0 %v4759
    %4828 = vmatprep.subr.mxu0 0.0
    %4829 = vmatpush1.msra.mxu0 %v4760
    %4830 = vmatprep.subr.mxu0 0.0
    %4831 = vmatpush1.msra.mxu0 %v4761
    %4832 = vmatprep.subr.mxu0 0.0
    %4833 = vmatpush1.msra.mxu0 %v4762
    %4834 = vmatprep.subr.mxu0 0.0
    %4835 = vmatpush1.msra.mxu0 0.0
    %4836 = vmatprep.subr.mxu0 0.0
    %4837 = vmatpush1.msra.mxu0 0.0
    %4838 = vmatprep.subr.mxu0 0.0
    %4839 = vmatpush1.msra.mxu0 0.0
    %4840 = vmatprep.subr.mxu0 0.0
    %4841 = vmatpush1.msra.mxu0 0.0
    %4842 = vmatprep.subr.mxu0 0.0
    %4843 = vmatpush1.msra.mxu0 0.0
    %4844 = vmatprep.subr.mxu0 0.0
    %4845 = vmatpush1.msra.mxu0 0.0
    %4846 = vmatprep.subr.mxu0 0.0
    %4847 = vmatpush1.msra.mxu0 0.0
    %4848 = vmatprep.subr.mxu0 0.0
    %4849 = vmatpush1.msra.mxu0 0.0
    %4850 = vmatprep.subr.mxu0 0.0
    %4851 = vmatpush1.msra.mxu0 0.0
    %4852 = vmatprep.subr.mxu0 0.0
    %4853 = vmatpush1.msra.mxu0 0.0
    %4854 = vmatprep.subr.mxu0 0.0
    %4855 = vmatpush1.msra.mxu0 0.0
    %4856 = vmatprep.subr.mxu0 0.0
    %4857 = vmatpush1.msra.mxu0 0.0
    %4858 = vmatprep.subr.mxu0 0.0
    %4859 = vmatpush1.msra.mxu0 0.0
    %4860 = vmatprep.subr.mxu0 0.0
    %4861 = vmatpush1.msra.mxu0 0.0
    %4862 = vmatprep.subr.mxu0 0.0
    %4863 = vmatpush1.msra.mxu0 0.0
    %4864 = vmatprep.subr.mxu0 0.0
    %4865 = vmatpush1.msra.mxu0 0.0
    %4866 = vmatprep.subr.mxu0 0.0
    %4867 = vmatpush1.msra.mxu0 0.0
    %4868 = vmatprep.subr.mxu0 0.0
    %4869 = vmatpush1.msra.mxu0 0.0
    %4870 = vmatprep.subr.mxu0 0.0
    %4871 = vmatpush1.msra.mxu0 0.0
    %4872 = vmatprep.subr.mxu0 0.0
    %4873 = vmatpush1.msra.mxu0 0.0
    %4874 = vmatprep.subr.mxu0 0.0
    %4875 = vmatpush1.msra.mxu0 0.0
    %4876 = vmatprep.subr.mxu0 0.0
    %4877 = vmatpush1.msra.mxu0 0.0
    %4878 = vmatprep.subr.mxu0 0.0
    %4879 = vmatpush1.msra.mxu0 0.0
    %4880 = vmatprep.subr.mxu0 0.0
    %4881 = vmatpush1.msra.mxu0 0.0
    %4882 = vmatprep.subr.mxu0 0.0
    %4883 = vmatpush1.msra.mxu0 0.0
    %4884 = vmatprep.subr.mxu0 0.0
    %4885 = vmatpush1.msra.mxu0 0.0
    %4886 = vmatprep.subr.mxu0 0.0
    %4887 = vmatpush1.msra.mxu0 0.0
    %4888 = vmatprep.subr.mxu0 0.0
    %4889 = vmatpush1.msra.mxu0 0.0
    %4890 = vmatprep.mubr.f32.mxu0 0.0
    %4891 = vmatmul.mubr.f32.gmra.mrb[0].mxu0 %v4764
    %v4892 = vpop.f32.mrb[0].mxu0
    %v4893 = vadd.f32 0.0, %v4892
    %v4894 = vpop.f32.mrb[0].mxu0
    %4895 = vmatprep.mubr.f32.mxu0 0.0
    %4896 = vmatmul.mubr.f32.gmra.mrb[0].mxu0 %v4767
    %v4897 = vpop.f32.mrb[0].mxu0
    %v4898 = vadd.f32 0.0, %v4897
    %v4899 = vpop.f32.mrb[0].mxu0
    %4900 = vmatprep.mubr.f32.mxu0 0.0
    %4901 = vmatmul.mubr.f32.gmra.mrb[0].mxu0 %v4770
    %v4902 = vpop.f32.mrb[0].mxu0
    %v4903 = vadd.f32 0.0, %v4902
    %v4904 = vpop.f32.mrb[0].mxu0
    %4905 = vmatprep.mubr.f32.mxu0 0.0
    %4906 = vmatmul.mubr.f32.gmra.mrb[0].mxu0 %v4773
    %v4907 = vpop.f32.mrb[0].mxu0
    %v4908 = vpop.f32.mrb[0].mxu0
    %4909 = vmatprep.mubr.f32.mxu0 0.0
    %4910 = vmatmul.mubr.f32.gmra.mrb[0].mxu0 %v4776
    %v4911 = vpop.f32.mrb[0].mxu0
    %v4912 = vpop.f32.mrb[0].mxu0
    %4913 = vmatprep.mubr.f32.mxu0 0.0
    %4914 = vmatmul.mubr.f32.gmra.mrb[0].mxu0 %v4779
    %v4915 = vpop.f32.mrb[0].mxu0
    %v4916 = vpop.f32.mrb[0].mxu0
    %4917 = vmatprep.mubr.f32.mxu0 0.0
    %4918 = vmatmul.mubr.f32.gmra.mrb[0].mxu0 %v4782
    %v4919 = vpop.f32.mrb[0].mxu0
    %v4920 = vpop.f32.mrb[0].mxu0
    %4921 = vmatprep.mubr.f32.mxu0 0.0
    %4922 = vmatmul.mubr.f32.gmra.mrb[0].mxu0 %v4785
    %v4923 = vpop.f32.mrb[0].mxu0
    %v4924 = vadd.f32 0.0, %v4923
    %v4925 = vpop.f32.mrb[0].mxu0
    %4926 = vmatprep.mubr.f32.mxu0 0.0
    %4927 = vmatmul.mubr.f32.gmra.mrb[0].mxu0 %v4788
    %v4928 = vpop.f32.mrb[0].mxu0
    %v4929 = vadd.f32 0.0, %v4928
    %v4930 = vpop.f32.mrb[0].mxu0
    %4931 = vmatprep.mubr.f32.mxu0 0.0
    %4932 = vmatmul.mubr.f32.gmra.mrb[0].mxu0 %v4791
    %v4933 = vpop.f32.mrb[0].mxu0
    %v4934 = vadd.f32 0.0, %v4933
    %v4935 = vpop.f32.mrb[0].mxu0
    %4936 = vmatprep.mubr.f32.mxu0 0.0
    %4937 = vmatmul.mubr.f32.gmra.mrb[0].mxu0 %v4794
    %v4938 = vpop.f32.mrb[0].mxu0
    %v4939 = vpop.f32.mrb[0].mxu0
    %4940 = vmatprep.mubr.f32.mxu0 0.0
    %4941 = vmatmul.mubr.f32.gmra.mrb[0].mxu0 %v4797
    %v4942 = vpop.f32.mrb[0].mxu0
    %v4943 = vpop.f32.mrb[0].mxu0
    %4944 = vmatprep.mubr.f32.mxu0 0.0
    %4945 = vmatmul.mubr.f32.gmra.mrb[0].mxu0 %v4800
    %v4946 = vpop.f32.mrb[0].mxu0
    %v4947 = vpop.f32.mrb[0].mxu0
    %4948 = vmatprep.mubr.f32.mxu0 0.0
    %4949 = vmatmul.mubr.f32.gmra.mrb[0].mxu0 %v4803
    %v4950 = vpop.f32.mrb[0].mxu0
    %v4951 = vpop.f32.mrb[0].mxu0
    %4952 = vmatprep.mubr.f32.mxu0 0.0
    %4953 = vmatmul.mubr.f32.gmra.mrb[0].mxu0 %v4806
    %v4954 = vpop.f32.mrb[0].mxu0
    %v4955 = vadd.f32 0.0, %v4954
    %v4956 = vpop.f32.mrb[0].mxu0
    %4957 = vmatprep.mubr.f32.mxu0 0.0
    %4958 = vmatmul.mubr.f32.gmra.mrb[0].mxu0 %v4809
    %v4959 = vpop.f32.mrb[0].mxu0
    %v4960 = vadd.f32 0.0, %v4959
    %v4961 = vpop.f32.mrb[0].mxu0
    %4962 = vmatprep.mubr.f32.mxu0 0.0
    %4963 = vmatmul.mubr.f32.gmra.mrb[0].mxu0 %v4812
    %v4964 = vpop.f32.mrb[0].mxu0
    %v4965 = vadd.f32 0.0, %v4964
    %v4966 = vpop.f32.mrb[0].mxu0
    %4967 = vmatprep.mubr.f32.mxu0 0.0
    %4968 = vmatmul.mubr.f32.gmra.mrb[0].mxu0 %v4815
    %v4969 = vpop.f32.mrb[0].mxu0
    %v4970 = vpop.f32.mrb[0].mxu0
    %4971 = vmatprep.mubr.f32.mxu0 0.0
    %4972 = vmatmul.mubr.f32.gmra.mrb[0].mxu0 %v4818
    %v4973 = vpop.f32.mrb[0].mxu0
    %v4974 = vpop.f32.mrb[0].mxu0
    %4975 = vmatprep.mubr.f32.mxu0 0.0
    %4976 = vmatmul.mubr.f32.gmra.mrb[0].mxu0 %v4821
    %v4977 = vpop.f32.mrb[0].mxu0
    %v4978 = vpop.f32.mrb[0].mxu0
    %4979 = vmatprep.mubr.f32.mxu0 0.0
    %4980 = vmatmul.mubr.f32.gmra.mrb[0].mxu0 %v4824
    %v4981 = vpop.f32.mrb[0].mxu0
    %v4982 = vpop.f32.mrb[0].mxu0
    %4983 = vdwg.mxu0
    %v4984 = vadd.f32 %v4728, %v4893
    %v4985 = vadd.f32 %v4729, %v4898
    %v4986 = vadd.f32 %v4730, %v4903
    %v4987 = vadd.f32 %v4731, %v4924
    %v4988 = vadd.f32 %v4732, %v4929
    %v4989 = vadd.f32 %v4733, %v4934
    %v4990 = vadd.f32 %v4734, %v4955
    %v4991 = vadd.f32 %v4735, %v4960
    %v4992 = vadd.f32 %v4736, %v4965
    %v4993 = vld [vmem:[#allocation2 + $0x48] sm:$0xff]
    %v4994 = vld [vmem:[#allocation2 + $0x50] sm:$0xff]
    %v4995 = vld [vmem:[#allocation2 + $0x58] sm:$0xff]
    %v4996 = vld [vmem:[#allocation2 + $0x60] sm:$0xff]
    %v4997 = vld [vmem:[#allocation2 + $0x68] sm:$0xff]
    %v4998 = vld [vmem:[#allocation2 + $0x70] sm:$0xff]
    %v4999 = vld [vmem:[#allocation2 + $0x78] sm:$0xff]
    %v5000 = vld [vmem:[#allocation2 + $0x80] sm:$0xff]
    %v5001 = vld [vmem:[#allocation2 + $0x88] sm:$0xff]
    %v5002 = vld [vmem:[#allocation2 + $0x90] sm:$0xff]
    %v5003 = vld [vmem:[#allocation2 + $0x98] sm:$0xff]
    %v5004 = vld [vmem:[#allocation2 + $0xa0] sm:$0xff]
    %v5005 = vld [vmem:[#allocation2 + $0xa8] sm:$0xff]
    %v5006 = vld [vmem:[#allocation2 + $0xb0] sm:$0xff]
    %v5007 = vld [vmem:[#allocation2 + $0xb8] sm:$0xff]
    %v5008 = vld [vmem:[#allocation2 + $0xc0] sm:$0xff]
    %v5009 = vld [vmem:[#allocation2 + $0xc8] sm:$0xff]
    %v5010 = vld [vmem:[#allocation2 + $0xd0] sm:$0xff]
    %v5011 = vld [vmem:[#allocation2 + $0xd8] sm:$0xff]
    %v5012 = vld [vmem:[#allocation2 + $0xe0] sm:$0xff]
    %v5013 = vld [vmem:[#allocation2 + $0xe8] sm:$0xff]
    %s5014 = scalar_lea.vmem %s5, 160
    %v5015 = vld [vmem:[%s5014] sm:$0xff]
    %v5016 = vld [vmem:[%s5014 + $0x8] sm:$0xff]
    %v5017 = vld [vmem:[%s5014 + $0x10] sm:$0xff]
    %v5018 = vld [vmem:[%s5014 + $0x18] sm:$0xff]
    %v5020 = vsel %vm3774, %v4993, 0
    %v5023 = vsel %vm3774, %v4994, 0
    %v5026 = vsel %vm3774, %v4995, 0
    %v5029 = vsel %vm3774, %v4996, 0
    %v5032 = vsel %vm3774, %v4997, 0
    %v5035 = vsel %vm3774, %v4998, 0
    %v5038 = vsel %vm3774, %v4999, 0
    %v5041 = vsel %vm3774, %v5000, 0
    %v5044 = vsel %vm3774, %v5001, 0
    %v5047 = vsel %vm3774, %v5002, 0
    %v5050 = vsel %vm3774, %v5003, 0
    %v5053 = vsel %vm3774, %v5004, 0
    %v5056 = vsel %vm3774, %v5005, 0
    %v5059 = vsel %vm3774, %v5006, 0
    %v5062 = vsel %vm3774, %v5007, 0
    %v5065 = vsel %vm3774, %v5008, 0
    %v5068 = vsel %vm3774, %v5009, 0
    %v5071 = vsel %vm3774, %v5010, 0
    %v5074 = vsel %vm3774, %v5011, 0
    %v5077 = vsel %vm3774, %v5012, 0
    %v5080 = vsel %vm3774, %v5013, 0
    %5082 = vmatprep.subr.mxu0 0.0
    %5083 = vmatpush1.msra.mxu0 %v5015
    %5084 = vmatprep.subr.mxu0 0.0
    %5085 = vmatpush1.msra.mxu0 %v5016
    %5086 = vmatprep.subr.mxu0 0.0
    %5087 = vmatpush1.msra.mxu0 %v5017
    %5088 = vmatprep.subr.mxu0 0.0
    %5089 = vmatpush1.msra.mxu0 %v5018
    %5090 = vmatprep.subr.mxu0 0.0
    %5091 = vmatpush1.msra.mxu0 0.0
    %5092 = vmatprep.subr.mxu0 0.0
    %5093 = vmatpush1.msra.mxu0 0.0
    %5094 = vmatprep.subr.mxu0 0.0
    %5095 = vmatpush1.msra.mxu0 0.0
    %5096 = vmatprep.subr.mxu0 0.0
    %5097 = vmatpush1.msra.mxu0 0.0
    %5098 = vmatprep.subr.mxu0 0.0
    %5099 = vmatpush1.msra.mxu0 0.0
    %5100 = vmatprep.subr.mxu0 0.0
    %5101 = vmatpush1.msra.mxu0 0.0
    %5102 = vmatprep.subr.mxu0 0.0
    %5103 = vmatpush1.msra.mxu0 0.0
    %5104 = vmatprep.subr.mxu0 0.0
    %5105 = vmatpush1.msra.mxu0 0.0
    %5106 = vmatprep.subr.mxu0 0.0
    %5107 = vmatpush1.msra.mxu0 0.0
    %5108 = vmatprep.subr.mxu0 0.0
    %5109 = vmatpush1.msra.mxu0 0.0
    %5110 = vmatprep.subr.mxu0 0.0
    %5111 = vmatpush1.msra.mxu0 0.0
    %5112 = vmatprep.subr.mxu0 0.0
    %5113 = vmatpush1.msra.mxu0 0.0
    %5114 = vmatprep.subr.mxu0 0.0
    %5115 = vmatpush1.msra.mxu0 0.0
    %5116 = vmatprep.subr.mxu0 0.0
    %5117 = vmatpush1.msra.mxu0 0.0
    %5118 = vmatprep.subr.mxu0 0.0
    %5119 = vmatpush1.msra.mxu0 0.0
    %5120 = vmatprep.subr.mxu0 0.0
    %5121 = vmatpush1.msra.mxu0 0.0
    %5122 = vmatprep.subr.mxu0 0.0
    %5123 = vmatpush1.msra.mxu0 0.0
    %5124 = vmatprep.subr.mxu0 0.0
    %5125 = vmatpush1.msra.mxu0 0.0
    %5126 = vmatprep.subr.mxu0 0.0
    %5127 = vmatpush1.msra.mxu0 0.0
    %5128 = vmatprep.subr.mxu0 0.0
    %5129 = vmatpush1.msra.mxu0 0.0
    %5130 = vmatprep.subr.mxu0 0.0
    %5131 = vmatpush1.msra.mxu0 0.0
    %5132 = vmatprep.subr.mxu0 0.0
    %5133 = vmatpush1.msra.mxu0 0.0
    %5134 = vmatprep.subr.mxu0 0.0
    %5135 = vmatpush1.msra.mxu0 0.0
    %5136 = vmatprep.subr.mxu0 0.0
    %5137 = vmatpush1.msra.mxu0 0.0
    %5138 = vmatprep.subr.mxu0 0.0
    %5139 = vmatpush1.msra.mxu0 0.0
    %5140 = vmatprep.subr.mxu0 0.0
    %5141 = vmatpush1.msra.mxu0 0.0
    %5142 = vmatprep.subr.mxu0 0.0
    %5143 = vmatpush1.msra.mxu0 0.0
    %5144 = vmatprep.subr.mxu0 0.0
    %5145 = vmatpush1.msra.mxu0 0.0
    %5146 = vmatprep.mubr.f32.mxu0 0.0
    %5147 = vmatmul.mubr.f32.gmra.mrb[0].mxu0 %v5020
    %v5148 = vpop.f32.mrb[0].mxu0
    %v5149 = vadd.f32 0.0, %v5148
    %v5150 = vpop.f32.mrb[0].mxu0
    %5151 = vmatprep.mubr.f32.mxu0 0.0
    %5152 = vmatmul.mubr.f32.gmra.mrb[0].mxu0 %v5023
    %v5153 = vpop.f32.mrb[0].mxu0
    %v5154 = vadd.f32 0.0, %v5153
    %v5155 = vpop.f32.mrb[0].mxu0
    %5156 = vmatprep.mubr.f32.mxu0 0.0
    %5157 = vmatmul.mubr.f32.gmra.mrb[0].mxu0 %v5026
    %v5158 = vpop.f32.mrb[0].mxu0
    %v5159 = vadd.f32 0.0, %v5158
    %v5160 = vpop.f32.mrb[0].mxu0
    %5161 = vmatprep.mubr.f32.mxu0 0.0
    %5162 = vmatmul.mubr.f32.gmra.mrb[0].mxu0 %v5029
    %v5163 = vpop.f32.mrb[0].mxu0
    %v5164 = vpop.f32.mrb[0].mxu0
    %5165 = vmatprep.mubr.f32.mxu0 0.0
    %5166 = vmatmul.mubr.f32.gmra.mrb[0].mxu0 %v5032
    %v5167 = vpop.f32.mrb[0].mxu0
    %v5168 = vpop.f32.mrb[0].mxu0
    %5169 = vmatprep.mubr.f32.mxu0 0.0
    %5170 = vmatmul.mubr.f32.gmra.mrb[0].mxu0 %v5035
    %v5171 = vpop.f32.mrb[0].mxu0
    %v5172 = vpop.f32.mrb[0].mxu0
    %5173 = vmatprep.mubr.f32.mxu0 0.0
    %5174 = vmatmul.mubr.f32.gmra.mrb[0].mxu0 %v5038
    %v5175 = vpop.f32.mrb[0].mxu0
    %v5176 = vpop.f32.mrb[0].mxu0
    %5177 = vmatprep.mubr.f32.mxu0 0.0
    %5178 = vmatmul.mubr.f32.gmra.mrb[0].mxu0 %v5041
    %v5179 = vpop.f32.mrb[0].mxu0
    %v5180 = vadd.f32 0.0, %v5179
    %v5181 = vpop.f32.mrb[0].mxu0
    %5182 = vmatprep.mubr.f32.mxu0 0.0
    %5183 = vmatmul.mubr.f32.gmra.mrb[0].mxu0 %v5044
    %v5184 = vpop.f32.mrb[0].mxu0
    %v5185 = vadd.f32 0.0, %v5184
    %v5186 = vpop.f32.mrb[0].mxu0
    %5187 = vmatprep.mubr.f32.mxu0 0.0
    %5188 = vmatmul.mubr.f32.gmra.mrb[0].mxu0 %v5047
    %v5189 = vpop.f32.mrb[0].mxu0
    %v5190 = vadd.f32 0.0, %v5189
    %v5191 = vpop.f32.mrb[0].mxu0
    %5192 = vmatprep.mubr.f32.mxu0 0.0
    %5193 = vmatmul.mubr.f32.gmra.mrb[0].mxu0 %v5050
    %v5194 = vpop.f32.mrb[0].mxu0
    %v5195 = vpop.f32.mrb[0].mxu0
    %5196 = vmatprep.mubr.f32.mxu0 0.0
    %5197 = vmatmul.mubr.f32.gmra.mrb[0].mxu0 %v5053
    %v5198 = vpop.f32.mrb[0].mxu0
    %v5199 = vpop.f32.mrb[0].mxu0
    %5200 = vmatprep.mubr.f32.mxu0 0.0
    %5201 = vmatmul.mubr.f32.gmra.mrb[0].mxu0 %v5056
    %v5202 = vpop.f32.mrb[0].mxu0
    %v5203 = vpop.f32.mrb[0].mxu0
    %5204 = vmatprep.mubr.f32.mxu0 0.0
    %5205 = vmatmul.mubr.f32.gmra.mrb[0].mxu0 %v5059
    %v5206 = vpop.f32.mrb[0].mxu0
    %v5207 = vpop.f32.mrb[0].mxu0
    %5208 = vmatprep.mubr.f32.mxu0 0.0
    %5209 = vmatmul.mubr.f32.gmra.mrb[0].mxu0 %v5062
    %v5210 = vpop.f32.mrb[0].mxu0
    %v5211 = vadd.f32 0.0, %v5210
    %v5212 = vpop.f32.mrb[0].mxu0
    %5213 = vmatprep.mubr.f32.mxu0 0.0
    %5214 = vmatmul.mubr.f32.gmra.mrb[0].mxu0 %v5065
    %v5215 = vpop.f32.mrb[0].mxu0
    %v5216 = vadd.f32 0.0, %v5215
    %v5217 = vpop.f32.mrb[0].mxu0
    %5218 = vmatprep.mubr.f32.mxu0 0.0
    %5219 = vmatmul.mubr.f32.gmra.mrb[0].mxu0 %v5068
    %v5220 = vpop.f32.mrb[0].mxu0
    %v5221 = vadd.f32 0.0, %v5220
    %v5222 = vpop.f32.mrb[0].mxu0
    %5223 = vmatprep.mubr.f32.mxu0 0.0
    %5224 = vmatmul.mubr.f32.gmra.mrb[0].mxu0 %v5071
    %v5225 = vpop.f32.mrb[0].mxu0
    %v5226 = vpop.f32.mrb[0].mxu0
    %5227 = vmatprep.mubr.f32.mxu0 0.0
    %5228 = vmatmul.mubr.f32.gmra.mrb[0].mxu0 %v5074
    %v5229 = vpop.f32.mrb[0].mxu0
    %v5230 = vpop.f32.mrb[0].mxu0
    %5231 = vmatprep.mubr.f32.mxu0 0.0
    %5232 = vmatmul.mubr.f32.gmra.mrb[0].mxu0 %v5077
    %v5233 = vpop.f32.mrb[0].mxu0
    %v5234 = vpop.f32.mrb[0].mxu0
    %5235 = vmatprep.mubr.f32.mxu0 0.0
    %5236 = vmatmul.mubr.f32.gmra.mrb[0].mxu0 %v5080
    %v5237 = vpop.f32.mrb[0].mxu0
    %v5238 = vpop.f32.mrb[0].mxu0
    %5239 = vdwg.mxu0
    %v5240 = vadd.f32 %v4984, %v5149
    %v5241 = vadd.f32 %v4985, %v5154
    %v5242 = vadd.f32 %v4986, %v5159
    %v5243 = vadd.f32 %v4987, %v5180
    %v5244 = vadd.f32 %v4988, %v5185
    %v5245 = vadd.f32 %v4989, %v5190
    %v5246 = vadd.f32 %v4990, %v5211
    %v5247 = vadd.f32 %v4991, %v5216
    %v5248 = vadd.f32 %v4992, %v5221
    %v5249 = vld [vmem:[#allocation2 + $0x70] sm:$0xff]
    %v5250 = vld [vmem:[#allocation2 + $0x78] sm:$0xff]
    %v5251 = vld [vmem:[#allocation2 + $0x80] sm:$0xff]
    %v5252 = vld [vmem:[#allocation2 + $0x88] sm:$0xff]
    %v5253 = vld [vmem:[#allocation2 + $0x90] sm:$0xff]
    %v5254 = vld [vmem:[#allocation2 + $0x98] sm:$0xff]
    %v5255 = vld [vmem:[#allocation2 + $0xa0] sm:$0xff]
    %v5256 = vld [vmem:[#allocation2 + $0xa8] sm:$0xff]
    %v5257 = vld [vmem:[#allocation2 + $0xb0] sm:$0xff]
    %v5258 = vld [vmem:[#allocation2 + $0xb8] sm:$0xff]
    %v5259 = vld [vmem:[#allocation2 + $0xc0] sm:$0xff]
    %v5260 = vld [vmem:[#allocation2 + $0xc8] sm:$0xff]
    %v5261 = vld [vmem:[#allocation2 + $0xd0] sm:$0xff]
    %v5262 = vld [vmem:[#allocation2 + $0xd8] sm:$0xff]
    %v5263 = vld [vmem:[#allocation2 + $0xe0] sm:$0xff]
    %v5264 = vld [vmem:[#allocation2 + $0xe8] sm:$0xff]
    %v5265 = vld [vmem:[#allocation2 + $0xf0] sm:$0xff]
    %v5266 = vld [vmem:[#allocation2 + $0xf8] sm:$0xff]
    %v5267 = vld [vmem:[#allocation2 + $0x100] sm:$0xff]
    %v5268 = vld [vmem:[#allocation2 + $0x108] sm:$0xff]
    %v5269 = vld [vmem:[#allocation2 + $0x110] sm:$0xff]
    %s5270 = scalar_lea.vmem %s5, 192
    %v5271 = vld [vmem:[%s5270] sm:$0xff]
    %v5272 = vld [vmem:[%s5270 + $0x8] sm:$0xff]
    %v5273 = vld [vmem:[%s5270 + $0x10] sm:$0xff]
    %v5274 = vld [vmem:[%s5270 + $0x18] sm:$0xff]
    %v5276 = vsel %vm3774, %v5249, 0
    %v5279 = vsel %vm3774, %v5250, 0
    %v5282 = vsel %vm3774, %v5251, 0
    %v5285 = vsel %vm3774, %v5252, 0
    %v5288 = vsel %vm3774, %v5253, 0
    %v5291 = vsel %vm3774, %v5254, 0
    %v5294 = vsel %vm3774, %v5255, 0
    %v5297 = vsel %vm3774, %v5256, 0
    %v5300 = vsel %vm3774, %v5257, 0
    %v5303 = vsel %vm3774, %v5258, 0
    %v5306 = vsel %vm3774, %v5259, 0
    %v5309 = vsel %vm3774, %v5260, 0
    %v5312 = vsel %vm3774, %v5261, 0
    %v5315 = vsel %vm3774, %v5262, 0
    %v5318 = vsel %vm3774, %v5263, 0
    %v5321 = vsel %vm3774, %v5264, 0
    %v5324 = vsel %vm3774, %v5265, 0
    %v5327 = vsel %vm3774, %v5266, 0
    %v5330 = vsel %vm3774, %v5267, 0
    %v5333 = vsel %vm3774, %v5268, 0
    %v5336 = vsel %vm3774, %v5269, 0
    %5338 = vmatprep.subr.mxu0 0.0
    %5339 = vmatpush1.msra.mxu0 %v5271
    %5340 = vmatprep.subr.mxu0 0.0
    %5341 = vmatpush1.msra.mxu0 %v5272
    %5342 = vmatprep.subr.mxu0 0.0
    %5343 = vmatpush1.msra.mxu0 %v5273
    %5344 = vmatprep.subr.mxu0 0.0
    %5345 = vmatpush1.msra.mxu0 %v5274
    %5346 = vmatprep.subr.mxu0 0.0
    %5347 = vmatpush1.msra.mxu0 0.0
    %5348 = vmatprep.subr.mxu0 0.0
    %5349 = vmatpush1.msra.mxu0 0.0
    %5350 = vmatprep.subr.mxu0 0.0
    %5351 = vmatpush1.msra.mxu0 0.0
    %5352 = vmatprep.subr.mxu0 0.0
    %5353 = vmatpush1.msra.mxu0 0.0
    %5354 = vmatprep.subr.mxu0 0.0
    %5355 = vmatpush1.msra.mxu0 0.0
    %5356 = vmatprep.subr.mxu0 0.0
    %5357 = vmatpush1.msra.mxu0 0.0
    %5358 = vmatprep.subr.mxu0 0.0
    %5359 = vmatpush1.msra.mxu0 0.0
    %5360 = vmatprep.subr.mxu0 0.0
    %5361 = vmatpush1.msra.mxu0 0.0
    %5362 = vmatprep.subr.mxu0 0.0
    %5363 = vmatpush1.msra.mxu0 0.0
    %5364 = vmatprep.subr.mxu0 0.0
    %5365 = vmatpush1.msra.mxu0 0.0
    %5366 = vmatprep.subr.mxu0 0.0
    %5367 = vmatpush1.msra.mxu0 0.0
    %5368 = vmatprep.subr.mxu0 0.0
    %5369 = vmatpush1.msra.mxu0 0.0
    %5370 = vmatprep.subr.mxu0 0.0
    %5371 = vmatpush1.msra.mxu0 0.0
    %5372 = vmatprep.subr.mxu0 0.0
    %5373 = vmatpush1.msra.mxu0 0.0
    %5374 = vmatprep.subr.mxu0 0.0
    %5375 = vmatpush1.msra.mxu0 0.0
    %5376 = vmatprep.subr.mxu0 0.0
    %5377 = vmatpush1.msra.mxu0 0.0
    %5378 = vmatprep.subr.mxu0 0.0
    %5379 = vmatpush1.msra.mxu0 0.0
    %5380 = vmatprep.subr.mxu0 0.0
    %5381 = vmatpush1.msra.mxu0 0.0
    %5382 = vmatprep.subr.mxu0 0.0
    %5383 = vmatpush1.msra.mxu0 0.0
    %5384 = vmatprep.subr.mxu0 0.0
    %5385 = vmatpush1.msra.mxu0 0.0
    %5386 = vmatprep.subr.mxu0 0.0
    %5387 = vmatpush1.msra.mxu0 0.0
    %5388 = vmatprep.subr.mxu0 0.0
    %5389 = vmatpush1.msra.mxu0 0.0
    %5390 = vmatprep.subr.mxu0 0.0
    %5391 = vmatpush1.msra.mxu0 0.0
    %5392 = vmatprep.subr.mxu0 0.0
    %5393 = vmatpush1.msra.mxu0 0.0
    %5394 = vmatprep.subr.mxu0 0.0
    %5395 = vmatpush1.msra.mxu0 0.0
    %5396 = vmatprep.subr.mxu0 0.0
    %5397 = vmatpush1.msra.mxu0 0.0
    %5398 = vmatprep.subr.mxu0 0.0
    %5399 = vmatpush1.msra.mxu0 0.0
    %5400 = vmatprep.subr.mxu0 0.0
    %5401 = vmatpush1.msra.mxu0 0.0
    %5402 = vmatprep.mubr.f32.mxu0 0.0
    %5403 = vmatmul.mubr.f32.gmra.mrb[0].mxu0 %v5276
    %v5404 = vpop.f32.mrb[0].mxu0
    %v5405 = vadd.f32 0.0, %v5404
    %v5406 = vpop.f32.mrb[0].mxu0
    %5407 = vmatprep.mubr.f32.mxu0 0.0
    %5408 = vmatmul.mubr.f32.gmra.mrb[0].mxu0 %v5279
    %v5409 = vpop.f32.mrb[0].mxu0
    %v5410 = vadd.f32 0.0, %v5409
    %v5411 = vpop.f32.mrb[0].mxu0
    %5412 = vmatprep.mubr.f32.mxu0 0.0
    %5413 = vmatmul.mubr.f32.gmra.mrb[0].mxu0 %v5282
    %v5414 = vpop.f32.mrb[0].mxu0
    %v5415 = vadd.f32 0.0, %v5414
    %v5416 = vpop.f32.mrb[0].mxu0
    %5417 = vmatprep.mubr.f32.mxu0 0.0
    %5418 = vmatmul.mubr.f32.gmra.mrb[0].mxu0 %v5285
    %v5419 = vpop.f32.mrb[0].mxu0
    %v5420 = vpop.f32.mrb[0].mxu0
    %5421 = vmatprep.mubr.f32.mxu0 0.0
    %5422 = vmatmul.mubr.f32.gmra.mrb[0].mxu0 %v5288
    %v5423 = vpop.f32.mrb[0].mxu0
    %v5424 = vpop.f32.mrb[0].mxu0
    %5425 = vmatprep.mubr.f32.mxu0 0.0
    %5426 = vmatmul.mubr.f32.gmra.mrb[0].mxu0 %v5291
    %v5427 = vpop.f32.mrb[0].mxu0
    %v5428 = vpop.f32.mrb[0].mxu0
    %5429 = vmatprep.mubr.f32.mxu0 0.0
    %5430 = vmatmul.mubr.f32.gmra.mrb[0].mxu0 %v5294
    %v5431 = vpop.f32.mrb[0].mxu0
    %v5432 = vpop.f32.mrb[0].mxu0
    %5433 = vmatprep.mubr.f32.mxu0 0.0
    %5434 = vmatmul.mubr.f32.gmra.mrb[0].mxu0 %v5297
    %v5435 = vpop.f32.mrb[0].mxu0
    %v5436 = vadd.f32 0.0, %v5435
    %v5437 = vpop.f32.mrb[0].mxu0
    %5438 = vmatprep.mubr.f32.mxu0 0.0
    %5439 = vmatmul.mubr.f32.gmra.mrb[0].mxu0 %v5300
    %v5440 = vpop.f32.mrb[0].mxu0
    %v5441 = vadd.f32 0.0, %v5440
    %v5442 = vpop.f32.mrb[0].mxu0
    %5443 = vmatprep.mubr.f32.mxu0 0.0
    %5444 = vmatmul.mubr.f32.gmra.mrb[0].mxu0 %v5303
    %v5445 = vpop.f32.mrb[0].mxu0
    %v5446 = vadd.f32 0.0, %v5445
    %v5447 = vpop.f32.mrb[0].mxu0
    %5448 = vmatprep.mubr.f32.mxu0 0.0
    %5449 = vmatmul.mubr.f32.gmra.mrb[0].mxu0 %v5306
    %v5450 = vpop.f32.mrb[0].mxu0
    %v5451 = vpop.f32.mrb[0].mxu0
    %5452 = vmatprep.mubr.f32.mxu0 0.0
    %5453 = vmatmul.mubr.f32.gmra.mrb[0].mxu0 %v5309
    %v5454 = vpop.f32.mrb[0].mxu0
    %v5455 = vpop.f32.mrb[0].mxu0
    %5456 = vmatprep.mubr.f32.mxu0 0.0
    %5457 = vmatmul.mubr.f32.gmra.mrb[0].mxu0 %v5312
    %v5458 = vpop.f32.mrb[0].mxu0
    %v5459 = vpop.f32.mrb[0].mxu0
    %5460 = vmatprep.mubr.f32.mxu0 0.0
    %5461 = vmatmul.mubr.f32.gmra.mrb[0].mxu0 %v5315
    %v5462 = vpop.f32.mrb[0].mxu0
    %v5463 = vpop.f32.mrb[0].mxu0
    %5464 = vmatprep.mubr.f32.mxu0 0.0
    %5465 = vmatmul.mubr.f32.gmra.mrb[0].mxu0 %v5318
    %v5466 = vpop.f32.mrb[0].mxu0
    %v5467 = vadd.f32 0.0, %v5466
    %v5468 = vpop.f32.mrb[0].mxu0
    %5469 = vmatprep.mubr.f32.mxu0 0.0
    %5470 = vmatmul.mubr.f32.gmra.mrb[0].mxu0 %v5321
    %v5471 = vpop.f32.mrb[0].mxu0
    %v5472 = vadd.f32 0.0, %v5471
    %v5473 = vpop.f32.mrb[0].mxu0
    %5474 = vmatprep.mubr.f32.mxu0 0.0
    %5475 = vmatmul.mubr.f32.gmra.mrb[0].mxu0 %v5324
    %v5476 = vpop.f32.mrb[0].mxu0
    %v5477 = vadd.f32 0.0, %v5476
    %v5478 = vpop.f32.mrb[0].mxu0
    %5479 = vmatprep.mubr.f32.mxu0 0.0
    %5480 = vmatmul.mubr.f32.gmra.mrb[0].mxu0 %v5327
    %v5481 = vpop.f32.mrb[0].mxu0
    %v5482 = vpop.f32.mrb[0].mxu0
    %5483 = vmatprep.mubr.f32.mxu0 0.0
    %5484 = vmatmul.mubr.f32.gmra.mrb[0].mxu0 %v5330
    %v5485 = vpop.f32.mrb[0].mxu0
    %v5486 = vpop.f32.mrb[0].mxu0
    %5487 = vmatprep.mubr.f32.mxu0 0.0
    %5488 = vmatmul.mubr.f32.gmra.mrb[0].mxu0 %v5333
    %v5489 = vpop.f32.mrb[0].mxu0
    %v5490 = vpop.f32.mrb[0].mxu0
    %5491 = vmatprep.mubr.f32.mxu0 0.0
    %5492 = vmatmul.mubr.f32.gmra.mrb[0].mxu0 %v5336
    %v5493 = vpop.f32.mrb[0].mxu0
    %v5494 = vpop.f32.mrb[0].mxu0
    %5495 = vdwg.mxu0
    %v5496 = vadd.f32 %v5240, %v5405
    %v5497 = vadd.f32 %v5241, %v5410
    %v5498 = vadd.f32 %v5242, %v5415
    %v5499 = vadd.f32 %v5243, %v5436
    %v5500 = vadd.f32 %v5244, %v5441
    %v5501 = vadd.f32 %v5245, %v5446
    %v5502 = vadd.f32 %v5246, %v5467
    %v5503 = vadd.f32 %v5247, %v5472
    %v5504 = vadd.f32 %v5248, %v5477
    %v5505 = vld [vmem:[#allocation2 + $0x78] sm:$0xff]
    %v5506 = vld [vmem:[#allocation2 + $0x80] sm:$0xff]
    %v5507 = vld [vmem:[#allocation2 + $0x88] sm:$0xff]
    %v5508 = vld [vmem:[#allocation2 + $0x90] sm:$0xff]
    %v5509 = vld [vmem:[#allocation2 + $0x98] sm:$0xff]
    %v5510 = vld [vmem:[#allocation2 + $0xa0] sm:$0xff]
    %v5511 = vld [vmem:[#allocation2 + $0xa8] sm:$0xff]
    %v5512 = vld [vmem:[#allocation2 + $0xb0] sm:$0xff]
    %v5513 = vld [vmem:[#allocation2 + $0xb8] sm:$0xff]
    %v5514 = vld [vmem:[#allocation2 + $0xc0] sm:$0xff]
    %v5515 = vld [vmem:[#allocation2 + $0xc8] sm:$0xff]
    %v5516 = vld [vmem:[#allocation2 + $0xd0] sm:$0xff]
    %v5517 = vld [vmem:[#allocation2 + $0xd8] sm:$0xff]
    %v5518 = vld [vmem:[#allocation2 + $0xe0] sm:$0xff]
    %v5519 = vld [vmem:[#allocation2 + $0xe8] sm:$0xff]
    %v5520 = vld [vmem:[#allocation2 + $0xf0] sm:$0xff]
    %v5521 = vld [vmem:[#allocation2 + $0xf8] sm:$0xff]
    %v5522 = vld [vmem:[#allocation2 + $0x100] sm:$0xff]
    %v5523 = vld [vmem:[#allocation2 + $0x108] sm:$0xff]
    %v5524 = vld [vmem:[#allocation2 + $0x110] sm:$0xff]
    %v5525 = vld [vmem:[#allocation2 + $0x118] sm:$0xff]
    %s5526 = scalar_lea.vmem %s5, 224
    %v5527 = vld [vmem:[%s5526] sm:$0xff]
    %v5528 = vld [vmem:[%s5526 + $0x8] sm:$0xff]
    %v5529 = vld [vmem:[%s5526 + $0x10] sm:$0xff]
    %v5530 = vld [vmem:[%s5526 + $0x18] sm:$0xff]
    %v5532 = vsel %vm3774, %v5505, 0
    %v5535 = vsel %vm3774, %v5506, 0
    %v5538 = vsel %vm3774, %v5507, 0
    %v5541 = vsel %vm3774, %v5508, 0
    %v5544 = vsel %vm3774, %v5509, 0
    %v5547 = vsel %vm3774, %v5510, 0
    %v5550 = vsel %vm3774, %v5511, 0
    %v5553 = vsel %vm3774, %v5512, 0
    %v5556 = vsel %vm3774, %v5513, 0
    %v5559 = vsel %vm3774, %v5514, 0
    %v5562 = vsel %vm3774, %v5515, 0
    %v5565 = vsel %vm3774, %v5516, 0
    %v5568 = vsel %vm3774, %v5517, 0
    %v5571 = vsel %vm3774, %v5518, 0
    %v5574 = vsel %vm3774, %v5519, 0
    %v5577 = vsel %vm3774, %v5520, 0
    %v5580 = vsel %vm3774, %v5521, 0
    %v5583 = vsel %vm3774, %v5522, 0
    %v5586 = vsel %vm3774, %v5523, 0
    %v5589 = vsel %vm3774, %v5524, 0
    %v5592 = vsel %vm3774, %v5525, 0
    %5594 = vmatprep.subr.mxu0 0.0
    %5595 = vmatpush1.msra.mxu0 %v5527
    %5596 = vmatprep.subr.mxu0 0.0
    %5597 = vmatpush1.msra.mxu0 %v5528
    %5598 = vmatprep.subr.mxu0 0.0
    %5599 = vmatpush1.msra.mxu0 %v5529
    %5600 = vmatprep.subr.mxu0 0.0
    %5601 = vmatpush1.msra.mxu0 %v5530
    %5602 = vmatprep.subr.mxu0 0.0
    %5603 = vmatpush1.msra.mxu0 0.0
    %5604 = vmatprep.subr.mxu0 0.0
    %5605 = vmatpush1.msra.mxu0 0.0
    %5606 = vmatprep.subr.mxu0 0.0
    %5607 = vmatpush1.msra.mxu0 0.0
    %5608 = vmatprep.subr.mxu0 0.0
    %5609 = vmatpush1.msra.mxu0 0.0
    %5610 = vmatprep.subr.mxu0 0.0
    %5611 = vmatpush1.msra.mxu0 0.0
    %5612 = vmatprep.subr.mxu0 0.0
    %5613 = vmatpush1.msra.mxu0 0.0
    %5614 = vmatprep.subr.mxu0 0.0
    %5615 = vmatpush1.msra.mxu0 0.0
    %5616 = vmatprep.subr.mxu0 0.0
    %5617 = vmatpush1.msra.mxu0 0.0
    %5618 = vmatprep.subr.mxu0 0.0
    %5619 = vmatpush1.msra.mxu0 0.0
    %5620 = vmatprep.subr.mxu0 0.0
    %5621 = vmatpush1.msra.mxu0 0.0
    %5622 = vmatprep.subr.mxu0 0.0
    %5623 = vmatpush1.msra.mxu0 0.0
    %5624 = vmatprep.subr.mxu0 0.0
    %5625 = vmatpush1.msra.mxu0 0.0
    %5626 = vmatprep.subr.mxu0 0.0
    %5627 = vmatpush1.msra.mxu0 0.0
    %5628 = vmatprep.subr.mxu0 0.0
    %5629 = vmatpush1.msra.mxu0 0.0
    %5630 = vmatprep.subr.mxu0 0.0
    %5631 = vmatpush1.msra.mxu0 0.0
    %5632 = vmatprep.subr.mxu0 0.0
    %5633 = vmatpush1.msra.mxu0 0.0
    %5634 = vmatprep.subr.mxu0 0.0
    %5635 = vmatpush1.msra.mxu0 0.0
    %5636 = vmatprep.subr.mxu0 0.0
    %5637 = vmatpush1.msra.mxu0 0.0
    %5638 = vmatprep.subr.mxu0 0.0
    %5639 = vmatpush1.msra.mxu0 0.0
    %5640 = vmatprep.subr.mxu0 0.0
    %5641 = vmatpush1.msra.mxu0 0.0
    %5642 = vmatprep.subr.mxu0 0.0
    %5643 = vmatpush1.msra.mxu0 0.0
    %5644 = vmatprep.subr.mxu0 0.0
    %5645 = vmatpush1.msra.mxu0 0.0
    %5646 = vmatprep.subr.mxu0 0.0
    %5647 = vmatpush1.msra.mxu0 0.0
    %5648 = vmatprep.subr.mxu0 0.0
    %5649 = vmatpush1.msra.mxu0 0.0
    %5650 = vmatprep.subr.mxu0 0.0
    %5651 = vmatpush1.msra.mxu0 0.0
    %5652 = vmatprep.subr.mxu0 0.0
    %5653 = vmatpush1.msra.mxu0 0.0
    %5654 = vmatprep.subr.mxu0 0.0
    %5655 = vmatpush1.msra.mxu0 0.0
    %5656 = vmatprep.subr.mxu0 0.0
    %5657 = vmatpush1.msra.mxu0 0.0
    %5658 = vmatprep.mubr.f32.mxu0 0.0
    %5659 = vmatmul.mubr.f32.gmra.mrb[0].mxu0 %v5532
    %v5660 = vpop.f32.mrb[0].mxu0
    %v5661 = vadd.f32 0.0, %v5660
    %v5662 = vpop.f32.mrb[0].mxu0
    %5663 = vmatprep.mubr.f32.mxu0 0.0
    %5664 = vmatmul.mubr.f32.gmra.mrb[0].mxu0 %v5535
    %v5665 = vpop.f32.mrb[0].mxu0
    %v5666 = vadd.f32 0.0, %v5665
    %v5667 = vpop.f32.mrb[0].mxu0
    %5668 = vmatprep.mubr.f32.mxu0 0.0
    %5669 = vmatmul.mubr.f32.gmra.mrb[0].mxu0 %v5538
    %v5670 = vpop.f32.mrb[0].mxu0
    %v5671 = vadd.f32 0.0, %v5670
    %v5672 = vpop.f32.mrb[0].mxu0
    %5673 = vmatprep.mubr.f32.mxu0 0.0
    %5674 = vmatmul.mubr.f32.gmra.mrb[0].mxu0 %v5541
    %v5675 = vpop.f32.mrb[0].mxu0
    %v5676 = vpop.f32.mrb[0].mxu0
    %5677 = vmatprep.mubr.f32.mxu0 0.0
    %5678 = vmatmul.mubr.f32.gmra.mrb[0].mxu0 %v5544
    %v5679 = vpop.f32.mrb[0].mxu0
    %v5680 = vpop.f32.mrb[0].mxu0
    %5681 = vmatprep.mubr.f32.mxu0 0.0
    %5682 = vmatmul.mubr.f32.gmra.mrb[0].mxu0 %v5547
    %v5683 = vpop.f32.mrb[0].mxu0
    %v5684 = vpop.f32.mrb[0].mxu0
    %5685 = vmatprep.mubr.f32.mxu0 0.0
    %5686 = vmatmul.mubr.f32.gmra.mrb[0].mxu0 %v5550
    %v5687 = vpop.f32.mrb[0].mxu0
    %v5688 = vpop.f32.mrb[0].mxu0
    %5689 = vmatprep.mubr.f32.mxu0 0.0
    %5690 = vmatmul.mubr.f32.gmra.mrb[0].mxu0 %v5553
    %v5691 = vpop.f32.mrb[0].mxu0
    %v5692 = vadd.f32 0.0, %v5691
    %v5693 = vpop.f32.mrb[0].mxu0
    %5694 = vmatprep.mubr.f32.mxu0 0.0
    %5695 = vmatmul.mubr.f32.gmra.mrb[0].mxu0 %v5556
    %v5696 = vpop.f32.mrb[0].mxu0
    %v5697 = vadd.f32 0.0, %v5696
    %v5698 = vpop.f32.mrb[0].mxu0
    %5699 = vmatprep.mubr.f32.mxu0 0.0
    %5700 = vmatmul.mubr.f32.gmra.mrb[0].mxu0 %v5559
    %v5701 = vpop.f32.mrb[0].mxu0
    %v5702 = vadd.f32 0.0, %v5701
    %v5703 = vpop.f32.mrb[0].mxu0
    %5704 = vmatprep.mubr.f32.mxu0 0.0
    %5705 = vmatmul.mubr.f32.gmra.mrb[0].mxu0 %v5562
    %v5706 = vpop.f32.mrb[0].mxu0
    %v5707 = vpop.f32.mrb[0].mxu0
    %5708 = vmatprep.mubr.f32.mxu0 0.0
    %5709 = vmatmul.mubr.f32.gmra.mrb[0].mxu0 %v5565
    %v5710 = vpop.f32.mrb[0].mxu0
    %v5711 = vpop.f32.mrb[0].mxu0
    %5712 = vmatprep.mubr.f32.mxu0 0.0
    %5713 = vmatmul.mubr.f32.gmra.mrb[0].mxu0 %v5568
    %v5714 = vpop.f32.mrb[0].mxu0
    %v5715 = vpop.f32.mrb[0].mxu0
    %5716 = vmatprep.mubr.f32.mxu0 0.0
    %5717 = vmatmul.mubr.f32.gmra.mrb[0].mxu0 %v5571
    %v5718 = vpop.f32.mrb[0].mxu0
    %v5719 = vpop.f32.mrb[0].mxu0
    %5720 = vmatprep.mubr.f32.mxu0 0.0
    %5721 = vmatmul.mubr.f32.gmra.mrb[0].mxu0 %v5574
    %v5722 = vpop.f32.mrb[0].mxu0
    %v5723 = vadd.f32 0.0, %v5722
    %v5724 = vpop.f32.mrb[0].mxu0
    %5725 = vmatprep.mubr.f32.mxu0 0.0
    %5726 = vmatmul.mubr.f32.gmra.mrb[0].mxu0 %v5577
    %v5727 = vpop.f32.mrb[0].mxu0
    %v5728 = vadd.f32 0.0, %v5727
    %v5729 = vpop.f32.mrb[0].mxu0
    %5730 = vmatprep.mubr.f32.mxu0 0.0
    %5731 = vmatmul.mubr.f32.gmra.mrb[0].mxu0 %v5580
    %v5732 = vpop.f32.mrb[0].mxu0
    %v5733 = vadd.f32 0.0, %v5732
    %v5734 = vpop.f32.mrb[0].mxu0
    %5735 = vmatprep.mubr.f32.mxu0 0.0
    %5736 = vmatmul.mubr.f32.gmra.mrb[0].mxu0 %v5583
    %v5737 = vpop.f32.mrb[0].mxu0
    %v5738 = vpop.f32.mrb[0].mxu0
    %5739 = vmatprep.mubr.f32.mxu0 0.0
    %5740 = vmatmul.mubr.f32.gmra.mrb[0].mxu0 %v5586
    %v5741 = vpop.f32.mrb[0].mxu0
    %v5742 = vpop.f32.mrb[0].mxu0
    %5743 = vmatprep.mubr.f32.mxu0 0.0
    %5744 = vmatmul.mubr.f32.gmra.mrb[0].mxu0 %v5589
    %v5745 = vpop.f32.mrb[0].mxu0
    %v5746 = vpop.f32.mrb[0].mxu0
    %5747 = vmatprep.mubr.f32.mxu0 0.0
    %5748 = vmatmul.mubr.f32.gmra.mrb[0].mxu0 %v5592
    %v5749 = vpop.f32.mrb[0].mxu0
    %v5750 = vpop.f32.mrb[0].mxu0
    %5751 = vdwg.mxu0
    %v5752 = vadd.f32 %v5496, %v5661
    %v5753 = vadd.f32 %v5497, %v5666
    %v5754 = vadd.f32 %v5498, %v5671
    %v5755 = vadd.f32 %v5499, %v5692
    %v5756 = vadd.f32 %v5500, %v5697
    %v5757 = vadd.f32 %v5501, %v5702
    %v5758 = vadd.f32 %v5502, %v5723
    %v5759 = vadd.f32 %v5503, %v5728
    %v5760 = vadd.f32 %v5504, %v5733
    %v5761 = vld [vmem:[#allocation2 + $0x80] sm:$0xff]
    %v5762 = vld [vmem:[#allocation2 + $0x88] sm:$0xff]
    %v5763 = vld [vmem:[#allocation2 + $0x90] sm:$0xff]
    %v5764 = vld [vmem:[#allocation2 + $0x98] sm:$0xff]
    %v5765 = vld [vmem:[#allocation2 + $0xa0] sm:$0xff]
    %v5766 = vld [vmem:[#allocation2 + $0xa8] sm:$0xff]
    %v5767 = vld [vmem:[#allocation2 + $0xb0] sm:$0xff]
    %v5768 = vld [vmem:[#allocation2 + $0xb8] sm:$0xff]
    %v5769 = vld [vmem:[#allocation2 + $0xc0] sm:$0xff]
    %v5770 = vld [vmem:[#allocation2 + $0xc8] sm:$0xff]
    %v5771 = vld [vmem:[#allocation2 + $0xd0] sm:$0xff]
    %v5772 = vld [vmem:[#allocation2 + $0xd8] sm:$0xff]
    %v5773 = vld [vmem:[#allocation2 + $0xe0] sm:$0xff]
    %v5774 = vld [vmem:[#allocation2 + $0xe8] sm:$0xff]
    %v5775 = vld [vmem:[#allocation2 + $0xf0] sm:$0xff]
    %v5776 = vld [vmem:[#allocation2 + $0xf8] sm:$0xff]
    %v5777 = vld [vmem:[#allocation2 + $0x100] sm:$0xff]
    %v5778 = vld [vmem:[#allocation2 + $0x108] sm:$0xff]
    %v5779 = vld [vmem:[#allocation2 + $0x110] sm:$0xff]
    %v5780 = vld [vmem:[#allocation2 + $0x118] sm:$0xff]
    %v5781 = vld [vmem:[#allocation2 + $0x120] sm:$0xff]
    %s5782 = scalar_lea.vmem %s5, 256
    %v5783 = vld [vmem:[%s5782] sm:$0xff]
    %v5784 = vld [vmem:[%s5782 + $0x8] sm:$0xff]
    %v5785 = vld [vmem:[%s5782 + $0x10] sm:$0xff]
    %v5786 = vld [vmem:[%s5782 + $0x18] sm:$0xff]
    %v5788 = vsel %vm3774, %v5761, 0
    %v5791 = vsel %vm3774, %v5762, 0
    %v5794 = vsel %vm3774, %v5763, 0
    %v5797 = vsel %vm3774, %v5764, 0
    %v5800 = vsel %vm3774, %v5765, 0
    %v5803 = vsel %vm3774, %v5766, 0
    %v5806 = vsel %vm3774, %v5767, 0
    %v5809 = vsel %vm3774, %v5768, 0
    %v5812 = vsel %vm3774, %v5769, 0
    %v5815 = vsel %vm3774, %v5770, 0
    %v5818 = vsel %vm3774, %v5771, 0
    %v5821 = vsel %vm3774, %v5772, 0
    %v5824 = vsel %vm3774, %v5773, 0
    %v5827 = vsel %vm3774, %v5774, 0
    %v5830 = vsel %vm3774, %v5775, 0
    %v5833 = vsel %vm3774, %v5776, 0
    %v5836 = vsel %vm3774, %v5777, 0
    %v5839 = vsel %vm3774, %v5778, 0
    %v5842 = vsel %vm3774, %v5779, 0
    %v5845 = vsel %vm3774, %v5780, 0
    %v5848 = vsel %vm3774, %v5781, 0
    %5850 = vmatprep.subr.mxu0 0.0
    %5851 = vmatpush1.msra.mxu0 %v5783
    %5852 = vmatprep.subr.mxu0 0.0
    %5853 = vmatpush1.msra.mxu0 %v5784
    %5854 = vmatprep.subr.mxu0 0.0
    %5855 = vmatpush1.msra.mxu0 %v5785
    %5856 = vmatprep.subr.mxu0 0.0
    %5857 = vmatpush1.msra.mxu0 %v5786
    %5858 = vmatprep.subr.mxu0 0.0
    %5859 = vmatpush1.msra.mxu0 0.0
    %5860 = vmatprep.subr.mxu0 0.0
    %5861 = vmatpush1.msra.mxu0 0.0
    %5862 = vmatprep.subr.mxu0 0.0
    %5863 = vmatpush1.msra.mxu0 0.0
    %5864 = vmatprep.subr.mxu0 0.0
    %5865 = vmatpush1.msra.mxu0 0.0
    %5866 = vmatprep.subr.mxu0 0.0
    %5867 = vmatpush1.msra.mxu0 0.0
    %5868 = vmatprep.subr.mxu0 0.0
    %5869 = vmatpush1.msra.mxu0 0.0
    %5870 = vmatprep.subr.mxu0 0.0
    %5871 = vmatpush1.msra.mxu0 0.0
    %5872 = vmatprep.subr.mxu0 0.0
    %5873 = vmatpush1.msra.mxu0 0.0
    %5874 = vmatprep.subr.mxu0 0.0
    %5875 = vmatpush1.msra.mxu0 0.0
    %5876 = vmatprep.subr.mxu0 0.0
    %5877 = vmatpush1.msra.mxu0 0.0
    %5878 = vmatprep.subr.mxu0 0.0
    %5879 = vmatpush1.msra.mxu0 0.0
    %5880 = vmatprep.subr.mxu0 0.0
    %5881 = vmatpush1.msra.mxu0 0.0
    %5882 = vmatprep.subr.mxu0 0.0
    %5883 = vmatpush1.msra.mxu0 0.0
    %5884 = vmatprep.subr.mxu0 0.0
    %5885 = vmatpush1.msra.mxu0 0.0
    %5886 = vmatprep.subr.mxu0 0.0
    %5887 = vmatpush1.msra.mxu0 0.0
    %5888 = vmatprep.subr.mxu0 0.0
    %5889 = vmatpush1.msra.mxu0 0.0
    %5890 = vmatprep.subr.mxu0 0.0
    %5891 = vmatpush1.msra.mxu0 0.0
    %5892 = vmatprep.subr.mxu0 0.0
    %5893 = vmatpush1.msra.mxu0 0.0
    %5894 = vmatprep.subr.mxu0 0.0
    %5895 = vmatpush1.msra.mxu0 0.0
    %5896 = vmatprep.subr.mxu0 0.0
    %5897 = vmatpush1.msra.mxu0 0.0
    %5898 = vmatprep.subr.mxu0 0.0
    %5899 = vmatpush1.msra.mxu0 0.0
    %5900 = vmatprep.subr.mxu0 0.0
    %5901 = vmatpush1.msra.mxu0 0.0
    %5902 = vmatprep.subr.mxu0 0.0
    %5903 = vmatpush1.msra.mxu0 0.0
    %5904 = vmatprep.subr.mxu0 0.0
    %5905 = vmatpush1.msra.mxu0 0.0
    %5906 = vmatprep.subr.mxu0 0.0
    %5907 = vmatpush1.msra.mxu0 0.0
    %5908 = vmatprep.subr.mxu0 0.0
    %5909 = vmatpush1.msra.mxu0 0.0
    %5910 = vmatprep.subr.mxu0 0.0
    %5911 = vmatpush1.msra.mxu0 0.0
    %5912 = vmatprep.subr.mxu0 0.0
    %5913 = vmatpush1.msra.mxu0 0.0
    %5914 = vmatprep.mubr.f32.mxu0 0.0
    %5915 = vmatmul.mubr.f32.gmra.mrb[0].mxu0 %v5788
    %v5916 = vpop.f32.mrb[0].mxu0
    %v5917 = vadd.f32 0.0, %v5916
    %v5918 = vpop.f32.mrb[0].mxu0
    %5919 = vmatprep.mubr.f32.mxu0 0.0
    %5920 = vmatmul.mubr.f32.gmra.mrb[0].mxu0 %v5791
    %v5921 = vpop.f32.mrb[0].mxu0
    %v5922 = vadd.f32 0.0, %v5921
    %v5923 = vpop.f32.mrb[0].mxu0
    %5924 = vmatprep.mubr.f32.mxu0 0.0
    %5925 = vmatmul.mubr.f32.gmra.mrb[0].mxu0 %v5794
    %v5926 = vpop.f32.mrb[0].mxu0
    %v5927 = vadd.f32 0.0, %v5926
    %v5928 = vpop.f32.mrb[0].mxu0
    %5929 = vmatprep.mubr.f32.mxu0 0.0
    %5930 = vmatmul.mubr.f32.gmra.mrb[0].mxu0 %v5797
    %v5931 = vpop.f32.mrb[0].mxu0
    %v5932 = vpop.f32.mrb[0].mxu0
    %5933 = vmatprep.mubr.f32.mxu0 0.0
    %5934 = vmatmul.mubr.f32.gmra.mrb[0].mxu0 %v5800
    %v5935 = vpop.f32.mrb[0].mxu0
    %v5936 = vpop.f32.mrb[0].mxu0
    %5937 = vmatprep.mubr.f32.mxu0 0.0
    %5938 = vmatmul.mubr.f32.gmra.mrb[0].mxu0 %v5803
    %v5939 = vpop.f32.mrb[0].mxu0
    %v5940 = vpop.f32.mrb[0].mxu0
    %5941 = vmatprep.mubr.f32.mxu0 0.0
    %5942 = vmatmul.mubr.f32.gmra.mrb[0].mxu0 %v5806
    %v5943 = vpop.f32.mrb[0].mxu0
    %v5944 = vpop.f32.mrb[0].mxu0
    %5945 = vmatprep.mubr.f32.mxu0 0.0
    %5946 = vmatmul.mubr.f32.gmra.mrb[0].mxu0 %v5809
    %v5947 = vpop.f32.mrb[0].mxu0
    %v5948 = vadd.f32 0.0, %v5947
    %v5949 = vpop.f32.mrb[0].mxu0
    %5950 = vmatprep.mubr.f32.mxu0 0.0
    %5951 = vmatmul.mubr.f32.gmra.mrb[0].mxu0 %v5812
    %v5952 = vpop.f32.mrb[0].mxu0
    %v5953 = vadd.f32 0.0, %v5952
    %v5954 = vpop.f32.mrb[0].mxu0
    %5955 = vmatprep.mubr.f32.mxu0 0.0
    %5956 = vmatmul.mubr.f32.gmra.mrb[0].mxu0 %v5815
    %v5957 = vpop.f32.mrb[0].mxu0
    %v5958 = vadd.f32 0.0, %v5957
    %v5959 = vpop.f32.mrb[0].mxu0
    %5960 = vmatprep.mubr.f32.mxu0 0.0
    %5961 = vmatmul.mubr.f32.gmra.mrb[0].mxu0 %v5818
    %v5962 = vpop.f32.mrb[0].mxu0
    %v5963 = vpop.f32.mrb[0].mxu0
    %5964 = vmatprep.mubr.f32.mxu0 0.0
    %5965 = vmatmul.mubr.f32.gmra.mrb[0].mxu0 %v5821
    %v5966 = vpop.f32.mrb[0].mxu0
    %v5967 = vpop.f32.mrb[0].mxu0
    %5968 = vmatprep.mubr.f32.mxu0 0.0
    %5969 = vmatmul.mubr.f32.gmra.mrb[0].mxu0 %v5824
    %v5970 = vpop.f32.mrb[0].mxu0
    %v5971 = vpop.f32.mrb[0].mxu0
    %5972 = vmatprep.mubr.f32.mxu0 0.0
    %5973 = vmatmul.mubr.f32.gmra.mrb[0].mxu0 %v5827
    %v5974 = vpop.f32.mrb[0].mxu0
    %v5975 = vpop.f32.mrb[0].mxu0
    %5976 = vmatprep.mubr.f32.mxu0 0.0
    %5977 = vmatmul.mubr.f32.gmra.mrb[0].mxu0 %v5830
    %v5978 = vpop.f32.mrb[0].mxu0
    %v5979 = vadd.f32 0.0, %v5978
    %v5980 = vpop.f32.mrb[0].mxu0
    %5981 = vmatprep.mubr.f32.mxu0 0.0
    %5982 = vmatmul.mubr.f32.gmra.mrb[0].mxu0 %v5833
    %v5983 = vpop.f32.mrb[0].mxu0
    %v5984 = vadd.f32 0.0, %v5983
    %v5985 = vpop.f32.mrb[0].mxu0
    %5986 = vmatprep.mubr.f32.mxu0 0.0
    %5987 = vmatmul.mubr.f32.gmra.mrb[0].mxu0 %v5836
    %v5988 = vpop.f32.mrb[0].mxu0
    %v5989 = vadd.f32 0.0, %v5988
    %v5990 = vpop.f32.mrb[0].mxu0
    %5991 = vmatprep.mubr.f32.mxu0 0.0
    %5992 = vmatmul.mubr.f32.gmra.mrb[0].mxu0 %v5839
    %v5993 = vpop.f32.mrb[0].mxu0
    %v5994 = vpop.f32.mrb[0].mxu0
    %5995 = vmatprep.mubr.f32.mxu0 0.0
    %5996 = vmatmul.mubr.f32.gmra.mrb[0].mxu0 %v5842
    %v5997 = vpop.f32.mrb[0].mxu0
    %v5998 = vpop.f32.mrb[0].mxu0
    %5999 = vmatprep.mubr.f32.mxu0 0.0
    %6000 = vmatmul.mubr.f32.gmra.mrb[0].mxu0 %v5845
    %v6001 = vpop.f32.mrb[0].mxu0
    %v6002 = vpop.f32.mrb[0].mxu0
    %6003 = vmatprep.mubr.f32.mxu0 0.0
    %6004 = vmatmul.mubr.f32.gmra.mrb[0].mxu0 %v5848
    %v6005 = vpop.f32.mrb[0].mxu0
    %v6006 = vpop.f32.mrb[0].mxu0
    %6007 = vdwg.mxu0
    %v6008 = vadd.f32 %v5752, %v5917
    %v6009 = vadd.f32 %v5753, %v5922
    %v6010 = vadd.f32 %v5754, %v5927
    %v6011 = vadd.f32 %v5755, %v5948
    %v6012 = vadd.f32 %v5756, %v5953
    %v6013 = vadd.f32 %v5757, %v5958
    %v6014 = vadd.f32 %v5758, %v5979
    %v6015 = vadd.f32 %v5759, %v5984
    %v6016 = vadd.f32 %v5760, %v5989
    %v6017 = vld [vmem:[%s6] sm:$0x1]
    %v6019 = vlaneseq
    %v6020 = vshrl.u32 %v6019, 7
    %v6021 = vsub.s32 0, %v6020
    %v6022 = vrot.slane %v6017, %v6021
    %v6024 = vadd.f32 %v6008, %v6022
    %v6025 = vadd.f32 %v6009, %v6022
    %v6026 = vadd.f32 %v6010, %v6022
    %v6027 = vadd.f32 %v6011, %v6022
    %v6028 = vadd.f32 %v6012, %v6022
    %v6029 = vadd.f32 %v6013, %v6022
    %v6030 = vadd.f32 %v6014, %v6022
    %v6031 = vadd.f32 %v6015, %v6022
    %v6032 = vadd.f32 %v6016, %v6022
    %v6033 = vmax.f32 %v6024, 0.0
    %v6034 = vmax.f32 %v6025, 0.0
    %v6035 = vmax.f32 %v6026, 0.0
    %v6036 = vmax.f32 %v6027, 0.0
    %v6037 = vmax.f32 %v6028, 0.0
    %v6038 = vmax.f32 %v6029, 0.0
    %v6039 = vmax.f32 %v6030, 0.0
    %v6040 = vmax.f32 %v6031, 0.0
    %v6041 = vmax.f32 %v6032, 0.0
    %6042 = vst.msk [vmem:[#allocation3] sm:$0xff] %vm3774, %v6033
    %6044 = vrot.lane.b32.xlu0 %v6034, 32
    %v6045 = vpop.permute.xlu0 %6044
    %vm6047 = vcmask 523520
    %6048 = vst.msk [vmem:[#allocation3] sm:$0xff] %vm6047, %v6045
    %6050 = vrot.lane.b32.xlu0 %v6035, 64
    %v6051 = vpop.permute.xlu0 %6050
    %vm6053 = vcmask 785920
    %6054 = vst.msk [vmem:[#allocation3] sm:$0xff] %vm6053, %v6051
    %6056 = vrot.lane.b32.xlu0 %v6036, 96
    %v6057 = vpop.permute.xlu0 %6056
    %vm6059 = vcmask 1048320
    %6060 = vst.msk [vmem:[#allocation3] sm:$0xff] %vm6059, %v6057
    %6061 = vst.msk [vmem:[#allocation3 + $0x8] sm:$0xff] %vm3774, %v6037
    %6063 = vrot.lane.b32.xlu0 %v6038, 32
    %v6064 = vpop.permute.xlu0 %6063
    %6066 = vst.msk [vmem:[#allocation3 + $0x8] sm:$0xff] %vm6047, %v6064
    %6068 = vrot.lane.b32.xlu0 %v6039, 64
    %v6069 = vpop.permute.xlu0 %6068
    %6071 = vst.msk [vmem:[#allocation3 + $0x8] sm:$0xff] %vm6053, %v6069
    %6073 = vrot.lane.b32.xlu0 %v6040, 96
    %v6074 = vpop.permute.xlu0 %6073
    %6076 = vst.msk [vmem:[#allocation3 + $0x8] sm:$0xff] %vm6059, %v6074
    %6077 = vst.msk [vmem:[#allocation3 + $0x10] sm:$0xff] %vm3774, %v6041
    %v6078 = vld [vmem:[%s1] sm:$0xff]
    %v6079 = vld [vmem:[%s7] sm:$0xff]
    %v6080 = vld [vmem:[%s7 + $0x8] sm:$0xff]
    %v6081 = vld [vmem:[%s7 + $0x10] sm:$0xff]
    %v6082 = vld [vmem:[%s7 + $0x18] sm:$0xff]
    %v6083 = vld [vmem:[%s7 + $0x20] sm:$0xff]
    %v6084 = vld [vmem:[%s7 + $0x28] sm:$0xff]
    %v6085 = vld [vmem:[%s7 + $0x30] sm:$0xff]
    %v6086 = vld [vmem:[%s7 + $0x38] sm:$0xff]
    %v6087 = vld [vmem:[%s7 + $0x40] sm:$0xff]
    %v6088 = vld [vmem:[%s7 + $0x48] sm:$0xff]
    %v6089 = vld [vmem:[%s7 + $0x50] sm:$0xff]
    %v6090 = vld [vmem:[%s7 + $0x58] sm:$0xff]
    %v6091 = vld [vmem:[%s7 + $0x60] sm:$0xff]
    %v6092 = vld [vmem:[%s7 + $0x68] sm:$0xff]
    %v6093 = vld [vmem:[%s7 + $0x70] sm:$0xff]
    %v6094 = vld [vmem:[%s7 + $0x78] sm:$0xff]
    %v6095 = vld [vmem:[%s8] sm:$0x1]
    %v6097 = vlaneseq
    %v6098 = vshrl.u32 %v6097, 7
    %v6099 = vsub.s32 0, %v6098
    %v6100 = vrot.slane %v6095, %v6099
    %6102 = vmatprep.subr.mxu0 0.0
    %6103 = vmatpush1.msra.mxu0 %v6079
    %6104 = vmatprep.subr.mxu0 0.0
    %6105 = vmatpush1.msra.mxu0 %v6080
    %6106 = vmatprep.subr.mxu0 0.0
    %6107 = vmatpush1.msra.mxu0 %v6081
    %6108 = vmatprep.subr.mxu0 0.0
    %6109 = vmatpush1.msra.mxu0 %v6082
    %6110 = vmatprep.subr.mxu0 0.0
    %6111 = vmatpush1.msra.mxu0 %v6083
    %6112 = vmatprep.subr.mxu0 0.0
    %6113 = vmatpush1.msra.mxu0 %v6084
    %6114 = vmatprep.subr.mxu0 0.0
    %6115 = vmatpush1.msra.mxu0 %v6085
    %6116 = vmatprep.subr.mxu0 0.0
    %6117 = vmatpush1.msra.mxu0 %v6086
    %6118 = vmatprep.subr.mxu0 0.0
    %6119 = vmatpush1.msra.mxu0 %v6087
    %6120 = vmatprep.subr.mxu0 0.0
    %6121 = vmatpush1.msra.mxu0 %v6088
    %6122 = vmatprep.subr.mxu0 0.0
    %6123 = vmatpush1.msra.mxu0 %v6089
    %6124 = vmatprep.subr.mxu0 0.0
    %6125 = vmatpush1.msra.mxu0 %v6090
    %6126 = vmatprep.subr.mxu0 0.0
    %6127 = vmatpush1.msra.mxu0 %v6091
    %6128 = vmatprep.subr.mxu0 0.0
    %6129 = vmatpush1.msra.mxu0 %v6092
    %6130 = vmatprep.subr.mxu0 0.0
    %6131 = vmatpush1.msra.mxu0 %v6093
    %6132 = vmatprep.subr.mxu0 0.0
    %6133 = vmatpush1.msra.mxu0 %v6094
    %6134 = vmatprep.subr.mxu0 0.0
    %6135 = vmatpush1.msra.mxu0 0.0
    %6136 = vmatprep.subr.mxu0 0.0
    %6137 = vmatpush1.msra.mxu0 0.0
    %6138 = vmatprep.subr.mxu0 0.0
    %6139 = vmatpush1.msra.mxu0 0.0
    %6140 = vmatprep.subr.mxu0 0.0
    %6141 = vmatpush1.msra.mxu0 0.0
    %6142 = vmatprep.subr.mxu0 0.0
    %6143 = vmatpush1.msra.mxu0 0.0
    %6144 = vmatprep.subr.mxu0 0.0
    %6145 = vmatpush1.msra.mxu0 0.0
    %6146 = vmatprep.subr.mxu0 0.0
    %6147 = vmatpush1.msra.mxu0 0.0
    %6148 = vmatprep.subr.mxu0 0.0
    %6149 = vmatpush1.msra.mxu0 0.0
    %6150 = vmatprep.subr.mxu0 0.0
    %6151 = vmatpush1.msra.mxu0 0.0
    %6152 = vmatprep.subr.mxu0 0.0
    %6153 = vmatpush1.msra.mxu0 0.0
    %6154 = vmatprep.subr.mxu0 0.0
    %6155 = vmatpush1.msra.mxu0 0.0
    %6156 = vmatprep.subr.mxu0 0.0
    %6157 = vmatpush1.msra.mxu0 0.0
    %6158 = vmatprep.subr.mxu0 0.0
    %6159 = vmatpush1.msra.mxu0 0.0
    %6160 = vmatprep.subr.mxu0 0.0
    %6161 = vmatpush1.msra.mxu0 0.0
    %6162 = vmatprep.subr.mxu0 0.0
    %6163 = vmatpush1.msra.mxu0 0.0
    %6164 = vmatprep.subr.mxu0 0.0
    %6165 = vmatpush1.msra.mxu0 0.0
    %6166 = vmatprep.mubr.f32.mxu0 0.0
    %6167 = vmatmul.mubr.f32.gmra.mrb[0].mxu0 %v6078
    %v6168 = vpop.f32.mrb[0].mxu0
    %v6169 = vadd.f32 %v6100, %v6168
    %v6170 = vpop.f32.mrb[0].mxu0
    %6171 = vdwg.mxu0
    %v6172 = vmax.f32 %v6169, 0.0
    %v6173 = vld [vmem:[%s2] sm:$0xff]
    %v6174 = vld [vmem:[#allocation3] sm:$0xff]
    %v6175 = vld [vmem:[#allocation3 + $0x8] sm:$0xff]
    %v6176 = vld [vmem:[#allocation3 + $0x10] sm:$0xff]
    %v6177 = vld [vmem:[#allocation10] sm:$0xff]
    %v6178 = vld [vmem:[#allocation10 + $0x8] sm:$0xff]
    %v6179 = vld [vmem:[#allocation10 + $0x10] sm:$0xff]
    %v6180 = vld [vmem:[#allocation10 + $0x18] sm:$0xff]
    %v6181 = vld [vmem:[#allocation10 + $0x20] sm:$0xff]
    %v6182 = vld [vmem:[#allocation10 + $0x28] sm:$0xff]
    %v6183 = vld [vmem:[#allocation10 + $0x30] sm:$0xff]
    %v6184 = vld [vmem:[#allocation10 + $0x38] sm:$0xff]
    %v6185 = vld [vmem:[#allocation10 + $0x40] sm:$0xff]
    %v6186 = vld [vmem:[#allocation10 + $0x48] sm:$0xff]
    %v6187 = vld [vmem:[#allocation10 + $0x50] sm:$0xff]
    %v6188 = vld [vmem:[#allocation10 + $0x58] sm:$0xff]
    %v6189 = vld [vmem:[#allocation10 + $0x60] sm:$0xff]
    %v6190 = vld [vmem:[#allocation10 + $0x68] sm:$0xff]
    %v6191 = vld [vmem:[#allocation10 + $0x70] sm:$0xff]
    %v6192 = vld [vmem:[#allocation10 + $0x78] sm:$0xff]
    %v6193 = vld [vmem:[#allocation10 + $0x80] sm:$0xff]
    %v6194 = vld [vmem:[#allocation10 + $0x88] sm:$0xff]
    %v6195 = vld [vmem:[#allocation10 + $0x90] sm:$0xff]
    %v6196 = vld [vmem:[#allocation10 + $0x98] sm:$0xff]
    %v6197 = vld [vmem:[#allocation10 + $0xa0] sm:$0xff]
    %v6198 = vld [vmem:[#allocation10 + $0xa8] sm:$0xff]
    %v6199 = vld [vmem:[#allocation10 + $0xb0] sm:$0xff]
    %v6200 = vld [vmem:[#allocation10 + $0xb8] sm:$0xff]
    %v6201 = vld [vmem:[#allocation10 + $0xc0] sm:$0xff]
    %v6202 = vld [vmem:[#allocation10 + $0xc8] sm:$0xff]
    %v6203 = vld [vmem:[#allocation10 + $0xd0] sm:$0xff]
    %v6204 = vld [vmem:[#allocation10 + $0xd8] sm:$0xff]
    %v6205 = vld [vmem:[#allocation10 + $0xe0] sm:$0xff]
    %v6206 = vld [vmem:[#allocation10 + $0xe8] sm:$0xff]
    %v6207 = vld [vmem:[#allocation10 + $0xf0] sm:$0xff]
    %v6208 = vld [vmem:[#allocation10 + $0xf8] sm:$0xff]
    %v6209 = vld [vmem:[#allocation10 + $0x100] sm:$0xff]
    %v6210 = vld [vmem:[#allocation10 + $0x108] sm:$0xff]
    %v6211 = vld [vmem:[#allocation10 + $0x110] sm:$0xff]
    %v6212 = vld [vmem:[#allocation10 + $0x118] sm:$0xff]
    %v6213 = vld [vmem:[#allocation10 + $0x120] sm:$0xff]
    %v6214 = vld [vmem:[#allocation10 + $0x128] sm:$0xff]
    %v6215 = vld [vmem:[#allocation10 + $0x130] sm:$0xff]
    %v6216 = vld [vmem:[#allocation10 + $0x138] sm:$0xff]
    %v6217 = vld [vmem:[#allocation10 + $0x140] sm:$0xff]
    %v6218 = vld [vmem:[#allocation10 + $0x148] sm:$0xff]
    %v6219 = vld [vmem:[#allocation10 + $0x150] sm:$0xff]
    %v6220 = vld [vmem:[#allocation10 + $0x158] sm:$0xff]
    %v6221 = vld [vmem:[#allocation10 + $0x160] sm:$0xff]
    %v6222 = vld [vmem:[#allocation10 + $0x168] sm:$0xff]
    %v6223 = vld [vmem:[#allocation10 + $0x170] sm:$0xff]
    %v6224 = vld [vmem:[#allocation10 + $0x178] sm:$0xff]
    %v6225 = vld [vmem:[#allocation10 + $0x180] sm:$0xff]
    %v6226 = vld [vmem:[#allocation10 + $0x188] sm:$0xff]
    %v6227 = vld [vmem:[#allocation10 + $0x190] sm:$0xff]
    %v6228 = vld [vmem:[#allocation10 + $0x198] sm:$0xff]
    %v6229 = vld [vmem:[#allocation10 + $0x1a0] sm:$0xff]
    %v6230 = vld [vmem:[#allocation10 + $0x1a8] sm:$0xff]
    %v6231 = vld [vmem:[#allocation10 + $0x1b0] sm:$0xff]
    %v6232 = vld [vmem:[#allocation10 + $0x1b8] sm:$0xff]
    %v6233 = vld [vmem:[#allocation10 + $0x1c0] sm:$0xff]
    %v6234 = vld [vmem:[#allocation10 + $0x1c8] sm:$0xff]
    %v6235 = vld [vmem:[#allocation10 + $0x1d0] sm:$0xff]
    %v6236 = vld [vmem:[#allocation10 + $0x1d8] sm:$0xff]
    %v6237 = vld [vmem:[#allocation10 + $0x1e0] sm:$0xff]
    %v6238 = vld [vmem:[#allocation10 + $0x1e8] sm:$0xff]
    %v6239 = vld [vmem:[#allocation10 + $0x1f0] sm:$0xff]
    %v6240 = vld [vmem:[#allocation10 + $0x1f8] sm:$0xff]
    %v6241 = vld [vmem:[#allocation10 + $0x200] sm:$0xff]
    %v6242 = vld [vmem:[#allocation10 + $0x208] sm:$0xff]
    %v6243 = vld [vmem:[#allocation10 + $0x210] sm:$0xff]
    %v6244 = vld [vmem:[#allocation10 + $0x218] sm:$0xff]
    %v6245 = vld [vmem:[#allocation10 + $0x220] sm:$0xff]
    %v6246 = vld [vmem:[#allocation10 + $0x228] sm:$0xff]
    %v6247 = vld [vmem:[#allocation10 + $0x230] sm:$0xff]
    %v6248 = vld [vmem:[#allocation10 + $0x238] sm:$0xff]
    %v6249 = vld [vmem:[#allocation10 + $0x240] sm:$0xff]
    %v6250 = vld [vmem:[#allocation10 + $0x248] sm:$0xff]
    %v6251 = vld [vmem:[#allocation10 + $0x250] sm:$0xff]
    %v6252 = vld [vmem:[#allocation10 + $0x258] sm:$0xff]
    %v6253 = vld [vmem:[#allocation10 + $0x260] sm:$0xff]
    %v6254 = vld [vmem:[#allocation10 + $0x268] sm:$0xff]
    %v6255 = vld [vmem:[#allocation10 + $0x270] sm:$0xff]
    %v6256 = vld [vmem:[#allocation10 + $0x278] sm:$0xff]
    %v6257 = vld [vmem:[#allocation10 + $0x280] sm:$0xff]
    %v6258 = vld [vmem:[#allocation10 + $0x288] sm:$0xff]
    %v6259 = vld [vmem:[#allocation10 + $0x290] sm:$0xff]
    %v6260 = vld [vmem:[#allocation10 + $0x298] sm:$0xff]
    %v6261 = vld [vmem:[#allocation10 + $0x2a0] sm:$0xff]
    %v6262 = vld [vmem:[#allocation10 + $0x2a8] sm:$0xff]
    %v6263 = vld [vmem:[#allocation10 + $0x2b0] sm:$0xff]
    %v6264 = vld [vmem:[#allocation10 + $0x2b8] sm:$0xff]
    %v6265 = vld [vmem:[#allocation10 + $0x2c0] sm:$0xff]
    %v6266 = vld [vmem:[#allocation10 + $0x2c8] sm:$0xff]
    %v6267 = vld [vmem:[#allocation10 + $0x2d0] sm:$0xff]
    %v6268 = vld [vmem:[#allocation10 + $0x2d8] sm:$0xff]
    %v6269 = vld [vmem:[#allocation10 + $0x2e0] sm:$0xff]
    %v6270 = vld [vmem:[#allocation10 + $0x2e8] sm:$0xff]
    %v6271 = vld [vmem:[#allocation10 + $0x2f0] sm:$0xff]
    %v6272 = vld [vmem:[#allocation10 + $0x2f8] sm:$0xff]
    %v6273 = vld [vmem:[#allocation10 + $0x300] sm:$0xff]
    %v6274 = vld [vmem:[#allocation10 + $0x308] sm:$0xff]
    %v6275 = vld [vmem:[#allocation10 + $0x310] sm:$0xff]
    %v6276 = vld [vmem:[#allocation10 + $0x318] sm:$0xff]
    %v6277 = vld [vmem:[#allocation10 + $0x320] sm:$0xff]
    %v6278 = vld [vmem:[#allocation10 + $0x328] sm:$0xff]
    %v6279 = vld [vmem:[#allocation10 + $0x330] sm:$0xff]
    %v6280 = vld [vmem:[#allocation10 + $0x338] sm:$0xff]
    %v6281 = vld [vmem:[#allocation10 + $0x340] sm:$0xff]
    %v6282 = vld [vmem:[#allocation10 + $0x348] sm:$0xff]
    %v6283 = vld [vmem:[#allocation10 + $0x350] sm:$0xff]
    %v6284 = vld [vmem:[#allocation10 + $0x358] sm:$0xff]
    %v6285 = vld [vmem:[#allocation10 + $0x360] sm:$0xff]
    %v6286 = vld [vmem:[#allocation10 + $0x368] sm:$0xff]
    %v6287 = vld [vmem:[#allocation10 + $0x370] sm:$0xff]
    %v6288 = vld [vmem:[#allocation10 + $0x378] sm:$0xff]
    %v6289 = vld [vmem:[#allocation10 + $0x380] sm:$0xff]
    %v6290 = vld [vmem:[#allocation10 + $0x388] sm:$0xff]
    %v6291 = vld [vmem:[#allocation10 + $0x390] sm:$0xff]
    %v6292 = vld [vmem:[#allocation10 + $0x398] sm:$0xff]
    %v6293 = vld [vmem:[#allocation10 + $0x3a0] sm:$0xff]
    %v6294 = vld [vmem:[#allocation10 + $0x3a8] sm:$0xff]
    %v6295 = vld [vmem:[#allocation10 + $0x3b0] sm:$0xff]
    %v6296 = vld [vmem:[#allocation10 + $0x3b8] sm:$0xff]
    %v6297 = vld [vmem:[#allocation10 + $0x3c0] sm:$0xff]
    %v6298 = vld [vmem:[#allocation10 + $0x3c8] sm:$0xff]
    %v6299 = vld [vmem:[#allocation10 + $0x3d0] sm:$0xff]
    %v6300 = vld [vmem:[#allocation10 + $0x3d8] sm:$0xff]
    %v6301 = vld [vmem:[#allocation10 + $0x3e0] sm:$0xff]
    %v6302 = vld [vmem:[#allocation10 + $0x3e8] sm:$0xff]
    %v6303 = vld [vmem:[#allocation10 + $0x3f0] sm:$0xff]
    %v6304 = vld [vmem:[#allocation10 + $0x3f8] sm:$0xff]
    %v6305 = vld [vmem:[#allocation10 + $0x400] sm:$0xff]
    %v6306 = vld [vmem:[#allocation10 + $0x408] sm:$0xff]
    %v6307 = vld [vmem:[#allocation10 + $0x410] sm:$0xff]
    %v6308 = vld [vmem:[#allocation10 + $0x418] sm:$0xff]
    %v6309 = vld [vmem:[#allocation10 + $0x420] sm:$0xff]
    %v6310 = vld [vmem:[#allocation10 + $0x428] sm:$0xff]
    %v6311 = vld [vmem:[#allocation10 + $0x430] sm:$0xff]
    %v6312 = vld [vmem:[#allocation10 + $0x438] sm:$0xff]
    %v6313 = vld [vmem:[#allocation10 + $0x440] sm:$0xff]
    %v6314 = vld [vmem:[#allocation10 + $0x448] sm:$0xff]
    %v6315 = vld [vmem:[#allocation10 + $0x450] sm:$0xff]
    %v6316 = vld [vmem:[#allocation10 + $0x458] sm:$0xff]
    %v6317 = vld [vmem:[#allocation10 + $0x460] sm:$0xff]
    %v6318 = vld [vmem:[#allocation10 + $0x468] sm:$0xff]
    %v6319 = vld [vmem:[#allocation10 + $0x470] sm:$0xff]
    %v6320 = vld [vmem:[#allocation10 + $0x478] sm:$0xff]
    %v6321 = vld [vmem:[#allocation7] sm:$0xff]
    %v6322 = vld [vmem:[#allocation7 + $0x8] sm:$0xff]
    %v6323 = vld [vmem:[#allocation7 + $0x10] sm:$0xff]
    %v6324 = vld [vmem:[#allocation7 + $0x18] sm:$0xff]
    %v6325 = vld [vmem:[#allocation7 + $0x20] sm:$0xff]
    %v6326 = vld [vmem:[#allocation7 + $0x28] sm:$0xff]
    %v6327 = vld [vmem:[#allocation7 + $0x30] sm:$0xff]
    %v6328 = vld [vmem:[#allocation7 + $0x38] sm:$0xff]
    %v6329 = vld [vmem:[#allocation7 + $0x40] sm:$0xff]
    %v6330 = vld [vmem:[#allocation7 + $0x48] sm:$0xff]
    %v6331 = vld [vmem:[#allocation7 + $0x50] sm:$0xff]
    %v6332 = vld [vmem:[#allocation7 + $0x58] sm:$0xff]
    %v6333 = vld [vmem:[#allocation7 + $0x60] sm:$0xff]
    %v6334 = vld [vmem:[#allocation7 + $0x68] sm:$0xff]
    %v6335 = vld [vmem:[#allocation7 + $0x70] sm:$0xff]
    %v6336 = vld [vmem:[#allocation7 + $0x78] sm:$0xff]
    %v6337 = vld [vmem:[#allocation7 + $0x80] sm:$0xff]
    %v6338 = vld [vmem:[#allocation7 + $0x88] sm:$0xff]
    %v6339 = vld [vmem:[#allocation7 + $0x90] sm:$0xff]
    %v6340 = vld [vmem:[#allocation7 + $0x98] sm:$0xff]
    %v6341 = vld [vmem:[#allocation7 + $0xa0] sm:$0xff]
    %v6342 = vld [vmem:[#allocation7 + $0xa8] sm:$0xff]
    %v6343 = vld [vmem:[#allocation7 + $0xb0] sm:$0xff]
    %v6344 = vld [vmem:[#allocation7 + $0xb8] sm:$0xff]
    %v6345 = vld [vmem:[#allocation7 + $0xc0] sm:$0xff]
    %v6346 = vld [vmem:[#allocation7 + $0xc8] sm:$0xff]
    %v6347 = vld [vmem:[#allocation7 + $0xd0] sm:$0xff]
    %v6348 = vld [vmem:[#allocation7 + $0xd8] sm:$0xff]
    %v6349 = vld [vmem:[#allocation7 + $0xe0] sm:$0xff]
    %v6350 = vld [vmem:[#allocation7 + $0xe8] sm:$0xff]
    %v6351 = vld [vmem:[#allocation7 + $0xf0] sm:$0xff]
    %v6352 = vld [vmem:[#allocation7 + $0xf8] sm:$0xff]
    %v6353 = vld [vmem:[#allocation7 + $0x100] sm:$0xff]
    %v6354 = vld [vmem:[#allocation7 + $0x108] sm:$0xff]
    %v6355 = vld [vmem:[#allocation7 + $0x110] sm:$0xff]
    %v6356 = vld [vmem:[#allocation7 + $0x118] sm:$0xff]
    %v6357 = vld [vmem:[#allocation7 + $0x120] sm:$0xff]
    %v6358 = vld [vmem:[#allocation7 + $0x128] sm:$0xff]
    %v6359 = vld [vmem:[#allocation7 + $0x130] sm:$0xff]
    %v6360 = vld [vmem:[#allocation7 + $0x138] sm:$0xff]
    %v6361 = vld [vmem:[#allocation7 + $0x140] sm:$0xff]
    %v6362 = vld [vmem:[#allocation7 + $0x148] sm:$0xff]
    %v6363 = vld [vmem:[#allocation7 + $0x150] sm:$0xff]
    %v6364 = vld [vmem:[#allocation7 + $0x158] sm:$0xff]
    %v6365 = vld [vmem:[#allocation7 + $0x160] sm:$0xff]
    %v6366 = vld [vmem:[#allocation7 + $0x168] sm:$0xff]
    %v6367 = vld [vmem:[#allocation7 + $0x170] sm:$0xff]
    %v6368 = vld [vmem:[#allocation7 + $0x178] sm:$0xff]
    %v6369 = vld [vmem:[#allocation7 + $0x180] sm:$0xff]
    %v6370 = vld [vmem:[#allocation7 + $0x188] sm:$0xff]
    %v6371 = vld [vmem:[#allocation7 + $0x190] sm:$0xff]
    %v6372 = vld [vmem:[#allocation7 + $0x198] sm:$0xff]
    %v6373 = vld [vmem:[#allocation7 + $0x1a0] sm:$0xff]
    %v6374 = vld [vmem:[#allocation7 + $0x1a8] sm:$0xff]
    %v6375 = vld [vmem:[#allocation7 + $0x1b0] sm:$0xff]
    %v6376 = vld [vmem:[#allocation7 + $0x1b8] sm:$0xff]
    %v6377 = vld [vmem:[#allocation7 + $0x1c0] sm:$0xff]
    %v6378 = vld [vmem:[#allocation7 + $0x1c8] sm:$0xff]
    %v6379 = vld [vmem:[#allocation7 + $0x1d0] sm:$0xff]
    %v6380 = vld [vmem:[#allocation7 + $0x1d8] sm:$0xff]
    %v6381 = vld [vmem:[#allocation7 + $0x1e0] sm:$0xff]
    %v6382 = vld [vmem:[#allocation7 + $0x1e8] sm:$0xff]
    %v6383 = vld [vmem:[#allocation7 + $0x1f0] sm:$0xff]
    %v6384 = vld [vmem:[#allocation7 + $0x1f8] sm:$0xff]
    %6385 = vmatprep.subr.mxu0 %v6322
    %6386 = vmatpush1.msra.mxu0 %v6321
    %6387 = vmatprep.subr.mxu0 %v6326
    %6388 = vmatpush1.msra.mxu0 %v6325
    %6389 = vmatprep.subr.mxu0 %v6330
    %6390 = vmatpush1.msra.mxu0 %v6329
    %6391 = vmatprep.subr.mxu0 %v6334
    %6392 = vmatpush1.msra.mxu0 %v6333
    %6393 = vmatprep.subr.mxu0 %v6338
    %6394 = vmatpush1.msra.mxu0 %v6337
    %6395 = vmatprep.subr.mxu0 %v6342
    %6396 = vmatpush1.msra.mxu0 %v6341
    %6397 = vmatprep.subr.mxu0 %v6346
    %6398 = vmatpush1.msra.mxu0 %v6345
    %6399 = vmatprep.subr.mxu0 %v6350
    %6400 = vmatpush1.msra.mxu0 %v6349
    %6401 = vmatprep.subr.mxu0 %v6354
    %6402 = vmatpush1.msra.mxu0 %v6353
    %6403 = vmatprep.subr.mxu0 %v6358
    %6404 = vmatpush1.msra.mxu0 %v6357
    %6405 = vmatprep.subr.mxu0 %v6362
    %6406 = vmatpush1.msra.mxu0 %v6361
    %6407 = vmatprep.subr.mxu0 %v6366
    %6408 = vmatpush1.msra.mxu0 %v6365
    %6409 = vmatprep.subr.mxu0 %v6370
    %6410 = vmatpush1.msra.mxu0 %v6369
    %6411 = vmatprep.subr.mxu0 %v6374
    %6412 = vmatpush1.msra.mxu0 %v6373
    %6413 = vmatprep.subr.mxu0 %v6378
    %6414 = vmatpush1.msra.mxu0 %v6377
    %6415 = vmatprep.subr.mxu0 %v6382
    %6416 = vmatpush1.msra.mxu0 %v6381
    %6417 = vmatprep.subr.mxu0 0.0
    %6418 = vmatpush1.msra.mxu0 0.0
    %6419 = vmatprep.subr.mxu0 0.0
    %6420 = vmatpush1.msra.mxu0 0.0
    %6421 = vmatprep.subr.mxu0 0.0
    %6422 = vmatpush1.msra.mxu0 0.0
    %6423 = vmatprep.subr.mxu0 0.0
    %6424 = vmatpush1.msra.mxu0 0.0
    %6425 = vmatprep.subr.mxu0 0.0
    %6426 = vmatpush1.msra.mxu0 0.0
    %6427 = vmatprep.subr.mxu0 0.0
    %6428 = vmatpush1.msra.mxu0 0.0
    %6429 = vmatprep.subr.mxu0 0.0
    %6430 = vmatpush1.msra.mxu0 0.0
    %6431 = vmatprep.subr.mxu0 0.0
    %6432 = vmatpush1.msra.mxu0 0.0
    %6433 = vmatprep.subr.mxu0 0.0
    %6434 = vmatpush1.msra.mxu0 0.0
    %6435 = vmatprep.subr.mxu0 0.0
    %6436 = vmatpush1.msra.mxu0 0.0
    %6437 = vmatprep.subr.mxu0 0.0
    %6438 = vmatpush1.msra.mxu0 0.0
    %6439 = vmatprep.subr.mxu0 0.0
    %6440 = vmatpush1.msra.mxu0 0.0
    %6441 = vmatprep.subr.mxu0 0.0
    %6442 = vmatpush1.msra.mxu0 0.0
    %6443 = vmatprep.subr.mxu0 0.0
    %6444 = vmatpush1.msra.mxu0 0.0
    %6445 = vmatprep.subr.mxu0 0.0
    %6446 = vmatpush1.msra.mxu0 0.0
    %6447 = vmatprep.subr.mxu0 0.0
    %6448 = vmatpush1.msra.mxu0 0.0
    %6449 = vmatprep.mubr.f32.mxu0 0.0
    %6450 = vmatmul.mubr.f32.gmra.mrb[0].mxu0 %v6172
    %v6451 = vpop.f32.mrb[0].mxu0
    %v6452 = vadd.f32 0.0, %v6451
    %v6453 = vpop.f32.mrb[0].mxu0
    %v6454 = vadd.f32 0.0, %v6453
    %6455 = vdwg.mxu0
    %6456 = vmatprep.subr.mxu0 %v6324
    %6457 = vmatpush1.msra.mxu0 %v6323
    %6458 = vmatprep.subr.mxu0 %v6328
    %6459 = vmatpush1.msra.mxu0 %v6327
    %6460 = vmatprep.subr.mxu0 %v6332
    %6461 = vmatpush1.msra.mxu0 %v6331
    %6462 = vmatprep.subr.mxu0 %v6336
    %6463 = vmatpush1.msra.mxu0 %v6335
    %6464 = vmatprep.subr.mxu0 %v6340
    %6465 = vmatpush1.msra.mxu0 %v6339
    %6466 = vmatprep.subr.mxu0 %v6344
    %6467 = vmatpush1.msra.mxu0 %v6343
    %6468 = vmatprep.subr.mxu0 %v6348
    %6469 = vmatpush1.msra.mxu0 %v6347
    %6470 = vmatprep.subr.mxu0 %v6352
    %6471 = vmatpush1.msra.mxu0 %v6351
    %6472 = vmatprep.subr.mxu0 %v6356
    %6473 = vmatpush1.msra.mxu0 %v6355
    %6474 = vmatprep.subr.mxu0 %v6360
    %6475 = vmatpush1.msra.mxu0 %v6359
    %6476 = vmatprep.subr.mxu0 %v6364
    %6477 = vmatpush1.msra.mxu0 %v6363
    %6478 = vmatprep.subr.mxu0 %v6368
    %6479 = vmatpush1.msra.mxu0 %v6367
    %6480 = vmatprep.subr.mxu0 %v6372
    %6481 = vmatpush1.msra.mxu0 %v6371
    %6482 = vmatprep.subr.mxu0 %v6376
    %6483 = vmatpush1.msra.mxu0 %v6375
    %6484 = vmatprep.subr.mxu0 %v6380
    %6485 = vmatpush1.msra.mxu0 %v6379
    %6486 = vmatprep.subr.mxu0 %v6384
    %6487 = vmatpush1.msra.mxu0 %v6383
    %6488 = vmatprep.subr.mxu0 0.0
    %6489 = vmatpush1.msra.mxu0 0.0
    %6490 = vmatprep.subr.mxu0 0.0
    %6491 = vmatpush1.msra.mxu0 0.0
    %6492 = vmatprep.subr.mxu0 0.0
    %6493 = vmatpush1.msra.mxu0 0.0
    %6494 = vmatprep.subr.mxu0 0.0
    %6495 = vmatpush1.msra.mxu0 0.0
    %6496 = vmatprep.subr.mxu0 0.0
    %6497 = vmatpush1.msra.mxu0 0.0
    %6498 = vmatprep.subr.mxu0 0.0
    %6499 = vmatpush1.msra.mxu0 0.0
    %6500 = vmatprep.subr.mxu0 0.0
    %6501 = vmatpush1.msra.mxu0 0.0
    %6502 = vmatprep.subr.mxu0 0.0
    %6503 = vmatpush1.msra.mxu0 0.0
    %6504 = vmatprep.subr.mxu0 0.0
    %6505 = vmatpush1.msra.mxu0 0.0
    %6506 = vmatprep.subr.mxu0 0.0
    %6507 = vmatpush1.msra.mxu0 0.0
    %6508 = vmatprep.subr.mxu0 0.0
    %6509 = vmatpush1.msra.mxu0 0.0
    %6510 = vmatprep.subr.mxu0 0.0
    %6511 = vmatpush1.msra.mxu0 0.0
    %6512 = vmatprep.subr.mxu0 0.0
    %6513 = vmatpush1.msra.mxu0 0.0
    %6514 = vmatprep.subr.mxu0 0.0
    %6515 = vmatpush1.msra.mxu0 0.0
    %6516 = vmatprep.subr.mxu0 0.0
    %6517 = vmatpush1.msra.mxu0 0.0
    %6518 = vmatprep.subr.mxu0 0.0
    %6519 = vmatpush1.msra.mxu0 0.0
    %6520 = vmatprep.mubr.f32.mxu0 0.0
    %6521 = vmatmul.mubr.f32.gmra.mrb[0].mxu0 %v6172
    %v6522 = vpop.f32.mrb[0].mxu0
    %v6523 = vadd.f32 0.0, %v6522
    %v6524 = vpop.f32.mrb[0].mxu0
    %v6525 = vadd.f32 0.0, %v6524
    %6526 = vdwg.mxu0
    %v6528 = vsel %vm3774, %v6176, 0
    %6530 = vmatprep.subr.mxu0 %v6178
    %6531 = vmatpush1.msra.mxu0 %v6177
    %6532 = vmatprep.subr.mxu0 %v6182
    %6533 = vmatpush1.msra.mxu0 %v6181
    %6534 = vmatprep.subr.mxu0 %v6186
    %6535 = vmatpush1.msra.mxu0 %v6185
    %6536 = vmatprep.subr.mxu0 %v6190
    %6537 = vmatpush1.msra.mxu0 %v6189
    %6538 = vmatprep.subr.mxu0 %v6194
    %6539 = vmatpush1.msra.mxu0 %v6193
    %6540 = vmatprep.subr.mxu0 %v6198
    %6541 = vmatpush1.msra.mxu0 %v6197
    %6542 = vmatprep.subr.mxu0 %v6202
    %6543 = vmatpush1.msra.mxu0 %v6201
    %6544 = vmatprep.subr.mxu0 %v6206
    %6545 = vmatpush1.msra.mxu0 %v6205
    %6546 = vmatprep.subr.mxu0 %v6210
    %6547 = vmatpush1.msra.mxu0 %v6209
    %6548 = vmatprep.subr.mxu0 %v6214
    %6549 = vmatpush1.msra.mxu0 %v6213
    %6550 = vmatprep.subr.mxu0 %v6218
    %6551 = vmatpush1.msra.mxu0 %v6217
    %6552 = vmatprep.subr.mxu0 %v6222
    %6553 = vmatpush1.msra.mxu0 %v6221
    %6554 = vmatprep.subr.mxu0 %v6226
    %6555 = vmatpush1.msra.mxu0 %v6225
    %6556 = vmatprep.subr.mxu0 %v6230
    %6557 = vmatpush1.msra.mxu0 %v6229
    %6558 = vmatprep.subr.mxu0 %v6234
    %6559 = vmatpush1.msra.mxu0 %v6233
    %6560 = vmatprep.subr.mxu0 %v6238
    %6561 = vmatpush1.msra.mxu0 %v6237
    %6562 = vmatprep.subr.mxu0 %v6242
    %6563 = vmatpush1.msra.mxu0 %v6241
    %6564 = vmatprep.subr.mxu0 %v6246
    %6565 = vmatpush1.msra.mxu0 %v6245
    %6566 = vmatprep.subr.mxu0 %v6250
    %6567 = vmatpush1.msra.mxu0 %v6249
    %6568 = vmatprep.subr.mxu0 %v6254
    %6569 = vmatpush1.msra.mxu0 %v6253
    %6570 = vmatprep.subr.mxu0 %v6258
    %6571 = vmatpush1.msra.mxu0 %v6257
    %6572 = vmatprep.subr.mxu0 %v6262
    %6573 = vmatpush1.msra.mxu0 %v6261
    %6574 = vmatprep.subr.mxu0 %v6266
    %6575 = vmatpush1.msra.mxu0 %v6265
    %6576 = vmatprep.subr.mxu0 %v6270
    %6577 = vmatpush1.msra.mxu0 %v6269
    %6578 = vmatprep.subr.mxu0 %v6274
    %6579 = vmatpush1.msra.mxu0 %v6273
    %6580 = vmatprep.subr.mxu0 %v6278
    %6581 = vmatpush1.msra.mxu0 %v6277
    %6582 = vmatprep.subr.mxu0 %v6282
    %6583 = vmatpush1.msra.mxu0 %v6281
    %6584 = vmatprep.subr.mxu0 %v6286
    %6585 = vmatpush1.msra.mxu0 %v6285
    %6586 = vmatprep.subr.mxu0 %v6290
    %6587 = vmatpush1.msra.mxu0 %v6289
    %6588 = vmatprep.subr.mxu0 %v6294
    %6589 = vmatpush1.msra.mxu0 %v6293
    %6590 = vmatprep.subr.mxu0 %v6298
    %6591 = vmatpush1.msra.mxu0 %v6297
    %6592 = vmatprep.subr.mxu0 %v6302
    %6593 = vmatpush1.msra.mxu0 %v6301
    %6594 = vmatprep.mubr.f32.mxu0 %v6175
    %6595 = vmatmul.mubr.f32.gmra.mrb[0].mxu0 %v6174
    %v6596 = vpop.f32.mrb[0].mxu0
    %v6597 = vadd.f32 %v6452, %v6596
    %v6598 = vpop.f32.mrb[0].mxu0
    %v6599 = vadd.f32 %v6454, %v6598
    %6600 = vdwg.mxu0
    %6601 = vmatprep.subr.mxu0 %v6306
    %6602 = vmatpush1.msra.mxu0 %v6305
    %6603 = vmatprep.subr.mxu0 %v6310
    %6604 = vmatpush1.msra.mxu0 %v6309
    %6605 = vmatprep.subr.mxu0 %v6314
    %6606 = vmatpush1.msra.mxu0 %v6313
    %6607 = vmatprep.subr.mxu0 %v6318
    %6608 = vmatpush1.msra.mxu0 %v6317
    %6609 = vmatprep.subr.mxu0 0.0
    %6610 = vmatpush1.msra.mxu0 0.0
    %6611 = vmatprep.subr.mxu0 0.0
    %6612 = vmatpush1.msra.mxu0 0.0
    %6613 = vmatprep.subr.mxu0 0.0
    %6614 = vmatpush1.msra.mxu0 0.0
    %6615 = vmatprep.subr.mxu0 0.0
    %6616 = vmatpush1.msra.mxu0 0.0
    %6617 = vmatprep.subr.mxu0 0.0
    %6618 = vmatpush1.msra.mxu0 0.0
    %6619 = vmatprep.subr.mxu0 0.0
    %6620 = vmatpush1.msra.mxu0 0.0
    %6621 = vmatprep.subr.mxu0 0.0
    %6622 = vmatpush1.msra.mxu0 0.0
    %6623 = vmatprep.subr.mxu0 0.0
    %6624 = vmatpush1.msra.mxu0 0.0
    %6625 = vmatprep.subr.mxu0 0.0
    %6626 = vmatpush1.msra.mxu0 0.0
    %6627 = vmatprep.subr.mxu0 0.0
    %6628 = vmatpush1.msra.mxu0 0.0
    %6629 = vmatprep.subr.mxu0 0.0
    %6630 = vmatpush1.msra.mxu0 0.0
    %6631 = vmatprep.subr.mxu0 0.0
    %6632 = vmatpush1.msra.mxu0 0.0
    %6633 = vmatprep.subr.mxu0 0.0
    %6634 = vmatpush1.msra.mxu0 0.0
    %6635 = vmatprep.subr.mxu0 0.0
    %6636 = vmatpush1.msra.mxu0 0.0
    %6637 = vmatprep.subr.mxu0 0.0
    %6638 = vmatpush1.msra.mxu0 0.0
    %6639 = vmatprep.subr.mxu0 0.0
    %6640 = vmatpush1.msra.mxu0 0.0
    %6641 = vmatprep.subr.mxu0 0.0
    %6642 = vmatpush1.msra.mxu0 0.0
    %6643 = vmatprep.subr.mxu0 0.0
    %6644 = vmatpush1.msra.mxu0 0.0
    %6645 = vmatprep.subr.mxu0 0.0
    %6646 = vmatpush1.msra.mxu0 0.0
    %6647 = vmatprep.subr.mxu0 0.0
    %6648 = vmatpush1.msra.mxu0 0.0
    %6649 = vmatprep.subr.mxu0 0.0
    %6650 = vmatpush1.msra.mxu0 0.0
    %6651 = vmatprep.subr.mxu0 0.0
    %6652 = vmatpush1.msra.mxu0 0.0
    %6653 = vmatprep.subr.mxu0 0.0
    %6654 = vmatpush1.msra.mxu0 0.0
    %6655 = vmatprep.subr.mxu0 0.0
    %6656 = vmatpush1.msra.mxu0 0.0
    %6657 = vmatprep.subr.mxu0 0.0
    %6658 = vmatpush1.msra.mxu0 0.0
    %6659 = vmatprep.subr.mxu0 0.0
    %6660 = vmatpush1.msra.mxu0 0.0
    %6661 = vmatprep.subr.mxu0 0.0
    %6662 = vmatpush1.msra.mxu0 0.0
    %6663 = vmatprep.subr.mxu0 0.0
    %6664 = vmatpush1.msra.mxu0 0.0
    %6665 = vmatprep.mubr.f32.mxu0 0.0
    %6666 = vmatmul.mubr.f32.gmra.mrb[0].mxu0 %v6528
    %v6667 = vpop.f32.mrb[0].mxu0
    %v6668 = vadd.f32 %v6597, %v6667
    %v6669 = vpop.f32.mrb[0].mxu0
    %v6670 = vadd.f32 %v6599, %v6669
    %6671 = vdwg.mxu0
    %6672 = vmatprep.subr.mxu0 %v6180
    %6673 = vmatpush1.msra.mxu0 %v6179
    %6674 = vmatprep.subr.mxu0 %v6184
    %6675 = vmatpush1.msra.mxu0 %v6183
    %6676 = vmatprep.subr.mxu0 %v6188
    %6677 = vmatpush1.msra.mxu0 %v6187
    %6678 = vmatprep.subr.mxu0 %v6192
    %6679 = vmatpush1.msra.mxu0 %v6191
    %6680 = vmatprep.subr.mxu0 %v6196
    %6681 = vmatpush1.msra.mxu0 %v6195
    %6682 = vmatprep.subr.mxu0 %v6200
    %6683 = vmatpush1.msra.mxu0 %v6199
    %6684 = vmatprep.subr.mxu0 %v6204
    %6685 = vmatpush1.msra.mxu0 %v6203
    %6686 = vmatprep.subr.mxu0 %v6208
    %6687 = vmatpush1.msra.mxu0 %v6207
    %6688 = vmatprep.subr.mxu0 %v6212
    %6689 = vmatpush1.msra.mxu0 %v6211
    %6690 = vmatprep.subr.mxu0 %v6216
    %6691 = vmatpush1.msra.mxu0 %v6215
    %6692 = vmatprep.subr.mxu0 %v6220
    %6693 = vmatpush1.msra.mxu0 %v6219
    %6694 = vmatprep.subr.mxu0 %v6224
    %6695 = vmatpush1.msra.mxu0 %v6223
    %6696 = vmatprep.subr.mxu0 %v6228
    %6697 = vmatpush1.msra.mxu0 %v6227
    %6698 = vmatprep.subr.mxu0 %v6232
    %6699 = vmatpush1.msra.mxu0 %v6231
    %6700 = vmatprep.subr.mxu0 %v6236
    %6701 = vmatpush1.msra.mxu0 %v6235
    %6702 = vmatprep.subr.mxu0 %v6240
    %6703 = vmatpush1.msra.mxu0 %v6239
    %6704 = vmatprep.subr.mxu0 %v6244
    %6705 = vmatpush1.msra.mxu0 %v6243
    %6706 = vmatprep.subr.mxu0 %v6248
    %6707 = vmatpush1.msra.mxu0 %v6247
    %6708 = vmatprep.subr.mxu0 %v6252
    %6709 = vmatpush1.msra.mxu0 %v6251
    %6710 = vmatprep.subr.mxu0 %v6256
    %6711 = vmatpush1.msra.mxu0 %v6255
    %6712 = vmatprep.subr.mxu0 %v6260
    %6713 = vmatpush1.msra.mxu0 %v6259
    %6714 = vmatprep.subr.mxu0 %v6264
    %6715 = vmatpush1.msra.mxu0 %v6263
    %6716 = vmatprep.subr.mxu0 %v6268
    %6717 = vmatpush1.msra.mxu0 %v6267
    %6718 = vmatprep.subr.mxu0 %v6272
    %6719 = vmatpush1.msra.mxu0 %v6271
    %6720 = vmatprep.subr.mxu0 %v6276
    %6721 = vmatpush1.msra.mxu0 %v6275
    %6722 = vmatprep.subr.mxu0 %v6280
    %6723 = vmatpush1.msra.mxu0 %v6279
    %6724 = vmatprep.subr.mxu0 %v6284
    %6725 = vmatpush1.msra.mxu0 %v6283
    %6726 = vmatprep.subr.mxu0 %v6288
    %6727 = vmatpush1.msra.mxu0 %v6287
    %6728 = vmatprep.subr.mxu0 %v6292
    %6729 = vmatpush1.msra.mxu0 %v6291
    %6730 = vmatprep.subr.mxu0 %v6296
    %6731 = vmatpush1.msra.mxu0 %v6295
    %6732 = vmatprep.subr.mxu0 %v6300
    %6733 = vmatpush1.msra.mxu0 %v6299
    %6734 = vmatprep.subr.mxu0 %v6304
    %6735 = vmatpush1.msra.mxu0 %v6303
    %6736 = vmatprep.mubr.f32.mxu0 %v6175
    %6737 = vmatmul.mubr.f32.gmra.mrb[0].mxu0 %v6174
    %v6738 = vpop.f32.mrb[0].mxu0
    %v6739 = vadd.f32 %v6523, %v6738
    %v6740 = vpop.f32.mrb[0].mxu0
    %v6741 = vadd.f32 %v6525, %v6740
    %6742 = vdwg.mxu0
    %6743 = vmatprep.subr.mxu0 %v6308
    %6744 = vmatpush1.msra.mxu0 %v6307
    %6745 = vmatprep.subr.mxu0 %v6312
    %6746 = vmatpush1.msra.mxu0 %v6311
    %6747 = vmatprep.subr.mxu0 %v6316
    %6748 = vmatpush1.msra.mxu0 %v6315
    %6749 = vmatprep.subr.mxu0 %v6320
    %6750 = vmatpush1.msra.mxu0 %v6319
    %6751 = vmatprep.subr.mxu0 0.0
    %6752 = vmatpush1.msra.mxu0 0.0
    %6753 = vmatprep.subr.mxu0 0.0
    %6754 = vmatpush1.msra.mxu0 0.0
    %6755 = vmatprep.subr.mxu0 0.0
    %6756 = vmatpush1.msra.mxu0 0.0
    %6757 = vmatprep.subr.mxu0 0.0
    %6758 = vmatpush1.msra.mxu0 0.0
    %6759 = vmatprep.subr.mxu0 0.0
    %6760 = vmatpush1.msra.mxu0 0.0
    %6761 = vmatprep.subr.mxu0 0.0
    %6762 = vmatpush1.msra.mxu0 0.0
    %6763 = vmatprep.subr.mxu0 0.0
    %6764 = vmatpush1.msra.mxu0 0.0
    %6765 = vmatprep.subr.mxu0 0.0
    %6766 = vmatpush1.msra.mxu0 0.0
    %6767 = vmatprep.subr.mxu0 0.0
    %6768 = vmatpush1.msra.mxu0 0.0
    %6769 = vmatprep.subr.mxu0 0.0
    %6770 = vmatpush1.msra.mxu0 0.0
    %6771 = vmatprep.subr.mxu0 0.0
    %6772 = vmatpush1.msra.mxu0 0.0
    %6773 = vmatprep.subr.mxu0 0.0
    %6774 = vmatpush1.msra.mxu0 0.0
    %6775 = vmatprep.subr.mxu0 0.0
    %6776 = vmatpush1.msra.mxu0 0.0
    %6777 = vmatprep.subr.mxu0 0.0
    %6778 = vmatpush1.msra.mxu0 0.0
    %6779 = vmatprep.subr.mxu0 0.0
    %6780 = vmatpush1.msra.mxu0 0.0
    %6781 = vmatprep.subr.mxu0 0.0
    %6782 = vmatpush1.msra.mxu0 0.0
    %6783 = vmatprep.subr.mxu0 0.0
    %6784 = vmatpush1.msra.mxu0 0.0
    %6785 = vmatprep.subr.mxu0 0.0
    %6786 = vmatpush1.msra.mxu0 0.0
    %6787 = vmatprep.subr.mxu0 0.0
    %6788 = vmatpush1.msra.mxu0 0.0
    %6789 = vmatprep.subr.mxu0 0.0
    %6790 = vmatpush1.msra.mxu0 0.0
    %6791 = vmatprep.subr.mxu0 0.0
    %6792 = vmatpush1.msra.mxu0 0.0
    %6793 = vmatprep.subr.mxu0 0.0
    %6794 = vmatpush1.msra.mxu0 0.0
    %6795 = vmatprep.subr.mxu0 0.0
    %6796 = vmatpush1.msra.mxu0 0.0
    %6797 = vmatprep.subr.mxu0 0.0
    %6798 = vmatpush1.msra.mxu0 0.0
    %6799 = vmatprep.subr.mxu0 0.0
    %6800 = vmatpush1.msra.mxu0 0.0
    %6801 = vmatprep.subr.mxu0 0.0
    %6802 = vmatpush1.msra.mxu0 0.0
    %6803 = vmatprep.subr.mxu0 0.0
    %6804 = vmatpush1.msra.mxu0 0.0
    %6805 = vmatprep.subr.mxu0 0.0
    %6806 = vmatpush1.msra.mxu0 0.0
    %6807 = vmatprep.mubr.f32.mxu0 0.0
    %6808 = vmatmul.mubr.f32.gmra.mrb[0].mxu0 %v6528
    %v6809 = vpop.f32.mrb[0].mxu0
    %v6810 = vadd.f32 %v6739, %v6809
    %v6811 = vpop.f32.mrb[0].mxu0
    %v6812 = vadd.f32 %v6741, %v6811
    %6813 = vdwg.mxu0
    %v6814 = vld [vmem:[#allocation9] sm:$0xff]
    %v6815 = vld [vmem:[#allocation9 + $0x8] sm:$0xff]
    %v6816 = vld [vmem:[#allocation9 + $0x10] sm:$0xff]
    %v6817 = vld [vmem:[#allocation9 + $0x18] sm:$0xff]
    %v6818 = vld [vmem:[#allocation9 + $0x20] sm:$0xff]
    %v6819 = vld [vmem:[#allocation9 + $0x28] sm:$0xff]
    %v6820 = vld [vmem:[#allocation9 + $0x30] sm:$0xff]
    %v6821 = vld [vmem:[#allocation9 + $0x38] sm:$0xff]
    %v6822 = vld [vmem:[#allocation9 + $0x40] sm:$0xff]
    %v6823 = vld [vmem:[#allocation9 + $0x48] sm:$0xff]
    %v6824 = vld [vmem:[#allocation9 + $0x50] sm:$0xff]
    %v6825 = vld [vmem:[#allocation9 + $0x58] sm:$0xff]
    %v6826 = vld [vmem:[#allocation9 + $0x60] sm:$0xff]
    %v6827 = vld [vmem:[#allocation9 + $0x68] sm:$0xff]
    %v6828 = vld [vmem:[#allocation9 + $0x70] sm:$0xff]
    %v6829 = vld [vmem:[#allocation9 + $0x78] sm:$0xff]
    %v6830 = vld [vmem:[#allocation9 + $0x80] sm:$0xff]
    %v6831 = vld [vmem:[#allocation9 + $0x88] sm:$0xff]
    %v6832 = vld [vmem:[#allocation9 + $0x90] sm:$0xff]
    %v6833 = vld [vmem:[#allocation9 + $0x98] sm:$0xff]
    %v6834 = vld [vmem:[#allocation9 + $0xa0] sm:$0xff]
    %v6835 = vld [vmem:[#allocation9 + $0xa8] sm:$0xff]
    %v6836 = vld [vmem:[#allocation9 + $0xb0] sm:$0xff]
    %v6837 = vld [vmem:[#allocation9 + $0xb8] sm:$0xff]
    %v6838 = vld [vmem:[#allocation9 + $0xc0] sm:$0xff]
    %v6839 = vld [vmem:[#allocation9 + $0xc8] sm:$0xff]
    %v6840 = vld [vmem:[#allocation9 + $0xd0] sm:$0xff]
    %v6841 = vld [vmem:[#allocation9 + $0xd8] sm:$0xff]
    %v6842 = vld [vmem:[#allocation9 + $0xe0] sm:$0xff]
    %v6843 = vld [vmem:[#allocation9 + $0xe8] sm:$0xff]
    %v6844 = vld [vmem:[#allocation9 + $0xf0] sm:$0xff]
    %v6845 = vld [vmem:[#allocation9 + $0xf8] sm:$0xff]
    %v6846 = vld [vmem:[#allocation9 + $0x100] sm:$0xff]
    %v6847 = vld [vmem:[#allocation9 + $0x108] sm:$0xff]
    %v6848 = vld [vmem:[#allocation9 + $0x110] sm:$0xff]
    %v6849 = vld [vmem:[#allocation9 + $0x118] sm:$0xff]
    %v6850 = vld [vmem:[#allocation9 + $0x120] sm:$0xff]
    %v6851 = vld [vmem:[#allocation9 + $0x128] sm:$0xff]
    %v6852 = vld [vmem:[#allocation9 + $0x130] sm:$0xff]
    %v6853 = vld [vmem:[#allocation9 + $0x138] sm:$0xff]
    %v6854 = vld [vmem:[#allocation9 + $0x140] sm:$0xff]
    %v6855 = vld [vmem:[#allocation9 + $0x148] sm:$0xff]
    %v6856 = vld [vmem:[#allocation9 + $0x150] sm:$0xff]
    %v6857 = vld [vmem:[#allocation9 + $0x158] sm:$0xff]
    %v6858 = vld [vmem:[#allocation9 + $0x160] sm:$0xff]
    %v6859 = vld [vmem:[#allocation9 + $0x168] sm:$0xff]
    %v6860 = vld [vmem:[#allocation9 + $0x170] sm:$0xff]
    %v6861 = vld [vmem:[#allocation9 + $0x178] sm:$0xff]
    %v6862 = vld [vmem:[#allocation9 + $0x180] sm:$0xff]
    %v6863 = vld [vmem:[#allocation9 + $0x188] sm:$0xff]
    %v6864 = vld [vmem:[#allocation9 + $0x190] sm:$0xff]
    %v6865 = vld [vmem:[#allocation9 + $0x198] sm:$0xff]
    %v6866 = vld [vmem:[#allocation9 + $0x1a0] sm:$0xff]
    %v6867 = vld [vmem:[#allocation9 + $0x1a8] sm:$0xff]
    %v6868 = vld [vmem:[#allocation9 + $0x1b0] sm:$0xff]
    %v6869 = vld [vmem:[#allocation9 + $0x1b8] sm:$0xff]
    %v6870 = vld [vmem:[#allocation9 + $0x1c0] sm:$0xff]
    %v6871 = vld [vmem:[#allocation9 + $0x1c8] sm:$0xff]
    %v6872 = vld [vmem:[#allocation9 + $0x1d0] sm:$0xff]
    %v6873 = vld [vmem:[#allocation9 + $0x1d8] sm:$0xff]
    %v6874 = vld [vmem:[#allocation9 + $0x1e0] sm:$0xff]
    %v6875 = vld [vmem:[#allocation9 + $0x1e8] sm:$0xff]
    %v6876 = vld [vmem:[#allocation9 + $0x1f0] sm:$0xff]
    %v6877 = vld [vmem:[#allocation9 + $0x1f8] sm:$0xff]
    %6878 = vmatprep.subr.mxu0 %v6815
    %6879 = vmatpush1.msra.mxu0 %v6814
    %6880 = vmatprep.subr.mxu0 %v6819
    %6881 = vmatpush1.msra.mxu0 %v6818
    %6882 = vmatprep.subr.mxu0 %v6823
    %6883 = vmatpush1.msra.mxu0 %v6822
    %6884 = vmatprep.subr.mxu0 %v6827
    %6885 = vmatpush1.msra.mxu0 %v6826
    %6886 = vmatprep.subr.mxu0 %v6831
    %6887 = vmatpush1.msra.mxu0 %v6830
    %6888 = vmatprep.subr.mxu0 %v6835
    %6889 = vmatpush1.msra.mxu0 %v6834
    %6890 = vmatprep.subr.mxu0 %v6839
    %6891 = vmatpush1.msra.mxu0 %v6838
    %6892 = vmatprep.subr.mxu0 %v6843
    %6893 = vmatpush1.msra.mxu0 %v6842
    %6894 = vmatprep.subr.mxu0 %v6847
    %6895 = vmatpush1.msra.mxu0 %v6846
    %6896 = vmatprep.subr.mxu0 %v6851
    %6897 = vmatpush1.msra.mxu0 %v6850
    %6898 = vmatprep.subr.mxu0 %v6855
    %6899 = vmatpush1.msra.mxu0 %v6854
    %6900 = vmatprep.subr.mxu0 %v6859
    %6901 = vmatpush1.msra.mxu0 %v6858
    %6902 = vmatprep.subr.mxu0 %v6863
    %6903 = vmatpush1.msra.mxu0 %v6862
    %6904 = vmatprep.subr.mxu0 %v6867
    %6905 = vmatpush1.msra.mxu0 %v6866
    %6906 = vmatprep.subr.mxu0 %v6871
    %6907 = vmatpush1.msra.mxu0 %v6870
    %6908 = vmatprep.subr.mxu0 %v6875
    %6909 = vmatpush1.msra.mxu0 %v6874
    %6910 = vmatprep.subr.mxu0 0.0
    %6911 = vmatpush1.msra.mxu0 0.0
    %6912 = vmatprep.subr.mxu0 0.0
    %6913 = vmatpush1.msra.mxu0 0.0
    %6914 = vmatprep.subr.mxu0 0.0
    %6915 = vmatpush1.msra.mxu0 0.0
    %6916 = vmatprep.subr.mxu0 0.0
    %6917 = vmatpush1.msra.mxu0 0.0
    %6918 = vmatprep.subr.mxu0 0.0
    %6919 = vmatpush1.msra.mxu0 0.0
    %6920 = vmatprep.subr.mxu0 0.0
    %6921 = vmatpush1.msra.mxu0 0.0
    %6922 = vmatprep.subr.mxu0 0.0
    %6923 = vmatpush1.msra.mxu0 0.0
    %6924 = vmatprep.subr.mxu0 0.0
    %6925 = vmatpush1.msra.mxu0 0.0
    %6926 = vmatprep.subr.mxu0 0.0
    %6927 = vmatpush1.msra.mxu0 0.0
    %6928 = vmatprep.subr.mxu0 0.0
    %6929 = vmatpush1.msra.mxu0 0.0
    %6930 = vmatprep.subr.mxu0 0.0
    %6931 = vmatpush1.msra.mxu0 0.0
    %6932 = vmatprep.subr.mxu0 0.0
    %6933 = vmatpush1.msra.mxu0 0.0
    %6934 = vmatprep.subr.mxu0 0.0
    %6935 = vmatpush1.msra.mxu0 0.0
    %6936 = vmatprep.subr.mxu0 0.0
    %6937 = vmatpush1.msra.mxu0 0.0
    %6938 = vmatprep.subr.mxu0 0.0
    %6939 = vmatpush1.msra.mxu0 0.0
    %6940 = vmatprep.subr.mxu0 0.0
    %6941 = vmatpush1.msra.mxu0 0.0
    %6942 = vmatprep.mubr.f32.mxu0 0.0
    %6943 = vmatmul.mubr.f32.gmra.mrb[0].mxu0 %v6173
    %v6944 = vpop.f32.mrb[0].mxu0
    %v6945 = vadd.f32 0.0, %v6944
    %v6946 = vpop.f32.mrb[0].mxu0
    %v6947 = vadd.f32 0.0, %v6946
    %6948 = vdwg.mxu0
    %6949 = vmatprep.subr.mxu0 %v6817
    %6950 = vmatpush1.msra.mxu0 %v6816
    %6951 = vmatprep.subr.mxu0 %v6821
    %6952 = vmatpush1.msra.mxu0 %v6820
    %6953 = vmatprep.subr.mxu0 %v6825
    %6954 = vmatpush1.msra.mxu0 %v6824
    %6955 = vmatprep.subr.mxu0 %v6829
    %6956 = vmatpush1.msra.mxu0 %v6828
    %6957 = vmatprep.subr.mxu0 %v6833
    %6958 = vmatpush1.msra.mxu0 %v6832
    %6959 = vmatprep.subr.mxu0 %v6837
    %6960 = vmatpush1.msra.mxu0 %v6836
    %6961 = vmatprep.subr.mxu0 %v6841
    %6962 = vmatpush1.msra.mxu0 %v6840
    %6963 = vmatprep.subr.mxu0 %v6845
    %6964 = vmatpush1.msra.mxu0 %v6844
    %6965 = vmatprep.subr.mxu0 %v6849
    %6966 = vmatpush1.msra.mxu0 %v6848
    %6967 = vmatprep.subr.mxu0 %v6853
    %6968 = vmatpush1.msra.mxu0 %v6852
    %6969 = vmatprep.subr.mxu0 %v6857
    %6970 = vmatpush1.msra.mxu0 %v6856
    %6971 = vmatprep.subr.mxu0 %v6861
    %6972 = vmatpush1.msra.mxu0 %v6860
    %6973 = vmatprep.subr.mxu0 %v6865
    %6974 = vmatpush1.msra.mxu0 %v6864
    %6975 = vmatprep.subr.mxu0 %v6869
    %6976 = vmatpush1.msra.mxu0 %v6868
    %6977 = vmatprep.subr.mxu0 %v6873
    %6978 = vmatpush1.msra.mxu0 %v6872
    %6979 = vmatprep.subr.mxu0 %v6877
    %6980 = vmatpush1.msra.mxu0 %v6876
    %6981 = vmatprep.subr.mxu0 0.0
    %6982 = vmatpush1.msra.mxu0 0.0
    %6983 = vmatprep.subr.mxu0 0.0
    %6984 = vmatpush1.msra.mxu0 0.0
    %6985 = vmatprep.subr.mxu0 0.0
    %6986 = vmatpush1.msra.mxu0 0.0
    %6987 = vmatprep.subr.mxu0 0.0
    %6988 = vmatpush1.msra.mxu0 0.0
    %6989 = vmatprep.subr.mxu0 0.0
    %6990 = vmatpush1.msra.mxu0 0.0
    %6991 = vmatprep.subr.mxu0 0.0
    %6992 = vmatpush1.msra.mxu0 0.0
    %6993 = vmatprep.subr.mxu0 0.0
    %6994 = vmatpush1.msra.mxu0 0.0
    %6995 = vmatprep.subr.mxu0 0.0
    %6996 = vmatpush1.msra.mxu0 0.0
    %6997 = vmatprep.subr.mxu0 0.0
    %6998 = vmatpush1.msra.mxu0 0.0
    %6999 = vmatprep.subr.mxu0 0.0
    %7000 = vmatpush1.msra.mxu0 0.0
    %7001 = vmatprep.subr.mxu0 0.0
    %7002 = vmatpush1.msra.mxu0 0.0
    %7003 = vmatprep.subr.mxu0 0.0
    %7004 = vmatpush1.msra.mxu0 0.0
    %7005 = vmatprep.subr.mxu0 0.0
    %7006 = vmatpush1.msra.mxu0 0.0
    %7007 = vmatprep.subr.mxu0 0.0
    %7008 = vmatpush1.msra.mxu0 0.0
    %7009 = vmatprep.subr.mxu0 0.0
    %7010 = vmatpush1.msra.mxu0 0.0
    %7011 = vmatprep.subr.mxu0 0.0
    %7012 = vmatpush1.msra.mxu0 0.0
    %7013 = vmatprep.mubr.f32.mxu0 0.0
    %7014 = vmatmul.mubr.f32.gmra.mrb[0].mxu0 %v6173
    %v7015 = vpop.f32.mrb[0].mxu0
    %v7016 = vadd.f32 0.0, %v7015
    %v7017 = vpop.f32.mrb[0].mxu0
    %v7018 = vadd.f32 0.0, %v7017
    %7019 = vdwg.mxu0
    %v7020 = vadd.f32 %v6668, %v6945
    %v7021 = vadd.f32 %v6670, %v6947
    %v7022 = vadd.f32 %v6810, %v7016
    %v7023 = vadd.f32 %v6812, %v7018
    %v7024 = vld [vmem:[%s11] sm:$0xf]
    %v7026 = vlaneseq
    %v7027 = vshrl.u32 %v7026, 7
    %v7028 = vsub.s32 0, %v7027
    %v7029 = vrot.slane %v7024, %v7028
    %v7030 = vlaneseq
    %v7031 = vshrl.u32 %v7030, 7
    %v7032 = vsub.s32 1, %v7031
    %v7033 = vrot.slane %v7024, %v7032
    %v7034 = vlaneseq
    %v7035 = vshrl.u32 %v7034, 7
    %v7036 = vsub.s32 2, %v7035
    %v7037 = vrot.slane %v7024, %v7036
    %v7038 = vlaneseq
    %v7039 = vshrl.u32 %v7038, 7
    %v7040 = vsub.s32 3, %v7039
    %v7041 = vrot.slane %v7024, %v7040
    %v7046 = vadd.f32 %v7020, %v7029
    %v7047 = vadd.f32 %v7021, %v7033
    %v7048 = vadd.f32 %v7022, %v7037
    %v7049 = vadd.f32 %v7023, %v7041
    %v7050 = vxor.u32 %v7046, 2147483648
    %v7051 = vmul.f32 %v7050, 1.442695
    %v7052 = vpow.pop %v7051
    %v7053 = vadd.f32 %v7052, 1.0
    %v7054 = vrcp.pop %v7053
    %v7055 = vmul.f32 1.0, %v7054
    %v7056 = vxor.u32 %v7047, 2147483648
    %v7057 = vmul.f32 %v7056, 1.442695
    %v7058 = vpow.pop %v7057
    %v7059 = vadd.f32 %v7058, 1.0
    %v7060 = vrcp.pop %v7059
    %v7061 = vmul.f32 1.0, %v7060
    %v7062 = vmul.f32 %v7055, %v7049
    %v7063 = vadd.f32 %v7048, %v7062
    %v7064 = vtanh.pop %v7063
    %v7065 = vsub.f32 1.0, %v7061
    %v7066 = vmul.f32 %v7065, %v7064
    %v7067 = vmul.f32 %v7061, %v6173
    %v7068 = vadd.f32 %v7066, %v7067
    %7069 = vst [vmem:[#allocation14] sm:$0xff] %v7068
    %v7070 = vld [vmem:[#allocation12] sm:$0xff]
    %v7071 = vld [vmem:[#allocation12 + $0x8] sm:$0xff]
    %v7072 = vld [vmem:[#allocation12 + $0x10] sm:$0xff]
    %v7073 = vld [vmem:[#allocation12 + $0x18] sm:$0xff]
    %v7074 = vld [vmem:[#allocation12 + $0x20] sm:$0xff]
    %v7075 = vld [vmem:[#allocation12 + $0x28] sm:$0xff]
    %v7076 = vld [vmem:[#allocation12 + $0x30] sm:$0xff]
    %v7077 = vld [vmem:[#allocation12 + $0x38] sm:$0xff]
    %v7078 = vld [vmem:[#allocation12 + $0x40] sm:$0xff]
    %v7079 = vld [vmem:[#allocation12 + $0x48] sm:$0xff]
    %v7080 = vld [vmem:[#allocation12 + $0x50] sm:$0xff]
    %v7081 = vld [vmem:[#allocation12 + $0x58] sm:$0xff]
    %v7082 = vld [vmem:[#allocation12 + $0x60] sm:$0xff]
    %v7083 = vld [vmem:[#allocation12 + $0x68] sm:$0xff]
    %v7084 = vld [vmem:[#allocation12 + $0x70] sm:$0xff]
    %v7085 = vld [vmem:[#allocation12 + $0x78] sm:$0xff]
    %v7086 = vld [vmem:[%s14] sm:$0x1]
    %v7088 = vlaneseq
    %v7089 = vshrl.u32 %v7088, 7
    %v7090 = vsub.s32 0, %v7089
    %v7091 = vrot.slane %v7086, %v7090
    %7093 = vmatprep.subr.mxu0 0.0
    %7094 = vmatpush1.msra.mxu0 %v7070
    %7095 = vmatprep.subr.mxu0 0.0
    %7096 = vmatpush1.msra.mxu0 %v7071
    %7097 = vmatprep.subr.mxu0 0.0
    %7098 = vmatpush1.msra.mxu0 %v7072
    %7099 = vmatprep.subr.mxu0 0.0
    %7100 = vmatpush1.msra.mxu0 %v7073
    %7101 = vmatprep.subr.mxu0 0.0
    %7102 = vmatpush1.msra.mxu0 %v7074
    %7103 = vmatprep.subr.mxu0 0.0
    %7104 = vmatpush1.msra.mxu0 %v7075
    %7105 = vmatprep.subr.mxu0 0.0
    %7106 = vmatpush1.msra.mxu0 %v7076
    %7107 = vmatprep.subr.mxu0 0.0
    %7108 = vmatpush1.msra.mxu0 %v7077
    %7109 = vmatprep.subr.mxu0 0.0
    %7110 = vmatpush1.msra.mxu0 %v7078
    %7111 = vmatprep.subr.mxu0 0.0
    %7112 = vmatpush1.msra.mxu0 %v7079
    %7113 = vmatprep.subr.mxu0 0.0
    %7114 = vmatpush1.msra.mxu0 %v7080
    %7115 = vmatprep.subr.mxu0 0.0
    %7116 = vmatpush1.msra.mxu0 %v7081
    %7117 = vmatprep.subr.mxu0 0.0
    %7118 = vmatpush1.msra.mxu0 %v7082
    %7119 = vmatprep.subr.mxu0 0.0
    %7120 = vmatpush1.msra.mxu0 %v7083
    %7121 = vmatprep.subr.mxu0 0.0
    %7122 = vmatpush1.msra.mxu0 %v7084
    %7123 = vmatprep.subr.mxu0 0.0
    %7124 = vmatpush1.msra.mxu0 %v7085
    %7125 = vmatprep.subr.mxu0 0.0
    %7126 = vmatpush1.msra.mxu0 0.0
    %7127 = vmatprep.subr.mxu0 0.0
    %7128 = vmatpush1.msra.mxu0 0.0
    %7129 = vmatprep.subr.mxu0 0.0
    %7130 = vmatpush1.msra.mxu0 0.0
    %7131 = vmatprep.subr.mxu0 0.0
    %7132 = vmatpush1.msra.mxu0 0.0
    %7133 = vmatprep.subr.mxu0 0.0
    %7134 = vmatpush1.msra.mxu0 0.0
    %7135 = vmatprep.subr.mxu0 0.0
    %7136 = vmatpush1.msra.mxu0 0.0
    %7137 = vmatprep.subr.mxu0 0.0
    %7138 = vmatpush1.msra.mxu0 0.0
    %7139 = vmatprep.subr.mxu0 0.0
    %7140 = vmatpush1.msra.mxu0 0.0
    %7141 = vmatprep.subr.mxu0 0.0
    %7142 = vmatpush1.msra.mxu0 0.0
    %7143 = vmatprep.subr.mxu0 0.0
    %7144 = vmatpush1.msra.mxu0 0.0
    %7145 = vmatprep.subr.mxu0 0.0
    %7146 = vmatpush1.msra.mxu0 0.0
    %7147 = vmatprep.subr.mxu0 0.0
    %7148 = vmatpush1.msra.mxu0 0.0
    %7149 = vmatprep.subr.mxu0 0.0
    %7150 = vmatpush1.msra.mxu0 0.0
    %7151 = vmatprep.subr.mxu0 0.0
    %7152 = vmatpush1.msra.mxu0 0.0
    %7153 = vmatprep.subr.mxu0 0.0
    %7154 = vmatpush1.msra.mxu0 0.0
    %7155 = vmatprep.subr.mxu0 0.0
    %7156 = vmatpush1.msra.mxu0 0.0
    %7157 = vmatprep.mubr.f32.mxu0 0.0
    %7158 = vmatmul.mubr.f32.gmra.mrb[0].mxu0 %v7068
    %v7159 = vpop.f32.mrb[0].mxu0
    %v7160 = vadd.f32 %v7091, %v7159
    %v7161 = vpop.f32.mrb[0].mxu0
    %7162 = vdwg.mxu0
    %7163 = vst [vmem:[#allocation13] sm:$0xff] %v7160
    // Predicated region
    $region82: #{tpu_custom_call.1} parent=1 // pred_check
      _
    $region83: #{tpu_custom_call.1} parent=1 // pred_check_branch
      %7165 = sbr.rel (0) target = $region85
    $region84: #{tpu_custom_call.1} parent=1 // pred_region
      %s7167 = ssub.s32 128, 128
      %7168 = vsyncadd [#allocation6], %s7167
      %s7170 = sshll.u32 [#allocation13], 4
      %s7171 = int_to_ptr.vmem [resolvable:$true] %s7170
      %7173 = dma.vmem_to_hbm [thread:$0]  %s7171, 128, %s15, [#allocation6]
    $region85: #{tpu_custom_call.1} parent=1 // pred_fallthru
      _
    // Predicated region
    $region86: #{tpu_custom_call.1} parent=1 // pred_check
      _
    $region87: #{tpu_custom_call.1} parent=1 // pred_check_branch
      %7175 = sbr.rel (0) target = $region89
    $region88: #{tpu_custom_call.1} parent=1 // pred_region
      %s7177 = ssub.s32 128, 128
      %7178 = vsyncadd [#allocation15], %s7177
      %s7180 = sshll.u32 [#allocation14], 4
      %s7181 = int_to_ptr.vmem [resolvable:$true] %s7180
      %7183 = dma.vmem_to_hbm [thread:$0]  %s7181, 128, %s16, [#allocation15]
    $region89: #{tpu_custom_call.1} parent=1 // pred_fallthru
      _
    // Predicated region
    $region90: #{tpu_custom_call.1} parent=1 // pred_check
      _
    $region91: #{tpu_custom_call.1} parent=1 // pred_check_branch
      %7185 = sbr.rel (0) target = $region93
    $region92: #{tpu_custom_call.1} parent=1 // pred_region
      %7186 = dma.done [#allocation6], 128
    $region93: #{tpu_custom_call.1} parent=1 // pred_fallthru
      _
    // Predicated region
    $region94: #{tpu_custom_call.1} parent=1 // pred_check
      _
    $region95: #{tpu_custom_call.1} parent=1 // pred_check_branch
      %7188 = sbr.rel (0) target = $region97
    $region96: #{tpu_custom_call.1} parent=1 // pred_region
      %7189 = dma.done [#allocation15], 128
    $region97: #{tpu_custom_call.1} parent=1 // pred_fallthru
      _
    %7190 = vsyncpa [#allocation5], 1
    %7191 = vsyncpa [#allocation8], 1
    %7192 = vsyncpa [#allocation11], 1
    %7193 = vsyncpa [#allocation6], 1
    %7194 = vsyncpa [#allocation15], 1

</llo_original>
